<compile_context>
chip_gen: v7x
topology: tpu7x:2x2x1
jax: 0.10.0
libtpu: 0.0.40
codegen_flags: <defaults>
</compile_context>

<pallas_src>
from functools import partial

import numpy as np
import jax
import jax.numpy as jnp
from jax.experimental import pallas as pl
from jax.experimental.pallas import tpu as pltpu

LEAKY_SLOPE = 0.01           # pytorch-tools ABN default activation_param
BN_EPS = 1e-5
ACT_DTYPE = jnp.bfloat16     # MXU operand / activation dtype (f32 accumulate)
VMEM_LIMIT_BYTES = 32 * 1024 * 1024
NUM_CLASSES = 10


# --------------------------------------------------------------------------
# Prep-time helpers (run ONCE, outside jit)
# --------------------------------------------------------------------------
def _conv_selection(h, w, k, stride, pad):
    """(k*k, Ho*Wo, h*w) 0/1 matrices.  S[t] @ x_flat gathers, for every output
    pixel, the input pixel hit by tap t (dy=t//k, dx=t%k); rows whose tap falls
    in the zero padding are all-zero (== implicit padding)."""
    ho = (h + 2 * pad - k) // stride + 1
    wo = (w + 2 * pad - k) // stride + 1
    sel = np.zeros((k * k, ho * wo, h * w), np.float32)
    for dy in range(k):
        for dx in range(k):
            t = dy * k + dx
            for r in range(ho):
                iy = stride * r + dy - pad
                if not (0 <= iy < h):
                    continue
                for c in range(wo):
                    ix = stride * c + dx - pad
                    if 0 <= ix < w:
                        sel[t, r * wo + c, iy * w + ix] = 1.0
    return sel


def prepare_params(params, in_size=32):
    """Fold BN scales into bf16 weights, build tap-gather matrices, and flatten
    everything into the ordered operand list consumed by the fused kernel."""
    consts = []
    has_sel2 = []

    def add(a, dt):
        consts.append(jnp.asarray(a, dt))

    # stem: conv3x3 stride 2 -> weights tap-major (9*Cin, Cout), BN scale folded.
    cin = params['stem_w'].shape[2]
    cout = params['stem_w'].shape[3]
    add((params['stem_w'] * params['stem_scale']).reshape(9 * cin, cout), jnp.bfloat16)
    add(params['stem_shift'].reshape(1, -1), jnp.float32)

    h = in_size // 2                      # spatial size after the stride-2 stem
    for blocks in params['stages']:
        for bp in blocks:
            # TODO(synk): stride-1 / identity-shortcut block variants are not
            # needed for this config (layers=[1,1,1,1], all blocks stride 2).
            cin = bp['conv1_w'].shape[2]
            cout = bp['conv1_w'].shape[3]
            ho = h // 2

            # conv1: 3x3 stride-2 pad-1 (drop all-zero, pure-padding taps).
            sel1 = _conv_selection(h, h, 3, 2, 1)
            keep1 = [t for t in range(9) if sel1[t].any()]
            w1 = (bp['conv1_w'] * bp['bn1_scale']).reshape(9, cin, cout)
            add(sel1[keep1], jnp.bfloat16)
            add(jnp.concatenate([w1[t] for t in keep1], axis=0), jnp.bfloat16)
            add(bp['bn1_shift'].reshape(1, -1), jnp.float32)

            # shortcut: 1x1 stride-2 conv + BN (no activation).
            add(_conv_selection(h, h, 1, 2, 0)[0], jnp.bfloat16)
            add(bp['sc_w'][0, 0] * bp['sc_scale'], jnp.bfloat16)
            add(bp['sc_shift'].reshape(1, -1), jnp.float32)

            # conv2: 3x3 stride-1 pad-1 on the (ho x ho) map.
            sel2 = _conv_selection(ho, ho, 3, 1, 1)
            keep2 = [t for t in range(9) if sel2[t].any()]
            w2 = (bp['conv2_w'] * bp['bn2_scale']).reshape(9, cout, cout)
            identity = (ho == 1 and len(keep2) == 1)   # 1x1 map: conv2 == center 1x1
            has_sel2.append(not identity)
            if identity:
                add(w2[keep2[0]], jnp.bfloat16)
            else:
                add(sel2[keep2], jnp.bfloat16)
                add(jnp.concatenate([w2[t] for t in keep2], axis=0), jnp.bfloat16)
            add(bp['bn2_shift'].reshape(1, -1), jnp.float32)

            h = ho

    # head ('default'): conv1x1 + ABN(leaky) + GAP, then last_linear.
    add(params['head_w'][0, 0] * params['head_scale'], jnp.bfloat16)
    add(params['head_shift'].reshape(1, -1), jnp.float32)
    add(params['fc_w'], jnp.bfloat16)
    add(params['fc_b'].reshape(1, -1), jnp.float32)
    return consts, tuple(bool(v) for v in has_sel2)


# --------------------------------------------------------------------------
# Fused whole-network kernel (one grid step == one image)
# --------------------------------------------------------------------------
def _bnet_kernel(*refs, has_sel2, slope):
    o_ref = refs[-1]
    it = iter(refs[:-1])
    x_ref, stem_w, stem_b = next(it), next(it), next(it)

    def conv(lhs, w_ref, b_ref):
        return jnp.dot(lhs, w_ref[...], preferred_element_type=jnp.float32) + b_ref[...]

    def leaky(v):
        return jnp.where(v >= 0, v, v * slope)

    def gather_im2col(sel_ref, x):
        # Each tap: (Mout, Min) 0/1 matrix @ (Min, C) activations -> exact gather on MXU.
        pieces = [
            jnp.dot(sel_ref[t], x, preferred_element_type=jnp.float32).astype(jnp.bfloat16)
            for t in range(sel_ref.shape[0])
        ]
        return jnp.concatenate(pieces, axis=-1)          # (Mout, T*C) bf16

    # stem: 3x3/s2 conv (im2col prepared by the wrapper) + ABN(leaky_relu)
    x = leaky(conv(x_ref[0], stem_w, stem_b)).astype(jnp.bfloat16)   # (256, 16)

    # 4 SimpleBasicBlocks, stride 2, conv1x1 shortcut.
    # TODO(synk): drop_connect is a no-op here since drop_connect_rate=0.
    for bi in range(len(has_sel2)):
        sel1, w1, b1 = next(it), next(it), next(it)
        selsc, wsc, bsc = next(it), next(it), next(it)
        sel2 = next(it) if has_sel2[bi] else None
        w2, b2 = next(it), next(it)

        # conv1 3x3/s2 + folded BN + leaky_relu
        y1 = leaky(conv(gather_im2col(sel1, x), w1, b1)).astype(jnp.bfloat16)
        # shortcut 1x1/s2 + folded BN
        xs = jnp.dot(selsc[...], x, preferred_element_type=jnp.float32).astype(jnp.bfloat16)
        sc = conv(xs, wsc, bsc)
        # conv2 3x3/s1 + folded BN + residual + leaky_relu
        lhs2 = y1 if sel2 is None else gather_im2col(sel2, y1)
        x = leaky(conv(lhs2, w2, b2) + sc).astype(jnp.bfloat16)

    # head: conv1x1 + ABN(leaky) + FastGlobalAvgPool2d + last_linear
    wh, bh, wfc, bfc = next(it), next(it), next(it), next(it)
    h = leaky(conv(x, wh, bh))
    pooled = jnp.mean(h, axis=0, keepdims=True).astype(jnp.bfloat16)
    logits = conv(pooled, wfc, bfc)                       # (1, num_classes) f32
    o_ref[...] = logits.reshape(1, 1, -1)


def _const_index(b, *, nd):
    return (0,) * nd


def bnet_forward(x_nchw, consts, *, has_sel2):
    N, C, H, W = x_nchw.shape
    Ho, Wo = H // 2, W // 2

    # Single fused XLA prologue: NCHW -> NHWC, pad 1, im2col for the stride-2 stem
    # so the kernel's first layer is a plain (Ho*Wo, 9*C) x (9*C, 16) matmul.
    x = jnp.transpose(x_nchw, (0, 2, 3, 1)).astype(jnp.float32)
    xp = jnp.pad(x, ((0, 0), (1, 1), (1, 1), (0, 0)))
    cols = [xp[:, dy:dy + 2 * Ho:2, dx:dx + 2 * Wo:2, :]
            for dy in range(3) for dx in range(3)]
    x_col = jnp.concatenate(cols, axis=-1).reshape(N, Ho * Wo, 9 * C).astype(ACT_DTYPE)

    num_classes = consts[-1].shape[-1]
    in_specs = [pl.BlockSpec((1, Ho * Wo, 9 * C), lambda b: (b, 0, 0))]
    in_specs += [pl.BlockSpec(a.shape, partial(_const_index, nd=a.ndim)) for a in consts]

    out = pl.pallas_call(
        partial(_bnet_kernel, has_sel2=has_sel2, slope=LEAKY_SLOPE),
        out_shape=jax.ShapeDtypeStruct((N, 1, num_classes), jnp.float32),
        grid=(N,),
        in_specs=in_specs,
        out_specs=pl.BlockSpec((1, 1, num_classes), lambda b: (b, 0, 0)),
        compiler_params=pltpu.CompilerParams(
            dimension_semantics=("parallel",),            # v7x: one image per TC
            vmem_limit_bytes=VMEM_LIMIT_BYTES),
    )(x_col, *consts)
    return out.reshape(N, num_classes)


# --------------------------------------------------------------------------
# Deterministic parameter construction (in-script)
# --------------------------------------------------------------------------
def _kaiming(key, shape):
    fan_in = shape[0] * shape[1] * shape[2]
    return (2.0 / fan_in) ** 0.5 * jax.random.normal(key, shape, jnp.float32)


def _bn_params(c):
    gamma = jnp.ones((c,), jnp.float32)
    beta = jnp.zeros((c,), jnp.float32)
    mean = jnp.zeros((c,), jnp.float32)
    var = jnp.ones((c,), jnp.float32)
    scale = gamma / jnp.sqrt(var + BN_EPS)       # inference-mode BN
    shift = beta - mean * scale
    return scale, shift


def init_params(key):
    in_channels, stem_width = 3, 16
    channels = [16, 32, 64, 128]
    layers = [1, 1, 1, 1]
    head_width, num_classes = 128, NUM_CLASSES

    keys = iter(jax.random.split(key, 64))
    params = {}
    params['stem_w'] = _kaiming(next(keys), (3, 3, in_channels, stem_width))
    params['stem_scale'], params['stem_shift'] = _bn_params(stem_width)

    stages = []
    in_chs = stem_width
    for si, out_chs in enumerate(channels):
        blocks = []
        for bi in range(layers[si]):
            b_in = in_chs if bi == 0 else out_chs
            stride = 2 if bi == 0 else 1
            bp = {
                'conv1_w': _kaiming(next(keys), (3, 3, b_in, out_chs)),
                'conv2_w': _kaiming(next(keys), (3, 3, out_chs, out_chs)),
            }
            bp['bn1_scale'], bp['bn1_shift'] = _bn_params(out_chs)
            bp['bn2_scale'], bp['bn2_shift'] = _bn_params(out_chs)
            if stride != 1 or b_in != out_chs:
                bp['sc_w'] = _kaiming(next(keys), (1, 1, b_in, out_chs))
                bp['sc_scale'], bp['sc_shift'] = _bn_params(out_chs)
            blocks.append(bp)
        stages.append(blocks)
        in_chs = out_chs
    params['stages'] = stages

    params['head_w'] = _kaiming(next(keys), (1, 1, channels[3], head_width))
    params['head_scale'], params['head_shift'] = _bn_params(head_width)
    params['fc_w'] = 0.01 * jax.random.normal(next(keys),
                                              (head_width, num_classes),
                                              jnp.float32)
    params['fc_b'] = jnp.zeros((num_classes,), jnp.float32)
    return params


if __name__ == "__main__":
    key = jax.random.PRNGKey(0)
    kx, kp = jax.random.split(key)
    x = jax.random.normal(kx, (2, 3, 32, 32), jnp.float32)   # NCHW like PyTorch
    params = init_params(kp)
    consts, has_sel2 = prepare_params(params, in_size=x.shape[-1])   # once, outside jit
    fwd = jax.jit(partial(bnet_forward, has_sel2=has_sel2))
    out = fwd(x, consts)
    jax.block_until_ready(out)
    assert out.shape == (2, NUM_CLASSES) and out.dtype == jnp.float32
    assert bool(jnp.all(jnp.isfinite(out)))
    print("KERNEL_OK")
</pallas_src>

<mosaic_0001>
module attributes {stable_mosaic.version = 11 : i64} {
  func.func @_bnet_kernel(%arg0: i32, %arg1: memref<1x256x27xbf16, #tpu.memory_space<vmem>>, %arg2: memref<27x16xbf16, #tpu.memory_space<vmem>>, %arg3: memref<1x16xf32, #tpu.memory_space<vmem>>, %arg4: memref<9x64x256xbf16, #tpu.memory_space<vmem>>, %arg5: memref<144x16xbf16, #tpu.memory_space<vmem>>, %arg6: memref<1x16xf32, #tpu.memory_space<vmem>>, %arg7: memref<64x256xbf16, #tpu.memory_space<vmem>>, %arg8: memref<16x16xbf16, #tpu.memory_space<vmem>>, %arg9: memref<1x16xf32, #tpu.memory_space<vmem>>, %arg10: memref<9x64x64xbf16, #tpu.memory_space<vmem>>, %arg11: memref<144x16xbf16, #tpu.memory_space<vmem>>, %arg12: memref<1x16xf32, #tpu.memory_space<vmem>>, %arg13: memref<9x16x64xbf16, #tpu.memory_space<vmem>>, %arg14: memref<144x32xbf16, #tpu.memory_space<vmem>>, %arg15: memref<1x32xf32, #tpu.memory_space<vmem>>, %arg16: memref<16x64xbf16, #tpu.memory_space<vmem>>, %arg17: memref<16x32xbf16, #tpu.memory_space<vmem>>, %arg18: memref<1x32xf32, #tpu.memory_space<vmem>>, %arg19: memref<9x16x16xbf16, #tpu.memory_space<vmem>>, %arg20: memref<288x32xbf16, #tpu.memory_space<vmem>>, %arg21: memref<1x32xf32, #tpu.memory_space<vmem>>, %arg22: memref<9x4x16xbf16, #tpu.memory_space<vmem>>, %arg23: memref<288x64xbf16, #tpu.memory_space<vmem>>, %arg24: memref<1x64xf32, #tpu.memory_space<vmem>>, %arg25: memref<4x16xbf16, #tpu.memory_space<vmem>>, %arg26: memref<32x64xbf16, #tpu.memory_space<vmem>>, %arg27: memref<1x64xf32, #tpu.memory_space<vmem>>, %arg28: memref<9x4x4xbf16, #tpu.memory_space<vmem>>, %arg29: memref<576x64xbf16, #tpu.memory_space<vmem>>, %arg30: memref<1x64xf32, #tpu.memory_space<vmem>>, %arg31: memref<4x1x4xbf16, #tpu.memory_space<vmem>>, %arg32: memref<256x128xbf16, #tpu.memory_space<vmem>>, %arg33: memref<1x128xf32, #tpu.memory_space<vmem>>, %arg34: memref<1x4xbf16, #tpu.memory_space<vmem>>, %arg35: memref<64x128xbf16, #tpu.memory_space<vmem>>, %arg36: memref<1x128xf32, #tpu.memory_space<vmem>>, %arg37: memref<128x128xbf16, #tpu.memory_space<vmem>>, %arg38: memref<1x128xf32, #tpu.memory_space<vmem>>, %arg39: memref<128x128xbf16, #tpu.memory_space<vmem>>, %arg40: memref<1x128xf32, #tpu.memory_space<vmem>>, %arg41: memref<128x10xbf16, #tpu.memory_space<vmem>>, %arg42: memref<1x10xf32, #tpu.memory_space<vmem>>, %arg43: memref<1x1x10xf32, #tpu.memory_space<vmem>>) attributes {dimension_semantics = [#tpu.dimension_semantics<parallel>], iteration_bounds = array<i64: 2>, scalar_prefetch = 0 : i64, scratch_operands = 0 : i64, tpu.core_type = #tpu.core_type<tc>, window_params = [{transform_indices = @transform_0, window_bounds = array<i64: 1, 256, 27>}, {pipeline_mode = #tpu.pipeline_mode<synchronous>, transform_indices = @transform_1, window_bounds = array<i64: 27, 16>}, {pipeline_mode = #tpu.pipeline_mode<synchronous>, transform_indices = @transform_2, window_bounds = array<i64: 1, 16>}, {pipeline_mode = #tpu.pipeline_mode<synchronous>, transform_indices = @transform_3, window_bounds = array<i64: 9, 64, 256>}, {pipeline_mode = #tpu.pipeline_mode<synchronous>, transform_indices = @transform_4, window_bounds = array<i64: 144, 16>}, {pipeline_mode = #tpu.pipeline_mode<synchronous>, transform_indices = @transform_5, window_bounds = array<i64: 1, 16>}, {pipeline_mode = #tpu.pipeline_mode<synchronous>, transform_indices = @transform_6, window_bounds = array<i64: 64, 256>}, {pipeline_mode = #tpu.pipeline_mode<synchronous>, transform_indices = @transform_7, window_bounds = array<i64: 16, 16>}, {pipeline_mode = #tpu.pipeline_mode<synchronous>, transform_indices = @transform_8, window_bounds = array<i64: 1, 16>}, {pipeline_mode = #tpu.pipeline_mode<synchronous>, transform_indices = @transform_9, window_bounds = array<i64: 9, 64, 64>}, {pipeline_mode = #tpu.pipeline_mode<synchronous>, transform_indices = @transform_10, window_bounds = array<i64: 144, 16>}, {pipeline_mode = #tpu.pipeline_mode<synchronous>, transform_indices = @transform_11, window_bounds = array<i64: 1, 16>}, {pipeline_mode = #tpu.pipeline_mode<synchronous>, transform_indices = @transform_12, window_bounds = array<i64: 9, 16, 64>}, {pipeline_mode = #tpu.pipeline_mode<synchronous>, transform_indices = @transform_13, window_bounds = array<i64: 144, 32>}, {pipeline_mode = #tpu.pipeline_mode<synchronous>, transform_indices = @transform_14, window_bounds = array<i64: 1, 32>}, {pipeline_mode = #tpu.pipeline_mode<synchronous>, transform_indices = @transform_15, window_bounds = array<i64: 16, 64>}, {pipeline_mode = #tpu.pipeline_mode<synchronous>, transform_indices = @transform_16, window_bounds = array<i64: 16, 32>}, {pipeline_mode = #tpu.pipeline_mode<synchronous>, transform_indices = @transform_17, window_bounds = array<i64: 1, 32>}, {pipeline_mode = #tpu.pipeline_mode<synchronous>, transform_indices = @transform_18, window_bounds = array<i64: 9, 16, 16>}, {pipeline_mode = #tpu.pipeline_mode<synchronous>, transform_indices = @transform_19, window_bounds = array<i64: 288, 32>}, {pipeline_mode = #tpu.pipeline_mode<synchronous>, transform_indices = @transform_20, window_bounds = array<i64: 1, 32>}, {pipeline_mode = #tpu.pipeline_mode<synchronous>, transform_indices = @transform_21, window_bounds = array<i64: 9, 4, 16>}, {pipeline_mode = #tpu.pipeline_mode<synchronous>, transform_indices = @transform_22, window_bounds = array<i64: 288, 64>}, {pipeline_mode = #tpu.pipeline_mode<synchronous>, transform_indices = @transform_23, window_bounds = array<i64: 1, 64>}, {pipeline_mode = #tpu.pipeline_mode<synchronous>, transform_indices = @transform_24, window_bounds = array<i64: 4, 16>}, {pipeline_mode = #tpu.pipeline_mode<synchronous>, transform_indices = @transform_25, window_bounds = array<i64: 32, 64>}, {pipeline_mode = #tpu.pipeline_mode<synchronous>, transform_indices = @transform_26, window_bounds = array<i64: 1, 64>}, {pipeline_mode = #tpu.pipeline_mode<synchronous>, transform_indices = @transform_27, window_bounds = array<i64: 9, 4, 4>}, {pipeline_mode = #tpu.pipeline_mode<synchronous>, transform_indices = @transform_28, window_bounds = array<i64: 576, 64>}, {pipeline_mode = #tpu.pipeline_mode<synchronous>, transform_indices = @transform_29, window_bounds = array<i64: 1, 64>}, {pipeline_mode = #tpu.pipeline_mode<synchronous>, transform_indices = @transform_30, window_bounds = array<i64: 4, 1, 4>}, {pipeline_mode = #tpu.pipeline_mode<synchronous>, transform_indices = @transform_31, window_bounds = array<i64: 256, 128>}, {pipeline_mode = #tpu.pipeline_mode<synchronous>, transform_indices = @transform_32, window_bounds = array<i64: 1, 128>}, {pipeline_mode = #tpu.pipeline_mode<synchronous>, transform_indices = @transform_33, window_bounds = array<i64: 1, 4>}, {pipeline_mode = #tpu.pipeline_mode<synchronous>, transform_indices = @transform_34, window_bounds = array<i64: 64, 128>}, {pipeline_mode = #tpu.pipeline_mode<synchronous>, transform_indices = @transform_35, window_bounds = array<i64: 1, 128>}, {pipeline_mode = #tpu.pipeline_mode<synchronous>, transform_indices = @transform_36, window_bounds = array<i64: 128, 128>}, {pipeline_mode = #tpu.pipeline_mode<synchronous>, transform_indices = @transform_37, window_bounds = array<i64: 1, 128>}, {pipeline_mode = #tpu.pipeline_mode<synchronous>, transform_indices = @transform_38, window_bounds = array<i64: 128, 128>}, {pipeline_mode = #tpu.pipeline_mode<synchronous>, transform_indices = @transform_39, window_bounds = array<i64: 1, 128>}, {pipeline_mode = #tpu.pipeline_mode<synchronous>, transform_indices = @transform_40, window_bounds = array<i64: 128, 10>}, {pipeline_mode = #tpu.pipeline_mode<synchronous>, transform_indices = @transform_41, window_bounds = array<i64: 1, 10>}, {transform_indices = @transform_42, window_bounds = array<i64: 1, 1, 10>}]} {
    %c0 = arith.constant 0 : index
    %c0_0 = arith.constant 0 : index
    %c0_1 = arith.constant 0 : index
    %0 = vector.load %arg1[%c0, %c0_0, %c0_1] : memref<1x256x27xbf16, #tpu.memory_space<vmem>>, vector<1x256x27xbf16>
    %1 = vector.shape_cast %0 : vector<1x256x27xbf16> to vector<256x27xbf16>
    %c0_2 = arith.constant 0 : index
    %c0_3 = arith.constant 0 : index
    %2 = vector.load %arg2[%c0_2, %c0_3] : memref<27x16xbf16, #tpu.memory_space<vmem>>, vector<27x16xbf16>
    %cst = arith.constant dense<0.000000e+00> : vector<256x16xf32>
    %3 = tpu.matmul %1, %2, %cst {dimension_numbers = #tpu.dot_dimension_numbers<[1], [0], [0], [1], [0, 0, 1, 1], [], []>} : vector<256x27xbf16>, vector<27x16xbf16>, vector<256x16xf32> -> vector<256x16xf32>
    %c0_4 = arith.constant 0 : index
    %c0_5 = arith.constant 0 : index
    %4 = vector.load %arg3[%c0_4, %c0_5] : memref<1x16xf32, #tpu.memory_space<vmem>>, vector<1x16xf32>
    %5 = vector.broadcast %4 : vector<1x16xf32> to vector<256x16xf32>
    %6 = arith.addf %3, %5 : vector<256x16xf32>
    %cst_6 = arith.constant 0.000000e+00 : f32
    %7 = vector.broadcast %cst_6 : f32 to vector<256x16xf32>
    %8 = arith.cmpf oge, %6, %7 : vector<256x16xf32>
    %cst_7 = arith.constant 0.00999999977 : f32
    %9 = vector.broadcast %cst_7 : f32 to vector<256x16xf32>
    %10 = arith.mulf %6, %9 : vector<256x16xf32>
    %11 = arith.select %8, %6, %10 : vector<256x16xi1>, vector<256x16xf32>
    %12 = arith.truncf %11 : vector<256x16xf32> to vector<256x16xbf16>
    %c0_8 = arith.constant 0 : index
    %c0_9 = arith.constant 0 : index
    %c0_10 = arith.constant 0 : index
    %13 = vector.load %arg4[%c0_8, %c0_9, %c0_10] : memref<9x64x256xbf16, #tpu.memory_space<vmem>>, vector<1x64x256xbf16>
    %14 = vector.shape_cast %13 : vector<1x64x256xbf16> to vector<64x256xbf16>
    %cst_11 = arith.constant dense<0.000000e+00> : vector<64x16xf32>
    %15 = tpu.matmul %14, %12, %cst_11 {dimension_numbers = #tpu.dot_dimension_numbers<[1], [0], [0], [1], [0, 0, 1, 1], [], []>} : vector<64x256xbf16>, vector<256x16xbf16>, vector<64x16xf32> -> vector<64x16xf32>
    %16 = arith.truncf %15 : vector<64x16xf32> to vector<64x16xbf16>
    %c1 = arith.constant 1 : index
    %c0_12 = arith.constant 0 : index
    %c0_13 = arith.constant 0 : index
    %17 = vector.load %arg4[%c1, %c0_12, %c0_13] : memref<9x64x256xbf16, #tpu.memory_space<vmem>>, vector<1x64x256xbf16>
    %18 = vector.shape_cast %17 : vector<1x64x256xbf16> to vector<64x256xbf16>
    %cst_14 = arith.constant dense<0.000000e+00> : vector<64x16xf32>
    %19 = tpu.matmul %18, %12, %cst_14 {dimension_numbers = #tpu.dot_dimension_numbers<[1], [0], [0], [1], [0, 0, 1, 1], [], []>} : vector<64x256xbf16>, vector<256x16xbf16>, vector<64x16xf32> -> vector<64x16xf32>
    %20 = arith.truncf %19 : vector<64x16xf32> to vector<64x16xbf16>
    %c2 = arith.constant 2 : index
    %c0_15 = arith.constant 0 : index
    %c0_16 = arith.constant 0 : index
    %21 = vector.load %arg4[%c2, %c0_15, %c0_16] : memref<9x64x256xbf16, #tpu.memory_space<vmem>>, vector<1x64x256xbf16>
    %22 = vector.shape_cast %21 : vector<1x64x256xbf16> to vector<64x256xbf16>
    %cst_17 = arith.constant dense<0.000000e+00> : vector<64x16xf32>
    %23 = tpu.matmul %22, %12, %cst_17 {dimension_numbers = #tpu.dot_dimension_numbers<[1], [0], [0], [1], [0, 0, 1, 1], [], []>} : vector<64x256xbf16>, vector<256x16xbf16>, vector<64x16xf32> -> vector<64x16xf32>
    %24 = arith.truncf %23 : vector<64x16xf32> to vector<64x16xbf16>
    %c3 = arith.constant 3 : index
    %c0_18 = arith.constant 0 : index
    %c0_19 = arith.constant 0 : index
    %25 = vector.load %arg4[%c3, %c0_18, %c0_19] : memref<9x64x256xbf16, #tpu.memory_space<vmem>>, vector<1x64x256xbf16>
    %26 = vector.shape_cast %25 : vector<1x64x256xbf16> to vector<64x256xbf16>
    %cst_20 = arith.constant dense<0.000000e+00> : vector<64x16xf32>
    %27 = tpu.matmul %26, %12, %cst_20 {dimension_numbers = #tpu.dot_dimension_numbers<[1], [0], [0], [1], [0, 0, 1, 1], [], []>} : vector<64x256xbf16>, vector<256x16xbf16>, vector<64x16xf32> -> vector<64x16xf32>
    %28 = arith.truncf %27 : vector<64x16xf32> to vector<64x16xbf16>
    %c4 = arith.constant 4 : index
    %c0_21 = arith.constant 0 : index
    %c0_22 = arith.constant 0 : index
    %29 = vector.load %arg4[%c4, %c0_21, %c0_22] : memref<9x64x256xbf16, #tpu.memory_space<vmem>>, vector<1x64x256xbf16>
    %30 = vector.shape_cast %29 : vector<1x64x256xbf16> to vector<64x256xbf16>
    %cst_23 = arith.constant dense<0.000000e+00> : vector<64x16xf32>
    %31 = tpu.matmul %30, %12, %cst_23 {dimension_numbers = #tpu.dot_dimension_numbers<[1], [0], [0], [1], [0, 0, 1, 1], [], []>} : vector<64x256xbf16>, vector<256x16xbf16>, vector<64x16xf32> -> vector<64x16xf32>
    %32 = arith.truncf %31 : vector<64x16xf32> to vector<64x16xbf16>
    %c5 = arith.constant 5 : index
    %c0_24 = arith.constant 0 : index
    %c0_25 = arith.constant 0 : index
    %33 = vector.load %arg4[%c5, %c0_24, %c0_25] : memref<9x64x256xbf16, #tpu.memory_space<vmem>>, vector<1x64x256xbf16>
    %34 = vector.shape_cast %33 : vector<1x64x256xbf16> to vector<64x256xbf16>
    %cst_26 = arith.constant dense<0.000000e+00> : vector<64x16xf32>
    %35 = tpu.matmul %34, %12, %cst_26 {dimension_numbers = #tpu.dot_dimension_numbers<[1], [0], [0], [1], [0, 0, 1, 1], [], []>} : vector<64x256xbf16>, vector<256x16xbf16>, vector<64x16xf32> -> vector<64x16xf32>
    %36 = arith.truncf %35 : vector<64x16xf32> to vector<64x16xbf16>
    %c6 = arith.constant 6 : index
    %c0_27 = arith.constant 0 : index
    %c0_28 = arith.constant 0 : index
    %37 = vector.load %arg4[%c6, %c0_27, %c0_28] : memref<9x64x256xbf16, #tpu.memory_space<vmem>>, vector<1x64x256xbf16>
    %38 = vector.shape_cast %37 : vector<1x64x256xbf16> to vector<64x256xbf16>
    %cst_29 = arith.constant dense<0.000000e+00> : vector<64x16xf32>
    %39 = tpu.matmul %38, %12, %cst_29 {dimension_numbers = #tpu.dot_dimension_numbers<[1], [0], [0], [1], [0, 0, 1, 1], [], []>} : vector<64x256xbf16>, vector<256x16xbf16>, vector<64x16xf32> -> vector<64x16xf32>
    %40 = arith.truncf %39 : vector<64x16xf32> to vector<64x16xbf16>
    %c7 = arith.constant 7 : index
    %c0_30 = arith.constant 0 : index
    %c0_31 = arith.constant 0 : index
    %41 = vector.load %arg4[%c7, %c0_30, %c0_31] : memref<9x64x256xbf16, #tpu.memory_space<vmem>>, vector<1x64x256xbf16>
    %42 = vector.shape_cast %41 : vector<1x64x256xbf16> to vector<64x256xbf16>
    %cst_32 = arith.constant dense<0.000000e+00> : vector<64x16xf32>
    %43 = tpu.matmul %42, %12, %cst_32 {dimension_numbers = #tpu.dot_dimension_numbers<[1], [0], [0], [1], [0, 0, 1, 1], [], []>} : vector<64x256xbf16>, vector<256x16xbf16>, vector<64x16xf32> -> vector<64x16xf32>
    %44 = arith.truncf %43 : vector<64x16xf32> to vector<64x16xbf16>
    %c8 = arith.constant 8 : index
    %c0_33 = arith.constant 0 : index
    %c0_34 = arith.constant 0 : index
    %45 = vector.load %arg4[%c8, %c0_33, %c0_34] : memref<9x64x256xbf16, #tpu.memory_space<vmem>>, vector<1x64x256xbf16>
    %46 = vector.shape_cast %45 : vector<1x64x256xbf16> to vector<64x256xbf16>
    %cst_35 = arith.constant dense<0.000000e+00> : vector<64x16xf32>
    %47 = tpu.matmul %46, %12, %cst_35 {dimension_numbers = #tpu.dot_dimension_numbers<[1], [0], [0], [1], [0, 0, 1, 1], [], []>} : vector<64x256xbf16>, vector<256x16xbf16>, vector<64x16xf32> -> vector<64x16xf32>
    %48 = arith.truncf %47 : vector<64x16xf32> to vector<64x16xbf16>
    %49 = tpu.concatenate %16, %20, %24, %28, %32, %36, %40, %44, %48 in 1 : vector<64x16xbf16>, vector<64x16xbf16>, vector<64x16xbf16>, vector<64x16xbf16>, vector<64x16xbf16>, vector<64x16xbf16>, vector<64x16xbf16>, vector<64x16xbf16>, vector<64x16xbf16> -> vector<64x144xbf16>
    %c0_36 = arith.constant 0 : index
    %c0_37 = arith.constant 0 : index
    %50 = vector.load %arg5[%c0_36, %c0_37] : memref<144x16xbf16, #tpu.memory_space<vmem>>, vector<144x16xbf16>
    %cst_38 = arith.constant dense<0.000000e+00> : vector<64x16xf32>
    %51 = tpu.matmul %49, %50, %cst_38 {dimension_numbers = #tpu.dot_dimension_numbers<[1], [0], [0], [1], [0, 0, 1, 1], [], []>} : vector<64x144xbf16>, vector<144x16xbf16>, vector<64x16xf32> -> vector<64x16xf32>
    %c0_39 = arith.constant 0 : index
    %c0_40 = arith.constant 0 : index
    %52 = vector.load %arg6[%c0_39, %c0_40] : memref<1x16xf32, #tpu.memory_space<vmem>>, vector<1x16xf32>
    %53 = vector.broadcast %52 : vector<1x16xf32> to vector<64x16xf32>
    %54 = arith.addf %51, %53 : vector<64x16xf32>
    %cst_41 = arith.constant 0.000000e+00 : f32
    %55 = vector.broadcast %cst_41 : f32 to vector<64x16xf32>
    %56 = arith.cmpf oge, %54, %55 : vector<64x16xf32>
    %cst_42 = arith.constant 0.00999999977 : f32
    %57 = vector.broadcast %cst_42 : f32 to vector<64x16xf32>
    %58 = arith.mulf %54, %57 : vector<64x16xf32>
    %59 = arith.select %56, %54, %58 : vector<64x16xi1>, vector<64x16xf32>
    %60 = arith.truncf %59 : vector<64x16xf32> to vector<64x16xbf16>
    %c0_43 = arith.constant 0 : index
    %c0_44 = arith.constant 0 : index
    %61 = vector.load %arg7[%c0_43, %c0_44] : memref<64x256xbf16, #tpu.memory_space<vmem>>, vector<64x256xbf16>
    %cst_45 = arith.constant dense<0.000000e+00> : vector<64x16xf32>
    %62 = tpu.matmul %61, %12, %cst_45 {dimension_numbers = #tpu.dot_dimension_numbers<[1], [0], [0], [1], [0, 0, 1, 1], [], []>} : vector<64x256xbf16>, vector<256x16xbf16>, vector<64x16xf32> -> vector<64x16xf32>
    %63 = arith.truncf %62 : vector<64x16xf32> to vector<64x16xbf16>
    %c0_46 = arith.constant 0 : index
    %c0_47 = arith.constant 0 : index
    %64 = vector.load %arg8[%c0_46, %c0_47] : memref<16x16xbf16, #tpu.memory_space<vmem>>, vector<16x16xbf16>
    %cst_48 = arith.constant dense<0.000000e+00> : vector<64x16xf32>
    %65 = tpu.matmul %63, %64, %cst_48 {dimension_numbers = #tpu.dot_dimension_numbers<[1], [0], [0], [1], [0, 0, 1, 1], [], []>} : vector<64x16xbf16>, vector<16x16xbf16>, vector<64x16xf32> -> vector<64x16xf32>
    %c0_49 = arith.constant 0 : index
    %c0_50 = arith.constant 0 : index
    %66 = vector.load %arg9[%c0_49, %c0_50] : memref<1x16xf32, #tpu.memory_space<vmem>>, vector<1x16xf32>
    %67 = vector.broadcast %66 : vector<1x16xf32> to vector<64x16xf32>
    %68 = arith.addf %65, %67 : vector<64x16xf32>
    %c0_51 = arith.constant 0 : index
    %c0_52 = arith.constant 0 : index
    %c0_53 = arith.constant 0 : index
    %69 = vector.load %arg10[%c0_51, %c0_52, %c0_53] : memref<9x64x64xbf16, #tpu.memory_space<vmem>>, vector<1x64x64xbf16>
    %70 = vector.shape_cast %69 : vector<1x64x64xbf16> to vector<64x64xbf16>
    %cst_54 = arith.constant dense<0.000000e+00> : vector<64x16xf32>
    %71 = tpu.matmul %70, %60, %cst_54 {dimension_numbers = #tpu.dot_dimension_numbers<[1], [0], [0], [1], [0, 0, 1, 1], [], []>} : vector<64x64xbf16>, vector<64x16xbf16>, vector<64x16xf32> -> vector<64x16xf32>
    %72 = arith.truncf %71 : vector<64x16xf32> to vector<64x16xbf16>
    %c1_55 = arith.constant 1 : index
    %c0_56 = arith.constant 0 : index
    %c0_57 = arith.constant 0 : index
    %73 = vector.load %arg10[%c1_55, %c0_56, %c0_57] : memref<9x64x64xbf16, #tpu.memory_space<vmem>>, vector<1x64x64xbf16>
    %74 = vector.shape_cast %73 : vector<1x64x64xbf16> to vector<64x64xbf16>
    %cst_58 = arith.constant dense<0.000000e+00> : vector<64x16xf32>
    %75 = tpu.matmul %74, %60, %cst_58 {dimension_numbers = #tpu.dot_dimension_numbers<[1], [0], [0], [1], [0, 0, 1, 1], [], []>} : vector<64x64xbf16>, vector<64x16xbf16>, vector<64x16xf32> -> vector<64x16xf32>
    %76 = arith.truncf %75 : vector<64x16xf32> to vector<64x16xbf16>
    %c2_59 = arith.constant 2 : index
    %c0_60 = arith.constant 0 : index
    %c0_61 = arith.constant 0 : index
    %77 = vector.load %arg10[%c2_59, %c0_60, %c0_61] : memref<9x64x64xbf16, #tpu.memory_space<vmem>>, vector<1x64x64xbf16>
    %78 = vector.shape_cast %77 : vector<1x64x64xbf16> to vector<64x64xbf16>
    %cst_62 = arith.constant dense<0.000000e+00> : vector<64x16xf32>
    %79 = tpu.matmul %78, %60, %cst_62 {dimension_numbers = #tpu.dot_dimension_numbers<[1], [0], [0], [1], [0, 0, 1, 1], [], []>} : vector<64x64xbf16>, vector<64x16xbf16>, vector<64x16xf32> -> vector<64x16xf32>
    %80 = arith.truncf %79 : vector<64x16xf32> to vector<64x16xbf16>
    %c3_63 = arith.constant 3 : index
    %c0_64 = arith.constant 0 : index
    %c0_65 = arith.constant 0 : index
    %81 = vector.load %arg10[%c3_63, %c0_64, %c0_65] : memref<9x64x64xbf16, #tpu.memory_space<vmem>>, vector<1x64x64xbf16>
    %82 = vector.shape_cast %81 : vector<1x64x64xbf16> to vector<64x64xbf16>
    %cst_66 = arith.constant dense<0.000000e+00> : vector<64x16xf32>
    %83 = tpu.matmul %82, %60, %cst_66 {dimension_numbers = #tpu.dot_dimension_numbers<[1], [0], [0], [1], [0, 0, 1, 1], [], []>} : vector<64x64xbf16>, vector<64x16xbf16>, vector<64x16xf32> -> vector<64x16xf32>
    %84 = arith.truncf %83 : vector<64x16xf32> to vector<64x16xbf16>
    %c4_67 = arith.constant 4 : index
    %c0_68 = arith.constant 0 : index
    %c0_69 = arith.constant 0 : index
    %85 = vector.load %arg10[%c4_67, %c0_68, %c0_69] : memref<9x64x64xbf16, #tpu.memory_space<vmem>>, vector<1x64x64xbf16>
    %86 = vector.shape_cast %85 : vector<1x64x64xbf16> to vector<64x64xbf16>
    %cst_70 = arith.constant dense<0.000000e+00> : vector<64x16xf32>
    %87 = tpu.matmul %86, %60, %cst_70 {dimension_numbers = #tpu.dot_dimension_numbers<[1], [0], [0], [1], [0, 0, 1, 1], [], []>} : vector<64x64xbf16>, vector<64x16xbf16>, vector<64x16xf32> -> vector<64x16xf32>
    %88 = arith.truncf %87 : vector<64x16xf32> to vector<64x16xbf16>
    %c5_71 = arith.constant 5 : index
    %c0_72 = arith.constant 0 : index
    %c0_73 = arith.constant 0 : index
    %89 = vector.load %arg10[%c5_71, %c0_72, %c0_73] : memref<9x64x64xbf16, #tpu.memory_space<vmem>>, vector<1x64x64xbf16>
    %90 = vector.shape_cast %89 : vector<1x64x64xbf16> to vector<64x64xbf16>
    %cst_74 = arith.constant dense<0.000000e+00> : vector<64x16xf32>
    %91 = tpu.matmul %90, %60, %cst_74 {dimension_numbers = #tpu.dot_dimension_numbers<[1], [0], [0], [1], [0, 0, 1, 1], [], []>} : vector<64x64xbf16>, vector<64x16xbf16>, vector<64x16xf32> -> vector<64x16xf32>
    %92 = arith.truncf %91 : vector<64x16xf32> to vector<64x16xbf16>
    %c6_75 = arith.constant 6 : index
    %c0_76 = arith.constant 0 : index
    %c0_77 = arith.constant 0 : index
    %93 = vector.load %arg10[%c6_75, %c0_76, %c0_77] : memref<9x64x64xbf16, #tpu.memory_space<vmem>>, vector<1x64x64xbf16>
    %94 = vector.shape_cast %93 : vector<1x64x64xbf16> to vector<64x64xbf16>
    %cst_78 = arith.constant dense<0.000000e+00> : vector<64x16xf32>
    %95 = tpu.matmul %94, %60, %cst_78 {dimension_numbers = #tpu.dot_dimension_numbers<[1], [0], [0], [1], [0, 0, 1, 1], [], []>} : vector<64x64xbf16>, vector<64x16xbf16>, vector<64x16xf32> -> vector<64x16xf32>
    %96 = arith.truncf %95 : vector<64x16xf32> to vector<64x16xbf16>
    %c7_79 = arith.constant 7 : index
    %c0_80 = arith.constant 0 : index
    %c0_81 = arith.constant 0 : index
    %97 = vector.load %arg10[%c7_79, %c0_80, %c0_81] : memref<9x64x64xbf16, #tpu.memory_space<vmem>>, vector<1x64x64xbf16>
    %98 = vector.shape_cast %97 : vector<1x64x64xbf16> to vector<64x64xbf16>
    %cst_82 = arith.constant dense<0.000000e+00> : vector<64x16xf32>
    %99 = tpu.matmul %98, %60, %cst_82 {dimension_numbers = #tpu.dot_dimension_numbers<[1], [0], [0], [1], [0, 0, 1, 1], [], []>} : vector<64x64xbf16>, vector<64x16xbf16>, vector<64x16xf32> -> vector<64x16xf32>
    %100 = arith.truncf %99 : vector<64x16xf32> to vector<64x16xbf16>
    %c8_83 = arith.constant 8 : index
    %c0_84 = arith.constant 0 : index
    %c0_85 = arith.constant 0 : index
    %101 = vector.load %arg10[%c8_83, %c0_84, %c0_85] : memref<9x64x64xbf16, #tpu.memory_space<vmem>>, vector<1x64x64xbf16>
    %102 = vector.shape_cast %101 : vector<1x64x64xbf16> to vector<64x64xbf16>
    %cst_86 = arith.constant dense<0.000000e+00> : vector<64x16xf32>
    %103 = tpu.matmul %102, %60, %cst_86 {dimension_numbers = #tpu.dot_dimension_numbers<[1], [0], [0], [1], [0, 0, 1, 1], [], []>} : vector<64x64xbf16>, vector<64x16xbf16>, vector<64x16xf32> -> vector<64x16xf32>
    %104 = arith.truncf %103 : vector<64x16xf32> to vector<64x16xbf16>
    %105 = tpu.concatenate %72, %76, %80, %84, %88, %92, %96, %100, %104 in 1 : vector<64x16xbf16>, vector<64x16xbf16>, vector<64x16xbf16>, vector<64x16xbf16>, vector<64x16xbf16>, vector<64x16xbf16>, vector<64x16xbf16>, vector<64x16xbf16>, vector<64x16xbf16> -> vector<64x144xbf16>
    %c0_87 = arith.constant 0 : index
    %c0_88 = arith.constant 0 : index
    %106 = vector.load %arg11[%c0_87, %c0_88] : memref<144x16xbf16, #tpu.memory_space<vmem>>, vector<144x16xbf16>
    %cst_89 = arith.constant dense<0.000000e+00> : vector<64x16xf32>
    %107 = tpu.matmul %105, %106, %cst_89 {dimension_numbers = #tpu.dot_dimension_numbers<[1], [0], [0], [1], [0, 0, 1, 1], [], []>} : vector<64x144xbf16>, vector<144x16xbf16>, vector<64x16xf32> -> vector<64x16xf32>
    %c0_90 = arith.constant 0 : index
    %c0_91 = arith.constant 0 : index
    %108 = vector.load %arg12[%c0_90, %c0_91] : memref<1x16xf32, #tpu.memory_space<vmem>>, vector<1x16xf32>
    %109 = vector.broadcast %108 : vector<1x16xf32> to vector<64x16xf32>
    %110 = arith.addf %107, %109 : vector<64x16xf32>
    %111 = arith.addf %110, %68 : vector<64x16xf32>
    %cst_92 = arith.constant 0.000000e+00 : f32
    %112 = vector.broadcast %cst_92 : f32 to vector<64x16xf32>
    %113 = arith.cmpf oge, %111, %112 : vector<64x16xf32>
    %cst_93 = arith.constant 0.00999999977 : f32
    %114 = vector.broadcast %cst_93 : f32 to vector<64x16xf32>
    %115 = arith.mulf %111, %114 : vector<64x16xf32>
    %116 = arith.select %113, %111, %115 : vector<64x16xi1>, vector<64x16xf32>
    %117 = arith.truncf %116 : vector<64x16xf32> to vector<64x16xbf16>
    %c0_94 = arith.constant 0 : index
    %c0_95 = arith.constant 0 : index
    %c0_96 = arith.constant 0 : index
    %118 = vector.load %arg13[%c0_94, %c0_95, %c0_96] : memref<9x16x64xbf16, #tpu.memory_space<vmem>>, vector<1x16x64xbf16>
    %119 = vector.shape_cast %118 : vector<1x16x64xbf16> to vector<16x64xbf16>
    %cst_97 = arith.constant dense<0.000000e+00> : vector<16x16xf32>
    %120 = tpu.matmul %119, %117, %cst_97 {dimension_numbers = #tpu.dot_dimension_numbers<[1], [0], [0], [1], [0, 0, 1, 1], [], []>} : vector<16x64xbf16>, vector<64x16xbf16>, vector<16x16xf32> -> vector<16x16xf32>
    %121 = arith.truncf %120 : vector<16x16xf32> to vector<16x16xbf16>
    %c1_98 = arith.constant 1 : index
    %c0_99 = arith.constant 0 : index
    %c0_100 = arith.constant 0 : index
    %122 = vector.load %arg13[%c1_98, %c0_99, %c0_100] : memref<9x16x64xbf16, #tpu.memory_space<vmem>>, vector<1x16x64xbf16>
    %123 = vector.shape_cast %122 : vector<1x16x64xbf16> to vector<16x64xbf16>
    %cst_101 = arith.constant dense<0.000000e+00> : vector<16x16xf32>
    %124 = tpu.matmul %123, %117, %cst_101 {dimension_numbers = #tpu.dot_dimension_numbers<[1], [0], [0], [1], [0, 0, 1, 1], [], []>} : vector<16x64xbf16>, vector<64x16xbf16>, vector<16x16xf32> -> vector<16x16xf32>
    %125 = arith.truncf %124 : vector<16x16xf32> to vector<16x16xbf16>
    %c2_102 = arith.constant 2 : index
    %c0_103 = arith.constant 0 : index
    %c0_104 = arith.constant 0 : index
    %126 = vector.load %arg13[%c2_102, %c0_103, %c0_104] : memref<9x16x64xbf16, #tpu.memory_space<vmem>>, vector<1x16x64xbf16>
    %127 = vector.shape_cast %126 : vector<1x16x64xbf16> to vector<16x64xbf16>
    %cst_105 = arith.constant dense<0.000000e+00> : vector<16x16xf32>
    %128 = tpu.matmul %127, %117, %cst_105 {dimension_numbers = #tpu.dot_dimension_numbers<[1], [0], [0], [1], [0, 0, 1, 1], [], []>} : vector<16x64xbf16>, vector<64x16xbf16>, vector<16x16xf32> -> vector<16x16xf32>
    %129 = arith.truncf %128 : vector<16x16xf32> to vector<16x16xbf16>
    %c3_106 = arith.constant 3 : index
    %c0_107 = arith.constant 0 : index
    %c0_108 = arith.constant 0 : index
    %130 = vector.load %arg13[%c3_106, %c0_107, %c0_108] : memref<9x16x64xbf16, #tpu.memory_space<vmem>>, vector<1x16x64xbf16>
    %131 = vector.shape_cast %130 : vector<1x16x64xbf16> to vector<16x64xbf16>
    %cst_109 = arith.constant dense<0.000000e+00> : vector<16x16xf32>
    %132 = tpu.matmul %131, %117, %cst_109 {dimension_numbers = #tpu.dot_dimension_numbers<[1], [0], [0], [1], [0, 0, 1, 1], [], []>} : vector<16x64xbf16>, vector<64x16xbf16>, vector<16x16xf32> -> vector<16x16xf32>
    %133 = arith.truncf %132 : vector<16x16xf32> to vector<16x16xbf16>
    %c4_110 = arith.constant 4 : index
    %c0_111 = arith.constant 0 : index
    %c0_112 = arith.constant 0 : index
    %134 = vector.load %arg13[%c4_110, %c0_111, %c0_112] : memref<9x16x64xbf16, #tpu.memory_space<vmem>>, vector<1x16x64xbf16>
    %135 = vector.shape_cast %134 : vector<1x16x64xbf16> to vector<16x64xbf16>
    %cst_113 = arith.constant dense<0.000000e+00> : vector<16x16xf32>
    %136 = tpu.matmul %135, %117, %cst_113 {dimension_numbers = #tpu.dot_dimension_numbers<[1], [0], [0], [1], [0, 0, 1, 1], [], []>} : vector<16x64xbf16>, vector<64x16xbf16>, vector<16x16xf32> -> vector<16x16xf32>
    %137 = arith.truncf %136 : vector<16x16xf32> to vector<16x16xbf16>
    %c5_114 = arith.constant 5 : index
    %c0_115 = arith.constant 0 : index
    %c0_116 = arith.constant 0 : index
    %138 = vector.load %arg13[%c5_114, %c0_115, %c0_116] : memref<9x16x64xbf16, #tpu.memory_space<vmem>>, vector<1x16x64xbf16>
    %139 = vector.shape_cast %138 : vector<1x16x64xbf16> to vector<16x64xbf16>
    %cst_117 = arith.constant dense<0.000000e+00> : vector<16x16xf32>
    %140 = tpu.matmul %139, %117, %cst_117 {dimension_numbers = #tpu.dot_dimension_numbers<[1], [0], [0], [1], [0, 0, 1, 1], [], []>} : vector<16x64xbf16>, vector<64x16xbf16>, vector<16x16xf32> -> vector<16x16xf32>
    %141 = arith.truncf %140 : vector<16x16xf32> to vector<16x16xbf16>
    %c6_118 = arith.constant 6 : index
    %c0_119 = arith.constant 0 : index
    %c0_120 = arith.constant 0 : index
    %142 = vector.load %arg13[%c6_118, %c0_119, %c0_120] : memref<9x16x64xbf16, #tpu.memory_space<vmem>>, vector<1x16x64xbf16>
    %143 = vector.shape_cast %142 : vector<1x16x64xbf16> to vector<16x64xbf16>
    %cst_121 = arith.constant dense<0.000000e+00> : vector<16x16xf32>
    %144 = tpu.matmul %143, %117, %cst_121 {dimension_numbers = #tpu.dot_dimension_numbers<[1], [0], [0], [1], [0, 0, 1, 1], [], []>} : vector<16x64xbf16>, vector<64x16xbf16>, vector<16x16xf32> -> vector<16x16xf32>
    %145 = arith.truncf %144 : vector<16x16xf32> to vector<16x16xbf16>
    %c7_122 = arith.constant 7 : index
    %c0_123 = arith.constant 0 : index
    %c0_124 = arith.constant 0 : index
    %146 = vector.load %arg13[%c7_122, %c0_123, %c0_124] : memref<9x16x64xbf16, #tpu.memory_space<vmem>>, vector<1x16x64xbf16>
    %147 = vector.shape_cast %146 : vector<1x16x64xbf16> to vector<16x64xbf16>
    %cst_125 = arith.constant dense<0.000000e+00> : vector<16x16xf32>
    %148 = tpu.matmul %147, %117, %cst_125 {dimension_numbers = #tpu.dot_dimension_numbers<[1], [0], [0], [1], [0, 0, 1, 1], [], []>} : vector<16x64xbf16>, vector<64x16xbf16>, vector<16x16xf32> -> vector<16x16xf32>
    %149 = arith.truncf %148 : vector<16x16xf32> to vector<16x16xbf16>
    %c8_126 = arith.constant 8 : index
    %c0_127 = arith.constant 0 : index
    %c0_128 = arith.constant 0 : index
    %150 = vector.load %arg13[%c8_126, %c0_127, %c0_128] : memref<9x16x64xbf16, #tpu.memory_space<vmem>>, vector<1x16x64xbf16>
    %151 = vector.shape_cast %150 : vector<1x16x64xbf16> to vector<16x64xbf16>
    %cst_129 = arith.constant dense<0.000000e+00> : vector<16x16xf32>
    %152 = tpu.matmul %151, %117, %cst_129 {dimension_numbers = #tpu.dot_dimension_numbers<[1], [0], [0], [1], [0, 0, 1, 1], [], []>} : vector<16x64xbf16>, vector<64x16xbf16>, vector<16x16xf32> -> vector<16x16xf32>
    %153 = arith.truncf %152 : vector<16x16xf32> to vector<16x16xbf16>
    %154 = tpu.concatenate %121, %125, %129, %133, %137, %141, %145, %149, %153 in 1 : vector<16x16xbf16>, vector<16x16xbf16>, vector<16x16xbf16>, vector<16x16xbf16>, vector<16x16xbf16>, vector<16x16xbf16>, vector<16x16xbf16>, vector<16x16xbf16>, vector<16x16xbf16> -> vector<16x144xbf16>
    %c0_130 = arith.constant 0 : index
    %c0_131 = arith.constant 0 : index
    %155 = vector.load %arg14[%c0_130, %c0_131] : memref<144x32xbf16, #tpu.memory_space<vmem>>, vector<144x32xbf16>
    %cst_132 = arith.constant dense<0.000000e+00> : vector<16x32xf32>
    %156 = tpu.matmul %154, %155, %cst_132 {dimension_numbers = #tpu.dot_dimension_numbers<[1], [0], [0], [1], [0, 0, 1, 1], [], []>} : vector<16x144xbf16>, vector<144x32xbf16>, vector<16x32xf32> -> vector<16x32xf32>
    %c0_133 = arith.constant 0 : index
    %c0_134 = arith.constant 0 : index
    %157 = vector.load %arg15[%c0_133, %c0_134] : memref<1x32xf32, #tpu.memory_space<vmem>>, vector<1x32xf32>
    %158 = vector.broadcast %157 : vector<1x32xf32> to vector<16x32xf32>
    %159 = arith.addf %156, %158 : vector<16x32xf32>
    %cst_135 = arith.constant 0.000000e+00 : f32
    %160 = vector.broadcast %cst_135 : f32 to vector<16x32xf32>
    %161 = arith.cmpf oge, %159, %160 : vector<16x32xf32>
    %cst_136 = arith.constant 0.00999999977 : f32
    %162 = vector.broadcast %cst_136 : f32 to vector<16x32xf32>
    %163 = arith.mulf %159, %162 : vector<16x32xf32>
    %164 = arith.select %161, %159, %163 : vector<16x32xi1>, vector<16x32xf32>
    %165 = arith.truncf %164 : vector<16x32xf32> to vector<16x32xbf16>
    %c0_137 = arith.constant 0 : index
    %c0_138 = arith.constant 0 : index
    %166 = vector.load %arg16[%c0_137, %c0_138] : memref<16x64xbf16, #tpu.memory_space<vmem>>, vector<16x64xbf16>
    %cst_139 = arith.constant dense<0.000000e+00> : vector<16x16xf32>
    %167 = tpu.matmul %166, %117, %cst_139 {dimension_numbers = #tpu.dot_dimension_numbers<[1], [0], [0], [1], [0, 0, 1, 1], [], []>} : vector<16x64xbf16>, vector<64x16xbf16>, vector<16x16xf32> -> vector<16x16xf32>
    %168 = arith.truncf %167 : vector<16x16xf32> to vector<16x16xbf16>
    %c0_140 = arith.constant 0 : index
    %c0_141 = arith.constant 0 : index
    %169 = vector.load %arg17[%c0_140, %c0_141] : memref<16x32xbf16, #tpu.memory_space<vmem>>, vector<16x32xbf16>
    %cst_142 = arith.constant dense<0.000000e+00> : vector<16x32xf32>
    %170 = tpu.matmul %168, %169, %cst_142 {dimension_numbers = #tpu.dot_dimension_numbers<[1], [0], [0], [1], [0, 0, 1, 1], [], []>} : vector<16x16xbf16>, vector<16x32xbf16>, vector<16x32xf32> -> vector<16x32xf32>
    %c0_143 = arith.constant 0 : index
    %c0_144 = arith.constant 0 : index
    %171 = vector.load %arg18[%c0_143, %c0_144] : memref<1x32xf32, #tpu.memory_space<vmem>>, vector<1x32xf32>
    %172 = vector.broadcast %171 : vector<1x32xf32> to vector<16x32xf32>
    %173 = arith.addf %170, %172 : vector<16x32xf32>
    %c0_145 = arith.constant 0 : index
    %c0_146 = arith.constant 0 : index
    %c0_147 = arith.constant 0 : index
    %174 = vector.load %arg19[%c0_145, %c0_146, %c0_147] : memref<9x16x16xbf16, #tpu.memory_space<vmem>>, vector<1x16x16xbf16>
    %175 = vector.shape_cast %174 : vector<1x16x16xbf16> to vector<16x16xbf16>
    %cst_148 = arith.constant dense<0.000000e+00> : vector<16x32xf32>
    %176 = tpu.matmul %175, %165, %cst_148 {dimension_numbers = #tpu.dot_dimension_numbers<[1], [0], [0], [1], [0, 0, 1, 1], [], []>} : vector<16x16xbf16>, vector<16x32xbf16>, vector<16x32xf32> -> vector<16x32xf32>
    %177 = arith.truncf %176 : vector<16x32xf32> to vector<16x32xbf16>
    %c1_149 = arith.constant 1 : index
    %c0_150 = arith.constant 0 : index
    %c0_151 = arith.constant 0 : index
    %178 = vector.load %arg19[%c1_149, %c0_150, %c0_151] : memref<9x16x16xbf16, #tpu.memory_space<vmem>>, vector<1x16x16xbf16>
    %179 = vector.shape_cast %178 : vector<1x16x16xbf16> to vector<16x16xbf16>
    %cst_152 = arith.constant dense<0.000000e+00> : vector<16x32xf32>
    %180 = tpu.matmul %179, %165, %cst_152 {dimension_numbers = #tpu.dot_dimension_numbers<[1], [0], [0], [1], [0, 0, 1, 1], [], []>} : vector<16x16xbf16>, vector<16x32xbf16>, vector<16x32xf32> -> vector<16x32xf32>
    %181 = arith.truncf %180 : vector<16x32xf32> to vector<16x32xbf16>
    %c2_153 = arith.constant 2 : index
    %c0_154 = arith.constant 0 : index
    %c0_155 = arith.constant 0 : index
    %182 = vector.load %arg19[%c2_153, %c0_154, %c0_155] : memref<9x16x16xbf16, #tpu.memory_space<vmem>>, vector<1x16x16xbf16>
    %183 = vector.shape_cast %182 : vector<1x16x16xbf16> to vector<16x16xbf16>
    %cst_156 = arith.constant dense<0.000000e+00> : vector<16x32xf32>
    %184 = tpu.matmul %183, %165, %cst_156 {dimension_numbers = #tpu.dot_dimension_numbers<[1], [0], [0], [1], [0, 0, 1, 1], [], []>} : vector<16x16xbf16>, vector<16x32xbf16>, vector<16x32xf32> -> vector<16x32xf32>
    %185 = arith.truncf %184 : vector<16x32xf32> to vector<16x32xbf16>
    %c3_157 = arith.constant 3 : index
    %c0_158 = arith.constant 0 : index
    %c0_159 = arith.constant 0 : index
    %186 = vector.load %arg19[%c3_157, %c0_158, %c0_159] : memref<9x16x16xbf16, #tpu.memory_space<vmem>>, vector<1x16x16xbf16>
    %187 = vector.shape_cast %186 : vector<1x16x16xbf16> to vector<16x16xbf16>
    %cst_160 = arith.constant dense<0.000000e+00> : vector<16x32xf32>
    %188 = tpu.matmul %187, %165, %cst_160 {dimension_numbers = #tpu.dot_dimension_numbers<[1], [0], [0], [1], [0, 0, 1, 1], [], []>} : vector<16x16xbf16>, vector<16x32xbf16>, vector<16x32xf32> -> vector<16x32xf32>
    %189 = arith.truncf %188 : vector<16x32xf32> to vector<16x32xbf16>
    %c4_161 = arith.constant 4 : index
    %c0_162 = arith.constant 0 : index
    %c0_163 = arith.constant 0 : index
    %190 = vector.load %arg19[%c4_161, %c0_162, %c0_163] : memref<9x16x16xbf16, #tpu.memory_space<vmem>>, vector<1x16x16xbf16>
    %191 = vector.shape_cast %190 : vector<1x16x16xbf16> to vector<16x16xbf16>
    %cst_164 = arith.constant dense<0.000000e+00> : vector<16x32xf32>
    %192 = tpu.matmul %191, %165, %cst_164 {dimension_numbers = #tpu.dot_dimension_numbers<[1], [0], [0], [1], [0, 0, 1, 1], [], []>} : vector<16x16xbf16>, vector<16x32xbf16>, vector<16x32xf32> -> vector<16x32xf32>
    %193 = arith.truncf %192 : vector<16x32xf32> to vector<16x32xbf16>
    %c5_165 = arith.constant 5 : index
    %c0_166 = arith.constant 0 : index
    %c0_167 = arith.constant 0 : index
    %194 = vector.load %arg19[%c5_165, %c0_166, %c0_167] : memref<9x16x16xbf16, #tpu.memory_space<vmem>>, vector<1x16x16xbf16>
    %195 = vector.shape_cast %194 : vector<1x16x16xbf16> to vector<16x16xbf16>
    %cst_168 = arith.constant dense<0.000000e+00> : vector<16x32xf32>
    %196 = tpu.matmul %195, %165, %cst_168 {dimension_numbers = #tpu.dot_dimension_numbers<[1], [0], [0], [1], [0, 0, 1, 1], [], []>} : vector<16x16xbf16>, vector<16x32xbf16>, vector<16x32xf32> -> vector<16x32xf32>
    %197 = arith.truncf %196 : vector<16x32xf32> to vector<16x32xbf16>
    %c6_169 = arith.constant 6 : index
    %c0_170 = arith.constant 0 : index
    %c0_171 = arith.constant 0 : index
    %198 = vector.load %arg19[%c6_169, %c0_170, %c0_171] : memref<9x16x16xbf16, #tpu.memory_space<vmem>>, vector<1x16x16xbf16>
    %199 = vector.shape_cast %198 : vector<1x16x16xbf16> to vector<16x16xbf16>
    %cst_172 = arith.constant dense<0.000000e+00> : vector<16x32xf32>
    %200 = tpu.matmul %199, %165, %cst_172 {dimension_numbers = #tpu.dot_dimension_numbers<[1], [0], [0], [1], [0, 0, 1, 1], [], []>} : vector<16x16xbf16>, vector<16x32xbf16>, vector<16x32xf32> -> vector<16x32xf32>
    %201 = arith.truncf %200 : vector<16x32xf32> to vector<16x32xbf16>
    %c7_173 = arith.constant 7 : index
    %c0_174 = arith.constant 0 : index
    %c0_175 = arith.constant 0 : index
    %202 = vector.load %arg19[%c7_173, %c0_174, %c0_175] : memref<9x16x16xbf16, #tpu.memory_space<vmem>>, vector<1x16x16xbf16>
    %203 = vector.shape_cast %202 : vector<1x16x16xbf16> to vector<16x16xbf16>
    %cst_176 = arith.constant dense<0.000000e+00> : vector<16x32xf32>
    %204 = tpu.matmul %203, %165, %cst_176 {dimension_numbers = #tpu.dot_dimension_numbers<[1], [0], [0], [1], [0, 0, 1, 1], [], []>} : vector<16x16xbf16>, vector<16x32xbf16>, vector<16x32xf32> -> vector<16x32xf32>
    %205 = arith.truncf %204 : vector<16x32xf32> to vector<16x32xbf16>
    %c8_177 = arith.constant 8 : index
    %c0_178 = arith.constant 0 : index
    %c0_179 = arith.constant 0 : index
    %206 = vector.load %arg19[%c8_177, %c0_178, %c0_179] : memref<9x16x16xbf16, #tpu.memory_space<vmem>>, vector<1x16x16xbf16>
    %207 = vector.shape_cast %206 : vector<1x16x16xbf16> to vector<16x16xbf16>
    %cst_180 = arith.constant dense<0.000000e+00> : vector<16x32xf32>
    %208 = tpu.matmul %207, %165, %cst_180 {dimension_numbers = #tpu.dot_dimension_numbers<[1], [0], [0], [1], [0, 0, 1, 1], [], []>} : vector<16x16xbf16>, vector<16x32xbf16>, vector<16x32xf32> -> vector<16x32xf32>
    %209 = arith.truncf %208 : vector<16x32xf32> to vector<16x32xbf16>
    %210 = tpu.concatenate %177, %181, %185, %189, %193, %197, %201, %205, %209 in 1 : vector<16x32xbf16>, vector<16x32xbf16>, vector<16x32xbf16>, vector<16x32xbf16>, vector<16x32xbf16>, vector<16x32xbf16>, vector<16x32xbf16>, vector<16x32xbf16>, vector<16x32xbf16> -> vector<16x288xbf16>
    %c0_181 = arith.constant 0 : index
    %c0_182 = arith.constant 0 : index
    %211 = vector.load %arg20[%c0_181, %c0_182] : memref<288x32xbf16, #tpu.memory_space<vmem>>, vector<288x32xbf16>
    %cst_183 = arith.constant dense<0.000000e+00> : vector<16x32xf32>
    %212 = tpu.matmul %210, %211, %cst_183 {dimension_numbers = #tpu.dot_dimension_numbers<[1], [0], [0], [1], [0, 0, 1, 1], [], []>} : vector<16x288xbf16>, vector<288x32xbf16>, vector<16x32xf32> -> vector<16x32xf32>
    %c0_184 = arith.constant 0 : index
    %c0_185 = arith.constant 0 : index
    %213 = vector.load %arg21[%c0_184, %c0_185] : memref<1x32xf32, #tpu.memory_space<vmem>>, vector<1x32xf32>
    %214 = vector.broadcast %213 : vector<1x32xf32> to vector<16x32xf32>
    %215 = arith.addf %212, %214 : vector<16x32xf32>
    %216 = arith.addf %215, %173 : vector<16x32xf32>
    %cst_186 = arith.constant 0.000000e+00 : f32
    %217 = vector.broadcast %cst_186 : f32 to vector<16x32xf32>
    %218 = arith.cmpf oge, %216, %217 : vector<16x32xf32>
    %cst_187 = arith.constant 0.00999999977 : f32
    %219 = vector.broadcast %cst_187 : f32 to vector<16x32xf32>
    %220 = arith.mulf %216, %219 : vector<16x32xf32>
    %221 = arith.select %218, %216, %220 : vector<16x32xi1>, vector<16x32xf32>
    %222 = arith.truncf %221 : vector<16x32xf32> to vector<16x32xbf16>
    %c0_188 = arith.constant 0 : index
    %c0_189 = arith.constant 0 : index
    %c0_190 = arith.constant 0 : index
    %223 = vector.load %arg22[%c0_188, %c0_189, %c0_190] : memref<9x4x16xbf16, #tpu.memory_space<vmem>>, vector<1x4x16xbf16>
    %224 = vector.shape_cast %223 : vector<1x4x16xbf16> to vector<4x16xbf16>
    %cst_191 = arith.constant dense<0.000000e+00> : vector<4x32xf32>
    %225 = tpu.matmul %224, %222, %cst_191 {dimension_numbers = #tpu.dot_dimension_numbers<[1], [0], [0], [1], [0, 0, 1, 1], [], []>} : vector<4x16xbf16>, vector<16x32xbf16>, vector<4x32xf32> -> vector<4x32xf32>
    %226 = arith.truncf %225 : vector<4x32xf32> to vector<4x32xbf16>
    %c1_192 = arith.constant 1 : index
    %c0_193 = arith.constant 0 : index
    %c0_194 = arith.constant 0 : index
    %227 = vector.load %arg22[%c1_192, %c0_193, %c0_194] : memref<9x4x16xbf16, #tpu.memory_space<vmem>>, vector<1x4x16xbf16>
    %228 = vector.shape_cast %227 : vector<1x4x16xbf16> to vector<4x16xbf16>
    %cst_195 = arith.constant dense<0.000000e+00> : vector<4x32xf32>
    %229 = tpu.matmul %228, %222, %cst_195 {dimension_numbers = #tpu.dot_dimension_numbers<[1], [0], [0], [1], [0, 0, 1, 1], [], []>} : vector<4x16xbf16>, vector<16x32xbf16>, vector<4x32xf32> -> vector<4x32xf32>
    %230 = arith.truncf %229 : vector<4x32xf32> to vector<4x32xbf16>
    %c2_196 = arith.constant 2 : index
    %c0_197 = arith.constant 0 : index
    %c0_198 = arith.constant 0 : index
    %231 = vector.load %arg22[%c2_196, %c0_197, %c0_198] : memref<9x4x16xbf16, #tpu.memory_space<vmem>>, vector<1x4x16xbf16>
    %232 = vector.shape_cast %231 : vector<1x4x16xbf16> to vector<4x16xbf16>
    %cst_199 = arith.constant dense<0.000000e+00> : vector<4x32xf32>
    %233 = tpu.matmul %232, %222, %cst_199 {dimension_numbers = #tpu.dot_dimension_numbers<[1], [0], [0], [1], [0, 0, 1, 1], [], []>} : vector<4x16xbf16>, vector<16x32xbf16>, vector<4x32xf32> -> vector<4x32xf32>
    %234 = arith.truncf %233 : vector<4x32xf32> to vector<4x32xbf16>
    %c3_200 = arith.constant 3 : index
    %c0_201 = arith.constant 0 : index
    %c0_202 = arith.constant 0 : index
    %235 = vector.load %arg22[%c3_200, %c0_201, %c0_202] : memref<9x4x16xbf16, #tpu.memory_space<vmem>>, vector<1x4x16xbf16>
    %236 = vector.shape_cast %235 : vector<1x4x16xbf16> to vector<4x16xbf16>
    %cst_203 = arith.constant dense<0.000000e+00> : vector<4x32xf32>
    %237 = tpu.matmul %236, %222, %cst_203 {dimension_numbers = #tpu.dot_dimension_numbers<[1], [0], [0], [1], [0, 0, 1, 1], [], []>} : vector<4x16xbf16>, vector<16x32xbf16>, vector<4x32xf32> -> vector<4x32xf32>
    %238 = arith.truncf %237 : vector<4x32xf32> to vector<4x32xbf16>
    %c4_204 = arith.constant 4 : index
    %c0_205 = arith.constant 0 : index
    %c0_206 = arith.constant 0 : index
    %239 = vector.load %arg22[%c4_204, %c0_205, %c0_206] : memref<9x4x16xbf16, #tpu.memory_space<vmem>>, vector<1x4x16xbf16>
    %240 = vector.shape_cast %239 : vector<1x4x16xbf16> to vector<4x16xbf16>
    %cst_207 = arith.constant dense<0.000000e+00> : vector<4x32xf32>
    %241 = tpu.matmul %240, %222, %cst_207 {dimension_numbers = #tpu.dot_dimension_numbers<[1], [0], [0], [1], [0, 0, 1, 1], [], []>} : vector<4x16xbf16>, vector<16x32xbf16>, vector<4x32xf32> -> vector<4x32xf32>
    %242 = arith.truncf %241 : vector<4x32xf32> to vector<4x32xbf16>
    %c5_208 = arith.constant 5 : index
    %c0_209 = arith.constant 0 : index
    %c0_210 = arith.constant 0 : index
    %243 = vector.load %arg22[%c5_208, %c0_209, %c0_210] : memref<9x4x16xbf16, #tpu.memory_space<vmem>>, vector<1x4x16xbf16>
    %244 = vector.shape_cast %243 : vector<1x4x16xbf16> to vector<4x16xbf16>
    %cst_211 = arith.constant dense<0.000000e+00> : vector<4x32xf32>
    %245 = tpu.matmul %244, %222, %cst_211 {dimension_numbers = #tpu.dot_dimension_numbers<[1], [0], [0], [1], [0, 0, 1, 1], [], []>} : vector<4x16xbf16>, vector<16x32xbf16>, vector<4x32xf32> -> vector<4x32xf32>
    %246 = arith.truncf %245 : vector<4x32xf32> to vector<4x32xbf16>
    %c6_212 = arith.constant 6 : index
    %c0_213 = arith.constant 0 : index
    %c0_214 = arith.constant 0 : index
    %247 = vector.load %arg22[%c6_212, %c0_213, %c0_214] : memref<9x4x16xbf16, #tpu.memory_space<vmem>>, vector<1x4x16xbf16>
    %248 = vector.shape_cast %247 : vector<1x4x16xbf16> to vector<4x16xbf16>
    %cst_215 = arith.constant dense<0.000000e+00> : vector<4x32xf32>
    %249 = tpu.matmul %248, %222, %cst_215 {dimension_numbers = #tpu.dot_dimension_numbers<[1], [0], [0], [1], [0, 0, 1, 1], [], []>} : vector<4x16xbf16>, vector<16x32xbf16>, vector<4x32xf32> -> vector<4x32xf32>
    %250 = arith.truncf %249 : vector<4x32xf32> to vector<4x32xbf16>
    %c7_216 = arith.constant 7 : index
    %c0_217 = arith.constant 0 : index
    %c0_218 = arith.constant 0 : index
    %251 = vector.load %arg22[%c7_216, %c0_217, %c0_218] : memref<9x4x16xbf16, #tpu.memory_space<vmem>>, vector<1x4x16xbf16>
    %252 = vector.shape_cast %251 : vector<1x4x16xbf16> to vector<4x16xbf16>
    %cst_219 = arith.constant dense<0.000000e+00> : vector<4x32xf32>
    %253 = tpu.matmul %252, %222, %cst_219 {dimension_numbers = #tpu.dot_dimension_numbers<[1], [0], [0], [1], [0, 0, 1, 1], [], []>} : vector<4x16xbf16>, vector<16x32xbf16>, vector<4x32xf32> -> vector<4x32xf32>
    %254 = arith.truncf %253 : vector<4x32xf32> to vector<4x32xbf16>
    %c8_220 = arith.constant 8 : index
    %c0_221 = arith.constant 0 : index
    %c0_222 = arith.constant 0 : index
    %255 = vector.load %arg22[%c8_220, %c0_221, %c0_222] : memref<9x4x16xbf16, #tpu.memory_space<vmem>>, vector<1x4x16xbf16>
    %256 = vector.shape_cast %255 : vector<1x4x16xbf16> to vector<4x16xbf16>
    %cst_223 = arith.constant dense<0.000000e+00> : vector<4x32xf32>
    %257 = tpu.matmul %256, %222, %cst_223 {dimension_numbers = #tpu.dot_dimension_numbers<[1], [0], [0], [1], [0, 0, 1, 1], [], []>} : vector<4x16xbf16>, vector<16x32xbf16>, vector<4x32xf32> -> vector<4x32xf32>
    %258 = arith.truncf %257 : vector<4x32xf32> to vector<4x32xbf16>
    %259 = tpu.concatenate %226, %230, %234, %238, %242, %246, %250, %254, %258 in 1 : vector<4x32xbf16>, vector<4x32xbf16>, vector<4x32xbf16>, vector<4x32xbf16>, vector<4x32xbf16>, vector<4x32xbf16>, vector<4x32xbf16>, vector<4x32xbf16>, vector<4x32xbf16> -> vector<4x288xbf16>
    %c0_224 = arith.constant 0 : index
    %c0_225 = arith.constant 0 : index
    %260 = vector.load %arg23[%c0_224, %c0_225] : memref<288x64xbf16, #tpu.memory_space<vmem>>, vector<288x64xbf16>
    %cst_226 = arith.constant dense<0.000000e+00> : vector<4x64xf32>
    %261 = tpu.matmul %259, %260, %cst_226 {dimension_numbers = #tpu.dot_dimension_numbers<[1], [0], [0], [1], [0, 0, 1, 1], [], []>} : vector<4x288xbf16>, vector<288x64xbf16>, vector<4x64xf32> -> vector<4x64xf32>
    %c0_227 = arith.constant 0 : index
    %c0_228 = arith.constant 0 : index
    %262 = vector.load %arg24[%c0_227, %c0_228] : memref<1x64xf32, #tpu.memory_space<vmem>>, vector<1x64xf32>
    %263 = vector.broadcast %262 : vector<1x64xf32> to vector<4x64xf32>
    %264 = arith.addf %261, %263 : vector<4x64xf32>
    %cst_229 = arith.constant 0.000000e+00 : f32
    %265 = vector.broadcast %cst_229 : f32 to vector<4x64xf32>
    %266 = arith.cmpf oge, %264, %265 : vector<4x64xf32>
    %cst_230 = arith.constant 0.00999999977 : f32
    %267 = vector.broadcast %cst_230 : f32 to vector<4x64xf32>
    %268 = arith.mulf %264, %267 : vector<4x64xf32>
    %269 = arith.select %266, %264, %268 : vector<4x64xi1>, vector<4x64xf32>
    %270 = arith.truncf %269 : vector<4x64xf32> to vector<4x64xbf16>
    %c0_231 = arith.constant 0 : index
    %c0_232 = arith.constant 0 : index
    %271 = vector.load %arg25[%c0_231, %c0_232] : memref<4x16xbf16, #tpu.memory_space<vmem>>, vector<4x16xbf16>
    %cst_233 = arith.constant dense<0.000000e+00> : vector<4x32xf32>
    %272 = tpu.matmul %271, %222, %cst_233 {dimension_numbers = #tpu.dot_dimension_numbers<[1], [0], [0], [1], [0, 0, 1, 1], [], []>} : vector<4x16xbf16>, vector<16x32xbf16>, vector<4x32xf32> -> vector<4x32xf32>
    %273 = arith.truncf %272 : vector<4x32xf32> to vector<4x32xbf16>
    %c0_234 = arith.constant 0 : index
    %c0_235 = arith.constant 0 : index
    %274 = vector.load %arg26[%c0_234, %c0_235] : memref<32x64xbf16, #tpu.memory_space<vmem>>, vector<32x64xbf16>
    %cst_236 = arith.constant dense<0.000000e+00> : vector<4x64xf32>
    %275 = tpu.matmul %273, %274, %cst_236 {dimension_numbers = #tpu.dot_dimension_numbers<[1], [0], [0], [1], [0, 0, 1, 1], [], []>} : vector<4x32xbf16>, vector<32x64xbf16>, vector<4x64xf32> -> vector<4x64xf32>
    %c0_237 = arith.constant 0 : index
    %c0_238 = arith.constant 0 : index
    %276 = vector.load %arg27[%c0_237, %c0_238] : memref<1x64xf32, #tpu.memory_space<vmem>>, vector<1x64xf32>
    %277 = vector.broadcast %276 : vector<1x64xf32> to vector<4x64xf32>
    %278 = arith.addf %275, %277 : vector<4x64xf32>
    %c0_239 = arith.constant 0 : index
    %c0_240 = arith.constant 0 : index
    %c0_241 = arith.constant 0 : index
    %279 = vector.load %arg28[%c0_239, %c0_240, %c0_241] : memref<9x4x4xbf16, #tpu.memory_space<vmem>>, vector<1x4x4xbf16>
    %280 = vector.shape_cast %279 : vector<1x4x4xbf16> to vector<4x4xbf16>
    %cst_242 = arith.constant dense<0.000000e+00> : vector<4x64xf32>
    %281 = tpu.matmul %280, %270, %cst_242 {dimension_numbers = #tpu.dot_dimension_numbers<[1], [0], [0], [1], [0, 0, 1, 1], [], []>} : vector<4x4xbf16>, vector<4x64xbf16>, vector<4x64xf32> -> vector<4x64xf32>
    %282 = arith.truncf %281 : vector<4x64xf32> to vector<4x64xbf16>
    %c1_243 = arith.constant 1 : index
    %c0_244 = arith.constant 0 : index
    %c0_245 = arith.constant 0 : index
    %283 = vector.load %arg28[%c1_243, %c0_244, %c0_245] : memref<9x4x4xbf16, #tpu.memory_space<vmem>>, vector<1x4x4xbf16>
    %284 = vector.shape_cast %283 : vector<1x4x4xbf16> to vector<4x4xbf16>
    %cst_246 = arith.constant dense<0.000000e+00> : vector<4x64xf32>
    %285 = tpu.matmul %284, %270, %cst_246 {dimension_numbers = #tpu.dot_dimension_numbers<[1], [0], [0], [1], [0, 0, 1, 1], [], []>} : vector<4x4xbf16>, vector<4x64xbf16>, vector<4x64xf32> -> vector<4x64xf32>
    %286 = arith.truncf %285 : vector<4x64xf32> to vector<4x64xbf16>
    %c2_247 = arith.constant 2 : index
    %c0_248 = arith.constant 0 : index
    %c0_249 = arith.constant 0 : index
    %287 = vector.load %arg28[%c2_247, %c0_248, %c0_249] : memref<9x4x4xbf16, #tpu.memory_space<vmem>>, vector<1x4x4xbf16>
    %288 = vector.shape_cast %287 : vector<1x4x4xbf16> to vector<4x4xbf16>
    %cst_250 = arith.constant dense<0.000000e+00> : vector<4x64xf32>
    %289 = tpu.matmul %288, %270, %cst_250 {dimension_numbers = #tpu.dot_dimension_numbers<[1], [0], [0], [1], [0, 0, 1, 1], [], []>} : vector<4x4xbf16>, vector<4x64xbf16>, vector<4x64xf32> -> vector<4x64xf32>
    %290 = arith.truncf %289 : vector<4x64xf32> to vector<4x64xbf16>
    %c3_251 = arith.constant 3 : index
    %c0_252 = arith.constant 0 : index
    %c0_253 = arith.constant 0 : index
    %291 = vector.load %arg28[%c3_251, %c0_252, %c0_253] : memref<9x4x4xbf16, #tpu.memory_space<vmem>>, vector<1x4x4xbf16>
    %292 = vector.shape_cast %291 : vector<1x4x4xbf16> to vector<4x4xbf16>
    %cst_254 = arith.constant dense<0.000000e+00> : vector<4x64xf32>
    %293 = tpu.matmul %292, %270, %cst_254 {dimension_numbers = #tpu.dot_dimension_numbers<[1], [0], [0], [1], [0, 0, 1, 1], [], []>} : vector<4x4xbf16>, vector<4x64xbf16>, vector<4x64xf32> -> vector<4x64xf32>
    %294 = arith.truncf %293 : vector<4x64xf32> to vector<4x64xbf16>
    %c4_255 = arith.constant 4 : index
    %c0_256 = arith.constant 0 : index
    %c0_257 = arith.constant 0 : index
    %295 = vector.load %arg28[%c4_255, %c0_256, %c0_257] : memref<9x4x4xbf16, #tpu.memory_space<vmem>>, vector<1x4x4xbf16>
    %296 = vector.shape_cast %295 : vector<1x4x4xbf16> to vector<4x4xbf16>
    %cst_258 = arith.constant dense<0.000000e+00> : vector<4x64xf32>
    %297 = tpu.matmul %296, %270, %cst_258 {dimension_numbers = #tpu.dot_dimension_numbers<[1], [0], [0], [1], [0, 0, 1, 1], [], []>} : vector<4x4xbf16>, vector<4x64xbf16>, vector<4x64xf32> -> vector<4x64xf32>
    %298 = arith.truncf %297 : vector<4x64xf32> to vector<4x64xbf16>
    %c5_259 = arith.constant 5 : index
    %c0_260 = arith.constant 0 : index
    %c0_261 = arith.constant 0 : index
    %299 = vector.load %arg28[%c5_259, %c0_260, %c0_261] : memref<9x4x4xbf16, #tpu.memory_space<vmem>>, vector<1x4x4xbf16>
    %300 = vector.shape_cast %299 : vector<1x4x4xbf16> to vector<4x4xbf16>
    %cst_262 = arith.constant dense<0.000000e+00> : vector<4x64xf32>
    %301 = tpu.matmul %300, %270, %cst_262 {dimension_numbers = #tpu.dot_dimension_numbers<[1], [0], [0], [1], [0, 0, 1, 1], [], []>} : vector<4x4xbf16>, vector<4x64xbf16>, vector<4x64xf32> -> vector<4x64xf32>
    %302 = arith.truncf %301 : vector<4x64xf32> to vector<4x64xbf16>
    %c6_263 = arith.constant 6 : index
    %c0_264 = arith.constant 0 : index
    %c0_265 = arith.constant 0 : index
    %303 = vector.load %arg28[%c6_263, %c0_264, %c0_265] : memref<9x4x4xbf16, #tpu.memory_space<vmem>>, vector<1x4x4xbf16>
    %304 = vector.shape_cast %303 : vector<1x4x4xbf16> to vector<4x4xbf16>
    %cst_266 = arith.constant dense<0.000000e+00> : vector<4x64xf32>
    %305 = tpu.matmul %304, %270, %cst_266 {dimension_numbers = #tpu.dot_dimension_numbers<[1], [0], [0], [1], [0, 0, 1, 1], [], []>} : vector<4x4xbf16>, vector<4x64xbf16>, vector<4x64xf32> -> vector<4x64xf32>
    %306 = arith.truncf %305 : vector<4x64xf32> to vector<4x64xbf16>
    %c7_267 = arith.constant 7 : index
    %c0_268 = arith.constant 0 : index
    %c0_269 = arith.constant 0 : index
    %307 = vector.load %arg28[%c7_267, %c0_268, %c0_269] : memref<9x4x4xbf16, #tpu.memory_space<vmem>>, vector<1x4x4xbf16>
    %308 = vector.shape_cast %307 : vector<1x4x4xbf16> to vector<4x4xbf16>
    %cst_270 = arith.constant dense<0.000000e+00> : vector<4x64xf32>
    %309 = tpu.matmul %308, %270, %cst_270 {dimension_numbers = #tpu.dot_dimension_numbers<[1], [0], [0], [1], [0, 0, 1, 1], [], []>} : vector<4x4xbf16>, vector<4x64xbf16>, vector<4x64xf32> -> vector<4x64xf32>
    %310 = arith.truncf %309 : vector<4x64xf32> to vector<4x64xbf16>
    %c8_271 = arith.constant 8 : index
    %c0_272 = arith.constant 0 : index
    %c0_273 = arith.constant 0 : index
    %311 = vector.load %arg28[%c8_271, %c0_272, %c0_273] : memref<9x4x4xbf16, #tpu.memory_space<vmem>>, vector<1x4x4xbf16>
    %312 = vector.shape_cast %311 : vector<1x4x4xbf16> to vector<4x4xbf16>
    %cst_274 = arith.constant dense<0.000000e+00> : vector<4x64xf32>
    %313 = tpu.matmul %312, %270, %cst_274 {dimension_numbers = #tpu.dot_dimension_numbers<[1], [0], [0], [1], [0, 0, 1, 1], [], []>} : vector<4x4xbf16>, vector<4x64xbf16>, vector<4x64xf32> -> vector<4x64xf32>
    %314 = arith.truncf %313 : vector<4x64xf32> to vector<4x64xbf16>
    %315 = tpu.concatenate %282, %286, %290, %294, %298, %302, %306, %310, %314 in 1 : vector<4x64xbf16>, vector<4x64xbf16>, vector<4x64xbf16>, vector<4x64xbf16>, vector<4x64xbf16>, vector<4x64xbf16>, vector<4x64xbf16>, vector<4x64xbf16>, vector<4x64xbf16> -> vector<4x576xbf16>
    %c0_275 = arith.constant 0 : index
    %c0_276 = arith.constant 0 : index
    %316 = vector.load %arg29[%c0_275, %c0_276] : memref<576x64xbf16, #tpu.memory_space<vmem>>, vector<576x64xbf16>
    %cst_277 = arith.constant dense<0.000000e+00> : vector<4x64xf32>
    %317 = tpu.matmul %315, %316, %cst_277 {dimension_numbers = #tpu.dot_dimension_numbers<[1], [0], [0], [1], [0, 0, 1, 1], [], []>} : vector<4x576xbf16>, vector<576x64xbf16>, vector<4x64xf32> -> vector<4x64xf32>
    %c0_278 = arith.constant 0 : index
    %c0_279 = arith.constant 0 : index
    %318 = vector.load %arg30[%c0_278, %c0_279] : memref<1x64xf32, #tpu.memory_space<vmem>>, vector<1x64xf32>
    %319 = vector.broadcast %318 : vector<1x64xf32> to vector<4x64xf32>
    %320 = arith.addf %317, %319 : vector<4x64xf32>
    %321 = arith.addf %320, %278 : vector<4x64xf32>
    %cst_280 = arith.constant 0.000000e+00 : f32
    %322 = vector.broadcast %cst_280 : f32 to vector<4x64xf32>
    %323 = arith.cmpf oge, %321, %322 : vector<4x64xf32>
    %cst_281 = arith.constant 0.00999999977 : f32
    %324 = vector.broadcast %cst_281 : f32 to vector<4x64xf32>
    %325 = arith.mulf %321, %324 : vector<4x64xf32>
    %326 = arith.select %323, %321, %325 : vector<4x64xi1>, vector<4x64xf32>
    %327 = arith.truncf %326 : vector<4x64xf32> to vector<4x64xbf16>
    %c0_282 = arith.constant 0 : index
    %c0_283 = arith.constant 0 : index
    %c0_284 = arith.constant 0 : index
    %328 = vector.load %arg31[%c0_282, %c0_283, %c0_284] : memref<4x1x4xbf16, #tpu.memory_space<vmem>>, vector<1x1x4xbf16>
    %329 = vector.shape_cast %328 : vector<1x1x4xbf16> to vector<1x4xbf16>
    %cst_285 = arith.constant dense<0.000000e+00> : vector<1x64xf32>
    %330 = tpu.matmul %329, %327, %cst_285 {dimension_numbers = #tpu.dot_dimension_numbers<[1], [0], [0], [1], [0, 0, 1, 1], [], []>} : vector<1x4xbf16>, vector<4x64xbf16>, vector<1x64xf32> -> vector<1x64xf32>
    %331 = arith.truncf %330 : vector<1x64xf32> to vector<1x64xbf16>
    %c1_286 = arith.constant 1 : index
    %c0_287 = arith.constant 0 : index
    %c0_288 = arith.constant 0 : index
    %332 = vector.load %arg31[%c1_286, %c0_287, %c0_288] : memref<4x1x4xbf16, #tpu.memory_space<vmem>>, vector<1x1x4xbf16>
    %333 = vector.shape_cast %332 : vector<1x1x4xbf16> to vector<1x4xbf16>
    %cst_289 = arith.constant dense<0.000000e+00> : vector<1x64xf32>
    %334 = tpu.matmul %333, %327, %cst_289 {dimension_numbers = #tpu.dot_dimension_numbers<[1], [0], [0], [1], [0, 0, 1, 1], [], []>} : vector<1x4xbf16>, vector<4x64xbf16>, vector<1x64xf32> -> vector<1x64xf32>
    %335 = arith.truncf %334 : vector<1x64xf32> to vector<1x64xbf16>
    %c2_290 = arith.constant 2 : index
    %c0_291 = arith.constant 0 : index
    %c0_292 = arith.constant 0 : index
    %336 = vector.load %arg31[%c2_290, %c0_291, %c0_292] : memref<4x1x4xbf16, #tpu.memory_space<vmem>>, vector<1x1x4xbf16>
    %337 = vector.shape_cast %336 : vector<1x1x4xbf16> to vector<1x4xbf16>
    %cst_293 = arith.constant dense<0.000000e+00> : vector<1x64xf32>
    %338 = tpu.matmul %337, %327, %cst_293 {dimension_numbers = #tpu.dot_dimension_numbers<[1], [0], [0], [1], [0, 0, 1, 1], [], []>} : vector<1x4xbf16>, vector<4x64xbf16>, vector<1x64xf32> -> vector<1x64xf32>
    %339 = arith.truncf %338 : vector<1x64xf32> to vector<1x64xbf16>
    %c3_294 = arith.constant 3 : index
    %c0_295 = arith.constant 0 : index
    %c0_296 = arith.constant 0 : index
    %340 = vector.load %arg31[%c3_294, %c0_295, %c0_296] : memref<4x1x4xbf16, #tpu.memory_space<vmem>>, vector<1x1x4xbf16>
    %341 = vector.shape_cast %340 : vector<1x1x4xbf16> to vector<1x4xbf16>
    %cst_297 = arith.constant dense<0.000000e+00> : vector<1x64xf32>
    %342 = tpu.matmul %341, %327, %cst_297 {dimension_numbers = #tpu.dot_dimension_numbers<[1], [0], [0], [1], [0, 0, 1, 1], [], []>} : vector<1x4xbf16>, vector<4x64xbf16>, vector<1x64xf32> -> vector<1x64xf32>
    %343 = arith.truncf %342 : vector<1x64xf32> to vector<1x64xbf16>
    %344 = tpu.concatenate %331, %335, %339, %343 in 1 : vector<1x64xbf16>, vector<1x64xbf16>, vector<1x64xbf16>, vector<1x64xbf16> -> vector<1x256xbf16>
    %c0_298 = arith.constant 0 : index
    %c0_299 = arith.constant 0 : index
    %345 = vector.load %arg32[%c0_298, %c0_299] : memref<256x128xbf16, #tpu.memory_space<vmem>>, vector<256x128xbf16>
    %cst_300 = arith.constant dense<0.000000e+00> : vector<1x128xf32>
    %346 = tpu.matmul %344, %345, %cst_300 {dimension_numbers = #tpu.dot_dimension_numbers<[1], [0], [0], [1], [0, 0, 1, 1], [], []>} : vector<1x256xbf16>, vector<256x128xbf16>, vector<1x128xf32> -> vector<1x128xf32>
    %c0_301 = arith.constant 0 : index
    %c0_302 = arith.constant 0 : index
    %347 = vector.load %arg33[%c0_301, %c0_302] : memref<1x128xf32, #tpu.memory_space<vmem>>, vector<1x128xf32>
    %348 = arith.addf %346, %347 : vector<1x128xf32>
    %cst_303 = arith.constant 0.000000e+00 : f32
    %349 = vector.broadcast %cst_303 : f32 to vector<1x128xf32>
    %350 = arith.cmpf oge, %348, %349 : vector<1x128xf32>
    %cst_304 = arith.constant 0.00999999977 : f32
    %351 = vector.broadcast %cst_304 : f32 to vector<1x128xf32>
    %352 = arith.mulf %348, %351 : vector<1x128xf32>
    %353 = arith.select %350, %348, %352 : vector<1x128xi1>, vector<1x128xf32>
    %354 = arith.truncf %353 : vector<1x128xf32> to vector<1x128xbf16>
    %c0_305 = arith.constant 0 : index
    %c0_306 = arith.constant 0 : index
    %355 = vector.load %arg34[%c0_305, %c0_306] : memref<1x4xbf16, #tpu.memory_space<vmem>>, vector<1x4xbf16>
    %cst_307 = arith.constant dense<0.000000e+00> : vector<1x64xf32>
    %356 = tpu.matmul %355, %327, %cst_307 {dimension_numbers = #tpu.dot_dimension_numbers<[1], [0], [0], [1], [0, 0, 1, 1], [], []>} : vector<1x4xbf16>, vector<4x64xbf16>, vector<1x64xf32> -> vector<1x64xf32>
    %357 = arith.truncf %356 : vector<1x64xf32> to vector<1x64xbf16>
    %c0_308 = arith.constant 0 : index
    %c0_309 = arith.constant 0 : index
    %358 = vector.load %arg35[%c0_308, %c0_309] : memref<64x128xbf16, #tpu.memory_space<vmem>>, vector<64x128xbf16>
    %cst_310 = arith.constant dense<0.000000e+00> : vector<1x128xf32>
    %359 = tpu.matmul %357, %358, %cst_310 {dimension_numbers = #tpu.dot_dimension_numbers<[1], [0], [0], [1], [0, 0, 1, 1], [], []>} : vector<1x64xbf16>, vector<64x128xbf16>, vector<1x128xf32> -> vector<1x128xf32>
    %c0_311 = arith.constant 0 : index
    %c0_312 = arith.constant 0 : index
    %360 = vector.load %arg36[%c0_311, %c0_312] : memref<1x128xf32, #tpu.memory_space<vmem>>, vector<1x128xf32>
    %361 = arith.addf %359, %360 : vector<1x128xf32>
    %c0_313 = arith.constant 0 : index
    %c0_314 = arith.constant 0 : index
    %362 = vector.load %arg37[%c0_313, %c0_314] : memref<128x128xbf16, #tpu.memory_space<vmem>>, vector<128x128xbf16>
    %cst_315 = arith.constant dense<0.000000e+00> : vector<1x128xf32>
    %363 = tpu.matmul %354, %362, %cst_315 {dimension_numbers = #tpu.dot_dimension_numbers<[1], [0], [0], [1], [0, 0, 1, 1], [], []>} : vector<1x128xbf16>, vector<128x128xbf16>, vector<1x128xf32> -> vector<1x128xf32>
    %c0_316 = arith.constant 0 : index
    %c0_317 = arith.constant 0 : index
    %364 = vector.load %arg38[%c0_316, %c0_317] : memref<1x128xf32, #tpu.memory_space<vmem>>, vector<1x128xf32>
    %365 = arith.addf %363, %364 : vector<1x128xf32>
    %366 = arith.addf %365, %361 : vector<1x128xf32>
    %cst_318 = arith.constant 0.000000e+00 : f32
    %367 = vector.broadcast %cst_318 : f32 to vector<1x128xf32>
    %368 = arith.cmpf oge, %366, %367 : vector<1x128xf32>
    %cst_319 = arith.constant 0.00999999977 : f32
    %369 = vector.broadcast %cst_319 : f32 to vector<1x128xf32>
    %370 = arith.mulf %366, %369 : vector<1x128xf32>
    %371 = arith.select %368, %366, %370 : vector<1x128xi1>, vector<1x128xf32>
    %372 = arith.truncf %371 : vector<1x128xf32> to vector<1x128xbf16>
    %c0_320 = arith.constant 0 : index
    %c0_321 = arith.constant 0 : index
    %373 = vector.load %arg39[%c0_320, %c0_321] : memref<128x128xbf16, #tpu.memory_space<vmem>>, vector<128x128xbf16>
    %cst_322 = arith.constant dense<0.000000e+00> : vector<1x128xf32>
    %374 = tpu.matmul %372, %373, %cst_322 {dimension_numbers = #tpu.dot_dimension_numbers<[1], [0], [0], [1], [0, 0, 1, 1], [], []>} : vector<1x128xbf16>, vector<128x128xbf16>, vector<1x128xf32> -> vector<1x128xf32>
    %c0_323 = arith.constant 0 : index
    %c0_324 = arith.constant 0 : index
    %375 = vector.load %arg40[%c0_323, %c0_324] : memref<1x128xf32, #tpu.memory_space<vmem>>, vector<1x128xf32>
    %376 = arith.addf %374, %375 : vector<1x128xf32>
    %cst_325 = arith.constant 0.000000e+00 : f32
    %377 = vector.broadcast %cst_325 : f32 to vector<1x128xf32>
    %378 = arith.cmpf oge, %376, %377 : vector<1x128xf32>
    %cst_326 = arith.constant 0.00999999977 : f32
    %379 = vector.broadcast %cst_326 : f32 to vector<1x128xf32>
    %380 = arith.mulf %376, %379 : vector<1x128xf32>
    %381 = arith.select %378, %376, %380 : vector<1x128xi1>, vector<1x128xf32>
    %cst_327 = arith.constant dense<0.000000e+00> : vector<128xf32>
    %382 = vector.multi_reduction <add>, %381, %cst_327 [0] : vector<1x128xf32> to vector<128xf32>
    %383 = vector.shape_cast %382 : vector<128xf32> to vector<1x128xf32>
    %cst_328 = arith.constant 1.000000e+00 : f32
    %384 = vector.broadcast %cst_328 : f32 to vector<1x128xf32>
    %385 = arith.divf %383, %384 : vector<1x128xf32>
    %386 = arith.truncf %385 : vector<1x128xf32> to vector<1x128xbf16>
    %c0_329 = arith.constant 0 : index
    %c0_330 = arith.constant 0 : index
    %387 = vector.load %arg41[%c0_329, %c0_330] : memref<128x10xbf16, #tpu.memory_space<vmem>>, vector<128x10xbf16>
    %cst_331 = arith.constant dense<0.000000e+00> : vector<1x10xf32>
    %388 = tpu.matmul %386, %387, %cst_331 {dimension_numbers = #tpu.dot_dimension_numbers<[1], [0], [0], [1], [0, 0, 1, 1], [], []>} : vector<1x128xbf16>, vector<128x10xbf16>, vector<1x10xf32> -> vector<1x10xf32>
    %c0_332 = arith.constant 0 : index
    %c0_333 = arith.constant 0 : index
    %389 = vector.load %arg42[%c0_332, %c0_333] : memref<1x10xf32, #tpu.memory_space<vmem>>, vector<1x10xf32>
    %390 = arith.addf %388, %389 : vector<1x10xf32>
    %391 = vector.shape_cast %390 : vector<1x10xf32> to vector<1x1x10xf32>
    %c0_334 = arith.constant 0 : index
    %c0_335 = arith.constant 0 : index
    %c0_336 = arith.constant 0 : index
    %392 = vector.load %arg43[%c0_334, %c0_335, %c0_336] : memref<1x1x10xf32, #tpu.memory_space<vmem>>, vector<1x1x10xf32>
    tpu.vector_store %arg43[%c0_334, %c0_335, %c0_336], %391 {strides = array<i32>} : memref<1x1x10xf32, #tpu.memory_space<vmem>>, vector<1x1x10xf32>,
    return
  }
  func.func @transform_0(%arg0: i32) -> (i32, i32, i32) {
    %c0_i32 = arith.constant 0 : i32
    %c0_i32_0 = arith.constant 0 : i32
    %c0_i32_1 = arith.constant 0 : i32
    return %arg0, %c0_i32, %c0_i32_0 : i32, i32, i32
  }
  func.func @transform_1(%arg0: i32) -> (i32, i32) {
    %c0_i32 = arith.constant 0 : i32
    %c0_i32_0 = arith.constant 0 : i32
    %c0_i32_1 = arith.constant 0 : i32
    return %c0_i32, %c0_i32_0 : i32, i32
  }
  func.func @transform_2(%arg0: i32) -> (i32, i32) {
    %c0_i32 = arith.constant 0 : i32
    %c0_i32_0 = arith.constant 0 : i32
    %c0_i32_1 = arith.constant 0 : i32
    return %c0_i32, %c0_i32_0 : i32, i32
  }
  func.func @transform_3(%arg0: i32) -> (i32, i32, i32) {
    %c0_i32 = arith.constant 0 : i32
    %c0_i32_0 = arith.constant 0 : i32
    %c0_i32_1 = arith.constant 0 : i32
    %c0_i32_2 = arith.constant 0 : i32
    return %c0_i32, %c0_i32_0, %c0_i32_1 : i32, i32, i32
  }
  func.func @transform_4(%arg0: i32) -> (i32, i32) {
    %c0_i32 = arith.constant 0 : i32
    %c0_i32_0 = arith.constant 0 : i32
    %c0_i32_1 = arith.constant 0 : i32
    return %c0_i32, %c0_i32_0 : i32, i32
  }
  func.func @transform_5(%arg0: i32) -> (i32, i32) {
    %c0_i32 = arith.constant 0 : i32
    %c0_i32_0 = arith.constant 0 : i32
    %c0_i32_1 = arith.constant 0 : i32
    return %c0_i32, %c0_i32_0 : i32, i32
  }
  func.func @transform_6(%arg0: i32) -> (i32, i32) {
    %c0_i32 = arith.constant 0 : i32
    %c0_i32_0 = arith.constant 0 : i32
    %c0_i32_1 = arith.constant 0 : i32
    return %c0_i32, %c0_i32_0 : i32, i32
  }
  func.func @transform_7(%arg0: i32) -> (i32, i32) {
    %c0_i32 = arith.constant 0 : i32
    %c0_i32_0 = arith.constant 0 : i32
    %c0_i32_1 = arith.constant 0 : i32
    return %c0_i32, %c0_i32_0 : i32, i32
  }
  func.func @transform_8(%arg0: i32) -> (i32, i32) {
    %c0_i32 = arith.constant 0 : i32
    %c0_i32_0 = arith.constant 0 : i32
    %c0_i32_1 = arith.constant 0 : i32
    return %c0_i32, %c0_i32_0 : i32, i32
  }
  func.func @transform_9(%arg0: i32) -> (i32, i32, i32) {
    %c0_i32 = arith.constant 0 : i32
    %c0_i32_0 = arith.constant 0 : i32
    %c0_i32_1 = arith.constant 0 : i32
    %c0_i32_2 = arith.constant 0 : i32
    return %c0_i32, %c0_i32_0, %c0_i32_1 : i32, i32, i32
  }
  func.func @transform_10(%arg0: i32) -> (i32, i32) {
    %c0_i32 = arith.constant 0 : i32
    %c0_i32_0 = arith.constant 0 : i32
    %c0_i32_1 = arith.constant 0 : i32
    return %c0_i32, %c0_i32_0 : i32, i32
  }
  func.func @transform_11(%arg0: i32) -> (i32, i32) {
    %c0_i32 = arith.constant 0 : i32
    %c0_i32_0 = arith.constant 0 : i32
    %c0_i32_1 = arith.constant 0 : i32
    return %c0_i32, %c0_i32_0 : i32, i32
  }
  func.func @transform_12(%arg0: i32) -> (i32, i32, i32) {
    %c0_i32 = arith.constant 0 : i32
    %c0_i32_0 = arith.constant 0 : i32
    %c0_i32_1 = arith.constant 0 : i32
    %c0_i32_2 = arith.constant 0 : i32
    return %c0_i32, %c0_i32_0, %c0_i32_1 : i32, i32, i32
  }
  func.func @transform_13(%arg0: i32) -> (i32, i32) {
    %c0_i32 = arith.constant 0 : i32
    %c0_i32_0 = arith.constant 0 : i32
    %c0_i32_1 = arith.constant 0 : i32
    return %c0_i32, %c0_i32_0 : i32, i32
  }
  func.func @transform_14(%arg0: i32) -> (i32, i32) {
    %c0_i32 = arith.constant 0 : i32
    %c0_i32_0 = arith.constant 0 : i32
    %c0_i32_1 = arith.constant 0 : i32
    return %c0_i32, %c0_i32_0 : i32, i32
  }
  func.func @transform_15(%arg0: i32) -> (i32, i32) {
    %c0_i32 = arith.constant 0 : i32
    %c0_i32_0 = arith.constant 0 : i32
    %c0_i32_1 = arith.constant 0 : i32
    return %c0_i32, %c0_i32_0 : i32, i32
  }
  func.func @transform_16(%arg0: i32) -> (i32, i32) {
    %c0_i32 = arith.constant 0 : i32
    %c0_i32_0 = arith.constant 0 : i32
    %c0_i32_1 = arith.constant 0 : i32
    return %c0_i32, %c0_i32_0 : i32, i32
  }
  func.func @transform_17(%arg0: i32) -> (i32, i32) {
    %c0_i32 = arith.constant 0 : i32
    %c0_i32_0 = arith.constant 0 : i32
    %c0_i32_1 = arith.constant 0 : i32
    return %c0_i32, %c0_i32_0 : i32, i32
  }
  func.func @transform_18(%arg0: i32) -> (i32, i32, i32) {
    %c0_i32 = arith.constant 0 : i32
    %c0_i32_0 = arith.constant 0 : i32
    %c0_i32_1 = arith.constant 0 : i32
    %c0_i32_2 = arith.constant 0 : i32
    return %c0_i32, %c0_i32_0, %c0_i32_1 : i32, i32, i32
  }
  func.func @transform_19(%arg0: i32) -> (i32, i32) {
    %c0_i32 = arith.constant 0 : i32
    %c0_i32_0 = arith.constant 0 : i32
    %c0_i32_1 = arith.constant 0 : i32
    return %c0_i32, %c0_i32_0 : i32, i32
  }
  func.func @transform_20(%arg0: i32) -> (i32, i32) {
    %c0_i32 = arith.constant 0 : i32
    %c0_i32_0 = arith.constant 0 : i32
    %c0_i32_1 = arith.constant 0 : i32
    return %c0_i32, %c0_i32_0 : i32, i32
  }
  func.func @transform_21(%arg0: i32) -> (i32, i32, i32) {
    %c0_i32 = arith.constant 0 : i32
    %c0_i32_0 = arith.constant 0 : i32
    %c0_i32_1 = arith.constant 0 : i32
    %c0_i32_2 = arith.constant 0 : i32
    return %c0_i32, %c0_i32_0, %c0_i32_1 : i32, i32, i32
  }
  func.func @transform_22(%arg0: i32) -> (i32, i32) {
    %c0_i32 = arith.constant 0 : i32
    %c0_i32_0 = arith.constant 0 : i32
    %c0_i32_1 = arith.constant 0 : i32
    return %c0_i32, %c0_i32_0 : i32, i32
  }
  func.func @transform_23(%arg0: i32) -> (i32, i32) {
    %c0_i32 = arith.constant 0 : i32
    %c0_i32_0 = arith.constant 0 : i32
    %c0_i32_1 = arith.constant 0 : i32
    return %c0_i32, %c0_i32_0 : i32, i32
  }
  func.func @transform_24(%arg0: i32) -> (i32, i32) {
    %c0_i32 = arith.constant 0 : i32
    %c0_i32_0 = arith.constant 0 : i32
    %c0_i32_1 = arith.constant 0 : i32
    return %c0_i32, %c0_i32_0 : i32, i32
  }
  func.func @transform_25(%arg0: i32) -> (i32, i32) {
    %c0_i32 = arith.constant 0 : i32
    %c0_i32_0 = arith.constant 0 : i32
    %c0_i32_1 = arith.constant 0 : i32
    return %c0_i32, %c0_i32_0 : i32, i32
  }
  func.func @transform_26(%arg0: i32) -> (i32, i32) {
    %c0_i32 = arith.constant 0 : i32
    %c0_i32_0 = arith.constant 0 : i32
    %c0_i32_1 = arith.constant 0 : i32
    return %c0_i32, %c0_i32_0 : i32, i32
  }
  func.func @transform_27(%arg0: i32) -> (i32, i32, i32) {
    %c0_i32 = arith.constant 0 : i32
    %c0_i32_0 = arith.constant 0 : i32
    %c0_i32_1 = arith.constant 0 : i32
    %c0_i32_2 = arith.constant 0 : i32
    return %c0_i32, %c0_i32_0, %c0_i32_1 : i32, i32, i32
  }
  func.func @transform_28(%arg0: i32) -> (i32, i32) {
    %c0_i32 = arith.constant 0 : i32
    %c0_i32_0 = arith.constant 0 : i32
    %c0_i32_1 = arith.constant 0 : i32
    return %c0_i32, %c0_i32_0 : i32, i32
  }
  func.func @transform_29(%arg0: i32) -> (i32, i32) {
    %c0_i32 = arith.constant 0 : i32
    %c0_i32_0 = arith.constant 0 : i32
    %c0_i32_1 = arith.constant 0 : i32
    return %c0_i32, %c0_i32_0 : i32, i32
  }
  func.func @transform_30(%arg0: i32) -> (i32, i32, i32) {
    %c0_i32 = arith.constant 0 : i32
    %c0_i32_0 = arith.constant 0 : i32
    %c0_i32_1 = arith.constant 0 : i32
    %c0_i32_2 = arith.constant 0 : i32
    return %c0_i32, %c0_i32_0, %c0_i32_1 : i32, i32, i32
  }
  func.func @transform_31(%arg0: i32) -> (i32, i32) {
    %c0_i32 = arith.constant 0 : i32
    %c0_i32_0 = arith.constant 0 : i32
    %c0_i32_1 = arith.constant 0 : i32
    return %c0_i32, %c0_i32_0 : i32, i32
  }
  func.func @transform_32(%arg0: i32) -> (i32, i32) {
    %c0_i32 = arith.constant 0 : i32
    %c0_i32_0 = arith.constant 0 : i32
    %c0_i32_1 = arith.constant 0 : i32
    return %c0_i32, %c0_i32_0 : i32, i32
  }
  func.func @transform_33(%arg0: i32) -> (i32, i32) {
    %c0_i32 = arith.constant 0 : i32
    %c0_i32_0 = arith.constant 0 : i32
    %c0_i32_1 = arith.constant 0 : i32
    return %c0_i32, %c0_i32_0 : i32, i32
  }
  func.func @transform_34(%arg0: i32) -> (i32, i32) {
    %c0_i32 = arith.constant 0 : i32
    %c0_i32_0 = arith.constant 0 : i32
    %c0_i32_1 = arith.constant 0 : i32
    return %c0_i32, %c0_i32_0 : i32, i32
  }
  func.func @transform_35(%arg0: i32) -> (i32, i32) {
    %c0_i32 = arith.constant 0 : i32
    %c0_i32_0 = arith.constant 0 : i32
    %c0_i32_1 = arith.constant 0 : i32
    return %c0_i32, %c0_i32_0 : i32, i32
  }
  func.func @transform_36(%arg0: i32) -> (i32, i32) {
    %c0_i32 = arith.constant 0 : i32
    %c0_i32_0 = arith.constant 0 : i32
    %c0_i32_1 = arith.constant 0 : i32
    return %c0_i32, %c0_i32_0 : i32, i32
  }
  func.func @transform_37(%arg0: i32) -> (i32, i32) {
    %c0_i32 = arith.constant 0 : i32
    %c0_i32_0 = arith.constant 0 : i32
    %c0_i32_1 = arith.constant 0 : i32
    return %c0_i32, %c0_i32_0 : i32, i32
  }
  func.func @transform_38(%arg0: i32) -> (i32, i32) {
    %c0_i32 = arith.constant 0 : i32
    %c0_i32_0 = arith.constant 0 : i32
    %c0_i32_1 = arith.constant 0 : i32
    return %c0_i32, %c0_i32_0 : i32, i32
  }
  func.func @transform_39(%arg0: i32) -> (i32, i32) {
    %c0_i32 = arith.constant 0 : i32
    %c0_i32_0 = arith.constant 0 : i32
    %c0_i32_1 = arith.constant 0 : i32
    return %c0_i32, %c0_i32_0 : i32, i32
  }
  func.func @transform_40(%arg0: i32) -> (i32, i32) {
    %c0_i32 = arith.constant 0 : i32
    %c0_i32_0 = arith.constant 0 : i32
    %c0_i32_1 = arith.constant 0 : i32
    return %c0_i32, %c0_i32_0 : i32, i32
  }
  func.func @transform_41(%arg0: i32) -> (i32, i32) {
    %c0_i32 = arith.constant 0 : i32
    %c0_i32_0 = arith.constant 0 : i32
    %c0_i32_1 = arith.constant 0 : i32
    return %c0_i32, %c0_i32_0 : i32, i32
  }
  func.func @transform_42(%arg0: i32) -> (i32, i32, i32) {
    %c0_i32 = arith.constant 0 : i32
    %c0_i32_0 = arith.constant 0 : i32
    %c0_i32_1 = arith.constant 0 : i32
    return %arg0, %c0_i32, %c0_i32_0 : i32, i32, i32
  }
}

</mosaic_0001>

<llo_original>
// kernel: bnet_forward.1
$region0: #{bnet_forward.1}
  #allocation0 [shape = 'u32[]', space=smem, size = 0x4, offset = 0x4, fixed_abs, tag = 'smem constant byte address 0x4 - core index']
  #allocation1 [shape = 'u32[144,128]{1,0:T(1,128)}', space=vmem, size = 0x12000, scoped, tag = 'internal scratch']
  %s0 = inlined_call_operand.smem [shape: u32[43], index: -1, kind: input, shape index: {}]
  %s1 = sld [smem:[%s0]]
  %s2 = scalar_lea.smem %s0, 1
  %s3 = sld [smem:[%s2]]
  %s4 = scalar_lea.smem %s0, 2
  %s5 = sld [smem:[%s4]]
  %s6 = scalar_lea.smem %s0, 3
  %s7 = sld [smem:[%s6]]
  %s8 = scalar_lea.smem %s0, 4
  %s9 = sld [smem:[%s8]]
  %s10 = scalar_lea.smem %s0, 5
  %s11 = sld [smem:[%s10]]
  %s12 = scalar_lea.smem %s0, 6
  %s13 = sld [smem:[%s12]]
  %s14 = scalar_lea.smem %s0, 7
  %s15 = sld [smem:[%s14]]
  %s16 = scalar_lea.smem %s0, 8
  %s17 = sld [smem:[%s16]]
  %s18 = scalar_lea.smem %s0, 9
  %s19 = sld [smem:[%s18]]
  %s20 = scalar_lea.smem %s0, 10
  %s21 = sld [smem:[%s20]]
  %s22 = scalar_lea.smem %s0, 11
  %s23 = sld [smem:[%s22]]
  %s24 = scalar_lea.smem %s0, 12
  %s25 = sld [smem:[%s24]]
  %s26 = scalar_lea.smem %s0, 13
  %s27 = sld [smem:[%s26]]
  %s28 = scalar_lea.smem %s0, 14
  %s29 = sld [smem:[%s28]]
  %s30 = scalar_lea.smem %s0, 15
  %s31 = sld [smem:[%s30]]
  %s32 = scalar_lea.smem %s0, 16
  %s33 = sld [smem:[%s32]]
  %s34 = scalar_lea.smem %s0, 17
  %s35 = sld [smem:[%s34]]
  %s36 = scalar_lea.smem %s0, 18
  %s37 = sld [smem:[%s36]]
  %s38 = scalar_lea.smem %s0, 19
  %s39 = sld [smem:[%s38]]
  %s40 = scalar_lea.smem %s0, 20
  %s41 = sld [smem:[%s40]]
  %s42 = scalar_lea.smem %s0, 21
  %s43 = sld [smem:[%s42]]
  %s44 = scalar_lea.smem %s0, 22
  %s45 = sld [smem:[%s44]]
  %s46 = scalar_lea.smem %s0, 23
  %s47 = sld [smem:[%s46]]
  %s48 = scalar_lea.smem %s0, 24
  %s49 = sld [smem:[%s48]]
  %s50 = scalar_lea.smem %s0, 25
  %s51 = sld [smem:[%s50]]
  %s52 = scalar_lea.smem %s0, 26
  %s53 = sld [smem:[%s52]]
  %s54 = scalar_lea.smem %s0, 27
  %s55 = sld [smem:[%s54]]
  %s56 = scalar_lea.smem %s0, 28
  %s57 = sld [smem:[%s56]]
  %s58 = scalar_lea.smem %s0, 29
  %s59 = sld [smem:[%s58]]
  %s60 = scalar_lea.smem %s0, 30
  %s61 = sld [smem:[%s60]]
  %s62 = scalar_lea.smem %s0, 31
  %s63 = sld [smem:[%s62]]
  %s64 = scalar_lea.smem %s0, 32
  %s65 = sld [smem:[%s64]]
  %s66 = scalar_lea.smem %s0, 33
  %s67 = sld [smem:[%s66]]
  %s68 = scalar_lea.smem %s0, 34
  %s69 = sld [smem:[%s68]]
  %s70 = scalar_lea.smem %s0, 35
  %s71 = sld [smem:[%s70]]
  %s72 = scalar_lea.smem %s0, 36
  %s73 = sld [smem:[%s72]]
  %s74 = scalar_lea.smem %s0, 37
  %s75 = sld [smem:[%s74]]
  %s76 = scalar_lea.smem %s0, 38
  %s77 = sld [smem:[%s76]]
  %s78 = scalar_lea.smem %s0, 39
  %s79 = sld [smem:[%s78]]
  %s80 = scalar_lea.smem %s0, 40
  %s81 = sld [smem:[%s80]]
  %s82 = scalar_lea.smem %s0, 41
  %s83 = sld [smem:[%s82]]
  %s84 = scalar_lea.smem %s0, 42
  %s85 = sld [smem:[%s84]]
  %s86 = sld [smem:[#allocation0]]
  $region205: #{bnet_forward.1} parent=0
    _
  %s88 = ssub.s32 1, %s86
  %s89 = scalar_select 0, %s88, %s86
  $region1: #{bnet_forward.1} parent=0
    #allocation2 [shape = 'u8[512]{0}', space=vmem, size = 0x400, scoped, tag = 'input window, operand 41, single buffered']
    #allocation3 [shape = 's32[2]{0}', space=sflag, size = 0x8, scoped, tag = 'scoped memory for bnet_forward.1']
    #allocation4 [shape = 's32[2]{0}', space=sflag, size = 0x8, scoped, tag = 'scoped memory for bnet_forward.1']
    #allocation5 [shape = 'u8[1024]{0}', space=vmem, size = 0x400, scoped, tag = 'output window, operand 0']
    %90 = vsyncpa [#allocation3], 0
    %91 = vsyncpa [#allocation4], 0
    %s92 = scalar_lea.sflag [#allocation4], 1
    %93 = vsyncpa %s92, 0
    loop: start=0, step=1, limit=4
    $region2: #{bnet_forward.1} parent=1 // loop_pre_header
      _
    $region3: #{bnet_forward.1} parent=1 // loop_header
      %s95 = sphi 0, %s99
      %p96 = scmp.ge.s32.totalorder %s95, 4
      %s105 = sphi 0, %s107
      %s108 = sphi 0, %s105
      %s109 = sphi 0, %s108
      %s125 = sphi 0, %s109
      %s129 = sphi 0, %s129
      %s131 = sphi 0, %s129
      %s132 = sphi 0, %s131
      %s146 = sphi 0, %s132
      %s150 = sphi 0, %s150
      %s152 = sphi 0, %s150
      %s153 = sphi 0, %s152
      %s167 = sphi 0, %s153
      %s171 = sphi 0, %s171
      %s173 = sphi 0, %s171
      %s174 = sphi 0, %s173
      %s188 = sphi 0, %s174
      %s192 = sphi 0, %s192
      %s194 = sphi 0, %s192
      %s195 = sphi 0, %s194
      %s209 = sphi 0, %s195
      %s213 = sphi 0, %s213
      %s215 = sphi 0, %s213
      %s216 = sphi 0, %s215
      %s230 = sphi 0, %s216
      %s234 = sphi 0, %s234
      %s236 = sphi 0, %s234
      %s237 = sphi 0, %s236
      %s251 = sphi 0, %s237
      %s255 = sphi 0, %s255
      %s257 = sphi 0, %s255
      %s258 = sphi 0, %s257
      %s272 = sphi 0, %s258
      %s276 = sphi 0, %s276
      %s278 = sphi 0, %s276
      %s279 = sphi 0, %s278
      %s293 = sphi 0, %s279
      %s297 = sphi 0, %s297
      %s299 = sphi 0, %s297
      %s300 = sphi 0, %s299
      %s314 = sphi 0, %s300
      %s318 = sphi 0, %s318
      %s320 = sphi 0, %s318
      %s321 = sphi 0, %s320
      %s335 = sphi 0, %s321
      %s339 = sphi 0, %s339
      %s341 = sphi 0, %s339
      %s342 = sphi 0, %s341
      %s356 = sphi 0, %s342
      %s360 = sphi 0, %s360
      %s362 = sphi 0, %s360
      %s363 = sphi 0, %s362
      %s377 = sphi 0, %s363
      %s381 = sphi 0, %s381
      %s383 = sphi 0, %s381
      %s384 = sphi 0, %s383
      %s398 = sphi 0, %s384
      %s402 = sphi 0, %s402
      %s404 = sphi 0, %s402
      %s405 = sphi 0, %s404
      %s419 = sphi 0, %s405
      %s423 = sphi 0, %s423
      %s425 = sphi 0, %s423
      %s426 = sphi 0, %s425
      %s440 = sphi 0, %s426
      %s444 = sphi 0, %s444
      %s446 = sphi 0, %s444
      %s447 = sphi 0, %s446
      %s461 = sphi 0, %s447
      %s465 = sphi 0, %s465
      %s467 = sphi 0, %s465
      %s468 = sphi 0, %s467
      %s482 = sphi 0, %s468
      %s486 = sphi 0, %s486
      %s488 = sphi 0, %s486
      %s489 = sphi 0, %s488
      %s503 = sphi 0, %s489
      %s507 = sphi 0, %s507
      %s509 = sphi 0, %s507
      %s510 = sphi 0, %s509
      %s524 = sphi 0, %s510
      %s528 = sphi 0, %s528
      %s530 = sphi 0, %s528
      %s531 = sphi 0, %s530
      %s545 = sphi 0, %s531
      %s549 = sphi 0, %s549
      %s551 = sphi 0, %s549
      %s552 = sphi 0, %s551
      %s566 = sphi 0, %s552
      %s570 = sphi 0, %s570
      %s572 = sphi 0, %s570
      %s573 = sphi 0, %s572
      %s587 = sphi 0, %s573
      %s591 = sphi 0, %s591
      %s593 = sphi 0, %s591
      %s594 = sphi 0, %s593
      %s608 = sphi 0, %s594
      %s612 = sphi 0, %s612
      %s614 = sphi 0, %s612
      %s615 = sphi 0, %s614
      %s629 = sphi 0, %s615
      %s633 = sphi 0, %s633
      %s635 = sphi 0, %s633
      %s636 = sphi 0, %s635
      %s650 = sphi 0, %s636
      %s654 = sphi 0, %s654
      %s656 = sphi 0, %s654
      %s657 = sphi 0, %s656
      %s671 = sphi 0, %s657
      %s675 = sphi 0, %s675
      %s677 = sphi 0, %s675
      %s678 = sphi 0, %s677
      %s692 = sphi 0, %s678
      %s696 = sphi 0, %s696
      %s698 = sphi 0, %s696
      %s699 = sphi 0, %s698
      %s713 = sphi 0, %s699
      %s717 = sphi 0, %s717
      %s719 = sphi 0, %s717
      %s720 = sphi 0, %s719
      %s734 = sphi 0, %s720
      %s738 = sphi 0, %s738
      %s740 = sphi 0, %s738
      %s741 = sphi 0, %s740
      %s755 = sphi 0, %s741
      %s759 = sphi 0, %s759
      %s761 = sphi 0, %s759
      %s762 = sphi 0, %s761
      %s776 = sphi 0, %s762
      %s780 = sphi 0, %s780
      %s782 = sphi 0, %s780
      %s783 = sphi 0, %s782
      %s797 = sphi 0, %s783
      %s801 = sphi 0, %s801
      %s803 = sphi 0, %s801
      %s804 = sphi 0, %s803
      %s818 = sphi 0, %s804
      %s822 = sphi 0, %s822
      %s824 = sphi 0, %s822
      %s825 = sphi 0, %s824
      %s839 = sphi 0, %s825
      %s843 = sphi 0, %s843
      %s845 = sphi 0, %s843
      %s846 = sphi 0, %s845
      %s860 = sphi 0, %s846
      %s864 = sphi 0, %s864
      %s866 = sphi 0, %s864
      %s867 = sphi 0, %s866
      %s881 = sphi 0, %s867
      %s885 = sphi 0, %s885
      %s887 = sphi 0, %s885
      %s888 = sphi 0, %s887
      %s902 = sphi 0, %s888
      %s906 = sphi 0, %s906
      %s908 = sphi 0, %s906
      %s909 = sphi 0, %s908
      %s923 = sphi 0, %s909
      %s927 = sphi 0, %s927
      %s929 = sphi 0, %s927
      %s930 = sphi 0, %s929
      %s944 = sphi 0, %s930
      %s948 = sphi 0, %s948
      %s950 = sphi 0, %s948
      %s951 = sphi 0, %s950
      %s965 = sphi 0, %s951
      %s969 = sphi 0, %s969
      %s971 = sphi 0, %s969
      %s972 = sphi 0, %s971
      %s986 = sphi 0, %s972
      %s992 = sphi 0, %s994
      %s995 = sphi 0, %s992
      %s996 = sphi 0, %s995
      %s1012 = sphi 0, %s996
    $region4: #{bnet_forward.1} parent=1 // loop_header_branch
      %98 = sbr.rel (%p96) target = $region8
    $region5: #{bnet_forward.1} parent=1 // loop_body
      %s100 = ssub.s32 %s95, 1
      %s101 = ssub.s32 %s95, 2
      %s102 = sadd.s32 %s95, 1
      %s103 = ssub.s32 %s95, %s102
      %p104 = scmp.eq.s32.totalorder %s103, 0
      %s106 = sadd.s32 %s105, 1
      %s107 = scalar_select %p104, %s105, %s106
      %p110 = pneg %p104
      %p111 = scmp.eq.s32.totalorder %s95, 1
      %p112 = por %p110, %p111
      %p113 = scmp.ne.s32.totalorder %s105, %s108
      %p114 = scmp.eq.s32.totalorder %s95, 0
      %p115 = por %p113, %p114
      %p116 = scmp.ne.s32.totalorder %s105, %s108
      %p117 = scmp.eq.s32.totalorder %s100, 1
      %p118 = por %p116, %p117
      %p119 = scmp.ne.s32.totalorder %s108, %s109
      %p120 = scmp.eq.s32.totalorder %s100, 0
      %p121 = por %p119, %p120
      %p122 = scmp.ne.s32.totalorder %s108, %s109
      %p123 = scmp.eq.s32.totalorder %s101, 1
      %p124 = por %p122, %p123
      %p126 = scmp.ne.s32.totalorder %s109, %s125
      %p127 = scmp.eq.s32.totalorder %s101, 0
      %p128 = por %p126, %p127
      %s130 = sadd.s32 %s129, 1
      %p133 = scmp.eq.s32.totalorder %s95, 1
      %p134 = scmp.ne.s32.totalorder %s129, %s131
      %p135 = scmp.eq.s32.totalorder %s95, 0
      %p136 = por %p134, %p135
      %p137 = scmp.ne.s32.totalorder %s129, %s131
      %p138 = scmp.eq.s32.totalorder %s100, 1
      %p139 = por %p137, %p138
      %p140 = scmp.ne.s32.totalorder %s131, %s132
      %p141 = scmp.eq.s32.totalorder %s100, 0
      %p142 = por %p140, %p141
      %p143 = scmp.ne.s32.totalorder %s131, %s132
      %p144 = scmp.eq.s32.totalorder %s101, 1
      %p145 = por %p143, %p144
      %p147 = scmp.ne.s32.totalorder %s132, %s146
      %p148 = scmp.eq.s32.totalorder %s101, 0
      %p149 = por %p147, %p148
      %s151 = sadd.s32 %s150, 1
      %p154 = scmp.eq.s32.totalorder %s95, 1
      %p155 = scmp.ne.s32.totalorder %s150, %s152
      %p156 = scmp.eq.s32.totalorder %s95, 0
      %p157 = por %p155, %p156
      %p158 = scmp.ne.s32.totalorder %s150, %s152
      %p159 = scmp.eq.s32.totalorder %s100, 1
      %p160 = por %p158, %p159
      %p161 = scmp.ne.s32.totalorder %s152, %s153
      %p162 = scmp.eq.s32.totalorder %s100, 0
      %p163 = por %p161, %p162
      %p164 = scmp.ne.s32.totalorder %s152, %s153
      %p165 = scmp.eq.s32.totalorder %s101, 1
      %p166 = por %p164, %p165
      %p168 = scmp.ne.s32.totalorder %s153, %s167
      %p169 = scmp.eq.s32.totalorder %s101, 0
      %p170 = por %p168, %p169
      %s172 = sadd.s32 %s171, 1
      %p175 = scmp.eq.s32.totalorder %s95, 1
      %p176 = scmp.ne.s32.totalorder %s171, %s173
      %p177 = scmp.eq.s32.totalorder %s95, 0
      %p178 = por %p176, %p177
      %p179 = scmp.ne.s32.totalorder %s171, %s173
      %p180 = scmp.eq.s32.totalorder %s100, 1
      %p181 = por %p179, %p180
      %p182 = scmp.ne.s32.totalorder %s173, %s174
      %p183 = scmp.eq.s32.totalorder %s100, 0
      %p184 = por %p182, %p183
      %p185 = scmp.ne.s32.totalorder %s173, %s174
      %p186 = scmp.eq.s32.totalorder %s101, 1
      %p187 = por %p185, %p186
      %p189 = scmp.ne.s32.totalorder %s174, %s188
      %p190 = scmp.eq.s32.totalorder %s101, 0
      %p191 = por %p189, %p190
      %s193 = sadd.s32 %s192, 1
      %p196 = scmp.eq.s32.totalorder %s95, 1
      %p197 = scmp.ne.s32.totalorder %s192, %s194
      %p198 = scmp.eq.s32.totalorder %s95, 0
      %p199 = por %p197, %p198
      %p200 = scmp.ne.s32.totalorder %s192, %s194
      %p201 = scmp.eq.s32.totalorder %s100, 1
      %p202 = por %p200, %p201
      %p203 = scmp.ne.s32.totalorder %s194, %s195
      %p204 = scmp.eq.s32.totalorder %s100, 0
      %p205 = por %p203, %p204
      %p206 = scmp.ne.s32.totalorder %s194, %s195
      %p207 = scmp.eq.s32.totalorder %s101, 1
      %p208 = por %p206, %p207
      %p210 = scmp.ne.s32.totalorder %s195, %s209
      %p211 = scmp.eq.s32.totalorder %s101, 0
      %p212 = por %p210, %p211
      %s214 = sadd.s32 %s213, 1
      %p217 = scmp.eq.s32.totalorder %s95, 1
      %p218 = scmp.ne.s32.totalorder %s213, %s215
      %p219 = scmp.eq.s32.totalorder %s95, 0
      %p220 = por %p218, %p219
      %p221 = scmp.ne.s32.totalorder %s213, %s215
      %p222 = scmp.eq.s32.totalorder %s100, 1
      %p223 = por %p221, %p222
      %p224 = scmp.ne.s32.totalorder %s215, %s216
      %p225 = scmp.eq.s32.totalorder %s100, 0
      %p226 = por %p224, %p225
      %p227 = scmp.ne.s32.totalorder %s215, %s216
      %p228 = scmp.eq.s32.totalorder %s101, 1
      %p229 = por %p227, %p228
      %p231 = scmp.ne.s32.totalorder %s216, %s230
      %p232 = scmp.eq.s32.totalorder %s101, 0
      %p233 = por %p231, %p232
      %s235 = sadd.s32 %s234, 1
      %p238 = scmp.eq.s32.totalorder %s95, 1
      %p239 = scmp.ne.s32.totalorder %s234, %s236
      %p240 = scmp.eq.s32.totalorder %s95, 0
      %p241 = por %p239, %p240
      %p242 = scmp.ne.s32.totalorder %s234, %s236
      %p243 = scmp.eq.s32.totalorder %s100, 1
      %p244 = por %p242, %p243
      %p245 = scmp.ne.s32.totalorder %s236, %s237
      %p246 = scmp.eq.s32.totalorder %s100, 0
      %p247 = por %p245, %p246
      %p248 = scmp.ne.s32.totalorder %s236, %s237
      %p249 = scmp.eq.s32.totalorder %s101, 1
      %p250 = por %p248, %p249
      %p252 = scmp.ne.s32.totalorder %s237, %s251
      %p253 = scmp.eq.s32.totalorder %s101, 0
      %p254 = por %p252, %p253
      %s256 = sadd.s32 %s255, 1
      %p259 = scmp.eq.s32.totalorder %s95, 1
      %p260 = scmp.ne.s32.totalorder %s255, %s257
      %p261 = scmp.eq.s32.totalorder %s95, 0
      %p262 = por %p260, %p261
      %p263 = scmp.ne.s32.totalorder %s255, %s257
      %p264 = scmp.eq.s32.totalorder %s100, 1
      %p265 = por %p263, %p264
      %p266 = scmp.ne.s32.totalorder %s257, %s258
      %p267 = scmp.eq.s32.totalorder %s100, 0
      %p268 = por %p266, %p267
      %p269 = scmp.ne.s32.totalorder %s257, %s258
      %p270 = scmp.eq.s32.totalorder %s101, 1
      %p271 = por %p269, %p270
      %p273 = scmp.ne.s32.totalorder %s258, %s272
      %p274 = scmp.eq.s32.totalorder %s101, 0
      %p275 = por %p273, %p274
      %s277 = sadd.s32 %s276, 1
      %p280 = scmp.eq.s32.totalorder %s95, 1
      %p281 = scmp.ne.s32.totalorder %s276, %s278
      %p282 = scmp.eq.s32.totalorder %s95, 0
      %p283 = por %p281, %p282
      %p284 = scmp.ne.s32.totalorder %s276, %s278
      %p285 = scmp.eq.s32.totalorder %s100, 1
      %p286 = por %p284, %p285
      %p287 = scmp.ne.s32.totalorder %s278, %s279
      %p288 = scmp.eq.s32.totalorder %s100, 0
      %p289 = por %p287, %p288
      %p290 = scmp.ne.s32.totalorder %s278, %s279
      %p291 = scmp.eq.s32.totalorder %s101, 1
      %p292 = por %p290, %p291
      %p294 = scmp.ne.s32.totalorder %s279, %s293
      %p295 = scmp.eq.s32.totalorder %s101, 0
      %p296 = por %p294, %p295
      %s298 = sadd.s32 %s297, 1
      %p301 = scmp.eq.s32.totalorder %s95, 1
      %p302 = scmp.ne.s32.totalorder %s297, %s299
      %p303 = scmp.eq.s32.totalorder %s95, 0
      %p304 = por %p302, %p303
      %p305 = scmp.ne.s32.totalorder %s297, %s299
      %p306 = scmp.eq.s32.totalorder %s100, 1
      %p307 = por %p305, %p306
      %p308 = scmp.ne.s32.totalorder %s299, %s300
      %p309 = scmp.eq.s32.totalorder %s100, 0
      %p310 = por %p308, %p309
      %p311 = scmp.ne.s32.totalorder %s299, %s300
      %p312 = scmp.eq.s32.totalorder %s101, 1
      %p313 = por %p311, %p312
      %p315 = scmp.ne.s32.totalorder %s300, %s314
      %p316 = scmp.eq.s32.totalorder %s101, 0
      %p317 = por %p315, %p316
      %s319 = sadd.s32 %s318, 1
      %p322 = scmp.eq.s32.totalorder %s95, 1
      %p323 = scmp.ne.s32.totalorder %s318, %s320
      %p324 = scmp.eq.s32.totalorder %s95, 0
      %p325 = por %p323, %p324
      %p326 = scmp.ne.s32.totalorder %s318, %s320
      %p327 = scmp.eq.s32.totalorder %s100, 1
      %p328 = por %p326, %p327
      %p329 = scmp.ne.s32.totalorder %s320, %s321
      %p330 = scmp.eq.s32.totalorder %s100, 0
      %p331 = por %p329, %p330
      %p332 = scmp.ne.s32.totalorder %s320, %s321
      %p333 = scmp.eq.s32.totalorder %s101, 1
      %p334 = por %p332, %p333
      %p336 = scmp.ne.s32.totalorder %s321, %s335
      %p337 = scmp.eq.s32.totalorder %s101, 0
      %p338 = por %p336, %p337
      %s340 = sadd.s32 %s339, 1
      %p343 = scmp.eq.s32.totalorder %s95, 1
      %p344 = scmp.ne.s32.totalorder %s339, %s341
      %p345 = scmp.eq.s32.totalorder %s95, 0
      %p346 = por %p344, %p345
      %p347 = scmp.ne.s32.totalorder %s339, %s341
      %p348 = scmp.eq.s32.totalorder %s100, 1
      %p349 = por %p347, %p348
      %p350 = scmp.ne.s32.totalorder %s341, %s342
      %p351 = scmp.eq.s32.totalorder %s100, 0
      %p352 = por %p350, %p351
      %p353 = scmp.ne.s32.totalorder %s341, %s342
      %p354 = scmp.eq.s32.totalorder %s101, 1
      %p355 = por %p353, %p354
      %p357 = scmp.ne.s32.totalorder %s342, %s356
      %p358 = scmp.eq.s32.totalorder %s101, 0
      %p359 = por %p357, %p358
      %s361 = sadd.s32 %s360, 1
      %p364 = scmp.eq.s32.totalorder %s95, 1
      %p365 = scmp.ne.s32.totalorder %s360, %s362
      %p366 = scmp.eq.s32.totalorder %s95, 0
      %p367 = por %p365, %p366
      %p368 = scmp.ne.s32.totalorder %s360, %s362
      %p369 = scmp.eq.s32.totalorder %s100, 1
      %p370 = por %p368, %p369
      %p371 = scmp.ne.s32.totalorder %s362, %s363
      %p372 = scmp.eq.s32.totalorder %s100, 0
      %p373 = por %p371, %p372
      %p374 = scmp.ne.s32.totalorder %s362, %s363
      %p375 = scmp.eq.s32.totalorder %s101, 1
      %p376 = por %p374, %p375
      %p378 = scmp.ne.s32.totalorder %s363, %s377
      %p379 = scmp.eq.s32.totalorder %s101, 0
      %p380 = por %p378, %p379
      %s382 = sadd.s32 %s381, 1
      %p385 = scmp.eq.s32.totalorder %s95, 1
      %p386 = scmp.ne.s32.totalorder %s381, %s383
      %p387 = scmp.eq.s32.totalorder %s95, 0
      %p388 = por %p386, %p387
      %p389 = scmp.ne.s32.totalorder %s381, %s383
      %p390 = scmp.eq.s32.totalorder %s100, 1
      %p391 = por %p389, %p390
      %p392 = scmp.ne.s32.totalorder %s383, %s384
      %p393 = scmp.eq.s32.totalorder %s100, 0
      %p394 = por %p392, %p393
      %p395 = scmp.ne.s32.totalorder %s383, %s384
      %p396 = scmp.eq.s32.totalorder %s101, 1
      %p397 = por %p395, %p396
      %p399 = scmp.ne.s32.totalorder %s384, %s398
      %p400 = scmp.eq.s32.totalorder %s101, 0
      %p401 = por %p399, %p400
      %s403 = sadd.s32 %s402, 1
      %p406 = scmp.eq.s32.totalorder %s95, 1
      %p407 = scmp.ne.s32.totalorder %s402, %s404
      %p408 = scmp.eq.s32.totalorder %s95, 0
      %p409 = por %p407, %p408
      %p410 = scmp.ne.s32.totalorder %s402, %s404
      %p411 = scmp.eq.s32.totalorder %s100, 1
      %p412 = por %p410, %p411
      %p413 = scmp.ne.s32.totalorder %s404, %s405
      %p414 = scmp.eq.s32.totalorder %s100, 0
      %p415 = por %p413, %p414
      %p416 = scmp.ne.s32.totalorder %s404, %s405
      %p417 = scmp.eq.s32.totalorder %s101, 1
      %p418 = por %p416, %p417
      %p420 = scmp.ne.s32.totalorder %s405, %s419
      %p421 = scmp.eq.s32.totalorder %s101, 0
      %p422 = por %p420, %p421
      %s424 = sadd.s32 %s423, 1
      %p427 = scmp.eq.s32.totalorder %s95, 1
      %p428 = scmp.ne.s32.totalorder %s423, %s425
      %p429 = scmp.eq.s32.totalorder %s95, 0
      %p430 = por %p428, %p429
      %p431 = scmp.ne.s32.totalorder %s423, %s425
      %p432 = scmp.eq.s32.totalorder %s100, 1
      %p433 = por %p431, %p432
      %p434 = scmp.ne.s32.totalorder %s425, %s426
      %p435 = scmp.eq.s32.totalorder %s100, 0
      %p436 = por %p434, %p435
      %p437 = scmp.ne.s32.totalorder %s425, %s426
      %p438 = scmp.eq.s32.totalorder %s101, 1
      %p439 = por %p437, %p438
      %p441 = scmp.ne.s32.totalorder %s426, %s440
      %p442 = scmp.eq.s32.totalorder %s101, 0
      %p443 = por %p441, %p442
      %s445 = sadd.s32 %s444, 1
      %p448 = scmp.eq.s32.totalorder %s95, 1
      %p449 = scmp.ne.s32.totalorder %s444, %s446
      %p450 = scmp.eq.s32.totalorder %s95, 0
      %p451 = por %p449, %p450
      %p452 = scmp.ne.s32.totalorder %s444, %s446
      %p453 = scmp.eq.s32.totalorder %s100, 1
      %p454 = por %p452, %p453
      %p455 = scmp.ne.s32.totalorder %s446, %s447
      %p456 = scmp.eq.s32.totalorder %s100, 0
      %p457 = por %p455, %p456
      %p458 = scmp.ne.s32.totalorder %s446, %s447
      %p459 = scmp.eq.s32.totalorder %s101, 1
      %p460 = por %p458, %p459
      %p462 = scmp.ne.s32.totalorder %s447, %s461
      %p463 = scmp.eq.s32.totalorder %s101, 0
      %p464 = por %p462, %p463
      %s466 = sadd.s32 %s465, 1
      %p469 = scmp.eq.s32.totalorder %s95, 1
      %p470 = scmp.ne.s32.totalorder %s465, %s467
      %p471 = scmp.eq.s32.totalorder %s95, 0
      %p472 = por %p470, %p471
      %p473 = scmp.ne.s32.totalorder %s465, %s467
      %p474 = scmp.eq.s32.totalorder %s100, 1
      %p475 = por %p473, %p474
      %p476 = scmp.ne.s32.totalorder %s467, %s468
      %p477 = scmp.eq.s32.totalorder %s100, 0
      %p478 = por %p476, %p477
      %p479 = scmp.ne.s32.totalorder %s467, %s468
      %p480 = scmp.eq.s32.totalorder %s101, 1
      %p481 = por %p479, %p480
      %p483 = scmp.ne.s32.totalorder %s468, %s482
      %p484 = scmp.eq.s32.totalorder %s101, 0
      %p485 = por %p483, %p484
      %s487 = sadd.s32 %s486, 1
      %p490 = scmp.eq.s32.totalorder %s95, 1
      %p491 = scmp.ne.s32.totalorder %s486, %s488
      %p492 = scmp.eq.s32.totalorder %s95, 0
      %p493 = por %p491, %p492
      %p494 = scmp.ne.s32.totalorder %s486, %s488
      %p495 = scmp.eq.s32.totalorder %s100, 1
      %p496 = por %p494, %p495
      %p497 = scmp.ne.s32.totalorder %s488, %s489
      %p498 = scmp.eq.s32.totalorder %s100, 0
      %p499 = por %p497, %p498
      %p500 = scmp.ne.s32.totalorder %s488, %s489
      %p501 = scmp.eq.s32.totalorder %s101, 1
      %p502 = por %p500, %p501
      %p504 = scmp.ne.s32.totalorder %s489, %s503
      %p505 = scmp.eq.s32.totalorder %s101, 0
      %p506 = por %p504, %p505
      %s508 = sadd.s32 %s507, 1
      %p511 = scmp.eq.s32.totalorder %s95, 1
      %p512 = scmp.ne.s32.totalorder %s507, %s509
      %p513 = scmp.eq.s32.totalorder %s95, 0
      %p514 = por %p512, %p513
      %p515 = scmp.ne.s32.totalorder %s507, %s509
      %p516 = scmp.eq.s32.totalorder %s100, 1
      %p517 = por %p515, %p516
      %p518 = scmp.ne.s32.totalorder %s509, %s510
      %p519 = scmp.eq.s32.totalorder %s100, 0
      %p520 = por %p518, %p519
      %p521 = scmp.ne.s32.totalorder %s509, %s510
      %p522 = scmp.eq.s32.totalorder %s101, 1
      %p523 = por %p521, %p522
      %p525 = scmp.ne.s32.totalorder %s510, %s524
      %p526 = scmp.eq.s32.totalorder %s101, 0
      %p527 = por %p525, %p526
      %s529 = sadd.s32 %s528, 1
      %p532 = scmp.eq.s32.totalorder %s95, 1
      %p533 = scmp.ne.s32.totalorder %s528, %s530
      %p534 = scmp.eq.s32.totalorder %s95, 0
      %p535 = por %p533, %p534
      %p536 = scmp.ne.s32.totalorder %s528, %s530
      %p537 = scmp.eq.s32.totalorder %s100, 1
      %p538 = por %p536, %p537
      %p539 = scmp.ne.s32.totalorder %s530, %s531
      %p540 = scmp.eq.s32.totalorder %s100, 0
      %p541 = por %p539, %p540
      %p542 = scmp.ne.s32.totalorder %s530, %s531
      %p543 = scmp.eq.s32.totalorder %s101, 1
      %p544 = por %p542, %p543
      %p546 = scmp.ne.s32.totalorder %s531, %s545
      %p547 = scmp.eq.s32.totalorder %s101, 0
      %p548 = por %p546, %p547
      %s550 = sadd.s32 %s549, 1
      %p553 = scmp.eq.s32.totalorder %s95, 1
      %p554 = scmp.ne.s32.totalorder %s549, %s551
      %p555 = scmp.eq.s32.totalorder %s95, 0
      %p556 = por %p554, %p555
      %p557 = scmp.ne.s32.totalorder %s549, %s551
      %p558 = scmp.eq.s32.totalorder %s100, 1
      %p559 = por %p557, %p558
      %p560 = scmp.ne.s32.totalorder %s551, %s552
      %p561 = scmp.eq.s32.totalorder %s100, 0
      %p562 = por %p560, %p561
      %p563 = scmp.ne.s32.totalorder %s551, %s552
      %p564 = scmp.eq.s32.totalorder %s101, 1
      %p565 = por %p563, %p564
      %p567 = scmp.ne.s32.totalorder %s552, %s566
      %p568 = scmp.eq.s32.totalorder %s101, 0
      %p569 = por %p567, %p568
      %s571 = sadd.s32 %s570, 1
      %p574 = scmp.eq.s32.totalorder %s95, 1
      %p575 = scmp.ne.s32.totalorder %s570, %s572
      %p576 = scmp.eq.s32.totalorder %s95, 0
      %p577 = por %p575, %p576
      %p578 = scmp.ne.s32.totalorder %s570, %s572
      %p579 = scmp.eq.s32.totalorder %s100, 1
      %p580 = por %p578, %p579
      %p581 = scmp.ne.s32.totalorder %s572, %s573
      %p582 = scmp.eq.s32.totalorder %s100, 0
      %p583 = por %p581, %p582
      %p584 = scmp.ne.s32.totalorder %s572, %s573
      %p585 = scmp.eq.s32.totalorder %s101, 1
      %p586 = por %p584, %p585
      %p588 = scmp.ne.s32.totalorder %s573, %s587
      %p589 = scmp.eq.s32.totalorder %s101, 0
      %p590 = por %p588, %p589
      %s592 = sadd.s32 %s591, 1
      %p595 = scmp.eq.s32.totalorder %s95, 1
      %p596 = scmp.ne.s32.totalorder %s591, %s593
      %p597 = scmp.eq.s32.totalorder %s95, 0
      %p598 = por %p596, %p597
      %p599 = scmp.ne.s32.totalorder %s591, %s593
      %p600 = scmp.eq.s32.totalorder %s100, 1
      %p601 = por %p599, %p600
      %p602 = scmp.ne.s32.totalorder %s593, %s594
      %p603 = scmp.eq.s32.totalorder %s100, 0
      %p604 = por %p602, %p603
      %p605 = scmp.ne.s32.totalorder %s593, %s594
      %p606 = scmp.eq.s32.totalorder %s101, 1
      %p607 = por %p605, %p606
      %p609 = scmp.ne.s32.totalorder %s594, %s608
      %p610 = scmp.eq.s32.totalorder %s101, 0
      %p611 = por %p609, %p610
      %s613 = sadd.s32 %s612, 1
      %p616 = scmp.eq.s32.totalorder %s95, 1
      %p617 = scmp.ne.s32.totalorder %s612, %s614
      %p618 = scmp.eq.s32.totalorder %s95, 0
      %p619 = por %p617, %p618
      %p620 = scmp.ne.s32.totalorder %s612, %s614
      %p621 = scmp.eq.s32.totalorder %s100, 1
      %p622 = por %p620, %p621
      %p623 = scmp.ne.s32.totalorder %s614, %s615
      %p624 = scmp.eq.s32.totalorder %s100, 0
      %p625 = por %p623, %p624
      %p626 = scmp.ne.s32.totalorder %s614, %s615
      %p627 = scmp.eq.s32.totalorder %s101, 1
      %p628 = por %p626, %p627
      %p630 = scmp.ne.s32.totalorder %s615, %s629
      %p631 = scmp.eq.s32.totalorder %s101, 0
      %p632 = por %p630, %p631
      %s634 = sadd.s32 %s633, 1
      %p637 = scmp.eq.s32.totalorder %s95, 1
      %p638 = scmp.ne.s32.totalorder %s633, %s635
      %p639 = scmp.eq.s32.totalorder %s95, 0
      %p640 = por %p638, %p639
      %p641 = scmp.ne.s32.totalorder %s633, %s635
      %p642 = scmp.eq.s32.totalorder %s100, 1
      %p643 = por %p641, %p642
      %p644 = scmp.ne.s32.totalorder %s635, %s636
      %p645 = scmp.eq.s32.totalorder %s100, 0
      %p646 = por %p644, %p645
      %p647 = scmp.ne.s32.totalorder %s635, %s636
      %p648 = scmp.eq.s32.totalorder %s101, 1
      %p649 = por %p647, %p648
      %p651 = scmp.ne.s32.totalorder %s636, %s650
      %p652 = scmp.eq.s32.totalorder %s101, 0
      %p653 = por %p651, %p652
      %s655 = sadd.s32 %s654, 1
      %p658 = scmp.eq.s32.totalorder %s95, 1
      %p659 = scmp.ne.s32.totalorder %s654, %s656
      %p660 = scmp.eq.s32.totalorder %s95, 0
      %p661 = por %p659, %p660
      %p662 = scmp.ne.s32.totalorder %s654, %s656
      %p663 = scmp.eq.s32.totalorder %s100, 1
      %p664 = por %p662, %p663
      %p665 = scmp.ne.s32.totalorder %s656, %s657
      %p666 = scmp.eq.s32.totalorder %s100, 0
      %p667 = por %p665, %p666
      %p668 = scmp.ne.s32.totalorder %s656, %s657
      %p669 = scmp.eq.s32.totalorder %s101, 1
      %p670 = por %p668, %p669
      %p672 = scmp.ne.s32.totalorder %s657, %s671
      %p673 = scmp.eq.s32.totalorder %s101, 0
      %p674 = por %p672, %p673
      %s676 = sadd.s32 %s675, 1
      %p679 = scmp.eq.s32.totalorder %s95, 1
      %p680 = scmp.ne.s32.totalorder %s675, %s677
      %p681 = scmp.eq.s32.totalorder %s95, 0
      %p682 = por %p680, %p681
      %p683 = scmp.ne.s32.totalorder %s675, %s677
      %p684 = scmp.eq.s32.totalorder %s100, 1
      %p685 = por %p683, %p684
      %p686 = scmp.ne.s32.totalorder %s677, %s678
      %p687 = scmp.eq.s32.totalorder %s100, 0
      %p688 = por %p686, %p687
      %p689 = scmp.ne.s32.totalorder %s677, %s678
      %p690 = scmp.eq.s32.totalorder %s101, 1
      %p691 = por %p689, %p690
      %p693 = scmp.ne.s32.totalorder %s678, %s692
      %p694 = scmp.eq.s32.totalorder %s101, 0
      %p695 = por %p693, %p694
      %s697 = sadd.s32 %s696, 1
      %p700 = scmp.eq.s32.totalorder %s95, 1
      %p701 = scmp.ne.s32.totalorder %s696, %s698
      %p702 = scmp.eq.s32.totalorder %s95, 0
      %p703 = por %p701, %p702
      %p704 = scmp.ne.s32.totalorder %s696, %s698
      %p705 = scmp.eq.s32.totalorder %s100, 1
      %p706 = por %p704, %p705
      %p707 = scmp.ne.s32.totalorder %s698, %s699
      %p708 = scmp.eq.s32.totalorder %s100, 0
      %p709 = por %p707, %p708
      %p710 = scmp.ne.s32.totalorder %s698, %s699
      %p711 = scmp.eq.s32.totalorder %s101, 1
      %p712 = por %p710, %p711
      %p714 = scmp.ne.s32.totalorder %s699, %s713
      %p715 = scmp.eq.s32.totalorder %s101, 0
      %p716 = por %p714, %p715
      %s718 = sadd.s32 %s717, 1
      %p721 = scmp.eq.s32.totalorder %s95, 1
      %p722 = scmp.ne.s32.totalorder %s717, %s719
      %p723 = scmp.eq.s32.totalorder %s95, 0
      %p724 = por %p722, %p723
      %p725 = scmp.ne.s32.totalorder %s717, %s719
      %p726 = scmp.eq.s32.totalorder %s100, 1
      %p727 = por %p725, %p726
      %p728 = scmp.ne.s32.totalorder %s719, %s720
      %p729 = scmp.eq.s32.totalorder %s100, 0
      %p730 = por %p728, %p729
      %p731 = scmp.ne.s32.totalorder %s719, %s720
      %p732 = scmp.eq.s32.totalorder %s101, 1
      %p733 = por %p731, %p732
      %p735 = scmp.ne.s32.totalorder %s720, %s734
      %p736 = scmp.eq.s32.totalorder %s101, 0
      %p737 = por %p735, %p736
      %s739 = sadd.s32 %s738, 1
      %p742 = scmp.eq.s32.totalorder %s95, 1
      %p743 = scmp.ne.s32.totalorder %s738, %s740
      %p744 = scmp.eq.s32.totalorder %s95, 0
      %p745 = por %p743, %p744
      %p746 = scmp.ne.s32.totalorder %s738, %s740
      %p747 = scmp.eq.s32.totalorder %s100, 1
      %p748 = por %p746, %p747
      %p749 = scmp.ne.s32.totalorder %s740, %s741
      %p750 = scmp.eq.s32.totalorder %s100, 0
      %p751 = por %p749, %p750
      %p752 = scmp.ne.s32.totalorder %s740, %s741
      %p753 = scmp.eq.s32.totalorder %s101, 1
      %p754 = por %p752, %p753
      %p756 = scmp.ne.s32.totalorder %s741, %s755
      %p757 = scmp.eq.s32.totalorder %s101, 0
      %p758 = por %p756, %p757
      %s760 = sadd.s32 %s759, 1
      %p763 = scmp.eq.s32.totalorder %s95, 1
      %p764 = scmp.ne.s32.totalorder %s759, %s761
      %p765 = scmp.eq.s32.totalorder %s95, 0
      %p766 = por %p764, %p765
      %p767 = scmp.ne.s32.totalorder %s759, %s761
      %p768 = scmp.eq.s32.totalorder %s100, 1
      %p769 = por %p767, %p768
      %p770 = scmp.ne.s32.totalorder %s761, %s762
      %p771 = scmp.eq.s32.totalorder %s100, 0
      %p772 = por %p770, %p771
      %p773 = scmp.ne.s32.totalorder %s761, %s762
      %p774 = scmp.eq.s32.totalorder %s101, 1
      %p775 = por %p773, %p774
      %p777 = scmp.ne.s32.totalorder %s762, %s776
      %p778 = scmp.eq.s32.totalorder %s101, 0
      %p779 = por %p777, %p778
      %s781 = sadd.s32 %s780, 1
      %p784 = scmp.eq.s32.totalorder %s95, 1
      %p785 = scmp.ne.s32.totalorder %s780, %s782
      %p786 = scmp.eq.s32.totalorder %s95, 0
      %p787 = por %p785, %p786
      %p788 = scmp.ne.s32.totalorder %s780, %s782
      %p789 = scmp.eq.s32.totalorder %s100, 1
      %p790 = por %p788, %p789
      %p791 = scmp.ne.s32.totalorder %s782, %s783
      %p792 = scmp.eq.s32.totalorder %s100, 0
      %p793 = por %p791, %p792
      %p794 = scmp.ne.s32.totalorder %s782, %s783
      %p795 = scmp.eq.s32.totalorder %s101, 1
      %p796 = por %p794, %p795
      %p798 = scmp.ne.s32.totalorder %s783, %s797
      %p799 = scmp.eq.s32.totalorder %s101, 0
      %p800 = por %p798, %p799
      %s802 = sadd.s32 %s801, 1
      %p805 = scmp.eq.s32.totalorder %s95, 1
      %p806 = scmp.ne.s32.totalorder %s801, %s803
      %p807 = scmp.eq.s32.totalorder %s95, 0
      %p808 = por %p806, %p807
      %p809 = scmp.ne.s32.totalorder %s801, %s803
      %p810 = scmp.eq.s32.totalorder %s100, 1
      %p811 = por %p809, %p810
      %p812 = scmp.ne.s32.totalorder %s803, %s804
      %p813 = scmp.eq.s32.totalorder %s100, 0
      %p814 = por %p812, %p813
      %p815 = scmp.ne.s32.totalorder %s803, %s804
      %p816 = scmp.eq.s32.totalorder %s101, 1
      %p817 = por %p815, %p816
      %p819 = scmp.ne.s32.totalorder %s804, %s818
      %p820 = scmp.eq.s32.totalorder %s101, 0
      %p821 = por %p819, %p820
      %s823 = sadd.s32 %s822, 1
      %p826 = scmp.eq.s32.totalorder %s95, 1
      %p827 = scmp.ne.s32.totalorder %s822, %s824
      %p828 = scmp.eq.s32.totalorder %s95, 0
      %p829 = por %p827, %p828
      %p830 = scmp.ne.s32.totalorder %s822, %s824
      %p831 = scmp.eq.s32.totalorder %s100, 1
      %p832 = por %p830, %p831
      %p833 = scmp.ne.s32.totalorder %s824, %s825
      %p834 = scmp.eq.s32.totalorder %s100, 0
      %p835 = por %p833, %p834
      %p836 = scmp.ne.s32.totalorder %s824, %s825
      %p837 = scmp.eq.s32.totalorder %s101, 1
      %p838 = por %p836, %p837
      %p840 = scmp.ne.s32.totalorder %s825, %s839
      %p841 = scmp.eq.s32.totalorder %s101, 0
      %p842 = por %p840, %p841
      %s844 = sadd.s32 %s843, 1
      %p847 = scmp.eq.s32.totalorder %s95, 1
      %p848 = scmp.ne.s32.totalorder %s843, %s845
      %p849 = scmp.eq.s32.totalorder %s95, 0
      %p850 = por %p848, %p849
      %p851 = scmp.ne.s32.totalorder %s843, %s845
      %p852 = scmp.eq.s32.totalorder %s100, 1
      %p853 = por %p851, %p852
      %p854 = scmp.ne.s32.totalorder %s845, %s846
      %p855 = scmp.eq.s32.totalorder %s100, 0
      %p856 = por %p854, %p855
      %p857 = scmp.ne.s32.totalorder %s845, %s846
      %p858 = scmp.eq.s32.totalorder %s101, 1
      %p859 = por %p857, %p858
      %p861 = scmp.ne.s32.totalorder %s846, %s860
      %p862 = scmp.eq.s32.totalorder %s101, 0
      %p863 = por %p861, %p862
      %s865 = sadd.s32 %s864, 1
      %p868 = scmp.eq.s32.totalorder %s95, 1
      %p869 = scmp.ne.s32.totalorder %s864, %s866
      %p870 = scmp.eq.s32.totalorder %s95, 0
      %p871 = por %p869, %p870
      %p872 = scmp.ne.s32.totalorder %s864, %s866
      %p873 = scmp.eq.s32.totalorder %s100, 1
      %p874 = por %p872, %p873
      %p875 = scmp.ne.s32.totalorder %s866, %s867
      %p876 = scmp.eq.s32.totalorder %s100, 0
      %p877 = por %p875, %p876
      %p878 = scmp.ne.s32.totalorder %s866, %s867
      %p879 = scmp.eq.s32.totalorder %s101, 1
      %p880 = por %p878, %p879
      %p882 = scmp.ne.s32.totalorder %s867, %s881
      %p883 = scmp.eq.s32.totalorder %s101, 0
      %p884 = por %p882, %p883
      %s886 = sadd.s32 %s885, 1
      %p889 = scmp.eq.s32.totalorder %s95, 1
      %p890 = scmp.ne.s32.totalorder %s885, %s887
      %p891 = scmp.eq.s32.totalorder %s95, 0
      %p892 = por %p890, %p891
      %p893 = scmp.ne.s32.totalorder %s885, %s887
      %p894 = scmp.eq.s32.totalorder %s100, 1
      %p895 = por %p893, %p894
      %p896 = scmp.ne.s32.totalorder %s887, %s888
      %p897 = scmp.eq.s32.totalorder %s100, 0
      %p898 = por %p896, %p897
      %p899 = scmp.ne.s32.totalorder %s887, %s888
      %p900 = scmp.eq.s32.totalorder %s101, 1
      %p901 = por %p899, %p900
      %p903 = scmp.ne.s32.totalorder %s888, %s902
      %p904 = scmp.eq.s32.totalorder %s101, 0
      %p905 = por %p903, %p904
      %s907 = sadd.s32 %s906, 1
      %p910 = scmp.eq.s32.totalorder %s95, 1
      %p911 = scmp.ne.s32.totalorder %s906, %s908
      %p912 = scmp.eq.s32.totalorder %s95, 0
      %p913 = por %p911, %p912
      %p914 = scmp.ne.s32.totalorder %s906, %s908
      %p915 = scmp.eq.s32.totalorder %s100, 1
      %p916 = por %p914, %p915
      %p917 = scmp.ne.s32.totalorder %s908, %s909
      %p918 = scmp.eq.s32.totalorder %s100, 0
      %p919 = por %p917, %p918
      %p920 = scmp.ne.s32.totalorder %s908, %s909
      %p921 = scmp.eq.s32.totalorder %s101, 1
      %p922 = por %p920, %p921
      %p924 = scmp.ne.s32.totalorder %s909, %s923
      %p925 = scmp.eq.s32.totalorder %s101, 0
      %p926 = por %p924, %p925
      %s928 = sadd.s32 %s927, 1
      %p931 = scmp.eq.s32.totalorder %s95, 1
      %p932 = scmp.ne.s32.totalorder %s927, %s929
      %p933 = scmp.eq.s32.totalorder %s95, 0
      %p934 = por %p932, %p933
      %p935 = scmp.ne.s32.totalorder %s927, %s929
      %p936 = scmp.eq.s32.totalorder %s100, 1
      %p937 = por %p935, %p936
      %p938 = scmp.ne.s32.totalorder %s929, %s930
      %p939 = scmp.eq.s32.totalorder %s100, 0
      %p940 = por %p938, %p939
      %p941 = scmp.ne.s32.totalorder %s929, %s930
      %p942 = scmp.eq.s32.totalorder %s101, 1
      %p943 = por %p941, %p942
      %p945 = scmp.ne.s32.totalorder %s930, %s944
      %p946 = scmp.eq.s32.totalorder %s101, 0
      %p947 = por %p945, %p946
      %s949 = sadd.s32 %s948, 1
      %p952 = scmp.eq.s32.totalorder %s95, 1
      %p953 = scmp.ne.s32.totalorder %s948, %s950
      %p954 = scmp.eq.s32.totalorder %s95, 0
      %p955 = por %p953, %p954
      %p956 = scmp.ne.s32.totalorder %s948, %s950
      %p957 = scmp.eq.s32.totalorder %s100, 1
      %p958 = por %p956, %p957
      %p959 = scmp.ne.s32.totalorder %s950, %s951
      %p960 = scmp.eq.s32.totalorder %s100, 0
      %p961 = por %p959, %p960
      %p962 = scmp.ne.s32.totalorder %s950, %s951
      %p963 = scmp.eq.s32.totalorder %s101, 1
      %p964 = por %p962, %p963
      %p966 = scmp.ne.s32.totalorder %s951, %s965
      %p967 = scmp.eq.s32.totalorder %s101, 0
      %p968 = por %p966, %p967
      %s970 = sadd.s32 %s969, 1
      %p973 = scmp.eq.s32.totalorder %s95, 1
      %p974 = scmp.ne.s32.totalorder %s969, %s971
      %p975 = scmp.eq.s32.totalorder %s95, 0
      %p976 = por %p974, %p975
      %p977 = scmp.ne.s32.totalorder %s969, %s971
      %p978 = scmp.eq.s32.totalorder %s100, 1
      %p979 = por %p977, %p978
      %p980 = scmp.ne.s32.totalorder %s971, %s972
      %p981 = scmp.eq.s32.totalorder %s100, 0
      %p982 = por %p980, %p981
      %p983 = scmp.ne.s32.totalorder %s971, %s972
      %p984 = scmp.eq.s32.totalorder %s101, 1
      %p985 = por %p983, %p984
      %p987 = scmp.ne.s32.totalorder %s972, %s986
      %p988 = scmp.eq.s32.totalorder %s101, 0
      %p989 = por %p987, %p988
      %s990 = ssub.s32 %s95, %s102
      %p991 = scmp.eq.s32.totalorder %s990, 0
      %s993 = sadd.s32 %s992, 1
      %s994 = scalar_select %p991, %s992, %s993
      %p997 = pneg %p991
      %p998 = scmp.eq.s32.totalorder %s95, 1
      %p999 = por %p997, %p998
      %p1000 = scmp.ne.s32.totalorder %s992, %s995
      %p1001 = scmp.eq.s32.totalorder %s95, 0
      %p1002 = por %p1000, %p1001
      %p1003 = scmp.ne.s32.totalorder %s992, %s995
      %p1004 = scmp.eq.s32.totalorder %s100, 1
      %p1005 = por %p1003, %p1004
      %p1006 = scmp.ne.s32.totalorder %s995, %s996
      %p1007 = scmp.eq.s32.totalorder %s100, 0
      %p1008 = por %p1006, %p1007
      %p1009 = scmp.ne.s32.totalorder %s995, %s996
      %p1010 = scmp.eq.s32.totalorder %s101, 1
      %p1011 = por %p1009, %p1010
      %p1013 = scmp.ne.s32.totalorder %s996, %s1012
      %p1014 = scmp.eq.s32.totalorder %s101, 0
      %p1015 = por %p1013, %p1014
      %p1016 = scmp.le.s32.totalorder 1, %s95
      %p1017 = scmp.lt.s32.totalorder %s95, 3
      %p1018 = pnand %p1016, %p1017
      %p1019 = pneg %p1018
      // Predicated region
      $region9: #{bnet_forward.1} parent=5 // pred_check
        _
      $region10: #{bnet_forward.1} parent=5 // pred_check_branch
        %1021 = sbr.rel (%p1018) target = $region12
      $region11: #{bnet_forward.1} parent=5 // pred_region
        %s1022 = ssub.s32 %s95, 1
        // Predicated region
        $region13: #{bnet_forward.1} parent=11 // pred_check
          %p1023 = pneg %p142
        $region14: #{bnet_forward.1} parent=11 // pred_check_branch
          %1025 = sbr.rel (%p1023) target = $region16
        $region15: #{bnet_forward.1} parent=11 // pred_region
          _
        $region16: #{bnet_forward.1} parent=11 // pred_fallthru
          _
        // Predicated region
        $region17: #{bnet_forward.1} parent=11 // pred_check
          %p1026 = pneg %p163
        $region18: #{bnet_forward.1} parent=11 // pred_check_branch
          %1028 = sbr.rel (%p1026) target = $region20
        $region19: #{bnet_forward.1} parent=11 // pred_region
          _
        $region20: #{bnet_forward.1} parent=11 // pred_fallthru
          _
        // Predicated region
        $region21: #{bnet_forward.1} parent=11 // pred_check
          %p1029 = pneg %p184
        $region22: #{bnet_forward.1} parent=11 // pred_check_branch
          %1031 = sbr.rel (%p1029) target = $region24
        $region23: #{bnet_forward.1} parent=11 // pred_region
          _
        $region24: #{bnet_forward.1} parent=11 // pred_fallthru
          _
        // Predicated region
        $region25: #{bnet_forward.1} parent=11 // pred_check
          %p1032 = pneg %p205
        $region26: #{bnet_forward.1} parent=11 // pred_check_branch
          %1034 = sbr.rel (%p1032) target = $region28
        $region27: #{bnet_forward.1} parent=11 // pred_region
          _
        $region28: #{bnet_forward.1} parent=11 // pred_fallthru
          _
        // Predicated region
        $region29: #{bnet_forward.1} parent=11 // pred_check
          %p1035 = pneg %p226
        $region30: #{bnet_forward.1} parent=11 // pred_check_branch
          %1037 = sbr.rel (%p1035) target = $region32
        $region31: #{bnet_forward.1} parent=11 // pred_region
          _
        $region32: #{bnet_forward.1} parent=11 // pred_fallthru
          _
        // Predicated region
        $region33: #{bnet_forward.1} parent=11 // pred_check
          %p1038 = pneg %p247
        $region34: #{bnet_forward.1} parent=11 // pred_check_branch
          %1040 = sbr.rel (%p1038) target = $region36
        $region35: #{bnet_forward.1} parent=11 // pred_region
          _
        $region36: #{bnet_forward.1} parent=11 // pred_fallthru
          _
        // Predicated region
        $region37: #{bnet_forward.1} parent=11 // pred_check
          %p1041 = pneg %p268
        $region38: #{bnet_forward.1} parent=11 // pred_check_branch
          %1043 = sbr.rel (%p1041) target = $region40
        $region39: #{bnet_forward.1} parent=11 // pred_region
          _
        $region40: #{bnet_forward.1} parent=11 // pred_fallthru
          _
        // Predicated region
        $region41: #{bnet_forward.1} parent=11 // pred_check
          %p1044 = pneg %p289
        $region42: #{bnet_forward.1} parent=11 // pred_check_branch
          %1046 = sbr.rel (%p1044) target = $region44
        $region43: #{bnet_forward.1} parent=11 // pred_region
          _
        $region44: #{bnet_forward.1} parent=11 // pred_fallthru
          _
        // Predicated region
        $region45: #{bnet_forward.1} parent=11 // pred_check
          %p1047 = pneg %p310
        $region46: #{bnet_forward.1} parent=11 // pred_check_branch
          %1049 = sbr.rel (%p1047) target = $region48
        $region47: #{bnet_forward.1} parent=11 // pred_region
          _
        $region48: #{bnet_forward.1} parent=11 // pred_fallthru
          _
        // Predicated region
        $region49: #{bnet_forward.1} parent=11 // pred_check
          %p1050 = pneg %p331
        $region50: #{bnet_forward.1} parent=11 // pred_check_branch
          %1052 = sbr.rel (%p1050) target = $region52
        $region51: #{bnet_forward.1} parent=11 // pred_region
          _
        $region52: #{bnet_forward.1} parent=11 // pred_fallthru
          _
        // Predicated region
        $region53: #{bnet_forward.1} parent=11 // pred_check
          %p1053 = pneg %p352
        $region54: #{bnet_forward.1} parent=11 // pred_check_branch
          %1055 = sbr.rel (%p1053) target = $region56
        $region55: #{bnet_forward.1} parent=11 // pred_region
          _
        $region56: #{bnet_forward.1} parent=11 // pred_fallthru
          _
        // Predicated region
        $region57: #{bnet_forward.1} parent=11 // pred_check
          %p1056 = pneg %p373
        $region58: #{bnet_forward.1} parent=11 // pred_check_branch
          %1058 = sbr.rel (%p1056) target = $region60
        $region59: #{bnet_forward.1} parent=11 // pred_region
          _
        $region60: #{bnet_forward.1} parent=11 // pred_fallthru
          _
        // Predicated region
        $region61: #{bnet_forward.1} parent=11 // pred_check
          %p1059 = pneg %p394
        $region62: #{bnet_forward.1} parent=11 // pred_check_branch
          %1061 = sbr.rel (%p1059) target = $region64
        $region63: #{bnet_forward.1} parent=11 // pred_region
          _
        $region64: #{bnet_forward.1} parent=11 // pred_fallthru
          _
        // Predicated region
        $region65: #{bnet_forward.1} parent=11 // pred_check
          %p1062 = pneg %p415
        $region66: #{bnet_forward.1} parent=11 // pred_check_branch
          %1064 = sbr.rel (%p1062) target = $region68
        $region67: #{bnet_forward.1} parent=11 // pred_region
          _
        $region68: #{bnet_forward.1} parent=11 // pred_fallthru
          _
        // Predicated region
        $region69: #{bnet_forward.1} parent=11 // pred_check
          %p1065 = pneg %p436
        $region70: #{bnet_forward.1} parent=11 // pred_check_branch
          %1067 = sbr.rel (%p1065) target = $region72
        $region71: #{bnet_forward.1} parent=11 // pred_region
          _
        $region72: #{bnet_forward.1} parent=11 // pred_fallthru
          _
        // Predicated region
        $region73: #{bnet_forward.1} parent=11 // pred_check
          %p1068 = pneg %p457
        $region74: #{bnet_forward.1} parent=11 // pred_check_branch
          %1070 = sbr.rel (%p1068) target = $region76
        $region75: #{bnet_forward.1} parent=11 // pred_region
          _
        $region76: #{bnet_forward.1} parent=11 // pred_fallthru
          _
        // Predicated region
        $region77: #{bnet_forward.1} parent=11 // pred_check
          %p1071 = pneg %p478
        $region78: #{bnet_forward.1} parent=11 // pred_check_branch
          %1073 = sbr.rel (%p1071) target = $region80
        $region79: #{bnet_forward.1} parent=11 // pred_region
          _
        $region80: #{bnet_forward.1} parent=11 // pred_fallthru
          _
        // Predicated region
        $region81: #{bnet_forward.1} parent=11 // pred_check
          %p1074 = pneg %p499
        $region82: #{bnet_forward.1} parent=11 // pred_check_branch
          %1076 = sbr.rel (%p1074) target = $region84
        $region83: #{bnet_forward.1} parent=11 // pred_region
          _
        $region84: #{bnet_forward.1} parent=11 // pred_fallthru
          _
        // Predicated region
        $region85: #{bnet_forward.1} parent=11 // pred_check
          %p1077 = pneg %p520
        $region86: #{bnet_forward.1} parent=11 // pred_check_branch
          %1079 = sbr.rel (%p1077) target = $region88
        $region87: #{bnet_forward.1} parent=11 // pred_region
          _
        $region88: #{bnet_forward.1} parent=11 // pred_fallthru
          _
        // Predicated region
        $region89: #{bnet_forward.1} parent=11 // pred_check
          %p1080 = pneg %p541
        $region90: #{bnet_forward.1} parent=11 // pred_check_branch
          %1082 = sbr.rel (%p1080) target = $region92
        $region91: #{bnet_forward.1} parent=11 // pred_region
          _
        $region92: #{bnet_forward.1} parent=11 // pred_fallthru
          _
        // Predicated region
        $region93: #{bnet_forward.1} parent=11 // pred_check
          %p1083 = pneg %p562
        $region94: #{bnet_forward.1} parent=11 // pred_check_branch
          %1085 = sbr.rel (%p1083) target = $region96
        $region95: #{bnet_forward.1} parent=11 // pred_region
          _
        $region96: #{bnet_forward.1} parent=11 // pred_fallthru
          _
        // Predicated region
        $region97: #{bnet_forward.1} parent=11 // pred_check
          %p1086 = pneg %p583
        $region98: #{bnet_forward.1} parent=11 // pred_check_branch
          %1088 = sbr.rel (%p1086) target = $region100
        $region99: #{bnet_forward.1} parent=11 // pred_region
          _
        $region100: #{bnet_forward.1} parent=11 // pred_fallthru
          _
        // Predicated region
        $region101: #{bnet_forward.1} parent=11 // pred_check
          %p1089 = pneg %p604
        $region102: #{bnet_forward.1} parent=11 // pred_check_branch
          %1091 = sbr.rel (%p1089) target = $region104
        $region103: #{bnet_forward.1} parent=11 // pred_region
          _
        $region104: #{bnet_forward.1} parent=11 // pred_fallthru
          _
        // Predicated region
        $region105: #{bnet_forward.1} parent=11 // pred_check
          %p1092 = pneg %p625
        $region106: #{bnet_forward.1} parent=11 // pred_check_branch
          %1094 = sbr.rel (%p1092) target = $region108
        $region107: #{bnet_forward.1} parent=11 // pred_region
          _
        $region108: #{bnet_forward.1} parent=11 // pred_fallthru
          _
        // Predicated region
        $region109: #{bnet_forward.1} parent=11 // pred_check
          %p1095 = pneg %p646
        $region110: #{bnet_forward.1} parent=11 // pred_check_branch
          %1097 = sbr.rel (%p1095) target = $region112
        $region111: #{bnet_forward.1} parent=11 // pred_region
          _
        $region112: #{bnet_forward.1} parent=11 // pred_fallthru
          _
        // Predicated region
        $region113: #{bnet_forward.1} parent=11 // pred_check
          %p1098 = pneg %p667
        $region114: #{bnet_forward.1} parent=11 // pred_check_branch
          %1100 = sbr.rel (%p1098) target = $region116
        $region115: #{bnet_forward.1} parent=11 // pred_region
          _
        $region116: #{bnet_forward.1} parent=11 // pred_fallthru
          _
        // Predicated region
        $region117: #{bnet_forward.1} parent=11 // pred_check
          %p1101 = pneg %p688
        $region118: #{bnet_forward.1} parent=11 // pred_check_branch
          %1103 = sbr.rel (%p1101) target = $region120
        $region119: #{bnet_forward.1} parent=11 // pred_region
          _
        $region120: #{bnet_forward.1} parent=11 // pred_fallthru
          _
        // Predicated region
        $region121: #{bnet_forward.1} parent=11 // pred_check
          %p1104 = pneg %p709
        $region122: #{bnet_forward.1} parent=11 // pred_check_branch
          %1106 = sbr.rel (%p1104) target = $region124
        $region123: #{bnet_forward.1} parent=11 // pred_region
          _
        $region124: #{bnet_forward.1} parent=11 // pred_fallthru
          _
        // Predicated region
        $region125: #{bnet_forward.1} parent=11 // pred_check
          %p1107 = pneg %p730
        $region126: #{bnet_forward.1} parent=11 // pred_check_branch
          %1109 = sbr.rel (%p1107) target = $region128
        $region127: #{bnet_forward.1} parent=11 // pred_region
          _
        $region128: #{bnet_forward.1} parent=11 // pred_fallthru
          _
        // Predicated region
        $region129: #{bnet_forward.1} parent=11 // pred_check
          %p1110 = pneg %p751
        $region130: #{bnet_forward.1} parent=11 // pred_check_branch
          %1112 = sbr.rel (%p1110) target = $region132
        $region131: #{bnet_forward.1} parent=11 // pred_region
          _
        $region132: #{bnet_forward.1} parent=11 // pred_fallthru
          _
        // Predicated region
        $region133: #{bnet_forward.1} parent=11 // pred_check
          %p1113 = pneg %p772
        $region134: #{bnet_forward.1} parent=11 // pred_check_branch
          %1115 = sbr.rel (%p1113) target = $region136
        $region135: #{bnet_forward.1} parent=11 // pred_region
          _
        $region136: #{bnet_forward.1} parent=11 // pred_fallthru
          _
        // Predicated region
        $region137: #{bnet_forward.1} parent=11 // pred_check
          %p1116 = pneg %p793
        $region138: #{bnet_forward.1} parent=11 // pred_check_branch
          %1118 = sbr.rel (%p1116) target = $region140
        $region139: #{bnet_forward.1} parent=11 // pred_region
          _
        $region140: #{bnet_forward.1} parent=11 // pred_fallthru
          _
        // Predicated region
        $region141: #{bnet_forward.1} parent=11 // pred_check
          %p1119 = pneg %p814
        $region142: #{bnet_forward.1} parent=11 // pred_check_branch
          %1121 = sbr.rel (%p1119) target = $region144
        $region143: #{bnet_forward.1} parent=11 // pred_region
          _
        $region144: #{bnet_forward.1} parent=11 // pred_fallthru
          _
        // Predicated region
        $region145: #{bnet_forward.1} parent=11 // pred_check
          %p1122 = pneg %p835
        $region146: #{bnet_forward.1} parent=11 // pred_check_branch
          %1124 = sbr.rel (%p1122) target = $region148
        $region147: #{bnet_forward.1} parent=11 // pred_region
          _
        $region148: #{bnet_forward.1} parent=11 // pred_fallthru
          _
        // Predicated region
        $region149: #{bnet_forward.1} parent=11 // pred_check
          %p1125 = pneg %p856
        $region150: #{bnet_forward.1} parent=11 // pred_check_branch
          %1127 = sbr.rel (%p1125) target = $region152
        $region151: #{bnet_forward.1} parent=11 // pred_region
          _
        $region152: #{bnet_forward.1} parent=11 // pred_fallthru
          _
        // Predicated region
        $region153: #{bnet_forward.1} parent=11 // pred_check
          %p1128 = pneg %p877
        $region154: #{bnet_forward.1} parent=11 // pred_check_branch
          %1130 = sbr.rel (%p1128) target = $region156
        $region155: #{bnet_forward.1} parent=11 // pred_region
          _
        $region156: #{bnet_forward.1} parent=11 // pred_fallthru
          _
        // Predicated region
        $region157: #{bnet_forward.1} parent=11 // pred_check
          %p1131 = pneg %p898
        $region158: #{bnet_forward.1} parent=11 // pred_check_branch
          %1133 = sbr.rel (%p1131) target = $region160
        $region159: #{bnet_forward.1} parent=11 // pred_region
          _
        $region160: #{bnet_forward.1} parent=11 // pred_fallthru
          _
        // Predicated region
        $region161: #{bnet_forward.1} parent=11 // pred_check
          %p1134 = pneg %p919
        $region162: #{bnet_forward.1} parent=11 // pred_check_branch
          %1136 = sbr.rel (%p1134) target = $region164
        $region163: #{bnet_forward.1} parent=11 // pred_region
          _
        $region164: #{bnet_forward.1} parent=11 // pred_fallthru
          _
        // Predicated region
        $region165: #{bnet_forward.1} parent=11 // pred_check
          %p1137 = pneg %p940
        $region166: #{bnet_forward.1} parent=11 // pred_check_branch
          %1139 = sbr.rel (%p1137) target = $region168
        $region167: #{bnet_forward.1} parent=11 // pred_region
          _
        $region168: #{bnet_forward.1} parent=11 // pred_fallthru
          _
        // Predicated region
        $region169: #{bnet_forward.1} parent=11 // pred_check
          %p1140 = pneg %p961
        $region170: #{bnet_forward.1} parent=11 // pred_check_branch
          %1142 = sbr.rel (%p1140) target = $region172
        $region171: #{bnet_forward.1} parent=11 // pred_region
          _
        $region172: #{bnet_forward.1} parent=11 // pred_fallthru
          _
        // Predicated region
        $region173: #{bnet_forward.1} parent=11 // pred_check
          %p1143 = pneg %p982
        $region174: #{bnet_forward.1} parent=11 // pred_check_branch
          %1145 = sbr.rel (%p1143) target = $region176
        $region175: #{bnet_forward.1} parent=11 // pred_region
          %s1147 = ssub.s32 16, 16
          %1148 = vsyncadd [#allocation3], %s1147
          %s1150 = sshll.u32 [#allocation2], 4
          %s1151 = int_to_ptr.vmem [resolvable:$true] %s1150
          %1153 = dma.hbm_to_vmem [thread:$0]  %s83, 16, %s1151, [#allocation3]
        $region176: #{bnet_forward.1} parent=11 // pred_fallthru
          _
      $region12: #{bnet_forward.1} parent=5 // pred_fallthru
        _
      %p1154 = scmp.lt.s32.totalorder %s95, 2
      // Predicated region
      $region177: #{bnet_forward.1} parent=5 // pred_check
        %p1155 = pneg %p1154
      $region178: #{bnet_forward.1} parent=5 // pred_check_branch
        %1157 = sbr.rel (%p1155) target = $region180
      $region179: #{bnet_forward.1} parent=5 // pred_region
        // Predicated region
        $region181: #{bnet_forward.1} parent=179 // pred_check
          %p1158 = pneg %p115
        $region182: #{bnet_forward.1} parent=179 // pred_check_branch
          %1160 = sbr.rel (%p1158) target = $region184
        $region183: #{bnet_forward.1} parent=179 // pred_region
          %p1161 = scmp.lt.s32.totalorder %s95, 1
          %s1162 = scalar_select %p1161, %s95, 1
          %s1163 = smul.addr %s1162, 32
          %s1164 = smul.addr %s1163, 4
          %s1165 = scalar_lea.vmem %s1, %s1164
        $region184: #{bnet_forward.1} parent=179 // pred_fallthru
          _
      $region180: #{bnet_forward.1} parent=5 // pred_fallthru
        _
      %p1166 = scmp.le.s32.totalorder 1, %s95
      %p1167 = scmp.lt.s32.totalorder %s95, 3
      %p1168 = pnand %p1166, %p1167
      %p1169 = pneg %p1168
      // Predicated region
      $region185: #{bnet_forward.1} parent=5 // pred_check
        _
      $region186: #{bnet_forward.1} parent=5 // pred_check_branch
        %1171 = sbr.rel (%p1168) target = $region188
      $region187: #{bnet_forward.1} parent=5 // pred_region
        %s1172 = ssub.s32 %s95, 1
        // Predicated region
        $region189: #{bnet_forward.1} parent=187 // pred_check
          %p1173 = pneg %p982
        $region190: #{bnet_forward.1} parent=187 // pred_check_branch
          %1175 = sbr.rel (%p1173) target = $region192
        $region191: #{bnet_forward.1} parent=187 // pred_region
          %1176 = dma.done [#allocation3], 16
        $region192: #{bnet_forward.1} parent=187 // pred_fallthru
          _
        %p1177 = scmp.lt.s32.totalorder %s100, 1
        %s1178 = scalar_select %p1177, %s100, 1
        %s1179 = smul.addr %s1178, 32
        %s1180 = smul.addr %s1179, 4
        %s1181 = scalar_lea.vmem %s1, %s1180
        %p1182 = pneg %p121
        %p1183 = pneg %p118
        %p1184 = pneg %p142
        %p1185 = pneg %p139
        %p1186 = pneg %p163
        %p1187 = pneg %p160
        %p1188 = pneg %p184
        %p1189 = pneg %p181
        %p1190 = pneg %p205
        %p1191 = pneg %p202
        %p1192 = pneg %p226
        %p1193 = pneg %p223
        %p1194 = pneg %p247
        %p1195 = pneg %p244
        %p1196 = pneg %p268
        %p1197 = pneg %p265
        %p1198 = pneg %p289
        %p1199 = pneg %p286
        %p1200 = pneg %p310
        %p1201 = pneg %p307
        %p1202 = pneg %p331
        %p1203 = pneg %p328
        %p1204 = pneg %p352
        %p1205 = pneg %p349
        %p1206 = pneg %p373
        %p1207 = pneg %p370
        %p1208 = pneg %p394
        %p1209 = pneg %p391
        %p1210 = pneg %p415
        %p1211 = pneg %p412
        %p1212 = pneg %p436
        %p1213 = pneg %p433
        %p1214 = pneg %p457
        %p1215 = pneg %p454
        %p1216 = pneg %p478
        %p1217 = pneg %p475
        %p1218 = pneg %p499
        %p1219 = pneg %p496
        %p1220 = pneg %p520
        %p1221 = pneg %p517
        %p1222 = pneg %p541
        %p1223 = pneg %p538
        %p1224 = pneg %p562
        %p1225 = pneg %p559
        %p1226 = pneg %p583
        %p1227 = pneg %p580
        %p1228 = pneg %p604
        %p1229 = pneg %p601
        %p1230 = pneg %p625
        %p1231 = pneg %p622
        %p1232 = pneg %p646
        %p1233 = pneg %p643
        %p1234 = pneg %p667
        %p1235 = pneg %p664
        %p1236 = pneg %p688
        %p1237 = pneg %p685
        %p1238 = pneg %p709
        %p1239 = pneg %p706
        %p1240 = pneg %p730
        %p1241 = pneg %p727
        %p1242 = pneg %p751
        %p1243 = pneg %p748
        %p1244 = pneg %p772
        %p1245 = pneg %p769
        %p1246 = pneg %p793
        %p1247 = pneg %p790
        %p1248 = pneg %p814
        %p1249 = pneg %p811
        %p1250 = pneg %p835
        %p1251 = pneg %p832
        %p1252 = pneg %p856
        %p1253 = pneg %p853
        %p1254 = pneg %p877
        %p1255 = pneg %p874
        %p1256 = pneg %p898
        %p1257 = pneg %p895
        %p1258 = pneg %p919
        %p1259 = pneg %p916
        %p1260 = pneg %p940
        %p1261 = pneg %p937
        %p1262 = pneg %p961
        %p1263 = pneg %p958
        %p1264 = pneg %p982
        %p1265 = pneg %p979
        %p1266 = pneg %p1008
        %p1267 = pneg %p1005
        %s1268 = sand.u32 %s995, 1
        %s1269 = scalar_lea.sflag [#allocation4], %s1268
        %s1270 = sand.u32 %s995, 1
        %s1271 = scalar_lea.vmem [#allocation5], %s1270
        %p1272 = scmp.lt.s32.totalorder %s100, 1
        %s1273 = scalar_select %p1272, %s100, 1
        %s1274 = smul.addr %s1273, 32
        %s1275 = smul.addr %s1274, 4
        %s1276 = scalar_lea.vmem %s1, %s1275
        %v1278 = vld [vmem:[%s1276] sm:$0xf]
        %v1279 = vld [vmem:[%s1276 + $0x4] sm:$0xf]
        %v1280 = vld [vmem:[%s1276 + $0x8] sm:$0xf]
        %v1281 = vld [vmem:[%s1276 + $0xc] sm:$0xf]
        %v1282 = vld [vmem:[%s1276 + $0x10] sm:$0xf]
        %v1283 = vld [vmem:[%s1276 + $0x14] sm:$0xf]
        %v1284 = vld [vmem:[%s1276 + $0x18] sm:$0xf]
        %v1285 = vld [vmem:[%s1276 + $0x1c] sm:$0xf]
        %v1286 = vld [vmem:[%s1276 + $0x20] sm:$0xf]
        %v1287 = vld [vmem:[%s1276 + $0x24] sm:$0xf]
        %v1288 = vld [vmem:[%s1276 + $0x28] sm:$0xf]
        %v1289 = vld [vmem:[%s1276 + $0x2c] sm:$0xf]
        %v1290 = vld [vmem:[%s1276 + $0x30] sm:$0xf]
        %v1291 = vld [vmem:[%s1276 + $0x34] sm:$0xf]
        %v1292 = vld [vmem:[%s1276 + $0x38] sm:$0xf]
        %v1293 = vld [vmem:[%s1276 + $0x3c] sm:$0xf]
        %v1294 = vld [vmem:[%s1276 + $0x40] sm:$0xf]
        %v1295 = vld [vmem:[%s1276 + $0x44] sm:$0xf]
        %v1296 = vld [vmem:[%s1276 + $0x48] sm:$0xf]
        %v1297 = vld [vmem:[%s1276 + $0x4c] sm:$0xf]
        %v1298 = vld [vmem:[%s1276 + $0x50] sm:$0xf]
        %v1299 = vld [vmem:[%s1276 + $0x54] sm:$0xf]
        %v1300 = vld [vmem:[%s1276 + $0x58] sm:$0xf]
        %v1301 = vld [vmem:[%s1276 + $0x5c] sm:$0xf]
        %v1302 = vld [vmem:[%s1276 + $0x60] sm:$0xf]
        %v1303 = vld [vmem:[%s1276 + $0x64] sm:$0xf]
        %v1304 = vld [vmem:[%s1276 + $0x68] sm:$0xf]
        %v1305 = vld [vmem:[%s1276 + $0x6c] sm:$0xf]
        %v1306 = vld [vmem:[%s1276 + $0x70] sm:$0xf]
        %v1307 = vld [vmem:[%s1276 + $0x74] sm:$0xf]
        %v1308 = vld [vmem:[%s1276 + $0x78] sm:$0xf]
        %v1309 = vld [vmem:[%s1276 + $0x7c] sm:$0xf]
        %v1310 = vld [vmem:[%s3] sm:$0xf]
        %v1311 = vld [vmem:[%s3 + $0x4] sm:$0xf]
        %v1312 = vld [vmem:[%s3 + $0x8] sm:$0xf]
        %v1313 = vld [vmem:[%s3 + $0xc] sm:$0x3]
        %v1314 = vld [vmem:[%s5] sm:$0x1]
        %v1316 = vlaneseq
        %v1317 = vshrl.u32 %v1316, 7
        %v1318 = vsub.s32 0, %v1317
        %v1319 = vrot.slane %v1314, %v1318
        %v1353 = vunpack.c.l.b16 %v1278
        %v1354 = vunpack.c.l.b16 %v1279
        %v1355 = vunpack.c.l.b16 %v1280
        %v1356 = vunpack.c.l.b16 %v1281
        %v1357 = vunpack.c.l.b16 %v1282
        %v1358 = vunpack.c.l.b16 %v1283
        %v1359 = vunpack.c.l.b16 %v1284
        %v1360 = vunpack.c.l.b16 %v1285
        %v1361 = vunpack.c.l.b16 %v1286
        %v1362 = vunpack.c.l.b16 %v1287
        %v1363 = vunpack.c.l.b16 %v1288
        %v1364 = vunpack.c.l.b16 %v1289
        %v1365 = vunpack.c.l.b16 %v1290
        %v1366 = vunpack.c.l.b16 %v1291
        %v1367 = vunpack.c.l.b16 %v1292
        %v1368 = vunpack.c.l.b16 %v1293
        %v1369 = vunpack.c.l.b16 %v1294
        %v1370 = vunpack.c.l.b16 %v1295
        %v1371 = vunpack.c.l.b16 %v1296
        %v1372 = vunpack.c.l.b16 %v1297
        %v1373 = vunpack.c.l.b16 %v1298
        %v1374 = vunpack.c.l.b16 %v1299
        %v1375 = vunpack.c.l.b16 %v1300
        %v1376 = vunpack.c.l.b16 %v1301
        %v1377 = vunpack.c.l.b16 %v1302
        %v1378 = vunpack.c.l.b16 %v1303
        %v1379 = vunpack.c.l.b16 %v1304
        %v1380 = vunpack.c.l.b16 %v1305
        %v1381 = vunpack.c.l.b16 %v1306
        %v1382 = vunpack.c.l.b16 %v1307
        %v1383 = vunpack.c.l.b16 %v1308
        %v1384 = vunpack.c.l.b16 %v1309
        %v1385 = vpack.c.b16 %v1354, %v1353
        %v1386 = vpack.c.b16 %v1356, %v1355
        %v1387 = vpack.c.b16 %v1358, %v1357
        %v1388 = vpack.c.b16 %v1360, %v1359
        %v1389 = vpack.c.b16 %v1362, %v1361
        %v1390 = vpack.c.b16 %v1364, %v1363
        %v1391 = vpack.c.b16 %v1366, %v1365
        %v1392 = vpack.c.b16 %v1368, %v1367
        %v1393 = vpack.c.b16 %v1370, %v1369
        %v1394 = vpack.c.b16 %v1372, %v1371
        %v1395 = vpack.c.b16 %v1374, %v1373
        %v1396 = vpack.c.b16 %v1376, %v1375
        %v1397 = vpack.c.b16 %v1378, %v1377
        %v1398 = vpack.c.b16 %v1380, %v1379
        %v1399 = vpack.c.b16 %v1382, %v1381
        %v1400 = vpack.c.b16 %v1384, %v1383
        %v1405 = vunpack.c.l.b16 %v1310
        %v1406 = vunpack.c.l.b16 %v1311
        %v1407 = vunpack.c.l.b16 %v1312
        %v1408 = vunpack.c.l.b16 %v1313
        %v1409 = vpack.c.b16 %v1406, %v1405
        %v1410 = vpack.c.b16 %v1408, %v1407
        %vm1412 = vcmask 220160
        %v1414 = vsel %vm1412, %v1385, 0
        %v1417 = vsel %vm1412, %v1386, 0
        %v1420 = vsel %vm1412, %v1387, 0
        %v1423 = vsel %vm1412, %v1388, 0
        %v1426 = vsel %vm1412, %v1389, 0
        %v1429 = vsel %vm1412, %v1390, 0
        %v1432 = vsel %vm1412, %v1391, 0
        %v1435 = vsel %vm1412, %v1392, 0
        %v1438 = vsel %vm1412, %v1393, 0
        %v1441 = vsel %vm1412, %v1394, 0
        %v1444 = vsel %vm1412, %v1395, 0
        %v1447 = vsel %vm1412, %v1396, 0
        %v1450 = vsel %vm1412, %v1397, 0
        %v1453 = vsel %vm1412, %v1398, 0
        %v1456 = vsel %vm1412, %v1399, 0
        %v1459 = vsel %vm1412, %v1400, 0
        %vm1461 = vcmask 1044480
        %vm1462 = vcmask 1045504
        %v1463 = vsel %vm1461, 4294967295, 65535
        %v1464 = vsel %vm1462, %v1463, 0
        %v1466 = vand.u32 %v1410, %v1464
        %1468 = vmatprep.subr.bf16.mxu0 0
        %1469 = vmatpush1.bf16.msra.mxu0 %v1409
        %1470 = vmatprep.subr.bf16.mxu0 0
        %1471 = vmatpush1.bf16.msra.mxu0 %v1466
        %1472 = vmatprep.subr.bf16.mxu0 0
        %1473 = vmatpush1.bf16.msra.mxu0 0
        %1474 = vmatprep.subr.bf16.mxu0 0
        %1475 = vmatpush1.bf16.msra.mxu0 0
        %1476 = vmatprep.subr.bf16.mxu0 0
        %1477 = vmatpush1.bf16.msra.mxu0 0
        %1478 = vmatprep.subr.bf16.mxu0 0
        %1479 = vmatpush1.bf16.msra.mxu0 0
        %1480 = vmatprep.subr.bf16.mxu0 0
        %1481 = vmatpush1.bf16.msra.mxu0 0
        %1482 = vmatprep.subr.bf16.mxu0 0
        %1483 = vmatpush1.bf16.msra.mxu0 0
        %1484 = vmatprep.subr.bf16.mxu0 0
        %1485 = vmatpush1.bf16.msra.mxu0 0
        %1486 = vmatprep.subr.bf16.mxu0 0
        %1487 = vmatpush1.bf16.msra.mxu0 0
        %1488 = vmatprep.subr.bf16.mxu0 0
        %1489 = vmatpush1.bf16.msra.mxu0 0
        %1490 = vmatprep.subr.bf16.mxu0 0
        %1491 = vmatpush1.bf16.msra.mxu0 0
        %1492 = vmatprep.subr.bf16.mxu0 0
        %1493 = vmatpush1.bf16.msra.mxu0 0
        %1494 = vmatprep.subr.bf16.mxu0 0
        %1495 = vmatpush1.bf16.msra.mxu0 0
        %1496 = vmatprep.subr.bf16.mxu0 0
        %1497 = vmatpush1.bf16.msra.mxu0 0
        %1498 = vmatprep.subr.bf16.mxu0 0
        %1499 = vmatpush1.bf16.msra.mxu0 0
        %1500 = vmatprep.mubr.bf16.mxu0 0
        %1501 = vmatmul.mubr.bf16.gmra.mrb[0].mxu0 %v1414
        %v1502 = vpop.f32.mrb[0].mxu0
        %v1503 = vadd.f32 %v1319, %v1502
        %v1504 = vpop.f32.mrb[0].mxu0
        %v1505 = vpop.f32.mrb[0].mxu0
        %v1506 = vadd.f32 %v1319, %v1505
        %v1507 = vpop.f32.mrb[0].mxu0
        %1508 = vmatprep.mubr.bf16.mxu0 0
        %1509 = vmatmul.mubr.bf16.gmra.mrb[0].mxu0 %v1417
        %v1510 = vpop.f32.mrb[0].mxu0
        %v1511 = vadd.f32 %v1319, %v1510
        %v1512 = vpop.f32.mrb[0].mxu0
        %v1513 = vpop.f32.mrb[0].mxu0
        %v1514 = vadd.f32 %v1319, %v1513
        %v1515 = vpop.f32.mrb[0].mxu0
        %1516 = vmatprep.mubr.bf16.mxu0 0
        %1517 = vmatmul.mubr.bf16.gmra.mrb[0].mxu0 %v1420
        %v1518 = vpop.f32.mrb[0].mxu0
        %v1519 = vadd.f32 %v1319, %v1518
        %v1520 = vpop.f32.mrb[0].mxu0
        %v1521 = vpop.f32.mrb[0].mxu0
        %v1522 = vadd.f32 %v1319, %v1521
        %v1523 = vpop.f32.mrb[0].mxu0
        %1524 = vmatprep.mubr.bf16.mxu0 0
        %1525 = vmatmul.mubr.bf16.gmra.mrb[0].mxu0 %v1423
        %v1526 = vpop.f32.mrb[0].mxu0
        %v1527 = vadd.f32 %v1319, %v1526
        %v1528 = vpop.f32.mrb[0].mxu0
        %v1529 = vpop.f32.mrb[0].mxu0
        %v1530 = vadd.f32 %v1319, %v1529
        %v1531 = vpop.f32.mrb[0].mxu0
        %1532 = vmatprep.mubr.bf16.mxu0 0
        %1533 = vmatmul.mubr.bf16.gmra.mrb[0].mxu0 %v1426
        %v1534 = vpop.f32.mrb[0].mxu0
        %v1535 = vadd.f32 %v1319, %v1534
        %v1536 = vpop.f32.mrb[0].mxu0
        %v1537 = vpop.f32.mrb[0].mxu0
        %v1538 = vadd.f32 %v1319, %v1537
        %v1539 = vpop.f32.mrb[0].mxu0
        %1540 = vmatprep.mubr.bf16.mxu0 0
        %1541 = vmatmul.mubr.bf16.gmra.mrb[0].mxu0 %v1429
        %v1542 = vpop.f32.mrb[0].mxu0
        %v1543 = vadd.f32 %v1319, %v1542
        %v1544 = vpop.f32.mrb[0].mxu0
        %v1545 = vpop.f32.mrb[0].mxu0
        %v1546 = vadd.f32 %v1319, %v1545
        %v1547 = vpop.f32.mrb[0].mxu0
        %1548 = vmatprep.mubr.bf16.mxu0 0
        %1549 = vmatmul.mubr.bf16.gmra.mrb[0].mxu0 %v1432
        %v1550 = vpop.f32.mrb[0].mxu0
        %v1551 = vadd.f32 %v1319, %v1550
        %v1552 = vpop.f32.mrb[0].mxu0
        %v1553 = vpop.f32.mrb[0].mxu0
        %v1554 = vadd.f32 %v1319, %v1553
        %v1555 = vpop.f32.mrb[0].mxu0
        %1556 = vmatprep.mubr.bf16.mxu0 0
        %1557 = vmatmul.mubr.bf16.gmra.mrb[0].mxu0 %v1435
        %v1558 = vpop.f32.mrb[0].mxu0
        %v1559 = vadd.f32 %v1319, %v1558
        %v1560 = vpop.f32.mrb[0].mxu0
        %v1561 = vpop.f32.mrb[0].mxu0
        %v1562 = vadd.f32 %v1319, %v1561
        %v1563 = vpop.f32.mrb[0].mxu0
        %1564 = vmatprep.mubr.bf16.mxu0 0
        %1565 = vmatmul.mubr.bf16.gmra.mrb[0].mxu0 %v1438
        %v1566 = vpop.f32.mrb[0].mxu0
        %v1567 = vadd.f32 %v1319, %v1566
        %v1568 = vpop.f32.mrb[0].mxu0
        %v1569 = vpop.f32.mrb[0].mxu0
        %v1570 = vadd.f32 %v1319, %v1569
        %v1571 = vpop.f32.mrb[0].mxu0
        %1572 = vmatprep.mubr.bf16.mxu0 0
        %1573 = vmatmul.mubr.bf16.gmra.mrb[0].mxu0 %v1441
        %v1574 = vpop.f32.mrb[0].mxu0
        %v1575 = vadd.f32 %v1319, %v1574
        %v1576 = vpop.f32.mrb[0].mxu0
        %v1577 = vpop.f32.mrb[0].mxu0
        %v1578 = vadd.f32 %v1319, %v1577
        %v1579 = vpop.f32.mrb[0].mxu0
        %1580 = vmatprep.mubr.bf16.mxu0 0
        %1581 = vmatmul.mubr.bf16.gmra.mrb[0].mxu0 %v1444
        %v1582 = vpop.f32.mrb[0].mxu0
        %v1583 = vadd.f32 %v1319, %v1582
        %v1584 = vpop.f32.mrb[0].mxu0
        %v1585 = vpop.f32.mrb[0].mxu0
        %v1586 = vadd.f32 %v1319, %v1585
        %v1587 = vpop.f32.mrb[0].mxu0
        %1588 = vmatprep.mubr.bf16.mxu0 0
        %1589 = vmatmul.mubr.bf16.gmra.mrb[0].mxu0 %v1447
        %v1590 = vpop.f32.mrb[0].mxu0
        %v1591 = vadd.f32 %v1319, %v1590
        %v1592 = vpop.f32.mrb[0].mxu0
        %v1593 = vpop.f32.mrb[0].mxu0
        %v1594 = vadd.f32 %v1319, %v1593
        %v1595 = vpop.f32.mrb[0].mxu0
        %1596 = vmatprep.mubr.bf16.mxu0 0
        %1597 = vmatmul.mubr.bf16.gmra.mrb[0].mxu0 %v1450
        %v1598 = vpop.f32.mrb[0].mxu0
        %v1599 = vadd.f32 %v1319, %v1598
        %v1600 = vpop.f32.mrb[0].mxu0
        %v1601 = vpop.f32.mrb[0].mxu0
        %v1602 = vadd.f32 %v1319, %v1601
        %v1603 = vpop.f32.mrb[0].mxu0
        %1604 = vmatprep.mubr.bf16.mxu0 0
        %1605 = vmatmul.mubr.bf16.gmra.mrb[0].mxu0 %v1453
        %v1606 = vpop.f32.mrb[0].mxu0
        %v1607 = vadd.f32 %v1319, %v1606
        %v1608 = vpop.f32.mrb[0].mxu0
        %v1609 = vpop.f32.mrb[0].mxu0
        %v1610 = vadd.f32 %v1319, %v1609
        %v1611 = vpop.f32.mrb[0].mxu0
        %1612 = vmatprep.mubr.bf16.mxu0 0
        %1613 = vmatmul.mubr.bf16.gmra.mrb[0].mxu0 %v1456
        %v1614 = vpop.f32.mrb[0].mxu0
        %v1615 = vadd.f32 %v1319, %v1614
        %v1616 = vpop.f32.mrb[0].mxu0
        %v1617 = vpop.f32.mrb[0].mxu0
        %v1618 = vadd.f32 %v1319, %v1617
        %v1619 = vpop.f32.mrb[0].mxu0
        %1620 = vmatprep.mubr.bf16.mxu0 0
        %1621 = vmatmul.mubr.bf16.gmra.mrb[0].mxu0 %v1459
        %v1622 = vpop.f32.mrb[0].mxu0
        %v1623 = vadd.f32 %v1319, %v1622
        %v1624 = vpop.f32.mrb[0].mxu0
        %v1625 = vpop.f32.mrb[0].mxu0
        %v1626 = vadd.f32 %v1319, %v1625
        %v1627 = vpop.f32.mrb[0].mxu0
        %1628 = vdwg.mxu0
        %vm1629 = vcmp.ge.f32.partialorder %v1503, 0.0
        %vm1630 = vcmp.ge.f32.partialorder %v1506, 0.0
        %vm1631 = vcmp.ge.f32.partialorder %v1511, 0.0
        %vm1632 = vcmp.ge.f32.partialorder %v1514, 0.0
        %vm1633 = vcmp.ge.f32.partialorder %v1519, 0.0
        %vm1634 = vcmp.ge.f32.partialorder %v1522, 0.0
        %vm1635 = vcmp.ge.f32.partialorder %v1527, 0.0
        %vm1636 = vcmp.ge.f32.partialorder %v1530, 0.0
        %vm1637 = vcmp.ge.f32.partialorder %v1535, 0.0
        %vm1638 = vcmp.ge.f32.partialorder %v1538, 0.0
        %vm1639 = vcmp.ge.f32.partialorder %v1543, 0.0
        %vm1640 = vcmp.ge.f32.partialorder %v1546, 0.0
        %vm1641 = vcmp.ge.f32.partialorder %v1551, 0.0
        %vm1642 = vcmp.ge.f32.partialorder %v1554, 0.0
        %vm1643 = vcmp.ge.f32.partialorder %v1559, 0.0
        %vm1644 = vcmp.ge.f32.partialorder %v1562, 0.0
        %vm1645 = vcmp.ge.f32.partialorder %v1567, 0.0
        %vm1646 = vcmp.ge.f32.partialorder %v1570, 0.0
        %vm1647 = vcmp.ge.f32.partialorder %v1575, 0.0
        %vm1648 = vcmp.ge.f32.partialorder %v1578, 0.0
        %vm1649 = vcmp.ge.f32.partialorder %v1583, 0.0
        %vm1650 = vcmp.ge.f32.partialorder %v1586, 0.0
        %vm1651 = vcmp.ge.f32.partialorder %v1591, 0.0
        %vm1652 = vcmp.ge.f32.partialorder %v1594, 0.0
        %vm1653 = vcmp.ge.f32.partialorder %v1599, 0.0
        %vm1654 = vcmp.ge.f32.partialorder %v1602, 0.0
        %vm1655 = vcmp.ge.f32.partialorder %v1607, 0.0
        %vm1656 = vcmp.ge.f32.partialorder %v1610, 0.0
        %vm1657 = vcmp.ge.f32.partialorder %v1615, 0.0
        %vm1658 = vcmp.ge.f32.partialorder %v1618, 0.0
        %vm1659 = vcmp.ge.f32.partialorder %v1623, 0.0
        %vm1660 = vcmp.ge.f32.partialorder %v1626, 0.0
        %v1661 = vmul.f32 %v1503, 0.01
        %v1662 = vmul.f32 %v1506, 0.01
        %v1663 = vmul.f32 %v1511, 0.01
        %v1664 = vmul.f32 %v1514, 0.01
        %v1665 = vmul.f32 %v1519, 0.01
        %v1666 = vmul.f32 %v1522, 0.01
        %v1667 = vmul.f32 %v1527, 0.01
        %v1668 = vmul.f32 %v1530, 0.01
        %v1669 = vmul.f32 %v1535, 0.01
        %v1670 = vmul.f32 %v1538, 0.01
        %v1671 = vmul.f32 %v1543, 0.01
        %v1672 = vmul.f32 %v1546, 0.01
        %v1673 = vmul.f32 %v1551, 0.01
        %v1674 = vmul.f32 %v1554, 0.01
        %v1675 = vmul.f32 %v1559, 0.01
        %v1676 = vmul.f32 %v1562, 0.01
        %v1677 = vmul.f32 %v1567, 0.01
        %v1678 = vmul.f32 %v1570, 0.01
        %v1679 = vmul.f32 %v1575, 0.01
        %v1680 = vmul.f32 %v1578, 0.01
        %v1681 = vmul.f32 %v1583, 0.01
        %v1682 = vmul.f32 %v1586, 0.01
        %v1683 = vmul.f32 %v1591, 0.01
        %v1684 = vmul.f32 %v1594, 0.01
        %v1685 = vmul.f32 %v1599, 0.01
        %v1686 = vmul.f32 %v1602, 0.01
        %v1687 = vmul.f32 %v1607, 0.01
        %v1688 = vmul.f32 %v1610, 0.01
        %v1689 = vmul.f32 %v1615, 0.01
        %v1690 = vmul.f32 %v1618, 0.01
        %v1691 = vmul.f32 %v1623, 0.01
        %v1692 = vmul.f32 %v1626, 0.01
        %v1693 = vsel %vm1629, %v1503, %v1661
        %v1694 = vsel %vm1630, %v1506, %v1662
        %v1695 = vsel %vm1631, %v1511, %v1663
        %v1696 = vsel %vm1632, %v1514, %v1664
        %v1697 = vsel %vm1633, %v1519, %v1665
        %v1698 = vsel %vm1634, %v1522, %v1666
        %v1699 = vsel %vm1635, %v1527, %v1667
        %v1700 = vsel %vm1636, %v1530, %v1668
        %v1701 = vsel %vm1637, %v1535, %v1669
        %v1702 = vsel %vm1638, %v1538, %v1670
        %v1703 = vsel %vm1639, %v1543, %v1671
        %v1704 = vsel %vm1640, %v1546, %v1672
        %v1705 = vsel %vm1641, %v1551, %v1673
        %v1706 = vsel %vm1642, %v1554, %v1674
        %v1707 = vsel %vm1643, %v1559, %v1675
        %v1708 = vsel %vm1644, %v1562, %v1676
        %v1709 = vsel %vm1645, %v1567, %v1677
        %v1710 = vsel %vm1646, %v1570, %v1678
        %v1711 = vsel %vm1647, %v1575, %v1679
        %v1712 = vsel %vm1648, %v1578, %v1680
        %v1713 = vsel %vm1649, %v1583, %v1681
        %v1714 = vsel %vm1650, %v1586, %v1682
        %v1715 = vsel %vm1651, %v1591, %v1683
        %v1716 = vsel %vm1652, %v1594, %v1684
        %v1717 = vsel %vm1653, %v1599, %v1685
        %v1718 = vsel %vm1654, %v1602, %v1686
        %v1719 = vsel %vm1655, %v1607, %v1687
        %v1720 = vsel %vm1656, %v1610, %v1688
        %v1721 = vsel %vm1657, %v1615, %v1689
        %v1722 = vsel %vm1658, %v1618, %v1690
        %v1723 = vsel %vm1659, %v1623, %v1691
        %v1724 = vsel %vm1660, %v1626, %v1692
        %v1725 = vpack.c.bf16 %v1694, %v1693
        %v1726 = vpack.c.bf16 %v1696, %v1695
        %v1727 = vpack.c.bf16 %v1698, %v1697
        %v1728 = vpack.c.bf16 %v1700, %v1699
        %v1729 = vpack.c.bf16 %v1702, %v1701
        %v1730 = vpack.c.bf16 %v1704, %v1703
        %v1731 = vpack.c.bf16 %v1706, %v1705
        %v1732 = vpack.c.bf16 %v1708, %v1707
        %v1733 = vpack.c.bf16 %v1710, %v1709
        %v1734 = vpack.c.bf16 %v1712, %v1711
        %v1735 = vpack.c.bf16 %v1714, %v1713
        %v1736 = vpack.c.bf16 %v1716, %v1715
        %v1737 = vpack.c.bf16 %v1718, %v1717
        %v1738 = vpack.c.bf16 %v1720, %v1719
        %v1739 = vpack.c.bf16 %v1722, %v1721
        %v1740 = vpack.c.bf16 %v1724, %v1723
        %v1741 = vld [vmem:[%s7] sm:$0xff]
        %v1742 = vld [vmem:[%s7 + $0x8] sm:$0xff]
        %v1743 = vld [vmem:[%s7 + $0x10] sm:$0xff]
        %v1744 = vld [vmem:[%s7 + $0x18] sm:$0xff]
        %v1745 = vld [vmem:[%s7 + $0x20] sm:$0xff]
        %v1746 = vld [vmem:[%s7 + $0x28] sm:$0xff]
        %v1747 = vld [vmem:[%s7 + $0x30] sm:$0xff]
        %v1748 = vld [vmem:[%s7 + $0x38] sm:$0xff]
        %v1757 = vunpack.c.l.b16 %v1741
        %v1758 = vunpack.c.h.b16 %v1741
        %v1759 = vunpack.c.l.b16 %v1742
        %v1760 = vunpack.c.h.b16 %v1742
        %v1761 = vunpack.c.l.b16 %v1743
        %v1762 = vunpack.c.h.b16 %v1743
        %v1763 = vunpack.c.l.b16 %v1744
        %v1764 = vunpack.c.h.b16 %v1744
        %v1765 = vunpack.c.l.b16 %v1745
        %v1766 = vunpack.c.h.b16 %v1745
        %v1767 = vunpack.c.l.b16 %v1746
        %v1768 = vunpack.c.h.b16 %v1746
        %v1769 = vunpack.c.l.b16 %v1747
        %v1770 = vunpack.c.h.b16 %v1747
        %v1771 = vunpack.c.l.b16 %v1748
        %v1772 = vunpack.c.h.b16 %v1748
        %v1773 = vpack.c.b16 %v1759, %v1757
        %v1774 = vpack.c.b16 %v1760, %v1758
        %v1775 = vpack.c.b16 %v1763, %v1761
        %v1776 = vpack.c.b16 %v1764, %v1762
        %v1777 = vpack.c.b16 %v1767, %v1765
        %v1778 = vpack.c.b16 %v1768, %v1766
        %v1779 = vpack.c.b16 %v1771, %v1769
        %v1780 = vpack.c.b16 %v1772, %v1770
        %1789 = vmatprep.subr.bf16.mxu0 0
        %1790 = vmatpush1.bf16.msra.mxu0 %v1725
        %1791 = vmatprep.subr.bf16.mxu0 0
        %1792 = vmatpush1.bf16.msra.mxu0 %v1726
        %1793 = vmatprep.subr.bf16.mxu0 0
        %1794 = vmatpush1.bf16.msra.mxu0 %v1727
        %1795 = vmatprep.subr.bf16.mxu0 0
        %1796 = vmatpush1.bf16.msra.mxu0 %v1728
        %1797 = vmatprep.subr.bf16.mxu0 0
        %1798 = vmatpush1.bf16.msra.mxu0 %v1729
        %1799 = vmatprep.subr.bf16.mxu0 0
        %1800 = vmatpush1.bf16.msra.mxu0 %v1730
        %1801 = vmatprep.subr.bf16.mxu0 0
        %1802 = vmatpush1.bf16.msra.mxu0 %v1731
        %1803 = vmatprep.subr.bf16.mxu0 0
        %1804 = vmatpush1.bf16.msra.mxu0 %v1732
        %1805 = vmatprep.subr.bf16.mxu0 0
        %1806 = vmatpush1.bf16.msra.mxu0 %v1733
        %1807 = vmatprep.subr.bf16.mxu0 0
        %1808 = vmatpush1.bf16.msra.mxu0 %v1734
        %1809 = vmatprep.subr.bf16.mxu0 0
        %1810 = vmatpush1.bf16.msra.mxu0 %v1735
        %1811 = vmatprep.subr.bf16.mxu0 0
        %1812 = vmatpush1.bf16.msra.mxu0 %v1736
        %1813 = vmatprep.subr.bf16.mxu0 0
        %1814 = vmatpush1.bf16.msra.mxu0 %v1737
        %1815 = vmatprep.subr.bf16.mxu0 0
        %1816 = vmatpush1.bf16.msra.mxu0 %v1738
        %1817 = vmatprep.subr.bf16.mxu0 0
        %1818 = vmatpush1.bf16.msra.mxu0 %v1739
        %1819 = vmatprep.subr.bf16.mxu0 0
        %1820 = vmatpush1.bf16.msra.mxu0 %v1740
        %1821 = vmatprep.mubr.bf16.mxu0 %v1774
        %1822 = vmatmul.mubr.bf16.gmra.mrb[0].mxu0 %v1773
        %v1823 = vpop.f32.mrb[0].mxu0
        %v1824 = vadd.f32 0.0, %v1823
        %v1825 = vpop.f32.mrb[0].mxu0
        %v1826 = vpop.f32.mrb[0].mxu0
        %v1827 = vadd.f32 0.0, %v1826
        %v1828 = vpop.f32.mrb[0].mxu0
        %1829 = vmatprep.mubr.bf16.mxu0 %v1776
        %1830 = vmatmul.mubr.bf16.gmra.mrb[0].mxu0 %v1775
        %v1831 = vpop.f32.mrb[0].mxu0
        %v1832 = vadd.f32 0.0, %v1831
        %v1833 = vpop.f32.mrb[0].mxu0
        %v1834 = vpop.f32.mrb[0].mxu0
        %v1835 = vadd.f32 0.0, %v1834
        %v1836 = vpop.f32.mrb[0].mxu0
        %1837 = vmatprep.mubr.bf16.mxu0 %v1778
        %1838 = vmatmul.mubr.bf16.gmra.mrb[0].mxu0 %v1777
        %v1839 = vpop.f32.mrb[0].mxu0
        %v1840 = vadd.f32 0.0, %v1839
        %v1841 = vpop.f32.mrb[0].mxu0
        %v1842 = vpop.f32.mrb[0].mxu0
        %v1843 = vadd.f32 0.0, %v1842
        %v1844 = vpop.f32.mrb[0].mxu0
        %1845 = vmatprep.mubr.bf16.mxu0 %v1780
        %1846 = vmatmul.mubr.bf16.gmra.mrb[0].mxu0 %v1779
        %v1847 = vpop.f32.mrb[0].mxu0
        %v1848 = vadd.f32 0.0, %v1847
        %v1849 = vpop.f32.mrb[0].mxu0
        %v1850 = vpop.f32.mrb[0].mxu0
        %v1851 = vadd.f32 0.0, %v1850
        %v1852 = vpop.f32.mrb[0].mxu0
        %1853 = vdwg.mxu0
        %v1854 = vpack.c.bf16 %v1827, %v1824
        %v1855 = vpack.c.bf16 %v1835, %v1832
        %v1856 = vpack.c.bf16 %v1843, %v1840
        %v1857 = vpack.c.bf16 %v1851, %v1848
        %s1858 = scalar_lea.vmem %s7, 64
        %v1859 = vld [vmem:[%s1858] sm:$0xff]
        %v1860 = vld [vmem:[%s1858 + $0x8] sm:$0xff]
        %v1861 = vld [vmem:[%s1858 + $0x10] sm:$0xff]
        %v1862 = vld [vmem:[%s1858 + $0x18] sm:$0xff]
        %v1863 = vld [vmem:[%s1858 + $0x20] sm:$0xff]
        %v1864 = vld [vmem:[%s1858 + $0x28] sm:$0xff]
        %v1865 = vld [vmem:[%s1858 + $0x30] sm:$0xff]
        %v1866 = vld [vmem:[%s1858 + $0x38] sm:$0xff]
        %v1875 = vunpack.c.l.b16 %v1859
        %v1876 = vunpack.c.h.b16 %v1859
        %v1877 = vunpack.c.l.b16 %v1860
        %v1878 = vunpack.c.h.b16 %v1860
        %v1879 = vunpack.c.l.b16 %v1861
        %v1880 = vunpack.c.h.b16 %v1861
        %v1881 = vunpack.c.l.b16 %v1862
        %v1882 = vunpack.c.h.b16 %v1862
        %v1883 = vunpack.c.l.b16 %v1863
        %v1884 = vunpack.c.h.b16 %v1863
        %v1885 = vunpack.c.l.b16 %v1864
        %v1886 = vunpack.c.h.b16 %v1864
        %v1887 = vunpack.c.l.b16 %v1865
        %v1888 = vunpack.c.h.b16 %v1865
        %v1889 = vunpack.c.l.b16 %v1866
        %v1890 = vunpack.c.h.b16 %v1866
        %v1891 = vpack.c.b16 %v1877, %v1875
        %v1892 = vpack.c.b16 %v1878, %v1876
        %v1893 = vpack.c.b16 %v1881, %v1879
        %v1894 = vpack.c.b16 %v1882, %v1880
        %v1895 = vpack.c.b16 %v1885, %v1883
        %v1896 = vpack.c.b16 %v1886, %v1884
        %v1897 = vpack.c.b16 %v1889, %v1887
        %v1898 = vpack.c.b16 %v1890, %v1888
        %1907 = vmatprep.subr.bf16.mxu0 0
        %1908 = vmatpush1.bf16.msra.mxu0 %v1725
        %1909 = vmatprep.subr.bf16.mxu0 0
        %1910 = vmatpush1.bf16.msra.mxu0 %v1726
        %1911 = vmatprep.subr.bf16.mxu0 0
        %1912 = vmatpush1.bf16.msra.mxu0 %v1727
        %1913 = vmatprep.subr.bf16.mxu0 0
        %1914 = vmatpush1.bf16.msra.mxu0 %v1728
        %1915 = vmatprep.subr.bf16.mxu0 0
        %1916 = vmatpush1.bf16.msra.mxu0 %v1729
        %1917 = vmatprep.subr.bf16.mxu0 0
        %1918 = vmatpush1.bf16.msra.mxu0 %v1730
        %1919 = vmatprep.subr.bf16.mxu0 0
        %1920 = vmatpush1.bf16.msra.mxu0 %v1731
        %1921 = vmatprep.subr.bf16.mxu0 0
        %1922 = vmatpush1.bf16.msra.mxu0 %v1732
        %1923 = vmatprep.subr.bf16.mxu0 0
        %1924 = vmatpush1.bf16.msra.mxu0 %v1733
        %1925 = vmatprep.subr.bf16.mxu0 0
        %1926 = vmatpush1.bf16.msra.mxu0 %v1734
        %1927 = vmatprep.subr.bf16.mxu0 0
        %1928 = vmatpush1.bf16.msra.mxu0 %v1735
        %1929 = vmatprep.subr.bf16.mxu0 0
        %1930 = vmatpush1.bf16.msra.mxu0 %v1736
        %1931 = vmatprep.subr.bf16.mxu0 0
        %1932 = vmatpush1.bf16.msra.mxu0 %v1737
        %1933 = vmatprep.subr.bf16.mxu0 0
        %1934 = vmatpush1.bf16.msra.mxu0 %v1738
        %1935 = vmatprep.subr.bf16.mxu0 0
        %1936 = vmatpush1.bf16.msra.mxu0 %v1739
        %1937 = vmatprep.subr.bf16.mxu0 0
        %1938 = vmatpush1.bf16.msra.mxu0 %v1740
        %1939 = vmatprep.mubr.bf16.mxu0 %v1892
        %1940 = vmatmul.mubr.bf16.gmra.mrb[0].mxu0 %v1891
        %v1941 = vpop.f32.mrb[0].mxu0
        %v1942 = vadd.f32 0.0, %v1941
        %v1943 = vpop.f32.mrb[0].mxu0
        %v1944 = vpop.f32.mrb[0].mxu0
        %v1945 = vadd.f32 0.0, %v1944
        %v1946 = vpop.f32.mrb[0].mxu0
        %1947 = vmatprep.mubr.bf16.mxu0 %v1894
        %1948 = vmatmul.mubr.bf16.gmra.mrb[0].mxu0 %v1893
        %v1949 = vpop.f32.mrb[0].mxu0
        %v1950 = vadd.f32 0.0, %v1949
        %v1951 = vpop.f32.mrb[0].mxu0
        %v1952 = vpop.f32.mrb[0].mxu0
        %v1953 = vadd.f32 0.0, %v1952
        %v1954 = vpop.f32.mrb[0].mxu0
        %1955 = vmatprep.mubr.bf16.mxu0 %v1896
        %1956 = vmatmul.mubr.bf16.gmra.mrb[0].mxu0 %v1895
        %v1957 = vpop.f32.mrb[0].mxu0
        %v1958 = vadd.f32 0.0, %v1957
        %v1959 = vpop.f32.mrb[0].mxu0
        %v1960 = vpop.f32.mrb[0].mxu0
        %v1961 = vadd.f32 0.0, %v1960
        %v1962 = vpop.f32.mrb[0].mxu0
        %1963 = vmatprep.mubr.bf16.mxu0 %v1898
        %1964 = vmatmul.mubr.bf16.gmra.mrb[0].mxu0 %v1897
        %v1965 = vpop.f32.mrb[0].mxu0
        %v1966 = vadd.f32 0.0, %v1965
        %v1967 = vpop.f32.mrb[0].mxu0
        %v1968 = vpop.f32.mrb[0].mxu0
        %v1969 = vadd.f32 0.0, %v1968
        %v1970 = vpop.f32.mrb[0].mxu0
        %1971 = vdwg.mxu0
        %v1972 = vpack.c.bf16 %v1945, %v1942
        %v1973 = vpack.c.bf16 %v1953, %v1950
        %v1974 = vpack.c.bf16 %v1961, %v1958
        %v1975 = vpack.c.bf16 %v1969, %v1966
        %s1976 = scalar_lea.vmem %s7, 128
        %v1977 = vld [vmem:[%s1976] sm:$0xff]
        %v1978 = vld [vmem:[%s1976 + $0x8] sm:$0xff]
        %v1979 = vld [vmem:[%s1976 + $0x10] sm:$0xff]
        %v1980 = vld [vmem:[%s1976 + $0x18] sm:$0xff]
        %v1981 = vld [vmem:[%s1976 + $0x20] sm:$0xff]
        %v1982 = vld [vmem:[%s1976 + $0x28] sm:$0xff]
        %v1983 = vld [vmem:[%s1976 + $0x30] sm:$0xff]
        %v1984 = vld [vmem:[%s1976 + $0x38] sm:$0xff]
        %v1993 = vunpack.c.l.b16 %v1977
        %v1994 = vunpack.c.h.b16 %v1977
        %v1995 = vunpack.c.l.b16 %v1978
        %v1996 = vunpack.c.h.b16 %v1978
        %v1997 = vunpack.c.l.b16 %v1979
        %v1998 = vunpack.c.h.b16 %v1979
        %v1999 = vunpack.c.l.b16 %v1980
        %v2000 = vunpack.c.h.b16 %v1980
        %v2001 = vunpack.c.l.b16 %v1981
        %v2002 = vunpack.c.h.b16 %v1981
        %v2003 = vunpack.c.l.b16 %v1982
        %v2004 = vunpack.c.h.b16 %v1982
        %v2005 = vunpack.c.l.b16 %v1983
        %v2006 = vunpack.c.h.b16 %v1983
        %v2007 = vunpack.c.l.b16 %v1984
        %v2008 = vunpack.c.h.b16 %v1984
        %v2009 = vpack.c.b16 %v1995, %v1993
        %v2010 = vpack.c.b16 %v1996, %v1994
        %v2011 = vpack.c.b16 %v1999, %v1997
        %v2012 = vpack.c.b16 %v2000, %v1998
        %v2013 = vpack.c.b16 %v2003, %v2001
        %v2014 = vpack.c.b16 %v2004, %v2002
        %v2015 = vpack.c.b16 %v2007, %v2005
        %v2016 = vpack.c.b16 %v2008, %v2006
        %2025 = vmatprep.subr.bf16.mxu0 0
        %2026 = vmatpush1.bf16.msra.mxu0 %v1725
        %2027 = vmatprep.subr.bf16.mxu0 0
        %2028 = vmatpush1.bf16.msra.mxu0 %v1726
        %2029 = vmatprep.subr.bf16.mxu0 0
        %2030 = vmatpush1.bf16.msra.mxu0 %v1727
        %2031 = vmatprep.subr.bf16.mxu0 0
        %2032 = vmatpush1.bf16.msra.mxu0 %v1728
        %2033 = vmatprep.subr.bf16.mxu0 0
        %2034 = vmatpush1.bf16.msra.mxu0 %v1729
        %2035 = vmatprep.subr.bf16.mxu0 0
        %2036 = vmatpush1.bf16.msra.mxu0 %v1730
        %2037 = vmatprep.subr.bf16.mxu0 0
        %2038 = vmatpush1.bf16.msra.mxu0 %v1731
        %2039 = vmatprep.subr.bf16.mxu0 0
        %2040 = vmatpush1.bf16.msra.mxu0 %v1732
        %2041 = vmatprep.subr.bf16.mxu0 0
        %2042 = vmatpush1.bf16.msra.mxu0 %v1733
        %2043 = vmatprep.subr.bf16.mxu0 0
        %2044 = vmatpush1.bf16.msra.mxu0 %v1734
        %2045 = vmatprep.subr.bf16.mxu0 0
        %2046 = vmatpush1.bf16.msra.mxu0 %v1735
        %2047 = vmatprep.subr.bf16.mxu0 0
        %2048 = vmatpush1.bf16.msra.mxu0 %v1736
        %2049 = vmatprep.subr.bf16.mxu0 0
        %2050 = vmatpush1.bf16.msra.mxu0 %v1737
        %2051 = vmatprep.subr.bf16.mxu0 0
        %2052 = vmatpush1.bf16.msra.mxu0 %v1738
        %2053 = vmatprep.subr.bf16.mxu0 0
        %2054 = vmatpush1.bf16.msra.mxu0 %v1739
        %2055 = vmatprep.subr.bf16.mxu0 0
        %2056 = vmatpush1.bf16.msra.mxu0 %v1740
        %2057 = vmatprep.mubr.bf16.mxu0 %v2010
        %2058 = vmatmul.mubr.bf16.gmra.mrb[0].mxu0 %v2009
        %v2059 = vpop.f32.mrb[0].mxu0
        %v2060 = vadd.f32 0.0, %v2059
        %v2061 = vpop.f32.mrb[0].mxu0
        %v2062 = vpop.f32.mrb[0].mxu0
        %v2063 = vadd.f32 0.0, %v2062
        %v2064 = vpop.f32.mrb[0].mxu0
        %2065 = vmatprep.mubr.bf16.mxu0 %v2012
        %2066 = vmatmul.mubr.bf16.gmra.mrb[0].mxu0 %v2011
        %v2067 = vpop.f32.mrb[0].mxu0
        %v2068 = vadd.f32 0.0, %v2067
        %v2069 = vpop.f32.mrb[0].mxu0
        %v2070 = vpop.f32.mrb[0].mxu0
        %v2071 = vadd.f32 0.0, %v2070
        %v2072 = vpop.f32.mrb[0].mxu0
        %2073 = vmatprep.mubr.bf16.mxu0 %v2014
        %2074 = vmatmul.mubr.bf16.gmra.mrb[0].mxu0 %v2013
        %v2075 = vpop.f32.mrb[0].mxu0
        %v2076 = vadd.f32 0.0, %v2075
        %v2077 = vpop.f32.mrb[0].mxu0
        %v2078 = vpop.f32.mrb[0].mxu0
        %v2079 = vadd.f32 0.0, %v2078
        %v2080 = vpop.f32.mrb[0].mxu0
        %2081 = vmatprep.mubr.bf16.mxu0 %v2016
        %2082 = vmatmul.mubr.bf16.gmra.mrb[0].mxu0 %v2015
        %v2083 = vpop.f32.mrb[0].mxu0
        %v2084 = vadd.f32 0.0, %v2083
        %v2085 = vpop.f32.mrb[0].mxu0
        %v2086 = vpop.f32.mrb[0].mxu0
        %v2087 = vadd.f32 0.0, %v2086
        %v2088 = vpop.f32.mrb[0].mxu0
        %2089 = vdwg.mxu0
        %v2090 = vpack.c.bf16 %v2063, %v2060
        %v2091 = vpack.c.bf16 %v2071, %v2068
        %v2092 = vpack.c.bf16 %v2079, %v2076
        %v2093 = vpack.c.bf16 %v2087, %v2084
        %s2094 = scalar_lea.vmem %s7, 192
        %v2095 = vld [vmem:[%s2094] sm:$0xff]
        %v2096 = vld [vmem:[%s2094 + $0x8] sm:$0xff]
        %v2097 = vld [vmem:[%s2094 + $0x10] sm:$0xff]
        %v2098 = vld [vmem:[%s2094 + $0x18] sm:$0xff]
        %v2099 = vld [vmem:[%s2094 + $0x20] sm:$0xff]
        %v2100 = vld [vmem:[%s2094 + $0x28] sm:$0xff]
        %v2101 = vld [vmem:[%s2094 + $0x30] sm:$0xff]
        %v2102 = vld [vmem:[%s2094 + $0x38] sm:$0xff]
        %v2111 = vunpack.c.l.b16 %v2095
        %v2112 = vunpack.c.h.b16 %v2095
        %v2113 = vunpack.c.l.b16 %v2096
        %v2114 = vunpack.c.h.b16 %v2096
        %v2115 = vunpack.c.l.b16 %v2097
        %v2116 = vunpack.c.h.b16 %v2097
        %v2117 = vunpack.c.l.b16 %v2098
        %v2118 = vunpack.c.h.b16 %v2098
        %v2119 = vunpack.c.l.b16 %v2099
        %v2120 = vunpack.c.h.b16 %v2099
        %v2121 = vunpack.c.l.b16 %v2100
        %v2122 = vunpack.c.h.b16 %v2100
        %v2123 = vunpack.c.l.b16 %v2101
        %v2124 = vunpack.c.h.b16 %v2101
        %v2125 = vunpack.c.l.b16 %v2102
        %v2126 = vunpack.c.h.b16 %v2102
        %v2127 = vpack.c.b16 %v2113, %v2111
        %v2128 = vpack.c.b16 %v2114, %v2112
        %v2129 = vpack.c.b16 %v2117, %v2115
        %v2130 = vpack.c.b16 %v2118, %v2116
        %v2131 = vpack.c.b16 %v2121, %v2119
        %v2132 = vpack.c.b16 %v2122, %v2120
        %v2133 = vpack.c.b16 %v2125, %v2123
        %v2134 = vpack.c.b16 %v2126, %v2124
        %2143 = vmatprep.subr.bf16.mxu0 0
        %2144 = vmatpush1.bf16.msra.mxu0 %v1725
        %2145 = vmatprep.subr.bf16.mxu0 0
        %2146 = vmatpush1.bf16.msra.mxu0 %v1726
        %2147 = vmatprep.subr.bf16.mxu0 0
        %2148 = vmatpush1.bf16.msra.mxu0 %v1727
        %2149 = vmatprep.subr.bf16.mxu0 0
        %2150 = vmatpush1.bf16.msra.mxu0 %v1728
        %2151 = vmatprep.subr.bf16.mxu0 0
        %2152 = vmatpush1.bf16.msra.mxu0 %v1729
        %2153 = vmatprep.subr.bf16.mxu0 0
        %2154 = vmatpush1.bf16.msra.mxu0 %v1730
        %2155 = vmatprep.subr.bf16.mxu0 0
        %2156 = vmatpush1.bf16.msra.mxu0 %v1731
        %2157 = vmatprep.subr.bf16.mxu0 0
        %2158 = vmatpush1.bf16.msra.mxu0 %v1732
        %2159 = vmatprep.subr.bf16.mxu0 0
        %2160 = vmatpush1.bf16.msra.mxu0 %v1733
        %2161 = vmatprep.subr.bf16.mxu0 0
        %2162 = vmatpush1.bf16.msra.mxu0 %v1734
        %2163 = vmatprep.subr.bf16.mxu0 0
        %2164 = vmatpush1.bf16.msra.mxu0 %v1735
        %2165 = vmatprep.subr.bf16.mxu0 0
        %2166 = vmatpush1.bf16.msra.mxu0 %v1736
        %2167 = vmatprep.subr.bf16.mxu0 0
        %2168 = vmatpush1.bf16.msra.mxu0 %v1737
        %2169 = vmatprep.subr.bf16.mxu0 0
        %2170 = vmatpush1.bf16.msra.mxu0 %v1738
        %2171 = vmatprep.subr.bf16.mxu0 0
        %2172 = vmatpush1.bf16.msra.mxu0 %v1739
        %2173 = vmatprep.subr.bf16.mxu0 0
        %2174 = vmatpush1.bf16.msra.mxu0 %v1740
        %2175 = vmatprep.mubr.bf16.mxu0 %v2128
        %2176 = vmatmul.mubr.bf16.gmra.mrb[0].mxu0 %v2127
        %v2177 = vpop.f32.mrb[0].mxu0
        %v2178 = vadd.f32 0.0, %v2177
        %v2179 = vpop.f32.mrb[0].mxu0
        %v2180 = vpop.f32.mrb[0].mxu0
        %v2181 = vadd.f32 0.0, %v2180
        %v2182 = vpop.f32.mrb[0].mxu0
        %2183 = vmatprep.mubr.bf16.mxu0 %v2130
        %2184 = vmatmul.mubr.bf16.gmra.mrb[0].mxu0 %v2129
        %v2185 = vpop.f32.mrb[0].mxu0
        %v2186 = vadd.f32 0.0, %v2185
        %v2187 = vpop.f32.mrb[0].mxu0
        %v2188 = vpop.f32.mrb[0].mxu0
        %v2189 = vadd.f32 0.0, %v2188
        %v2190 = vpop.f32.mrb[0].mxu0
        %2191 = vmatprep.mubr.bf16.mxu0 %v2132
        %2192 = vmatmul.mubr.bf16.gmra.mrb[0].mxu0 %v2131
        %v2193 = vpop.f32.mrb[0].mxu0
        %v2194 = vadd.f32 0.0, %v2193
        %v2195 = vpop.f32.mrb[0].mxu0
        %v2196 = vpop.f32.mrb[0].mxu0
        %v2197 = vadd.f32 0.0, %v2196
        %v2198 = vpop.f32.mrb[0].mxu0
        %2199 = vmatprep.mubr.bf16.mxu0 %v2134
        %2200 = vmatmul.mubr.bf16.gmra.mrb[0].mxu0 %v2133
        %v2201 = vpop.f32.mrb[0].mxu0
        %v2202 = vadd.f32 0.0, %v2201
        %v2203 = vpop.f32.mrb[0].mxu0
        %v2204 = vpop.f32.mrb[0].mxu0
        %v2205 = vadd.f32 0.0, %v2204
        %v2206 = vpop.f32.mrb[0].mxu0
        %2207 = vdwg.mxu0
        %v2208 = vpack.c.bf16 %v2181, %v2178
        %v2209 = vpack.c.bf16 %v2189, %v2186
        %v2210 = vpack.c.bf16 %v2197, %v2194
        %v2211 = vpack.c.bf16 %v2205, %v2202
        %s2212 = scalar_lea.vmem %s7, 256
        %v2213 = vld [vmem:[%s2212] sm:$0xff]
        %v2214 = vld [vmem:[%s2212 + $0x8] sm:$0xff]
        %v2215 = vld [vmem:[%s2212 + $0x10] sm:$0xff]
        %v2216 = vld [vmem:[%s2212 + $0x18] sm:$0xff]
        %v2217 = vld [vmem:[%s2212 + $0x20] sm:$0xff]
        %v2218 = vld [vmem:[%s2212 + $0x28] sm:$0xff]
        %v2219 = vld [vmem:[%s2212 + $0x30] sm:$0xff]
        %v2220 = vld [vmem:[%s2212 + $0x38] sm:$0xff]
        %v2229 = vunpack.c.l.b16 %v2213
        %v2230 = vunpack.c.h.b16 %v2213
        %v2231 = vunpack.c.l.b16 %v2214
        %v2232 = vunpack.c.h.b16 %v2214
        %v2233 = vunpack.c.l.b16 %v2215
        %v2234 = vunpack.c.h.b16 %v2215
        %v2235 = vunpack.c.l.b16 %v2216
        %v2236 = vunpack.c.h.b16 %v2216
        %v2237 = vunpack.c.l.b16 %v2217
        %v2238 = vunpack.c.h.b16 %v2217
        %v2239 = vunpack.c.l.b16 %v2218
        %v2240 = vunpack.c.h.b16 %v2218
        %v2241 = vunpack.c.l.b16 %v2219
        %v2242 = vunpack.c.h.b16 %v2219
        %v2243 = vunpack.c.l.b16 %v2220
        %v2244 = vunpack.c.h.b16 %v2220
        %v2245 = vpack.c.b16 %v2231, %v2229
        %v2246 = vpack.c.b16 %v2232, %v2230
        %v2247 = vpack.c.b16 %v2235, %v2233
        %v2248 = vpack.c.b16 %v2236, %v2234
        %v2249 = vpack.c.b16 %v2239, %v2237
        %v2250 = vpack.c.b16 %v2240, %v2238
        %v2251 = vpack.c.b16 %v2243, %v2241
        %v2252 = vpack.c.b16 %v2244, %v2242
        %2261 = vmatprep.subr.bf16.mxu0 0
        %2262 = vmatpush1.bf16.msra.mxu0 %v1725
        %2263 = vmatprep.subr.bf16.mxu0 0
        %2264 = vmatpush1.bf16.msra.mxu0 %v1726
        %2265 = vmatprep.subr.bf16.mxu0 0
        %2266 = vmatpush1.bf16.msra.mxu0 %v1727
        %2267 = vmatprep.subr.bf16.mxu0 0
        %2268 = vmatpush1.bf16.msra.mxu0 %v1728
        %2269 = vmatprep.subr.bf16.mxu0 0
        %2270 = vmatpush1.bf16.msra.mxu0 %v1729
        %2271 = vmatprep.subr.bf16.mxu0 0
        %2272 = vmatpush1.bf16.msra.mxu0 %v1730
        %2273 = vmatprep.subr.bf16.mxu0 0
        %2274 = vmatpush1.bf16.msra.mxu0 %v1731
        %2275 = vmatprep.subr.bf16.mxu0 0
        %2276 = vmatpush1.bf16.msra.mxu0 %v1732
        %2277 = vmatprep.subr.bf16.mxu0 0
        %2278 = vmatpush1.bf16.msra.mxu0 %v1733
        %2279 = vmatprep.subr.bf16.mxu0 0
        %2280 = vmatpush1.bf16.msra.mxu0 %v1734
        %2281 = vmatprep.subr.bf16.mxu0 0
        %2282 = vmatpush1.bf16.msra.mxu0 %v1735
        %2283 = vmatprep.subr.bf16.mxu0 0
        %2284 = vmatpush1.bf16.msra.mxu0 %v1736
        %2285 = vmatprep.subr.bf16.mxu0 0
        %2286 = vmatpush1.bf16.msra.mxu0 %v1737
        %2287 = vmatprep.subr.bf16.mxu0 0
        %2288 = vmatpush1.bf16.msra.mxu0 %v1738
        %2289 = vmatprep.subr.bf16.mxu0 0
        %2290 = vmatpush1.bf16.msra.mxu0 %v1739
        %2291 = vmatprep.subr.bf16.mxu0 0
        %2292 = vmatpush1.bf16.msra.mxu0 %v1740
        %2293 = vmatprep.mubr.bf16.mxu0 %v2246
        %2294 = vmatmul.mubr.bf16.gmra.mrb[0].mxu0 %v2245
        %v2295 = vpop.f32.mrb[0].mxu0
        %v2296 = vadd.f32 0.0, %v2295
        %v2297 = vpop.f32.mrb[0].mxu0
        %v2298 = vpop.f32.mrb[0].mxu0
        %v2299 = vadd.f32 0.0, %v2298
        %v2300 = vpop.f32.mrb[0].mxu0
        %2301 = vmatprep.mubr.bf16.mxu0 %v2248
        %2302 = vmatmul.mubr.bf16.gmra.mrb[0].mxu0 %v2247
        %v2303 = vpop.f32.mrb[0].mxu0
        %v2304 = vadd.f32 0.0, %v2303
        %v2305 = vpop.f32.mrb[0].mxu0
        %v2306 = vpop.f32.mrb[0].mxu0
        %v2307 = vadd.f32 0.0, %v2306
        %v2308 = vpop.f32.mrb[0].mxu0
        %2309 = vmatprep.mubr.bf16.mxu0 %v2250
        %2310 = vmatmul.mubr.bf16.gmra.mrb[0].mxu0 %v2249
        %v2311 = vpop.f32.mrb[0].mxu0
        %v2312 = vadd.f32 0.0, %v2311
        %v2313 = vpop.f32.mrb[0].mxu0
        %v2314 = vpop.f32.mrb[0].mxu0
        %v2315 = vadd.f32 0.0, %v2314
        %v2316 = vpop.f32.mrb[0].mxu0
        %2317 = vmatprep.mubr.bf16.mxu0 %v2252
        %2318 = vmatmul.mubr.bf16.gmra.mrb[0].mxu0 %v2251
        %v2319 = vpop.f32.mrb[0].mxu0
        %v2320 = vadd.f32 0.0, %v2319
        %v2321 = vpop.f32.mrb[0].mxu0
        %v2322 = vpop.f32.mrb[0].mxu0
        %v2323 = vadd.f32 0.0, %v2322
        %v2324 = vpop.f32.mrb[0].mxu0
        %2325 = vdwg.mxu0
        %v2326 = vpack.c.bf16 %v2299, %v2296
        %v2327 = vpack.c.bf16 %v2307, %v2304
        %v2328 = vpack.c.bf16 %v2315, %v2312
        %v2329 = vpack.c.bf16 %v2323, %v2320
        %s2330 = scalar_lea.vmem %s7, 320
        %v2331 = vld [vmem:[%s2330] sm:$0xff]
        %v2332 = vld [vmem:[%s2330 + $0x8] sm:$0xff]
        %v2333 = vld [vmem:[%s2330 + $0x10] sm:$0xff]
        %v2334 = vld [vmem:[%s2330 + $0x18] sm:$0xff]
        %v2335 = vld [vmem:[%s2330 + $0x20] sm:$0xff]
        %v2336 = vld [vmem:[%s2330 + $0x28] sm:$0xff]
        %v2337 = vld [vmem:[%s2330 + $0x30] sm:$0xff]
        %v2338 = vld [vmem:[%s2330 + $0x38] sm:$0xff]
        %v2347 = vunpack.c.l.b16 %v2331
        %v2348 = vunpack.c.h.b16 %v2331
        %v2349 = vunpack.c.l.b16 %v2332
        %v2350 = vunpack.c.h.b16 %v2332
        %v2351 = vunpack.c.l.b16 %v2333
        %v2352 = vunpack.c.h.b16 %v2333
        %v2353 = vunpack.c.l.b16 %v2334
        %v2354 = vunpack.c.h.b16 %v2334
        %v2355 = vunpack.c.l.b16 %v2335
        %v2356 = vunpack.c.h.b16 %v2335
        %v2357 = vunpack.c.l.b16 %v2336
        %v2358 = vunpack.c.h.b16 %v2336
        %v2359 = vunpack.c.l.b16 %v2337
        %v2360 = vunpack.c.h.b16 %v2337
        %v2361 = vunpack.c.l.b16 %v2338
        %v2362 = vunpack.c.h.b16 %v2338
        %v2363 = vpack.c.b16 %v2349, %v2347
        %v2364 = vpack.c.b16 %v2350, %v2348
        %v2365 = vpack.c.b16 %v2353, %v2351
        %v2366 = vpack.c.b16 %v2354, %v2352
        %v2367 = vpack.c.b16 %v2357, %v2355
        %v2368 = vpack.c.b16 %v2358, %v2356
        %v2369 = vpack.c.b16 %v2361, %v2359
        %v2370 = vpack.c.b16 %v2362, %v2360
        %2379 = vmatprep.subr.bf16.mxu0 0
        %2380 = vmatpush1.bf16.msra.mxu0 %v1725
        %2381 = vmatprep.subr.bf16.mxu0 0
        %2382 = vmatpush1.bf16.msra.mxu0 %v1726
        %2383 = vmatprep.subr.bf16.mxu0 0
        %2384 = vmatpush1.bf16.msra.mxu0 %v1727
        %2385 = vmatprep.subr.bf16.mxu0 0
        %2386 = vmatpush1.bf16.msra.mxu0 %v1728
        %2387 = vmatprep.subr.bf16.mxu0 0
        %2388 = vmatpush1.bf16.msra.mxu0 %v1729
        %2389 = vmatprep.subr.bf16.mxu0 0
        %2390 = vmatpush1.bf16.msra.mxu0 %v1730
        %2391 = vmatprep.subr.bf16.mxu0 0
        %2392 = vmatpush1.bf16.msra.mxu0 %v1731
        %2393 = vmatprep.subr.bf16.mxu0 0
        %2394 = vmatpush1.bf16.msra.mxu0 %v1732
        %2395 = vmatprep.subr.bf16.mxu0 0
        %2396 = vmatpush1.bf16.msra.mxu0 %v1733
        %2397 = vmatprep.subr.bf16.mxu0 0
        %2398 = vmatpush1.bf16.msra.mxu0 %v1734
        %2399 = vmatprep.subr.bf16.mxu0 0
        %2400 = vmatpush1.bf16.msra.mxu0 %v1735
        %2401 = vmatprep.subr.bf16.mxu0 0
        %2402 = vmatpush1.bf16.msra.mxu0 %v1736
        %2403 = vmatprep.subr.bf16.mxu0 0
        %2404 = vmatpush1.bf16.msra.mxu0 %v1737
        %2405 = vmatprep.subr.bf16.mxu0 0
        %2406 = vmatpush1.bf16.msra.mxu0 %v1738
        %2407 = vmatprep.subr.bf16.mxu0 0
        %2408 = vmatpush1.bf16.msra.mxu0 %v1739
        %2409 = vmatprep.subr.bf16.mxu0 0
        %2410 = vmatpush1.bf16.msra.mxu0 %v1740
        %2411 = vmatprep.mubr.bf16.mxu0 %v2364
        %2412 = vmatmul.mubr.bf16.gmra.mrb[0].mxu0 %v2363
        %v2413 = vpop.f32.mrb[0].mxu0
        %v2414 = vadd.f32 0.0, %v2413
        %v2415 = vpop.f32.mrb[0].mxu0
        %v2416 = vpop.f32.mrb[0].mxu0
        %v2417 = vadd.f32 0.0, %v2416
        %v2418 = vpop.f32.mrb[0].mxu0
        %2419 = vmatprep.mubr.bf16.mxu0 %v2366
        %2420 = vmatmul.mubr.bf16.gmra.mrb[0].mxu0 %v2365
        %v2421 = vpop.f32.mrb[0].mxu0
        %v2422 = vadd.f32 0.0, %v2421
        %v2423 = vpop.f32.mrb[0].mxu0
        %v2424 = vpop.f32.mrb[0].mxu0
        %v2425 = vadd.f32 0.0, %v2424
        %v2426 = vpop.f32.mrb[0].mxu0
        %2427 = vmatprep.mubr.bf16.mxu0 %v2368
        %2428 = vmatmul.mubr.bf16.gmra.mrb[0].mxu0 %v2367
        %v2429 = vpop.f32.mrb[0].mxu0
        %v2430 = vadd.f32 0.0, %v2429
        %v2431 = vpop.f32.mrb[0].mxu0
        %v2432 = vpop.f32.mrb[0].mxu0
        %v2433 = vadd.f32 0.0, %v2432
        %v2434 = vpop.f32.mrb[0].mxu0
        %2435 = vmatprep.mubr.bf16.mxu0 %v2370
        %2436 = vmatmul.mubr.bf16.gmra.mrb[0].mxu0 %v2369
        %v2437 = vpop.f32.mrb[0].mxu0
        %v2438 = vadd.f32 0.0, %v2437
        %v2439 = vpop.f32.mrb[0].mxu0
        %v2440 = vpop.f32.mrb[0].mxu0
        %v2441 = vadd.f32 0.0, %v2440
        %v2442 = vpop.f32.mrb[0].mxu0
        %2443 = vdwg.mxu0
        %v2444 = vpack.c.bf16 %v2417, %v2414
        %v2445 = vpack.c.bf16 %v2425, %v2422
        %v2446 = vpack.c.bf16 %v2433, %v2430
        %v2447 = vpack.c.bf16 %v2441, %v2438
        %s2448 = scalar_lea.vmem %s7, 384
        %v2449 = vld [vmem:[%s2448] sm:$0xff]
        %v2450 = vld [vmem:[%s2448 + $0x8] sm:$0xff]
        %v2451 = vld [vmem:[%s2448 + $0x10] sm:$0xff]
        %v2452 = vld [vmem:[%s2448 + $0x18] sm:$0xff]
        %v2453 = vld [vmem:[%s2448 + $0x20] sm:$0xff]
        %v2454 = vld [vmem:[%s2448 + $0x28] sm:$0xff]
        %v2455 = vld [vmem:[%s2448 + $0x30] sm:$0xff]
        %v2456 = vld [vmem:[%s2448 + $0x38] sm:$0xff]
        %v2465 = vunpack.c.l.b16 %v2449
        %v2466 = vunpack.c.h.b16 %v2449
        %v2467 = vunpack.c.l.b16 %v2450
        %v2468 = vunpack.c.h.b16 %v2450
        %v2469 = vunpack.c.l.b16 %v2451
        %v2470 = vunpack.c.h.b16 %v2451
        %v2471 = vunpack.c.l.b16 %v2452
        %v2472 = vunpack.c.h.b16 %v2452
        %v2473 = vunpack.c.l.b16 %v2453
        %v2474 = vunpack.c.h.b16 %v2453
        %v2475 = vunpack.c.l.b16 %v2454
        %v2476 = vunpack.c.h.b16 %v2454
        %v2477 = vunpack.c.l.b16 %v2455
        %v2478 = vunpack.c.h.b16 %v2455
        %v2479 = vunpack.c.l.b16 %v2456
        %v2480 = vunpack.c.h.b16 %v2456
        %v2481 = vpack.c.b16 %v2467, %v2465
        %v2482 = vpack.c.b16 %v2468, %v2466
        %v2483 = vpack.c.b16 %v2471, %v2469
        %v2484 = vpack.c.b16 %v2472, %v2470
        %v2485 = vpack.c.b16 %v2475, %v2473
        %v2486 = vpack.c.b16 %v2476, %v2474
        %v2487 = vpack.c.b16 %v2479, %v2477
        %v2488 = vpack.c.b16 %v2480, %v2478
        %2497 = vmatprep.subr.bf16.mxu0 0
        %2498 = vmatpush1.bf16.msra.mxu0 %v1725
        %2499 = vmatprep.subr.bf16.mxu0 0
        %2500 = vmatpush1.bf16.msra.mxu0 %v1726
        %2501 = vmatprep.subr.bf16.mxu0 0
        %2502 = vmatpush1.bf16.msra.mxu0 %v1727
        %2503 = vmatprep.subr.bf16.mxu0 0
        %2504 = vmatpush1.bf16.msra.mxu0 %v1728
        %2505 = vmatprep.subr.bf16.mxu0 0
        %2506 = vmatpush1.bf16.msra.mxu0 %v1729
        %2507 = vmatprep.subr.bf16.mxu0 0
        %2508 = vmatpush1.bf16.msra.mxu0 %v1730
        %2509 = vmatprep.subr.bf16.mxu0 0
        %2510 = vmatpush1.bf16.msra.mxu0 %v1731
        %2511 = vmatprep.subr.bf16.mxu0 0
        %2512 = vmatpush1.bf16.msra.mxu0 %v1732
        %2513 = vmatprep.subr.bf16.mxu0 0
        %2514 = vmatpush1.bf16.msra.mxu0 %v1733
        %2515 = vmatprep.subr.bf16.mxu0 0
        %2516 = vmatpush1.bf16.msra.mxu0 %v1734
        %2517 = vmatprep.subr.bf16.mxu0 0
        %2518 = vmatpush1.bf16.msra.mxu0 %v1735
        %2519 = vmatprep.subr.bf16.mxu0 0
        %2520 = vmatpush1.bf16.msra.mxu0 %v1736
        %2521 = vmatprep.subr.bf16.mxu0 0
        %2522 = vmatpush1.bf16.msra.mxu0 %v1737
        %2523 = vmatprep.subr.bf16.mxu0 0
        %2524 = vmatpush1.bf16.msra.mxu0 %v1738
        %2525 = vmatprep.subr.bf16.mxu0 0
        %2526 = vmatpush1.bf16.msra.mxu0 %v1739
        %2527 = vmatprep.subr.bf16.mxu0 0
        %2528 = vmatpush1.bf16.msra.mxu0 %v1740
        %2529 = vmatprep.mubr.bf16.mxu0 %v2482
        %2530 = vmatmul.mubr.bf16.gmra.mrb[0].mxu0 %v2481
        %v2531 = vpop.f32.mrb[0].mxu0
        %v2532 = vadd.f32 0.0, %v2531
        %v2533 = vpop.f32.mrb[0].mxu0
        %v2534 = vpop.f32.mrb[0].mxu0
        %v2535 = vadd.f32 0.0, %v2534
        %v2536 = vpop.f32.mrb[0].mxu0
        %2537 = vmatprep.mubr.bf16.mxu0 %v2484
        %2538 = vmatmul.mubr.bf16.gmra.mrb[0].mxu0 %v2483
        %v2539 = vpop.f32.mrb[0].mxu0
        %v2540 = vadd.f32 0.0, %v2539
        %v2541 = vpop.f32.mrb[0].mxu0
        %v2542 = vpop.f32.mrb[0].mxu0
        %v2543 = vadd.f32 0.0, %v2542
        %v2544 = vpop.f32.mrb[0].mxu0
        %2545 = vmatprep.mubr.bf16.mxu0 %v2486
        %2546 = vmatmul.mubr.bf16.gmra.mrb[0].mxu0 %v2485
        %v2547 = vpop.f32.mrb[0].mxu0
        %v2548 = vadd.f32 0.0, %v2547
        %v2549 = vpop.f32.mrb[0].mxu0
        %v2550 = vpop.f32.mrb[0].mxu0
        %v2551 = vadd.f32 0.0, %v2550
        %v2552 = vpop.f32.mrb[0].mxu0
        %2553 = vmatprep.mubr.bf16.mxu0 %v2488
        %2554 = vmatmul.mubr.bf16.gmra.mrb[0].mxu0 %v2487
        %v2555 = vpop.f32.mrb[0].mxu0
        %v2556 = vadd.f32 0.0, %v2555
        %v2557 = vpop.f32.mrb[0].mxu0
        %v2558 = vpop.f32.mrb[0].mxu0
        %v2559 = vadd.f32 0.0, %v2558
        %v2560 = vpop.f32.mrb[0].mxu0
        %2561 = vdwg.mxu0
        %v2562 = vpack.c.bf16 %v2535, %v2532
        %v2563 = vpack.c.bf16 %v2543, %v2540
        %v2564 = vpack.c.bf16 %v2551, %v2548
        %v2565 = vpack.c.bf16 %v2559, %v2556
        %s2566 = scalar_lea.vmem %s7, 448
        %v2567 = vld [vmem:[%s2566] sm:$0xff]
        %v2568 = vld [vmem:[%s2566 + $0x8] sm:$0xff]
        %v2569 = vld [vmem:[%s2566 + $0x10] sm:$0xff]
        %v2570 = vld [vmem:[%s2566 + $0x18] sm:$0xff]
        %v2571 = vld [vmem:[%s2566 + $0x20] sm:$0xff]
        %v2572 = vld [vmem:[%s2566 + $0x28] sm:$0xff]
        %v2573 = vld [vmem:[%s2566 + $0x30] sm:$0xff]
        %v2574 = vld [vmem:[%s2566 + $0x38] sm:$0xff]
        %v2583 = vunpack.c.l.b16 %v2567
        %v2584 = vunpack.c.h.b16 %v2567
        %v2585 = vunpack.c.l.b16 %v2568
        %v2586 = vunpack.c.h.b16 %v2568
        %v2587 = vunpack.c.l.b16 %v2569
        %v2588 = vunpack.c.h.b16 %v2569
        %v2589 = vunpack.c.l.b16 %v2570
        %v2590 = vunpack.c.h.b16 %v2570
        %v2591 = vunpack.c.l.b16 %v2571
        %v2592 = vunpack.c.h.b16 %v2571
        %v2593 = vunpack.c.l.b16 %v2572
        %v2594 = vunpack.c.h.b16 %v2572
        %v2595 = vunpack.c.l.b16 %v2573
        %v2596 = vunpack.c.h.b16 %v2573
        %v2597 = vunpack.c.l.b16 %v2574
        %v2598 = vunpack.c.h.b16 %v2574
        %v2599 = vpack.c.b16 %v2585, %v2583
        %v2600 = vpack.c.b16 %v2586, %v2584
        %v2601 = vpack.c.b16 %v2589, %v2587
        %v2602 = vpack.c.b16 %v2590, %v2588
        %v2603 = vpack.c.b16 %v2593, %v2591
        %v2604 = vpack.c.b16 %v2594, %v2592
        %v2605 = vpack.c.b16 %v2597, %v2595
        %v2606 = vpack.c.b16 %v2598, %v2596
        %2615 = vmatprep.subr.bf16.mxu0 0
        %2616 = vmatpush1.bf16.msra.mxu0 %v1725
        %2617 = vmatprep.subr.bf16.mxu0 0
        %2618 = vmatpush1.bf16.msra.mxu0 %v1726
        %2619 = vmatprep.subr.bf16.mxu0 0
        %2620 = vmatpush1.bf16.msra.mxu0 %v1727
        %2621 = vmatprep.subr.bf16.mxu0 0
        %2622 = vmatpush1.bf16.msra.mxu0 %v1728
        %2623 = vmatprep.subr.bf16.mxu0 0
        %2624 = vmatpush1.bf16.msra.mxu0 %v1729
        %2625 = vmatprep.subr.bf16.mxu0 0
        %2626 = vmatpush1.bf16.msra.mxu0 %v1730
        %2627 = vmatprep.subr.bf16.mxu0 0
        %2628 = vmatpush1.bf16.msra.mxu0 %v1731
        %2629 = vmatprep.subr.bf16.mxu0 0
        %2630 = vmatpush1.bf16.msra.mxu0 %v1732
        %2631 = vmatprep.subr.bf16.mxu0 0
        %2632 = vmatpush1.bf16.msra.mxu0 %v1733
        %2633 = vmatprep.subr.bf16.mxu0 0
        %2634 = vmatpush1.bf16.msra.mxu0 %v1734
        %2635 = vmatprep.subr.bf16.mxu0 0
        %2636 = vmatpush1.bf16.msra.mxu0 %v1735
        %2637 = vmatprep.subr.bf16.mxu0 0
        %2638 = vmatpush1.bf16.msra.mxu0 %v1736
        %2639 = vmatprep.subr.bf16.mxu0 0
        %2640 = vmatpush1.bf16.msra.mxu0 %v1737
        %2641 = vmatprep.subr.bf16.mxu0 0
        %2642 = vmatpush1.bf16.msra.mxu0 %v1738
        %2643 = vmatprep.subr.bf16.mxu0 0
        %2644 = vmatpush1.bf16.msra.mxu0 %v1739
        %2645 = vmatprep.subr.bf16.mxu0 0
        %2646 = vmatpush1.bf16.msra.mxu0 %v1740
        %2647 = vmatprep.mubr.bf16.mxu0 %v2600
        %2648 = vmatmul.mubr.bf16.gmra.mrb[0].mxu0 %v2599
        %v2649 = vpop.f32.mrb[0].mxu0
        %v2650 = vadd.f32 0.0, %v2649
        %v2651 = vpop.f32.mrb[0].mxu0
        %v2652 = vpop.f32.mrb[0].mxu0
        %v2653 = vadd.f32 0.0, %v2652
        %v2654 = vpop.f32.mrb[0].mxu0
        %2655 = vmatprep.mubr.bf16.mxu0 %v2602
        %2656 = vmatmul.mubr.bf16.gmra.mrb[0].mxu0 %v2601
        %v2657 = vpop.f32.mrb[0].mxu0
        %v2658 = vadd.f32 0.0, %v2657
        %v2659 = vpop.f32.mrb[0].mxu0
        %v2660 = vpop.f32.mrb[0].mxu0
        %v2661 = vadd.f32 0.0, %v2660
        %v2662 = vpop.f32.mrb[0].mxu0
        %2663 = vmatprep.mubr.bf16.mxu0 %v2604
        %2664 = vmatmul.mubr.bf16.gmra.mrb[0].mxu0 %v2603
        %v2665 = vpop.f32.mrb[0].mxu0
        %v2666 = vadd.f32 0.0, %v2665
        %v2667 = vpop.f32.mrb[0].mxu0
        %v2668 = vpop.f32.mrb[0].mxu0
        %v2669 = vadd.f32 0.0, %v2668
        %v2670 = vpop.f32.mrb[0].mxu0
        %2671 = vmatprep.mubr.bf16.mxu0 %v2606
        %2672 = vmatmul.mubr.bf16.gmra.mrb[0].mxu0 %v2605
        %v2673 = vpop.f32.mrb[0].mxu0
        %v2674 = vadd.f32 0.0, %v2673
        %v2675 = vpop.f32.mrb[0].mxu0
        %v2676 = vpop.f32.mrb[0].mxu0
        %v2677 = vadd.f32 0.0, %v2676
        %v2678 = vpop.f32.mrb[0].mxu0
        %2679 = vdwg.mxu0
        %v2680 = vpack.c.bf16 %v2653, %v2650
        %v2681 = vpack.c.bf16 %v2661, %v2658
        %v2682 = vpack.c.bf16 %v2669, %v2666
        %v2683 = vpack.c.bf16 %v2677, %v2674
        %s2684 = scalar_lea.vmem %s7, 512
        %v2685 = vld [vmem:[%s2684] sm:$0xff]
        %v2686 = vld [vmem:[%s2684 + $0x8] sm:$0xff]
        %v2687 = vld [vmem:[%s2684 + $0x10] sm:$0xff]
        %v2688 = vld [vmem:[%s2684 + $0x18] sm:$0xff]
        %v2689 = vld [vmem:[%s2684 + $0x20] sm:$0xff]
        %v2690 = vld [vmem:[%s2684 + $0x28] sm:$0xff]
        %v2691 = vld [vmem:[%s2684 + $0x30] sm:$0xff]
        %v2692 = vld [vmem:[%s2684 + $0x38] sm:$0xff]
        %v2701 = vunpack.c.l.b16 %v2685
        %v2702 = vunpack.c.h.b16 %v2685
        %v2703 = vunpack.c.l.b16 %v2686
        %v2704 = vunpack.c.h.b16 %v2686
        %v2705 = vunpack.c.l.b16 %v2687
        %v2706 = vunpack.c.h.b16 %v2687
        %v2707 = vunpack.c.l.b16 %v2688
        %v2708 = vunpack.c.h.b16 %v2688
        %v2709 = vunpack.c.l.b16 %v2689
        %v2710 = vunpack.c.h.b16 %v2689
        %v2711 = vunpack.c.l.b16 %v2690
        %v2712 = vunpack.c.h.b16 %v2690
        %v2713 = vunpack.c.l.b16 %v2691
        %v2714 = vunpack.c.h.b16 %v2691
        %v2715 = vunpack.c.l.b16 %v2692
        %v2716 = vunpack.c.h.b16 %v2692
        %v2717 = vpack.c.b16 %v2703, %v2701
        %v2718 = vpack.c.b16 %v2704, %v2702
        %v2719 = vpack.c.b16 %v2707, %v2705
        %v2720 = vpack.c.b16 %v2708, %v2706
        %v2721 = vpack.c.b16 %v2711, %v2709
        %v2722 = vpack.c.b16 %v2712, %v2710
        %v2723 = vpack.c.b16 %v2715, %v2713
        %v2724 = vpack.c.b16 %v2716, %v2714
        %2733 = vmatprep.subr.bf16.mxu0 0
        %2734 = vmatpush1.bf16.msra.mxu0 %v1725
        %2735 = vmatprep.subr.bf16.mxu0 0
        %2736 = vmatpush1.bf16.msra.mxu0 %v1726
        %2737 = vmatprep.subr.bf16.mxu0 0
        %2738 = vmatpush1.bf16.msra.mxu0 %v1727
        %2739 = vmatprep.subr.bf16.mxu0 0
        %2740 = vmatpush1.bf16.msra.mxu0 %v1728
        %2741 = vmatprep.subr.bf16.mxu0 0
        %2742 = vmatpush1.bf16.msra.mxu0 %v1729
        %2743 = vmatprep.subr.bf16.mxu0 0
        %2744 = vmatpush1.bf16.msra.mxu0 %v1730
        %2745 = vmatprep.subr.bf16.mxu0 0
        %2746 = vmatpush1.bf16.msra.mxu0 %v1731
        %2747 = vmatprep.subr.bf16.mxu0 0
        %2748 = vmatpush1.bf16.msra.mxu0 %v1732
        %2749 = vmatprep.subr.bf16.mxu0 0
        %2750 = vmatpush1.bf16.msra.mxu0 %v1733
        %2751 = vmatprep.subr.bf16.mxu0 0
        %2752 = vmatpush1.bf16.msra.mxu0 %v1734
        %2753 = vmatprep.subr.bf16.mxu0 0
        %2754 = vmatpush1.bf16.msra.mxu0 %v1735
        %2755 = vmatprep.subr.bf16.mxu0 0
        %2756 = vmatpush1.bf16.msra.mxu0 %v1736
        %2757 = vmatprep.subr.bf16.mxu0 0
        %2758 = vmatpush1.bf16.msra.mxu0 %v1737
        %2759 = vmatprep.subr.bf16.mxu0 0
        %2760 = vmatpush1.bf16.msra.mxu0 %v1738
        %2761 = vmatprep.subr.bf16.mxu0 0
        %2762 = vmatpush1.bf16.msra.mxu0 %v1739
        %2763 = vmatprep.subr.bf16.mxu0 0
        %2764 = vmatpush1.bf16.msra.mxu0 %v1740
        %2765 = vmatprep.mubr.bf16.mxu0 %v2718
        %2766 = vmatmul.mubr.bf16.gmra.mrb[0].mxu0 %v2717
        %v2767 = vpop.f32.mrb[0].mxu0
        %v2768 = vadd.f32 0.0, %v2767
        %v2769 = vpop.f32.mrb[0].mxu0
        %v2770 = vpop.f32.mrb[0].mxu0
        %v2771 = vadd.f32 0.0, %v2770
        %v2772 = vpop.f32.mrb[0].mxu0
        %2773 = vmatprep.mubr.bf16.mxu0 %v2720
        %2774 = vmatmul.mubr.bf16.gmra.mrb[0].mxu0 %v2719
        %v2775 = vpop.f32.mrb[0].mxu0
        %v2776 = vadd.f32 0.0, %v2775
        %v2777 = vpop.f32.mrb[0].mxu0
        %v2778 = vpop.f32.mrb[0].mxu0
        %v2779 = vadd.f32 0.0, %v2778
        %v2780 = vpop.f32.mrb[0].mxu0
        %2781 = vmatprep.mubr.bf16.mxu0 %v2722
        %2782 = vmatmul.mubr.bf16.gmra.mrb[0].mxu0 %v2721
        %v2783 = vpop.f32.mrb[0].mxu0
        %v2784 = vadd.f32 0.0, %v2783
        %v2785 = vpop.f32.mrb[0].mxu0
        %v2786 = vpop.f32.mrb[0].mxu0
        %v2787 = vadd.f32 0.0, %v2786
        %v2788 = vpop.f32.mrb[0].mxu0
        %2789 = vmatprep.mubr.bf16.mxu0 %v2724
        %2790 = vmatmul.mubr.bf16.gmra.mrb[0].mxu0 %v2723
        %v2791 = vpop.f32.mrb[0].mxu0
        %v2792 = vadd.f32 0.0, %v2791
        %v2793 = vpop.f32.mrb[0].mxu0
        %v2794 = vpop.f32.mrb[0].mxu0
        %v2795 = vadd.f32 0.0, %v2794
        %v2796 = vpop.f32.mrb[0].mxu0
        %2797 = vdwg.mxu0
        %v2798 = vpack.c.bf16 %v2771, %v2768
        %v2799 = vpack.c.bf16 %v2779, %v2776
        %v2800 = vpack.c.bf16 %v2787, %v2784
        %v2801 = vpack.c.bf16 %v2795, %v2792
        %2806 = vrot.lane.b32.xlu0 %v1972, 16
        %v2807 = vpop.permute.xlu0 %2806
        %2808 = vrot.lane.b32.xlu0 %v1973, 16
        %v2809 = vpop.permute.xlu0 %2808
        %2810 = vrot.lane.b32.xlu0 %v1974, 16
        %v2811 = vpop.permute.xlu0 %2810
        %2812 = vrot.lane.b32.xlu0 %v1975, 16
        %v2813 = vpop.permute.xlu0 %2812
        %2818 = vrot.lane.b32.xlu0 %v2090, 32
        %v2819 = vpop.permute.xlu0 %2818
        %2820 = vrot.lane.b32.xlu0 %v2091, 32
        %v2821 = vpop.permute.xlu0 %2820
        %2822 = vrot.lane.b32.xlu0 %v2092, 32
        %v2823 = vpop.permute.xlu0 %2822
        %2824 = vrot.lane.b32.xlu0 %v2093, 32
        %v2825 = vpop.permute.xlu0 %2824
        %2830 = vrot.lane.b32.xlu0 %v2208, 48
        %v2831 = vpop.permute.xlu0 %2830
        %2832 = vrot.lane.b32.xlu0 %v2209, 48
        %v2833 = vpop.permute.xlu0 %2832
        %2834 = vrot.lane.b32.xlu0 %v2210, 48
        %v2835 = vpop.permute.xlu0 %2834
        %2836 = vrot.lane.b32.xlu0 %v2211, 48
        %v2837 = vpop.permute.xlu0 %2836
        %2842 = vrot.lane.b32.xlu0 %v2326, 64
        %v2843 = vpop.permute.xlu0 %2842
        %2844 = vrot.lane.b32.xlu0 %v2327, 64
        %v2845 = vpop.permute.xlu0 %2844
        %2846 = vrot.lane.b32.xlu0 %v2328, 64
        %v2847 = vpop.permute.xlu0 %2846
        %2848 = vrot.lane.b32.xlu0 %v2329, 64
        %v2849 = vpop.permute.xlu0 %2848
        %2854 = vrot.lane.b32.xlu0 %v2444, 80
        %v2855 = vpop.permute.xlu0 %2854
        %2856 = vrot.lane.b32.xlu0 %v2445, 80
        %v2857 = vpop.permute.xlu0 %2856
        %2858 = vrot.lane.b32.xlu0 %v2446, 80
        %v2859 = vpop.permute.xlu0 %2858
        %2860 = vrot.lane.b32.xlu0 %v2447, 80
        %v2861 = vpop.permute.xlu0 %2860
        %2866 = vrot.lane.b32.xlu0 %v2562, 96
        %v2867 = vpop.permute.xlu0 %2866
        %2868 = vrot.lane.b32.xlu0 %v2563, 96
        %v2869 = vpop.permute.xlu0 %2868
        %2870 = vrot.lane.b32.xlu0 %v2564, 96
        %v2871 = vpop.permute.xlu0 %2870
        %2872 = vrot.lane.b32.xlu0 %v2565, 96
        %v2873 = vpop.permute.xlu0 %2872
        %2878 = vrot.lane.b32.xlu0 %v2680, 112
        %v2879 = vpop.permute.xlu0 %2878
        %2880 = vrot.lane.b32.xlu0 %v2681, 112
        %v2881 = vpop.permute.xlu0 %2880
        %2882 = vrot.lane.b32.xlu0 %v2682, 112
        %v2883 = vpop.permute.xlu0 %2882
        %2884 = vrot.lane.b32.xlu0 %v2683, 112
        %v2885 = vpop.permute.xlu0 %2884
        %vm2886 = vcmask 130048
        %v2889 = vsel %vm2886, %v1854, %v2807
        %v2892 = vsel %vm2886, %v1855, %v2809
        %v2895 = vsel %vm2886, %v1856, %v2811
        %v2898 = vsel %vm2886, %v1857, %v2813
        %vm2899 = vcmask 261120
        %v2901 = vsel %vm2899, %v2889, %v2819
        %v2903 = vsel %vm2899, %v2892, %v2821
        %v2905 = vsel %vm2899, %v2895, %v2823
        %v2907 = vsel %vm2899, %v2898, %v2825
        %vm2908 = vcmask 392192
        %v2910 = vsel %vm2908, %v2901, %v2831
        %v2912 = vsel %vm2908, %v2903, %v2833
        %v2914 = vsel %vm2908, %v2905, %v2835
        %v2916 = vsel %vm2908, %v2907, %v2837
        %vm2917 = vcmask 523264
        %v2919 = vsel %vm2917, %v2910, %v2843
        %v2921 = vsel %vm2917, %v2912, %v2845
        %v2923 = vsel %vm2917, %v2914, %v2847
        %v2925 = vsel %vm2917, %v2916, %v2849
        %vm2926 = vcmask 654336
        %v2928 = vsel %vm2926, %v2919, %v2855
        %v2930 = vsel %vm2926, %v2921, %v2857
        %v2932 = vsel %vm2926, %v2923, %v2859
        %v2934 = vsel %vm2926, %v2925, %v2861
        %vm2935 = vcmask 785408
        %v2937 = vsel %vm2935, %v2928, %v2867
        %v2939 = vsel %vm2935, %v2930, %v2869
        %v2941 = vsel %vm2935, %v2932, %v2871
        %v2943 = vsel %vm2935, %v2934, %v2873
        %vm2944 = vcmask 916480
        %v2946 = vsel %vm2944, %v2937, %v2879
        %v2949 = vsel %vm2944, %v2939, %v2881
        %v2952 = vsel %vm2944, %v2941, %v2883
        %v2955 = vsel %vm2944, %v2943, %v2885
        %v2957 = vld [vmem:[%s9] sm:$0xf]
        %v2958 = vld [vmem:[%s9 + $0x4] sm:$0xf]
        %v2959 = vld [vmem:[%s9 + $0x8] sm:$0xf]
        %v2960 = vld [vmem:[%s9 + $0xc] sm:$0xf]
        %v2961 = vld [vmem:[%s9 + $0x10] sm:$0xf]
        %v2962 = vld [vmem:[%s9 + $0x14] sm:$0xf]
        %v2963 = vld [vmem:[%s9 + $0x18] sm:$0xf]
        %v2964 = vld [vmem:[%s9 + $0x1c] sm:$0xf]
        %v2965 = vld [vmem:[%s9 + $0x20] sm:$0xf]
        %v2966 = vld [vmem:[%s9 + $0x24] sm:$0xf]
        %v2967 = vld [vmem:[%s9 + $0x28] sm:$0xf]
        %v2968 = vld [vmem:[%s9 + $0x2c] sm:$0xf]
        %v2969 = vld [vmem:[%s9 + $0x30] sm:$0xf]
        %v2970 = vld [vmem:[%s9 + $0x34] sm:$0xf]
        %v2971 = vld [vmem:[%s9 + $0x38] sm:$0xf]
        %v2972 = vld [vmem:[%s9 + $0x3c] sm:$0xf]
        %v2973 = vld [vmem:[%s9 + $0x40] sm:$0xf]
        %v2974 = vld [vmem:[%s9 + $0x44] sm:$0xf]
        %v2975 = vld [vmem:[%s11] sm:$0x1]
        %v2977 = vlaneseq
        %v2978 = vshrl.u32 %v2977, 7
        %v2979 = vsub.s32 0, %v2978
        %v2980 = vrot.slane %v2975, %v2979
        %v3000 = vunpack.c.l.b16 %v2957
        %v3001 = vunpack.c.l.b16 %v2958
        %v3002 = vunpack.c.l.b16 %v2959
        %v3003 = vunpack.c.l.b16 %v2960
        %v3004 = vunpack.c.l.b16 %v2961
        %v3005 = vunpack.c.l.b16 %v2962
        %v3006 = vunpack.c.l.b16 %v2963
        %v3007 = vunpack.c.l.b16 %v2964
        %v3008 = vunpack.c.l.b16 %v2965
        %v3009 = vunpack.c.l.b16 %v2966
        %v3010 = vunpack.c.l.b16 %v2967
        %v3011 = vunpack.c.l.b16 %v2968
        %v3012 = vunpack.c.l.b16 %v2969
        %v3013 = vunpack.c.l.b16 %v2970
        %v3014 = vunpack.c.l.b16 %v2971
        %v3015 = vunpack.c.l.b16 %v2972
        %v3016 = vunpack.c.l.b16 %v2973
        %v3017 = vunpack.c.l.b16 %v2974
        %v3018 = vpack.c.b16 %v3001, %v3000
        %v3019 = vpack.c.b16 %v3003, %v3002
        %v3020 = vpack.c.b16 %v3005, %v3004
        %v3021 = vpack.c.b16 %v3007, %v3006
        %v3022 = vpack.c.b16 %v3009, %v3008
        %v3023 = vpack.c.b16 %v3011, %v3010
        %v3024 = vpack.c.b16 %v3013, %v3012
        %v3025 = vpack.c.b16 %v3015, %v3014
        %v3026 = vpack.c.b16 %v3017, %v3016
        %v3037 = vsel %vm2886, %v2798, 0
        %v3040 = vsel %vm2886, %v2799, 0
        %v3043 = vsel %vm2886, %v2800, 0
        %v3046 = vsel %vm2886, %v2801, 0
        %3048 = vmatprep.subr.bf16.mxu0 0
        %3049 = vmatpush1.bf16.msra.mxu0 %v3018
        %3050 = vmatprep.subr.bf16.mxu0 0
        %3051 = vmatpush1.bf16.msra.mxu0 %v3019
        %3052 = vmatprep.subr.bf16.mxu0 0
        %3053 = vmatpush1.bf16.msra.mxu0 %v3020
        %3054 = vmatprep.subr.bf16.mxu0 0
        %3055 = vmatpush1.bf16.msra.mxu0 %v3021
        %3056 = vmatprep.subr.bf16.mxu0 0
        %3057 = vmatpush1.bf16.msra.mxu0 %v3022
        %3058 = vmatprep.subr.bf16.mxu0 0
        %3059 = vmatpush1.bf16.msra.mxu0 %v3023
        %3060 = vmatprep.subr.bf16.mxu0 0
        %3061 = vmatpush1.bf16.msra.mxu0 %v3024
        %3062 = vmatprep.subr.bf16.mxu0 0
        %3063 = vmatpush1.bf16.msra.mxu0 %v3025
        %3064 = vmatprep.subr.bf16.mxu0 0
        %3065 = vmatpush1.bf16.msra.mxu0 %v3026
        %3066 = vmatprep.subr.bf16.mxu0 0
        %3067 = vmatpush1.bf16.msra.mxu0 0
        %3068 = vmatprep.subr.bf16.mxu0 0
        %3069 = vmatpush1.bf16.msra.mxu0 0
        %3070 = vmatprep.subr.bf16.mxu0 0
        %3071 = vmatpush1.bf16.msra.mxu0 0
        %3072 = vmatprep.subr.bf16.mxu0 0
        %3073 = vmatpush1.bf16.msra.mxu0 0
        %3074 = vmatprep.subr.bf16.mxu0 0
        %3075 = vmatpush1.bf16.msra.mxu0 0
        %3076 = vmatprep.subr.bf16.mxu0 0
        %3077 = vmatpush1.bf16.msra.mxu0 0
        %3078 = vmatprep.subr.bf16.mxu0 0
        %3079 = vmatpush1.bf16.msra.mxu0 0
        %3080 = vmatprep.mubr.bf16.mxu0 %v3037
        %3081 = vmatmul.mubr.bf16.gmra.mrb[0].mxu0 %v2946
        %v3082 = vpop.f32.mrb[0].mxu0
        %v3083 = vadd.f32 %v2980, %v3082
        %v3084 = vpop.f32.mrb[0].mxu0
        %v3085 = vpop.f32.mrb[0].mxu0
        %v3086 = vadd.f32 %v2980, %v3085
        %v3087 = vpop.f32.mrb[0].mxu0
        %3088 = vmatprep.mubr.bf16.mxu0 %v3040
        %3089 = vmatmul.mubr.bf16.gmra.mrb[0].mxu0 %v2949
        %v3090 = vpop.f32.mrb[0].mxu0
        %v3091 = vadd.f32 %v2980, %v3090
        %v3092 = vpop.f32.mrb[0].mxu0
        %v3093 = vpop.f32.mrb[0].mxu0
        %v3094 = vadd.f32 %v2980, %v3093
        %v3095 = vpop.f32.mrb[0].mxu0
        %3096 = vmatprep.mubr.bf16.mxu0 %v3043
        %3097 = vmatmul.mubr.bf16.gmra.mrb[0].mxu0 %v2952
        %v3098 = vpop.f32.mrb[0].mxu0
        %v3099 = vadd.f32 %v2980, %v3098
        %v3100 = vpop.f32.mrb[0].mxu0
        %v3101 = vpop.f32.mrb[0].mxu0
        %v3102 = vadd.f32 %v2980, %v3101
        %v3103 = vpop.f32.mrb[0].mxu0
        %3104 = vmatprep.mubr.bf16.mxu0 %v3046
        %3105 = vmatmul.mubr.bf16.gmra.mrb[0].mxu0 %v2955
        %v3106 = vpop.f32.mrb[0].mxu0
        %v3107 = vadd.f32 %v2980, %v3106
        %v3108 = vpop.f32.mrb[0].mxu0
        %v3109 = vpop.f32.mrb[0].mxu0
        %v3110 = vadd.f32 %v2980, %v3109
        %v3111 = vpop.f32.mrb[0].mxu0
        %3112 = vdwg.mxu0
        %vm3113 = vcmp.ge.f32.partialorder %v3083, 0.0
        %vm3114 = vcmp.ge.f32.partialorder %v3086, 0.0
        %vm3115 = vcmp.ge.f32.partialorder %v3091, 0.0
        %vm3116 = vcmp.ge.f32.partialorder %v3094, 0.0
        %vm3117 = vcmp.ge.f32.partialorder %v3099, 0.0
        %vm3118 = vcmp.ge.f32.partialorder %v3102, 0.0
        %vm3119 = vcmp.ge.f32.partialorder %v3107, 0.0
        %vm3120 = vcmp.ge.f32.partialorder %v3110, 0.0
        %v3121 = vmul.f32 %v3083, 0.01
        %v3122 = vmul.f32 %v3086, 0.01
        %v3123 = vmul.f32 %v3091, 0.01
        %v3124 = vmul.f32 %v3094, 0.01
        %v3125 = vmul.f32 %v3099, 0.01
        %v3126 = vmul.f32 %v3102, 0.01
        %v3127 = vmul.f32 %v3107, 0.01
        %v3128 = vmul.f32 %v3110, 0.01
        %v3129 = vsel %vm3113, %v3083, %v3121
        %v3130 = vsel %vm3114, %v3086, %v3122
        %v3131 = vsel %vm3115, %v3091, %v3123
        %v3132 = vsel %vm3116, %v3094, %v3124
        %v3133 = vsel %vm3117, %v3099, %v3125
        %v3134 = vsel %vm3118, %v3102, %v3126
        %v3135 = vsel %vm3119, %v3107, %v3127
        %v3136 = vsel %vm3120, %v3110, %v3128
        %v3137 = vpack.c.bf16 %v3130, %v3129
        %v3138 = vpack.c.bf16 %v3132, %v3131
        %v3139 = vpack.c.bf16 %v3134, %v3133
        %v3140 = vpack.c.bf16 %v3136, %v3135
        %v3141 = vld [vmem:[%s13] sm:$0xff]
        %v3142 = vld [vmem:[%s13 + $0x8] sm:$0xff]
        %v3143 = vld [vmem:[%s13 + $0x10] sm:$0xff]
        %v3144 = vld [vmem:[%s13 + $0x18] sm:$0xff]
        %v3145 = vld [vmem:[%s13 + $0x20] sm:$0xff]
        %v3146 = vld [vmem:[%s13 + $0x28] sm:$0xff]
        %v3147 = vld [vmem:[%s13 + $0x30] sm:$0xff]
        %v3148 = vld [vmem:[%s13 + $0x38] sm:$0xff]
        %v3157 = vunpack.c.l.b16 %v3141
        %v3158 = vunpack.c.h.b16 %v3141
        %v3159 = vunpack.c.l.b16 %v3142
        %v3160 = vunpack.c.h.b16 %v3142
        %v3161 = vunpack.c.l.b16 %v3143
        %v3162 = vunpack.c.h.b16 %v3143
        %v3163 = vunpack.c.l.b16 %v3144
        %v3164 = vunpack.c.h.b16 %v3144
        %v3165 = vunpack.c.l.b16 %v3145
        %v3166 = vunpack.c.h.b16 %v3145
        %v3167 = vunpack.c.l.b16 %v3146
        %v3168 = vunpack.c.h.b16 %v3146
        %v3169 = vunpack.c.l.b16 %v3147
        %v3170 = vunpack.c.h.b16 %v3147
        %v3171 = vunpack.c.l.b16 %v3148
        %v3172 = vunpack.c.h.b16 %v3148
        %v3173 = vpack.c.b16 %v3159, %v3157
        %v3174 = vpack.c.b16 %v3160, %v3158
        %v3175 = vpack.c.b16 %v3163, %v3161
        %v3176 = vpack.c.b16 %v3164, %v3162
        %v3177 = vpack.c.b16 %v3167, %v3165
        %v3178 = vpack.c.b16 %v3168, %v3166
        %v3179 = vpack.c.b16 %v3171, %v3169
        %v3180 = vpack.c.b16 %v3172, %v3170
        %3189 = vmatprep.subr.bf16.mxu0 0
        %3190 = vmatpush1.bf16.msra.mxu0 %v1725
        %3191 = vmatprep.subr.bf16.mxu0 0
        %3192 = vmatpush1.bf16.msra.mxu0 %v1726
        %3193 = vmatprep.subr.bf16.mxu0 0
        %3194 = vmatpush1.bf16.msra.mxu0 %v1727
        %3195 = vmatprep.subr.bf16.mxu0 0
        %3196 = vmatpush1.bf16.msra.mxu0 %v1728
        %3197 = vmatprep.subr.bf16.mxu0 0
        %3198 = vmatpush1.bf16.msra.mxu0 %v1729
        %3199 = vmatprep.subr.bf16.mxu0 0
        %3200 = vmatpush1.bf16.msra.mxu0 %v1730
        %3201 = vmatprep.subr.bf16.mxu0 0
        %3202 = vmatpush1.bf16.msra.mxu0 %v1731
        %3203 = vmatprep.subr.bf16.mxu0 0
        %3204 = vmatpush1.bf16.msra.mxu0 %v1732
        %3205 = vmatprep.subr.bf16.mxu0 0
        %3206 = vmatpush1.bf16.msra.mxu0 %v1733
        %3207 = vmatprep.subr.bf16.mxu0 0
        %3208 = vmatpush1.bf16.msra.mxu0 %v1734
        %3209 = vmatprep.subr.bf16.mxu0 0
        %3210 = vmatpush1.bf16.msra.mxu0 %v1735
        %3211 = vmatprep.subr.bf16.mxu0 0
        %3212 = vmatpush1.bf16.msra.mxu0 %v1736
        %3213 = vmatprep.subr.bf16.mxu0 0
        %3214 = vmatpush1.bf16.msra.mxu0 %v1737
        %3215 = vmatprep.subr.bf16.mxu0 0
        %3216 = vmatpush1.bf16.msra.mxu0 %v1738
        %3217 = vmatprep.subr.bf16.mxu0 0
        %3218 = vmatpush1.bf16.msra.mxu0 %v1739
        %3219 = vmatprep.subr.bf16.mxu0 0
        %3220 = vmatpush1.bf16.msra.mxu0 %v1740
        %3221 = vmatprep.mubr.bf16.mxu0 %v3174
        %3222 = vmatmul.mubr.bf16.gmra.mrb[0].mxu0 %v3173
        %v3223 = vpop.f32.mrb[0].mxu0
        %v3224 = vadd.f32 0.0, %v3223
        %v3225 = vpop.f32.mrb[0].mxu0
        %v3226 = vpop.f32.mrb[0].mxu0
        %v3227 = vadd.f32 0.0, %v3226
        %v3228 = vpop.f32.mrb[0].mxu0
        %3229 = vmatprep.mubr.bf16.mxu0 %v3176
        %3230 = vmatmul.mubr.bf16.gmra.mrb[0].mxu0 %v3175
        %v3231 = vpop.f32.mrb[0].mxu0
        %v3232 = vadd.f32 0.0, %v3231
        %v3233 = vpop.f32.mrb[0].mxu0
        %v3234 = vpop.f32.mrb[0].mxu0
        %v3235 = vadd.f32 0.0, %v3234
        %v3236 = vpop.f32.mrb[0].mxu0
        %3237 = vmatprep.mubr.bf16.mxu0 %v3178
        %3238 = vmatmul.mubr.bf16.gmra.mrb[0].mxu0 %v3177
        %v3239 = vpop.f32.mrb[0].mxu0
        %v3240 = vadd.f32 0.0, %v3239
        %v3241 = vpop.f32.mrb[0].mxu0
        %v3242 = vpop.f32.mrb[0].mxu0
        %v3243 = vadd.f32 0.0, %v3242
        %v3244 = vpop.f32.mrb[0].mxu0
        %3245 = vmatprep.mubr.bf16.mxu0 %v3180
        %3246 = vmatmul.mubr.bf16.gmra.mrb[0].mxu0 %v3179
        %v3247 = vpop.f32.mrb[0].mxu0
        %v3248 = vadd.f32 0.0, %v3247
        %v3249 = vpop.f32.mrb[0].mxu0
        %v3250 = vpop.f32.mrb[0].mxu0
        %v3251 = vadd.f32 0.0, %v3250
        %v3252 = vpop.f32.mrb[0].mxu0
        %3253 = vdwg.mxu0
        %v3254 = vpack.c.bf16 %v3227, %v3224
        %v3255 = vpack.c.bf16 %v3235, %v3232
        %v3256 = vpack.c.bf16 %v3243, %v3240
        %v3257 = vpack.c.bf16 %v3251, %v3248
        %v3258 = vld [vmem:[%s15] sm:$0xf]
        %v3259 = vld [vmem:[%s15 + $0x4] sm:$0xf]
        %v3260 = vld [vmem:[%s17] sm:$0x1]
        %v3262 = vlaneseq
        %v3263 = vshrl.u32 %v3262, 7
        %v3264 = vsub.s32 0, %v3263
        %v3265 = vrot.slane %v3260, %v3264
        %v3269 = vunpack.c.l.b16 %v3258
        %v3270 = vunpack.c.l.b16 %v3259
        %v3271 = vpack.c.b16 %v3270, %v3269
        %v3274 = vsel %vm2886, %v3254, 0
        %v3277 = vsel %vm2886, %v3255, 0
        %v3280 = vsel %vm2886, %v3256, 0
        %v3283 = vsel %vm2886, %v3257, 0
        %3285 = vmatprep.subr.bf16.mxu0 0
        %3286 = vmatpush1.bf16.msra.mxu0 %v3271
        %3287 = vmatprep.subr.bf16.mxu0 0
        %3288 = vmatpush1.bf16.msra.mxu0 0
        %3289 = vmatprep.subr.bf16.mxu0 0
        %3290 = vmatpush1.bf16.msra.mxu0 0
        %3291 = vmatprep.subr.bf16.mxu0 0
        %3292 = vmatpush1.bf16.msra.mxu0 0
        %3293 = vmatprep.subr.bf16.mxu0 0
        %3294 = vmatpush1.bf16.msra.mxu0 0
        %3295 = vmatprep.subr.bf16.mxu0 0
        %3296 = vmatpush1.bf16.msra.mxu0 0
        %3297 = vmatprep.subr.bf16.mxu0 0
        %3298 = vmatpush1.bf16.msra.mxu0 0
        %3299 = vmatprep.subr.bf16.mxu0 0
        %3300 = vmatpush1.bf16.msra.mxu0 0
        %3301 = vmatprep.subr.bf16.mxu0 0
        %3302 = vmatpush1.bf16.msra.mxu0 0
        %3303 = vmatprep.subr.bf16.mxu0 0
        %3304 = vmatpush1.bf16.msra.mxu0 0
        %3305 = vmatprep.subr.bf16.mxu0 0
        %3306 = vmatpush1.bf16.msra.mxu0 0
        %3307 = vmatprep.subr.bf16.mxu0 0
        %3308 = vmatpush1.bf16.msra.mxu0 0
        %3309 = vmatprep.subr.bf16.mxu0 0
        %3310 = vmatpush1.bf16.msra.mxu0 0
        %3311 = vmatprep.subr.bf16.mxu0 0
        %3312 = vmatpush1.bf16.msra.mxu0 0
        %3313 = vmatprep.subr.bf16.mxu0 0
        %3314 = vmatpush1.bf16.msra.mxu0 0
        %3315 = vmatprep.subr.bf16.mxu0 0
        %3316 = vmatpush1.bf16.msra.mxu0 0
        %3317 = vmatprep.mubr.bf16.mxu0 0
        %3318 = vmatmul.mubr.bf16.gmra.mrb[0].mxu0 %v3274
        %v3319 = vpop.f32.mrb[0].mxu0
        %v3320 = vadd.f32 %v3265, %v3319
        %v3321 = vpop.f32.mrb[0].mxu0
        %v3322 = vpop.f32.mrb[0].mxu0
        %v3323 = vadd.f32 %v3265, %v3322
        %v3324 = vpop.f32.mrb[0].mxu0
        %3325 = vmatprep.mubr.bf16.mxu0 0
        %3326 = vmatmul.mubr.bf16.gmra.mrb[0].mxu0 %v3277
        %v3327 = vpop.f32.mrb[0].mxu0
        %v3328 = vadd.f32 %v3265, %v3327
        %v3329 = vpop.f32.mrb[0].mxu0
        %v3330 = vpop.f32.mrb[0].mxu0
        %v3331 = vadd.f32 %v3265, %v3330
        %v3332 = vpop.f32.mrb[0].mxu0
        %3333 = vmatprep.mubr.bf16.mxu0 0
        %3334 = vmatmul.mubr.bf16.gmra.mrb[0].mxu0 %v3280
        %v3335 = vpop.f32.mrb[0].mxu0
        %v3336 = vadd.f32 %v3265, %v3335
        %v3337 = vpop.f32.mrb[0].mxu0
        %v3338 = vpop.f32.mrb[0].mxu0
        %v3339 = vadd.f32 %v3265, %v3338
        %v3340 = vpop.f32.mrb[0].mxu0
        %3341 = vmatprep.mubr.bf16.mxu0 0
        %3342 = vmatmul.mubr.bf16.gmra.mrb[0].mxu0 %v3283
        %v3343 = vpop.f32.mrb[0].mxu0
        %v3344 = vadd.f32 %v3265, %v3343
        %v3345 = vpop.f32.mrb[0].mxu0
        %v3346 = vpop.f32.mrb[0].mxu0
        %v3347 = vadd.f32 %v3265, %v3346
        %v3348 = vpop.f32.mrb[0].mxu0
        %3349 = vdwg.mxu0
        %v3350 = vld [vmem:[%s19] sm:$0xf]
        %v3351 = vld [vmem:[%s19 + $0x4] sm:$0xf]
        %v3352 = vld [vmem:[%s19 + $0x8] sm:$0xf]
        %v3353 = vld [vmem:[%s19 + $0xc] sm:$0xf]
        %v3354 = vld [vmem:[%s19 + $0x10] sm:$0xf]
        %v3355 = vld [vmem:[%s19 + $0x14] sm:$0xf]
        %v3356 = vld [vmem:[%s19 + $0x18] sm:$0xf]
        %v3357 = vld [vmem:[%s19 + $0x1c] sm:$0xf]
        %v3366 = vunpack.c.l.b16 %v3350
        %v3367 = vunpack.c.l.b16 %v3351
        %v3368 = vunpack.c.l.b16 %v3352
        %v3369 = vunpack.c.l.b16 %v3353
        %v3370 = vunpack.c.l.b16 %v3354
        %v3371 = vunpack.c.l.b16 %v3355
        %v3372 = vunpack.c.l.b16 %v3356
        %v3373 = vunpack.c.l.b16 %v3357
        %v3374 = vpack.c.b16 %v3367, %v3366
        %v3375 = vpack.c.b16 %v3369, %v3368
        %v3376 = vpack.c.b16 %v3371, %v3370
        %v3377 = vpack.c.b16 %v3373, %v3372
        %v3379 = vsel %vm2917, %v3374, 0
        %v3382 = vsel %vm2917, %v3375, 0
        %v3385 = vsel %vm2917, %v3376, 0
        %v3388 = vsel %vm2917, %v3377, 0
        %3390 = vmatprep.subr.bf16.mxu0 0
        %3391 = vmatpush1.bf16.msra.mxu0 %v3137
        %3392 = vmatprep.subr.bf16.mxu0 0
        %3393 = vmatpush1.bf16.msra.mxu0 %v3138
        %3394 = vmatprep.subr.bf16.mxu0 0
        %3395 = vmatpush1.bf16.msra.mxu0 %v3139
        %3396 = vmatprep.subr.bf16.mxu0 0
        %3397 = vmatpush1.bf16.msra.mxu0 %v3140
        %3398 = vmatprep.subr.bf16.mxu0 0
        %3399 = vmatpush1.bf16.msra.mxu0 0
        %3400 = vmatprep.subr.bf16.mxu0 0
        %3401 = vmatpush1.bf16.msra.mxu0 0
        %3402 = vmatprep.subr.bf16.mxu0 0
        %3403 = vmatpush1.bf16.msra.mxu0 0
        %3404 = vmatprep.subr.bf16.mxu0 0
        %3405 = vmatpush1.bf16.msra.mxu0 0
        %3406 = vmatprep.subr.bf16.mxu0 0
        %3407 = vmatpush1.bf16.msra.mxu0 0
        %3408 = vmatprep.subr.bf16.mxu0 0
        %3409 = vmatpush1.bf16.msra.mxu0 0
        %3410 = vmatprep.subr.bf16.mxu0 0
        %3411 = vmatpush1.bf16.msra.mxu0 0
        %3412 = vmatprep.subr.bf16.mxu0 0
        %3413 = vmatpush1.bf16.msra.mxu0 0
        %3414 = vmatprep.subr.bf16.mxu0 0
        %3415 = vmatpush1.bf16.msra.mxu0 0
        %3416 = vmatprep.subr.bf16.mxu0 0
        %3417 = vmatpush1.bf16.msra.mxu0 0
        %3418 = vmatprep.subr.bf16.mxu0 0
        %3419 = vmatpush1.bf16.msra.mxu0 0
        %3420 = vmatprep.subr.bf16.mxu0 0
        %3421 = vmatpush1.bf16.msra.mxu0 0
        %3422 = vmatprep.mubr.bf16.mxu0 0
        %3423 = vmatmul.mubr.bf16.gmra.mrb[0].mxu0 %v3379
        %v3424 = vpop.f32.mrb[0].mxu0
        %v3425 = vadd.f32 0.0, %v3424
        %v3426 = vpop.f32.mrb[0].mxu0
        %v3427 = vpop.f32.mrb[0].mxu0
        %v3428 = vadd.f32 0.0, %v3427
        %v3429 = vpop.f32.mrb[0].mxu0
        %3430 = vmatprep.mubr.bf16.mxu0 0
        %3431 = vmatmul.mubr.bf16.gmra.mrb[0].mxu0 %v3382
        %v3432 = vpop.f32.mrb[0].mxu0
        %v3433 = vadd.f32 0.0, %v3432
        %v3434 = vpop.f32.mrb[0].mxu0
        %v3435 = vpop.f32.mrb[0].mxu0
        %v3436 = vadd.f32 0.0, %v3435
        %v3437 = vpop.f32.mrb[0].mxu0
        %3438 = vmatprep.mubr.bf16.mxu0 0
        %3439 = vmatmul.mubr.bf16.gmra.mrb[0].mxu0 %v3385
        %v3440 = vpop.f32.mrb[0].mxu0
        %v3441 = vadd.f32 0.0, %v3440
        %v3442 = vpop.f32.mrb[0].mxu0
        %v3443 = vpop.f32.mrb[0].mxu0
        %v3444 = vadd.f32 0.0, %v3443
        %v3445 = vpop.f32.mrb[0].mxu0
        %3446 = vmatprep.mubr.bf16.mxu0 0
        %3447 = vmatmul.mubr.bf16.gmra.mrb[0].mxu0 %v3388
        %v3448 = vpop.f32.mrb[0].mxu0
        %v3449 = vadd.f32 0.0, %v3448
        %v3450 = vpop.f32.mrb[0].mxu0
        %v3451 = vpop.f32.mrb[0].mxu0
        %v3452 = vadd.f32 0.0, %v3451
        %v3453 = vpop.f32.mrb[0].mxu0
        %3454 = vdwg.mxu0
        %v3455 = vpack.c.bf16 %v3428, %v3425
        %v3456 = vpack.c.bf16 %v3436, %v3433
        %v3457 = vpack.c.bf16 %v3444, %v3441
        %v3458 = vpack.c.bf16 %v3452, %v3449
        %s3459 = scalar_lea.vmem %s19, 32
        %v3460 = vld [vmem:[%s3459] sm:$0xf]
        %v3461 = vld [vmem:[%s3459 + $0x4] sm:$0xf]
        %v3462 = vld [vmem:[%s3459 + $0x8] sm:$0xf]
        %v3463 = vld [vmem:[%s3459 + $0xc] sm:$0xf]
        %v3464 = vld [vmem:[%s3459 + $0x10] sm:$0xf]
        %v3465 = vld [vmem:[%s3459 + $0x14] sm:$0xf]
        %v3466 = vld [vmem:[%s3459 + $0x18] sm:$0xf]
        %v3467 = vld [vmem:[%s3459 + $0x1c] sm:$0xf]
        %v3476 = vunpack.c.l.b16 %v3460
        %v3477 = vunpack.c.l.b16 %v3461
        %v3478 = vunpack.c.l.b16 %v3462
        %v3479 = vunpack.c.l.b16 %v3463
        %v3480 = vunpack.c.l.b16 %v3464
        %v3481 = vunpack.c.l.b16 %v3465
        %v3482 = vunpack.c.l.b16 %v3466
        %v3483 = vunpack.c.l.b16 %v3467
        %v3484 = vpack.c.b16 %v3477, %v3476
        %v3485 = vpack.c.b16 %v3479, %v3478
        %v3486 = vpack.c.b16 %v3481, %v3480
        %v3487 = vpack.c.b16 %v3483, %v3482
        %v3489 = vsel %vm2917, %v3484, 0
        %v3492 = vsel %vm2917, %v3485, 0
        %v3495 = vsel %vm2917, %v3486, 0
        %v3498 = vsel %vm2917, %v3487, 0
        %3500 = vmatprep.subr.bf16.mxu0 0
        %3501 = vmatpush1.bf16.msra.mxu0 %v3137
        %3502 = vmatprep.subr.bf16.mxu0 0
        %3503 = vmatpush1.bf16.msra.mxu0 %v3138
        %3504 = vmatprep.subr.bf16.mxu0 0
        %3505 = vmatpush1.bf16.msra.mxu0 %v3139
        %3506 = vmatprep.subr.bf16.mxu0 0
        %3507 = vmatpush1.bf16.msra.mxu0 %v3140
        %3508 = vmatprep.subr.bf16.mxu0 0
        %3509 = vmatpush1.bf16.msra.mxu0 0
        %3510 = vmatprep.subr.bf16.mxu0 0
        %3511 = vmatpush1.bf16.msra.mxu0 0
        %3512 = vmatprep.subr.bf16.mxu0 0
        %3513 = vmatpush1.bf16.msra.mxu0 0
        %3514 = vmatprep.subr.bf16.mxu0 0
        %3515 = vmatpush1.bf16.msra.mxu0 0
        %3516 = vmatprep.subr.bf16.mxu0 0
        %3517 = vmatpush1.bf16.msra.mxu0 0
        %3518 = vmatprep.subr.bf16.mxu0 0
        %3519 = vmatpush1.bf16.msra.mxu0 0
        %3520 = vmatprep.subr.bf16.mxu0 0
        %3521 = vmatpush1.bf16.msra.mxu0 0
        %3522 = vmatprep.subr.bf16.mxu0 0
        %3523 = vmatpush1.bf16.msra.mxu0 0
        %3524 = vmatprep.subr.bf16.mxu0 0
        %3525 = vmatpush1.bf16.msra.mxu0 0
        %3526 = vmatprep.subr.bf16.mxu0 0
        %3527 = vmatpush1.bf16.msra.mxu0 0
        %3528 = vmatprep.subr.bf16.mxu0 0
        %3529 = vmatpush1.bf16.msra.mxu0 0
        %3530 = vmatprep.subr.bf16.mxu0 0
        %3531 = vmatpush1.bf16.msra.mxu0 0
        %3532 = vmatprep.mubr.bf16.mxu0 0
        %3533 = vmatmul.mubr.bf16.gmra.mrb[0].mxu0 %v3489
        %v3534 = vpop.f32.mrb[0].mxu0
        %v3535 = vadd.f32 0.0, %v3534
        %v3536 = vpop.f32.mrb[0].mxu0
        %v3537 = vpop.f32.mrb[0].mxu0
        %v3538 = vadd.f32 0.0, %v3537
        %v3539 = vpop.f32.mrb[0].mxu0
        %3540 = vmatprep.mubr.bf16.mxu0 0
        %3541 = vmatmul.mubr.bf16.gmra.mrb[0].mxu0 %v3492
        %v3542 = vpop.f32.mrb[0].mxu0
        %v3543 = vadd.f32 0.0, %v3542
        %v3544 = vpop.f32.mrb[0].mxu0
        %v3545 = vpop.f32.mrb[0].mxu0
        %v3546 = vadd.f32 0.0, %v3545
        %v3547 = vpop.f32.mrb[0].mxu0
        %3548 = vmatprep.mubr.bf16.mxu0 0
        %3549 = vmatmul.mubr.bf16.gmra.mrb[0].mxu0 %v3495
        %v3550 = vpop.f32.mrb[0].mxu0
        %v3551 = vadd.f32 0.0, %v3550
        %v3552 = vpop.f32.mrb[0].mxu0
        %v3553 = vpop.f32.mrb[0].mxu0
        %v3554 = vadd.f32 0.0, %v3553
        %v3555 = vpop.f32.mrb[0].mxu0
        %3556 = vmatprep.mubr.bf16.mxu0 0
        %3557 = vmatmul.mubr.bf16.gmra.mrb[0].mxu0 %v3498
        %v3558 = vpop.f32.mrb[0].mxu0
        %v3559 = vadd.f32 0.0, %v3558
        %v3560 = vpop.f32.mrb[0].mxu0
        %v3561 = vpop.f32.mrb[0].mxu0
        %v3562 = vadd.f32 0.0, %v3561
        %v3563 = vpop.f32.mrb[0].mxu0
        %3564 = vdwg.mxu0
        %v3565 = vpack.c.bf16 %v3538, %v3535
        %v3566 = vpack.c.bf16 %v3546, %v3543
        %v3567 = vpack.c.bf16 %v3554, %v3551
        %v3568 = vpack.c.bf16 %v3562, %v3559
        %s3569 = scalar_lea.vmem %s19, 64
        %v3570 = vld [vmem:[%s3569] sm:$0xf]
        %v3571 = vld [vmem:[%s3569 + $0x4] sm:$0xf]
        %v3572 = vld [vmem:[%s3569 + $0x8] sm:$0xf]
        %v3573 = vld [vmem:[%s3569 + $0xc] sm:$0xf]
        %v3574 = vld [vmem:[%s3569 + $0x10] sm:$0xf]
        %v3575 = vld [vmem:[%s3569 + $0x14] sm:$0xf]
        %v3576 = vld [vmem:[%s3569 + $0x18] sm:$0xf]
        %v3577 = vld [vmem:[%s3569 + $0x1c] sm:$0xf]
        %v3586 = vunpack.c.l.b16 %v3570
        %v3587 = vunpack.c.l.b16 %v3571
        %v3588 = vunpack.c.l.b16 %v3572
        %v3589 = vunpack.c.l.b16 %v3573
        %v3590 = vunpack.c.l.b16 %v3574
        %v3591 = vunpack.c.l.b16 %v3575
        %v3592 = vunpack.c.l.b16 %v3576
        %v3593 = vunpack.c.l.b16 %v3577
        %v3594 = vpack.c.b16 %v3587, %v3586
        %v3595 = vpack.c.b16 %v3589, %v3588
        %v3596 = vpack.c.b16 %v3591, %v3590
        %v3597 = vpack.c.b16 %v3593, %v3592
        %v3599 = vsel %vm2917, %v3594, 0
        %v3602 = vsel %vm2917, %v3595, 0
        %v3605 = vsel %vm2917, %v3596, 0
        %v3608 = vsel %vm2917, %v3597, 0
        %3610 = vmatprep.subr.bf16.mxu0 0
        %3611 = vmatpush1.bf16.msra.mxu0 %v3137
        %3612 = vmatprep.subr.bf16.mxu0 0
        %3613 = vmatpush1.bf16.msra.mxu0 %v3138
        %3614 = vmatprep.subr.bf16.mxu0 0
        %3615 = vmatpush1.bf16.msra.mxu0 %v3139
        %3616 = vmatprep.subr.bf16.mxu0 0
        %3617 = vmatpush1.bf16.msra.mxu0 %v3140
        %3618 = vmatprep.subr.bf16.mxu0 0
        %3619 = vmatpush1.bf16.msra.mxu0 0
        %3620 = vmatprep.subr.bf16.mxu0 0
        %3621 = vmatpush1.bf16.msra.mxu0 0
        %3622 = vmatprep.subr.bf16.mxu0 0
        %3623 = vmatpush1.bf16.msra.mxu0 0
        %3624 = vmatprep.subr.bf16.mxu0 0
        %3625 = vmatpush1.bf16.msra.mxu0 0
        %3626 = vmatprep.subr.bf16.mxu0 0
        %3627 = vmatpush1.bf16.msra.mxu0 0
        %3628 = vmatprep.subr.bf16.mxu0 0
        %3629 = vmatpush1.bf16.msra.mxu0 0
        %3630 = vmatprep.subr.bf16.mxu0 0
        %3631 = vmatpush1.bf16.msra.mxu0 0
        %3632 = vmatprep.subr.bf16.mxu0 0
        %3633 = vmatpush1.bf16.msra.mxu0 0
        %3634 = vmatprep.subr.bf16.mxu0 0
        %3635 = vmatpush1.bf16.msra.mxu0 0
        %3636 = vmatprep.subr.bf16.mxu0 0
        %3637 = vmatpush1.bf16.msra.mxu0 0
        %3638 = vmatprep.subr.bf16.mxu0 0
        %3639 = vmatpush1.bf16.msra.mxu0 0
        %3640 = vmatprep.subr.bf16.mxu0 0
        %3641 = vmatpush1.bf16.msra.mxu0 0
        %3642 = vmatprep.mubr.bf16.mxu0 0
        %3643 = vmatmul.mubr.bf16.gmra.mrb[0].mxu0 %v3599
        %v3644 = vpop.f32.mrb[0].mxu0
        %v3645 = vadd.f32 0.0, %v3644
        %v3646 = vpop.f32.mrb[0].mxu0
        %v3647 = vpop.f32.mrb[0].mxu0
        %v3648 = vadd.f32 0.0, %v3647
        %v3649 = vpop.f32.mrb[0].mxu0
        %3650 = vmatprep.mubr.bf16.mxu0 0
        %3651 = vmatmul.mubr.bf16.gmra.mrb[0].mxu0 %v3602
        %v3652 = vpop.f32.mrb[0].mxu0
        %v3653 = vadd.f32 0.0, %v3652
        %v3654 = vpop.f32.mrb[0].mxu0
        %v3655 = vpop.f32.mrb[0].mxu0
        %v3656 = vadd.f32 0.0, %v3655
        %v3657 = vpop.f32.mrb[0].mxu0
        %3658 = vmatprep.mubr.bf16.mxu0 0
        %3659 = vmatmul.mubr.bf16.gmra.mrb[0].mxu0 %v3605
        %v3660 = vpop.f32.mrb[0].mxu0
        %v3661 = vadd.f32 0.0, %v3660
        %v3662 = vpop.f32.mrb[0].mxu0
        %v3663 = vpop.f32.mrb[0].mxu0
        %v3664 = vadd.f32 0.0, %v3663
        %v3665 = vpop.f32.mrb[0].mxu0
        %3666 = vmatprep.mubr.bf16.mxu0 0
        %3667 = vmatmul.mubr.bf16.gmra.mrb[0].mxu0 %v3608
        %v3668 = vpop.f32.mrb[0].mxu0
        %v3669 = vadd.f32 0.0, %v3668
        %v3670 = vpop.f32.mrb[0].mxu0
        %v3671 = vpop.f32.mrb[0].mxu0
        %v3672 = vadd.f32 0.0, %v3671
        %v3673 = vpop.f32.mrb[0].mxu0
        %3674 = vdwg.mxu0
        %v3675 = vpack.c.bf16 %v3648, %v3645
        %v3676 = vpack.c.bf16 %v3656, %v3653
        %v3677 = vpack.c.bf16 %v3664, %v3661
        %v3678 = vpack.c.bf16 %v3672, %v3669
        %s3679 = scalar_lea.vmem %s19, 96
        %v3680 = vld [vmem:[%s3679] sm:$0xf]
        %v3681 = vld [vmem:[%s3679 + $0x4] sm:$0xf]
        %v3682 = vld [vmem:[%s3679 + $0x8] sm:$0xf]
        %v3683 = vld [vmem:[%s3679 + $0xc] sm:$0xf]
        %v3684 = vld [vmem:[%s3679 + $0x10] sm:$0xf]
        %v3685 = vld [vmem:[%s3679 + $0x14] sm:$0xf]
        %v3686 = vld [vmem:[%s3679 + $0x18] sm:$0xf]
        %v3687 = vld [vmem:[%s3679 + $0x1c] sm:$0xf]
        %v3696 = vunpack.c.l.b16 %v3680
        %v3697 = vunpack.c.l.b16 %v3681
        %v3698 = vunpack.c.l.b16 %v3682
        %v3699 = vunpack.c.l.b16 %v3683
        %v3700 = vunpack.c.l.b16 %v3684
        %v3701 = vunpack.c.l.b16 %v3685
        %v3702 = vunpack.c.l.b16 %v3686
        %v3703 = vunpack.c.l.b16 %v3687
        %v3704 = vpack.c.b16 %v3697, %v3696
        %v3705 = vpack.c.b16 %v3699, %v3698
        %v3706 = vpack.c.b16 %v3701, %v3700
        %v3707 = vpack.c.b16 %v3703, %v3702
        %v3709 = vsel %vm2917, %v3704, 0
        %v3712 = vsel %vm2917, %v3705, 0
        %v3715 = vsel %vm2917, %v3706, 0
        %v3718 = vsel %vm2917, %v3707, 0
        %3720 = vmatprep.subr.bf16.mxu0 0
        %3721 = vmatpush1.bf16.msra.mxu0 %v3137
        %3722 = vmatprep.subr.bf16.mxu0 0
        %3723 = vmatpush1.bf16.msra.mxu0 %v3138
        %3724 = vmatprep.subr.bf16.mxu0 0
        %3725 = vmatpush1.bf16.msra.mxu0 %v3139
        %3726 = vmatprep.subr.bf16.mxu0 0
        %3727 = vmatpush1.bf16.msra.mxu0 %v3140
        %3728 = vmatprep.subr.bf16.mxu0 0
        %3729 = vmatpush1.bf16.msra.mxu0 0
        %3730 = vmatprep.subr.bf16.mxu0 0
        %3731 = vmatpush1.bf16.msra.mxu0 0
        %3732 = vmatprep.subr.bf16.mxu0 0
        %3733 = vmatpush1.bf16.msra.mxu0 0
        %3734 = vmatprep.subr.bf16.mxu0 0
        %3735 = vmatpush1.bf16.msra.mxu0 0
        %3736 = vmatprep.subr.bf16.mxu0 0
        %3737 = vmatpush1.bf16.msra.mxu0 0
        %3738 = vmatprep.subr.bf16.mxu0 0
        %3739 = vmatpush1.bf16.msra.mxu0 0
        %3740 = vmatprep.subr.bf16.mxu0 0
        %3741 = vmatpush1.bf16.msra.mxu0 0
        %3742 = vmatprep.subr.bf16.mxu0 0
        %3743 = vmatpush1.bf16.msra.mxu0 0
        %3744 = vmatprep.subr.bf16.mxu0 0
        %3745 = vmatpush1.bf16.msra.mxu0 0
        %3746 = vmatprep.subr.bf16.mxu0 0
        %3747 = vmatpush1.bf16.msra.mxu0 0
        %3748 = vmatprep.subr.bf16.mxu0 0
        %3749 = vmatpush1.bf16.msra.mxu0 0
        %3750 = vmatprep.subr.bf16.mxu0 0
        %3751 = vmatpush1.bf16.msra.mxu0 0
        %3752 = vmatprep.mubr.bf16.mxu0 0
        %3753 = vmatmul.mubr.bf16.gmra.mrb[0].mxu0 %v3709
        %v3754 = vpop.f32.mrb[0].mxu0
        %v3755 = vadd.f32 0.0, %v3754
        %v3756 = vpop.f32.mrb[0].mxu0
        %v3757 = vpop.f32.mrb[0].mxu0
        %v3758 = vadd.f32 0.0, %v3757
        %v3759 = vpop.f32.mrb[0].mxu0
        %3760 = vmatprep.mubr.bf16.mxu0 0
        %3761 = vmatmul.mubr.bf16.gmra.mrb[0].mxu0 %v3712
        %v3762 = vpop.f32.mrb[0].mxu0
        %v3763 = vadd.f32 0.0, %v3762
        %v3764 = vpop.f32.mrb[0].mxu0
        %v3765 = vpop.f32.mrb[0].mxu0
        %v3766 = vadd.f32 0.0, %v3765
        %v3767 = vpop.f32.mrb[0].mxu0
        %3768 = vmatprep.mubr.bf16.mxu0 0
        %3769 = vmatmul.mubr.bf16.gmra.mrb[0].mxu0 %v3715
        %v3770 = vpop.f32.mrb[0].mxu0
        %v3771 = vadd.f32 0.0, %v3770
        %v3772 = vpop.f32.mrb[0].mxu0
        %v3773 = vpop.f32.mrb[0].mxu0
        %v3774 = vadd.f32 0.0, %v3773
        %v3775 = vpop.f32.mrb[0].mxu0
        %3776 = vmatprep.mubr.bf16.mxu0 0
        %3777 = vmatmul.mubr.bf16.gmra.mrb[0].mxu0 %v3718
        %v3778 = vpop.f32.mrb[0].mxu0
        %v3779 = vadd.f32 0.0, %v3778
        %v3780 = vpop.f32.mrb[0].mxu0
        %v3781 = vpop.f32.mrb[0].mxu0
        %v3782 = vadd.f32 0.0, %v3781
        %v3783 = vpop.f32.mrb[0].mxu0
        %3784 = vdwg.mxu0
        %v3785 = vpack.c.bf16 %v3758, %v3755
        %v3786 = vpack.c.bf16 %v3766, %v3763
        %v3787 = vpack.c.bf16 %v3774, %v3771
        %v3788 = vpack.c.bf16 %v3782, %v3779
        %s3789 = scalar_lea.vmem %s19, 128
        %v3790 = vld [vmem:[%s3789] sm:$0xf]
        %v3791 = vld [vmem:[%s3789 + $0x4] sm:$0xf]
        %v3792 = vld [vmem:[%s3789 + $0x8] sm:$0xf]
        %v3793 = vld [vmem:[%s3789 + $0xc] sm:$0xf]
        %v3794 = vld [vmem:[%s3789 + $0x10] sm:$0xf]
        %v3795 = vld [vmem:[%s3789 + $0x14] sm:$0xf]
        %v3796 = vld [vmem:[%s3789 + $0x18] sm:$0xf]
        %v3797 = vld [vmem:[%s3789 + $0x1c] sm:$0xf]
        %v3806 = vunpack.c.l.b16 %v3790
        %v3807 = vunpack.c.l.b16 %v3791
        %v3808 = vunpack.c.l.b16 %v3792
        %v3809 = vunpack.c.l.b16 %v3793
        %v3810 = vunpack.c.l.b16 %v3794
        %v3811 = vunpack.c.l.b16 %v3795
        %v3812 = vunpack.c.l.b16 %v3796
        %v3813 = vunpack.c.l.b16 %v3797
        %v3814 = vpack.c.b16 %v3807, %v3806
        %v3815 = vpack.c.b16 %v3809, %v3808
        %v3816 = vpack.c.b16 %v3811, %v3810
        %v3817 = vpack.c.b16 %v3813, %v3812
        %v3819 = vsel %vm2917, %v3814, 0
        %v3822 = vsel %vm2917, %v3815, 0
        %v3825 = vsel %vm2917, %v3816, 0
        %v3828 = vsel %vm2917, %v3817, 0
        %3830 = vmatprep.subr.bf16.mxu0 0
        %3831 = vmatpush1.bf16.msra.mxu0 %v3137
        %3832 = vmatprep.subr.bf16.mxu0 0
        %3833 = vmatpush1.bf16.msra.mxu0 %v3138
        %3834 = vmatprep.subr.bf16.mxu0 0
        %3835 = vmatpush1.bf16.msra.mxu0 %v3139
        %3836 = vmatprep.subr.bf16.mxu0 0
        %3837 = vmatpush1.bf16.msra.mxu0 %v3140
        %3838 = vmatprep.subr.bf16.mxu0 0
        %3839 = vmatpush1.bf16.msra.mxu0 0
        %3840 = vmatprep.subr.bf16.mxu0 0
        %3841 = vmatpush1.bf16.msra.mxu0 0
        %3842 = vmatprep.subr.bf16.mxu0 0
        %3843 = vmatpush1.bf16.msra.mxu0 0
        %3844 = vmatprep.subr.bf16.mxu0 0
        %3845 = vmatpush1.bf16.msra.mxu0 0
        %3846 = vmatprep.subr.bf16.mxu0 0
        %3847 = vmatpush1.bf16.msra.mxu0 0
        %3848 = vmatprep.subr.bf16.mxu0 0
        %3849 = vmatpush1.bf16.msra.mxu0 0
        %3850 = vmatprep.subr.bf16.mxu0 0
        %3851 = vmatpush1.bf16.msra.mxu0 0
        %3852 = vmatprep.subr.bf16.mxu0 0
        %3853 = vmatpush1.bf16.msra.mxu0 0
        %3854 = vmatprep.subr.bf16.mxu0 0
        %3855 = vmatpush1.bf16.msra.mxu0 0
        %3856 = vmatprep.subr.bf16.mxu0 0
        %3857 = vmatpush1.bf16.msra.mxu0 0
        %3858 = vmatprep.subr.bf16.mxu0 0
        %3859 = vmatpush1.bf16.msra.mxu0 0
        %3860 = vmatprep.subr.bf16.mxu0 0
        %3861 = vmatpush1.bf16.msra.mxu0 0
        %3862 = vmatprep.mubr.bf16.mxu0 0
        %3863 = vmatmul.mubr.bf16.gmra.mrb[0].mxu0 %v3819
        %v3864 = vpop.f32.mrb[0].mxu0
        %v3865 = vadd.f32 0.0, %v3864
        %v3866 = vpop.f32.mrb[0].mxu0
        %v3867 = vpop.f32.mrb[0].mxu0
        %v3868 = vadd.f32 0.0, %v3867
        %v3869 = vpop.f32.mrb[0].mxu0
        %3870 = vmatprep.mubr.bf16.mxu0 0
        %3871 = vmatmul.mubr.bf16.gmra.mrb[0].mxu0 %v3822
        %v3872 = vpop.f32.mrb[0].mxu0
        %v3873 = vadd.f32 0.0, %v3872
        %v3874 = vpop.f32.mrb[0].mxu0
        %v3875 = vpop.f32.mrb[0].mxu0
        %v3876 = vadd.f32 0.0, %v3875
        %v3877 = vpop.f32.mrb[0].mxu0
        %3878 = vmatprep.mubr.bf16.mxu0 0
        %3879 = vmatmul.mubr.bf16.gmra.mrb[0].mxu0 %v3825
        %v3880 = vpop.f32.mrb[0].mxu0
        %v3881 = vadd.f32 0.0, %v3880
        %v3882 = vpop.f32.mrb[0].mxu0
        %v3883 = vpop.f32.mrb[0].mxu0
        %v3884 = vadd.f32 0.0, %v3883
        %v3885 = vpop.f32.mrb[0].mxu0
        %3886 = vmatprep.mubr.bf16.mxu0 0
        %3887 = vmatmul.mubr.bf16.gmra.mrb[0].mxu0 %v3828
        %v3888 = vpop.f32.mrb[0].mxu0
        %v3889 = vadd.f32 0.0, %v3888
        %v3890 = vpop.f32.mrb[0].mxu0
        %v3891 = vpop.f32.mrb[0].mxu0
        %v3892 = vadd.f32 0.0, %v3891
        %v3893 = vpop.f32.mrb[0].mxu0
        %3894 = vdwg.mxu0
        %v3895 = vpack.c.bf16 %v3868, %v3865
        %v3896 = vpack.c.bf16 %v3876, %v3873
        %v3897 = vpack.c.bf16 %v3884, %v3881
        %v3898 = vpack.c.bf16 %v3892, %v3889
        %s3899 = scalar_lea.vmem %s19, 160
        %v3900 = vld [vmem:[%s3899] sm:$0xf]
        %v3901 = vld [vmem:[%s3899 + $0x4] sm:$0xf]
        %v3902 = vld [vmem:[%s3899 + $0x8] sm:$0xf]
        %v3903 = vld [vmem:[%s3899 + $0xc] sm:$0xf]
        %v3904 = vld [vmem:[%s3899 + $0x10] sm:$0xf]
        %v3905 = vld [vmem:[%s3899 + $0x14] sm:$0xf]
        %v3906 = vld [vmem:[%s3899 + $0x18] sm:$0xf]
        %v3907 = vld [vmem:[%s3899 + $0x1c] sm:$0xf]
        %v3916 = vunpack.c.l.b16 %v3900
        %v3917 = vunpack.c.l.b16 %v3901
        %v3918 = vunpack.c.l.b16 %v3902
        %v3919 = vunpack.c.l.b16 %v3903
        %v3920 = vunpack.c.l.b16 %v3904
        %v3921 = vunpack.c.l.b16 %v3905
        %v3922 = vunpack.c.l.b16 %v3906
        %v3923 = vunpack.c.l.b16 %v3907
        %v3924 = vpack.c.b16 %v3917, %v3916
        %v3925 = vpack.c.b16 %v3919, %v3918
        %v3926 = vpack.c.b16 %v3921, %v3920
        %v3927 = vpack.c.b16 %v3923, %v3922
        %v3929 = vsel %vm2917, %v3924, 0
        %v3932 = vsel %vm2917, %v3925, 0
        %v3935 = vsel %vm2917, %v3926, 0
        %v3938 = vsel %vm2917, %v3927, 0
        %3940 = vmatprep.subr.bf16.mxu0 0
        %3941 = vmatpush1.bf16.msra.mxu0 %v3137
        %3942 = vmatprep.subr.bf16.mxu0 0
        %3943 = vmatpush1.bf16.msra.mxu0 %v3138
        %3944 = vmatprep.subr.bf16.mxu0 0
        %3945 = vmatpush1.bf16.msra.mxu0 %v3139
        %3946 = vmatprep.subr.bf16.mxu0 0
        %3947 = vmatpush1.bf16.msra.mxu0 %v3140
        %3948 = vmatprep.subr.bf16.mxu0 0
        %3949 = vmatpush1.bf16.msra.mxu0 0
        %3950 = vmatprep.subr.bf16.mxu0 0
        %3951 = vmatpush1.bf16.msra.mxu0 0
        %3952 = vmatprep.subr.bf16.mxu0 0
        %3953 = vmatpush1.bf16.msra.mxu0 0
        %3954 = vmatprep.subr.bf16.mxu0 0
        %3955 = vmatpush1.bf16.msra.mxu0 0
        %3956 = vmatprep.subr.bf16.mxu0 0
        %3957 = vmatpush1.bf16.msra.mxu0 0
        %3958 = vmatprep.subr.bf16.mxu0 0
        %3959 = vmatpush1.bf16.msra.mxu0 0
        %3960 = vmatprep.subr.bf16.mxu0 0
        %3961 = vmatpush1.bf16.msra.mxu0 0
        %3962 = vmatprep.subr.bf16.mxu0 0
        %3963 = vmatpush1.bf16.msra.mxu0 0
        %3964 = vmatprep.subr.bf16.mxu0 0
        %3965 = vmatpush1.bf16.msra.mxu0 0
        %3966 = vmatprep.subr.bf16.mxu0 0
        %3967 = vmatpush1.bf16.msra.mxu0 0
        %3968 = vmatprep.subr.bf16.mxu0 0
        %3969 = vmatpush1.bf16.msra.mxu0 0
        %3970 = vmatprep.subr.bf16.mxu0 0
        %3971 = vmatpush1.bf16.msra.mxu0 0
        %3972 = vmatprep.mubr.bf16.mxu0 0
        %3973 = vmatmul.mubr.bf16.gmra.mrb[0].mxu0 %v3929
        %v3974 = vpop.f32.mrb[0].mxu0
        %v3975 = vadd.f32 0.0, %v3974
        %v3976 = vpop.f32.mrb[0].mxu0
        %v3977 = vpop.f32.mrb[0].mxu0
        %v3978 = vadd.f32 0.0, %v3977
        %v3979 = vpop.f32.mrb[0].mxu0
        %3980 = vmatprep.mubr.bf16.mxu0 0
        %3981 = vmatmul.mubr.bf16.gmra.mrb[0].mxu0 %v3932
        %v3982 = vpop.f32.mrb[0].mxu0
        %v3983 = vadd.f32 0.0, %v3982
        %v3984 = vpop.f32.mrb[0].mxu0
        %v3985 = vpop.f32.mrb[0].mxu0
        %v3986 = vadd.f32 0.0, %v3985
        %v3987 = vpop.f32.mrb[0].mxu0
        %3988 = vmatprep.mubr.bf16.mxu0 0
        %3989 = vmatmul.mubr.bf16.gmra.mrb[0].mxu0 %v3935
        %v3990 = vpop.f32.mrb[0].mxu0
        %v3991 = vadd.f32 0.0, %v3990
        %v3992 = vpop.f32.mrb[0].mxu0
        %v3993 = vpop.f32.mrb[0].mxu0
        %v3994 = vadd.f32 0.0, %v3993
        %v3995 = vpop.f32.mrb[0].mxu0
        %3996 = vmatprep.mubr.bf16.mxu0 0
        %3997 = vmatmul.mubr.bf16.gmra.mrb[0].mxu0 %v3938
        %v3998 = vpop.f32.mrb[0].mxu0
        %v3999 = vadd.f32 0.0, %v3998
        %v4000 = vpop.f32.mrb[0].mxu0
        %v4001 = vpop.f32.mrb[0].mxu0
        %v4002 = vadd.f32 0.0, %v4001
        %v4003 = vpop.f32.mrb[0].mxu0
        %4004 = vdwg.mxu0
        %v4005 = vpack.c.bf16 %v3978, %v3975
        %v4006 = vpack.c.bf16 %v3986, %v3983
        %v4007 = vpack.c.bf16 %v3994, %v3991
        %v4008 = vpack.c.bf16 %v4002, %v3999
        %s4009 = scalar_lea.vmem %s19, 192
        %v4010 = vld [vmem:[%s4009] sm:$0xf]
        %v4011 = vld [vmem:[%s4009 + $0x4] sm:$0xf]
        %v4012 = vld [vmem:[%s4009 + $0x8] sm:$0xf]
        %v4013 = vld [vmem:[%s4009 + $0xc] sm:$0xf]
        %v4014 = vld [vmem:[%s4009 + $0x10] sm:$0xf]
        %v4015 = vld [vmem:[%s4009 + $0x14] sm:$0xf]
        %v4016 = vld [vmem:[%s4009 + $0x18] sm:$0xf]
        %v4017 = vld [vmem:[%s4009 + $0x1c] sm:$0xf]
        %v4026 = vunpack.c.l.b16 %v4010
        %v4027 = vunpack.c.l.b16 %v4011
        %v4028 = vunpack.c.l.b16 %v4012
        %v4029 = vunpack.c.l.b16 %v4013
        %v4030 = vunpack.c.l.b16 %v4014
        %v4031 = vunpack.c.l.b16 %v4015
        %v4032 = vunpack.c.l.b16 %v4016
        %v4033 = vunpack.c.l.b16 %v4017
        %v4034 = vpack.c.b16 %v4027, %v4026
        %v4035 = vpack.c.b16 %v4029, %v4028
        %v4036 = vpack.c.b16 %v4031, %v4030
        %v4037 = vpack.c.b16 %v4033, %v4032
        %v4039 = vsel %vm2917, %v4034, 0
        %v4042 = vsel %vm2917, %v4035, 0
        %v4045 = vsel %vm2917, %v4036, 0
        %v4048 = vsel %vm2917, %v4037, 0
        %4050 = vmatprep.subr.bf16.mxu0 0
        %4051 = vmatpush1.bf16.msra.mxu0 %v3137
        %4052 = vmatprep.subr.bf16.mxu0 0
        %4053 = vmatpush1.bf16.msra.mxu0 %v3138
        %4054 = vmatprep.subr.bf16.mxu0 0
        %4055 = vmatpush1.bf16.msra.mxu0 %v3139
        %4056 = vmatprep.subr.bf16.mxu0 0
        %4057 = vmatpush1.bf16.msra.mxu0 %v3140
        %4058 = vmatprep.subr.bf16.mxu0 0
        %4059 = vmatpush1.bf16.msra.mxu0 0
        %4060 = vmatprep.subr.bf16.mxu0 0
        %4061 = vmatpush1.bf16.msra.mxu0 0
        %4062 = vmatprep.subr.bf16.mxu0 0
        %4063 = vmatpush1.bf16.msra.mxu0 0
        %4064 = vmatprep.subr.bf16.mxu0 0
        %4065 = vmatpush1.bf16.msra.mxu0 0
        %4066 = vmatprep.subr.bf16.mxu0 0
        %4067 = vmatpush1.bf16.msra.mxu0 0
        %4068 = vmatprep.subr.bf16.mxu0 0
        %4069 = vmatpush1.bf16.msra.mxu0 0
        %4070 = vmatprep.subr.bf16.mxu0 0
        %4071 = vmatpush1.bf16.msra.mxu0 0
        %4072 = vmatprep.subr.bf16.mxu0 0
        %4073 = vmatpush1.bf16.msra.mxu0 0
        %4074 = vmatprep.subr.bf16.mxu0 0
        %4075 = vmatpush1.bf16.msra.mxu0 0
        %4076 = vmatprep.subr.bf16.mxu0 0
        %4077 = vmatpush1.bf16.msra.mxu0 0
        %4078 = vmatprep.subr.bf16.mxu0 0
        %4079 = vmatpush1.bf16.msra.mxu0 0
        %4080 = vmatprep.subr.bf16.mxu0 0
        %4081 = vmatpush1.bf16.msra.mxu0 0
        %4082 = vmatprep.mubr.bf16.mxu0 0
        %4083 = vmatmul.mubr.bf16.gmra.mrb[0].mxu0 %v4039
        %v4084 = vpop.f32.mrb[0].mxu0
        %v4085 = vadd.f32 0.0, %v4084
        %v4086 = vpop.f32.mrb[0].mxu0
        %v4087 = vpop.f32.mrb[0].mxu0
        %v4088 = vadd.f32 0.0, %v4087
        %v4089 = vpop.f32.mrb[0].mxu0
        %4090 = vmatprep.mubr.bf16.mxu0 0
        %4091 = vmatmul.mubr.bf16.gmra.mrb[0].mxu0 %v4042
        %v4092 = vpop.f32.mrb[0].mxu0
        %v4093 = vadd.f32 0.0, %v4092
        %v4094 = vpop.f32.mrb[0].mxu0
        %v4095 = vpop.f32.mrb[0].mxu0
        %v4096 = vadd.f32 0.0, %v4095
        %v4097 = vpop.f32.mrb[0].mxu0
        %4098 = vmatprep.mubr.bf16.mxu0 0
        %4099 = vmatmul.mubr.bf16.gmra.mrb[0].mxu0 %v4045
        %v4100 = vpop.f32.mrb[0].mxu0
        %v4101 = vadd.f32 0.0, %v4100
        %v4102 = vpop.f32.mrb[0].mxu0
        %v4103 = vpop.f32.mrb[0].mxu0
        %v4104 = vadd.f32 0.0, %v4103
        %v4105 = vpop.f32.mrb[0].mxu0
        %4106 = vmatprep.mubr.bf16.mxu0 0
        %4107 = vmatmul.mubr.bf16.gmra.mrb[0].mxu0 %v4048
        %v4108 = vpop.f32.mrb[0].mxu0
        %v4109 = vadd.f32 0.0, %v4108
        %v4110 = vpop.f32.mrb[0].mxu0
        %v4111 = vpop.f32.mrb[0].mxu0
        %v4112 = vadd.f32 0.0, %v4111
        %v4113 = vpop.f32.mrb[0].mxu0
        %4114 = vdwg.mxu0
        %v4115 = vpack.c.bf16 %v4088, %v4085
        %v4116 = vpack.c.bf16 %v4096, %v4093
        %v4117 = vpack.c.bf16 %v4104, %v4101
        %v4118 = vpack.c.bf16 %v4112, %v4109
        %s4119 = scalar_lea.vmem %s19, 224
        %v4120 = vld [vmem:[%s4119] sm:$0xf]
        %v4121 = vld [vmem:[%s4119 + $0x4] sm:$0xf]
        %v4122 = vld [vmem:[%s4119 + $0x8] sm:$0xf]
        %v4123 = vld [vmem:[%s4119 + $0xc] sm:$0xf]
        %v4124 = vld [vmem:[%s4119 + $0x10] sm:$0xf]
        %v4125 = vld [vmem:[%s4119 + $0x14] sm:$0xf]
        %v4126 = vld [vmem:[%s4119 + $0x18] sm:$0xf]
        %v4127 = vld [vmem:[%s4119 + $0x1c] sm:$0xf]
        %v4136 = vunpack.c.l.b16 %v4120
        %v4137 = vunpack.c.l.b16 %v4121
        %v4138 = vunpack.c.l.b16 %v4122
        %v4139 = vunpack.c.l.b16 %v4123
        %v4140 = vunpack.c.l.b16 %v4124
        %v4141 = vunpack.c.l.b16 %v4125
        %v4142 = vunpack.c.l.b16 %v4126
        %v4143 = vunpack.c.l.b16 %v4127
        %v4144 = vpack.c.b16 %v4137, %v4136
        %v4145 = vpack.c.b16 %v4139, %v4138
        %v4146 = vpack.c.b16 %v4141, %v4140
        %v4147 = vpack.c.b16 %v4143, %v4142
        %v4149 = vsel %vm2917, %v4144, 0
        %v4152 = vsel %vm2917, %v4145, 0
        %v4155 = vsel %vm2917, %v4146, 0
        %v4158 = vsel %vm2917, %v4147, 0
        %4160 = vmatprep.subr.bf16.mxu0 0
        %4161 = vmatpush1.bf16.msra.mxu0 %v3137
        %4162 = vmatprep.subr.bf16.mxu0 0
        %4163 = vmatpush1.bf16.msra.mxu0 %v3138
        %4164 = vmatprep.subr.bf16.mxu0 0
        %4165 = vmatpush1.bf16.msra.mxu0 %v3139
        %4166 = vmatprep.subr.bf16.mxu0 0
        %4167 = vmatpush1.bf16.msra.mxu0 %v3140
        %4168 = vmatprep.subr.bf16.mxu0 0
        %4169 = vmatpush1.bf16.msra.mxu0 0
        %4170 = vmatprep.subr.bf16.mxu0 0
        %4171 = vmatpush1.bf16.msra.mxu0 0
        %4172 = vmatprep.subr.bf16.mxu0 0
        %4173 = vmatpush1.bf16.msra.mxu0 0
        %4174 = vmatprep.subr.bf16.mxu0 0
        %4175 = vmatpush1.bf16.msra.mxu0 0
        %4176 = vmatprep.subr.bf16.mxu0 0
        %4177 = vmatpush1.bf16.msra.mxu0 0
        %4178 = vmatprep.subr.bf16.mxu0 0
        %4179 = vmatpush1.bf16.msra.mxu0 0
        %4180 = vmatprep.subr.bf16.mxu0 0
        %4181 = vmatpush1.bf16.msra.mxu0 0
        %4182 = vmatprep.subr.bf16.mxu0 0
        %4183 = vmatpush1.bf16.msra.mxu0 0
        %4184 = vmatprep.subr.bf16.mxu0 0
        %4185 = vmatpush1.bf16.msra.mxu0 0
        %4186 = vmatprep.subr.bf16.mxu0 0
        %4187 = vmatpush1.bf16.msra.mxu0 0
        %4188 = vmatprep.subr.bf16.mxu0 0
        %4189 = vmatpush1.bf16.msra.mxu0 0
        %4190 = vmatprep.subr.bf16.mxu0 0
        %4191 = vmatpush1.bf16.msra.mxu0 0
        %4192 = vmatprep.mubr.bf16.mxu0 0
        %4193 = vmatmul.mubr.bf16.gmra.mrb[0].mxu0 %v4149
        %v4194 = vpop.f32.mrb[0].mxu0
        %v4195 = vadd.f32 0.0, %v4194
        %v4196 = vpop.f32.mrb[0].mxu0
        %v4197 = vpop.f32.mrb[0].mxu0
        %v4198 = vadd.f32 0.0, %v4197
        %v4199 = vpop.f32.mrb[0].mxu0
        %4200 = vmatprep.mubr.bf16.mxu0 0
        %4201 = vmatmul.mubr.bf16.gmra.mrb[0].mxu0 %v4152
        %v4202 = vpop.f32.mrb[0].mxu0
        %v4203 = vadd.f32 0.0, %v4202
        %v4204 = vpop.f32.mrb[0].mxu0
        %v4205 = vpop.f32.mrb[0].mxu0
        %v4206 = vadd.f32 0.0, %v4205
        %v4207 = vpop.f32.mrb[0].mxu0
        %4208 = vmatprep.mubr.bf16.mxu0 0
        %4209 = vmatmul.mubr.bf16.gmra.mrb[0].mxu0 %v4155
        %v4210 = vpop.f32.mrb[0].mxu0
        %v4211 = vadd.f32 0.0, %v4210
        %v4212 = vpop.f32.mrb[0].mxu0
        %v4213 = vpop.f32.mrb[0].mxu0
        %v4214 = vadd.f32 0.0, %v4213
        %v4215 = vpop.f32.mrb[0].mxu0
        %4216 = vmatprep.mubr.bf16.mxu0 0
        %4217 = vmatmul.mubr.bf16.gmra.mrb[0].mxu0 %v4158
        %v4218 = vpop.f32.mrb[0].mxu0
        %v4219 = vadd.f32 0.0, %v4218
        %v4220 = vpop.f32.mrb[0].mxu0
        %v4221 = vpop.f32.mrb[0].mxu0
        %v4222 = vadd.f32 0.0, %v4221
        %v4223 = vpop.f32.mrb[0].mxu0
        %4224 = vdwg.mxu0
        %v4225 = vpack.c.bf16 %v4198, %v4195
        %v4226 = vpack.c.bf16 %v4206, %v4203
        %v4227 = vpack.c.bf16 %v4214, %v4211
        %v4228 = vpack.c.bf16 %v4222, %v4219
        %s4229 = scalar_lea.vmem %s19, 256
        %v4230 = vld [vmem:[%s4229] sm:$0xf]
        %v4231 = vld [vmem:[%s4229 + $0x4] sm:$0xf]
        %v4232 = vld [vmem:[%s4229 + $0x8] sm:$0xf]
        %v4233 = vld [vmem:[%s4229 + $0xc] sm:$0xf]
        %v4234 = vld [vmem:[%s4229 + $0x10] sm:$0xf]
        %v4235 = vld [vmem:[%s4229 + $0x14] sm:$0xf]
        %v4236 = vld [vmem:[%s4229 + $0x18] sm:$0xf]
        %v4237 = vld [vmem:[%s4229 + $0x1c] sm:$0xf]
        %v4246 = vunpack.c.l.b16 %v4230
        %v4247 = vunpack.c.l.b16 %v4231
        %v4248 = vunpack.c.l.b16 %v4232
        %v4249 = vunpack.c.l.b16 %v4233
        %v4250 = vunpack.c.l.b16 %v4234
        %v4251 = vunpack.c.l.b16 %v4235
        %v4252 = vunpack.c.l.b16 %v4236
        %v4253 = vunpack.c.l.b16 %v4237
        %v4254 = vpack.c.b16 %v4247, %v4246
        %v4255 = vpack.c.b16 %v4249, %v4248
        %v4256 = vpack.c.b16 %v4251, %v4250
        %v4257 = vpack.c.b16 %v4253, %v4252
        %v4259 = vsel %vm2917, %v4254, 0
        %v4262 = vsel %vm2917, %v4255, 0
        %v4265 = vsel %vm2917, %v4256, 0
        %v4268 = vsel %vm2917, %v4257, 0
        %4270 = vmatprep.subr.bf16.mxu0 0
        %4271 = vmatpush1.bf16.msra.mxu0 %v3137
        %4272 = vmatprep.subr.bf16.mxu0 0
        %4273 = vmatpush1.bf16.msra.mxu0 %v3138
        %4274 = vmatprep.subr.bf16.mxu0 0
        %4275 = vmatpush1.bf16.msra.mxu0 %v3139
        %4276 = vmatprep.subr.bf16.mxu0 0
        %4277 = vmatpush1.bf16.msra.mxu0 %v3140
        %4278 = vmatprep.subr.bf16.mxu0 0
        %4279 = vmatpush1.bf16.msra.mxu0 0
        %4280 = vmatprep.subr.bf16.mxu0 0
        %4281 = vmatpush1.bf16.msra.mxu0 0
        %4282 = vmatprep.subr.bf16.mxu0 0
        %4283 = vmatpush1.bf16.msra.mxu0 0
        %4284 = vmatprep.subr.bf16.mxu0 0
        %4285 = vmatpush1.bf16.msra.mxu0 0
        %4286 = vmatprep.subr.bf16.mxu0 0
        %4287 = vmatpush1.bf16.msra.mxu0 0
        %4288 = vmatprep.subr.bf16.mxu0 0
        %4289 = vmatpush1.bf16.msra.mxu0 0
        %4290 = vmatprep.subr.bf16.mxu0 0
        %4291 = vmatpush1.bf16.msra.mxu0 0
        %4292 = vmatprep.subr.bf16.mxu0 0
        %4293 = vmatpush1.bf16.msra.mxu0 0
        %4294 = vmatprep.subr.bf16.mxu0 0
        %4295 = vmatpush1.bf16.msra.mxu0 0
        %4296 = vmatprep.subr.bf16.mxu0 0
        %4297 = vmatpush1.bf16.msra.mxu0 0
        %4298 = vmatprep.subr.bf16.mxu0 0
        %4299 = vmatpush1.bf16.msra.mxu0 0
        %4300 = vmatprep.subr.bf16.mxu0 0
        %4301 = vmatpush1.bf16.msra.mxu0 0
        %4302 = vmatprep.mubr.bf16.mxu0 0
        %4303 = vmatmul.mubr.bf16.gmra.mrb[0].mxu0 %v4259
        %v4304 = vpop.f32.mrb[0].mxu0
        %v4305 = vadd.f32 0.0, %v4304
        %v4306 = vpop.f32.mrb[0].mxu0
        %v4307 = vpop.f32.mrb[0].mxu0
        %v4308 = vadd.f32 0.0, %v4307
        %v4309 = vpop.f32.mrb[0].mxu0
        %4310 = vmatprep.mubr.bf16.mxu0 0
        %4311 = vmatmul.mubr.bf16.gmra.mrb[0].mxu0 %v4262
        %v4312 = vpop.f32.mrb[0].mxu0
        %v4313 = vadd.f32 0.0, %v4312
        %v4314 = vpop.f32.mrb[0].mxu0
        %v4315 = vpop.f32.mrb[0].mxu0
        %v4316 = vadd.f32 0.0, %v4315
        %v4317 = vpop.f32.mrb[0].mxu0
        %4318 = vmatprep.mubr.bf16.mxu0 0
        %4319 = vmatmul.mubr.bf16.gmra.mrb[0].mxu0 %v4265
        %v4320 = vpop.f32.mrb[0].mxu0
        %v4321 = vadd.f32 0.0, %v4320
        %v4322 = vpop.f32.mrb[0].mxu0
        %v4323 = vpop.f32.mrb[0].mxu0
        %v4324 = vadd.f32 0.0, %v4323
        %v4325 = vpop.f32.mrb[0].mxu0
        %4326 = vmatprep.mubr.bf16.mxu0 0
        %4327 = vmatmul.mubr.bf16.gmra.mrb[0].mxu0 %v4268
        %v4328 = vpop.f32.mrb[0].mxu0
        %v4329 = vadd.f32 0.0, %v4328
        %v4330 = vpop.f32.mrb[0].mxu0
        %v4331 = vpop.f32.mrb[0].mxu0
        %v4332 = vadd.f32 0.0, %v4331
        %v4333 = vpop.f32.mrb[0].mxu0
        %4334 = vdwg.mxu0
        %v4335 = vpack.c.bf16 %v4308, %v4305
        %v4336 = vpack.c.bf16 %v4316, %v4313
        %v4337 = vpack.c.bf16 %v4324, %v4321
        %v4338 = vpack.c.bf16 %v4332, %v4329
        %4343 = vrot.lane.b32.xlu0 %v3565, 16
        %v4344 = vpop.permute.xlu0 %4343
        %4345 = vrot.lane.b32.xlu0 %v3566, 16
        %v4346 = vpop.permute.xlu0 %4345
        %4347 = vrot.lane.b32.xlu0 %v3567, 16
        %v4348 = vpop.permute.xlu0 %4347
        %4349 = vrot.lane.b32.xlu0 %v3568, 16
        %v4350 = vpop.permute.xlu0 %4349
        %4355 = vrot.lane.b32.xlu0 %v3675, 32
        %v4356 = vpop.permute.xlu0 %4355
        %4357 = vrot.lane.b32.xlu0 %v3676, 32
        %v4358 = vpop.permute.xlu0 %4357
        %4359 = vrot.lane.b32.xlu0 %v3677, 32
        %v4360 = vpop.permute.xlu0 %4359
        %4361 = vrot.lane.b32.xlu0 %v3678, 32
        %v4362 = vpop.permute.xlu0 %4361
        %4367 = vrot.lane.b32.xlu0 %v3785, 48
        %v4368 = vpop.permute.xlu0 %4367
        %4369 = vrot.lane.b32.xlu0 %v3786, 48
        %v4370 = vpop.permute.xlu0 %4369
        %4371 = vrot.lane.b32.xlu0 %v3787, 48
        %v4372 = vpop.permute.xlu0 %4371
        %4373 = vrot.lane.b32.xlu0 %v3788, 48
        %v4374 = vpop.permute.xlu0 %4373
        %4379 = vrot.lane.b32.xlu0 %v3895, 64
        %v4380 = vpop.permute.xlu0 %4379
        %4381 = vrot.lane.b32.xlu0 %v3896, 64
        %v4382 = vpop.permute.xlu0 %4381
        %4383 = vrot.lane.b32.xlu0 %v3897, 64
        %v4384 = vpop.permute.xlu0 %4383
        %4385 = vrot.lane.b32.xlu0 %v3898, 64
        %v4386 = vpop.permute.xlu0 %4385
        %4391 = vrot.lane.b32.xlu0 %v4005, 80
        %v4392 = vpop.permute.xlu0 %4391
        %4393 = vrot.lane.b32.xlu0 %v4006, 80
        %v4394 = vpop.permute.xlu0 %4393
        %4395 = vrot.lane.b32.xlu0 %v4007, 80
        %v4396 = vpop.permute.xlu0 %4395
        %4397 = vrot.lane.b32.xlu0 %v4008, 80
        %v4398 = vpop.permute.xlu0 %4397
        %4403 = vrot.lane.b32.xlu0 %v4115, 96
        %v4404 = vpop.permute.xlu0 %4403
        %4405 = vrot.lane.b32.xlu0 %v4116, 96
        %v4406 = vpop.permute.xlu0 %4405
        %4407 = vrot.lane.b32.xlu0 %v4117, 96
        %v4408 = vpop.permute.xlu0 %4407
        %4409 = vrot.lane.b32.xlu0 %v4118, 96
        %v4410 = vpop.permute.xlu0 %4409
        %4415 = vrot.lane.b32.xlu0 %v4225, 112
        %v4416 = vpop.permute.xlu0 %4415
        %4417 = vrot.lane.b32.xlu0 %v4226, 112
        %v4418 = vpop.permute.xlu0 %4417
        %4419 = vrot.lane.b32.xlu0 %v4227, 112
        %v4420 = vpop.permute.xlu0 %4419
        %4421 = vrot.lane.b32.xlu0 %v4228, 112
        %v4422 = vpop.permute.xlu0 %4421
        %v4425 = vsel %vm2886, %v3455, %v4344
        %v4428 = vsel %vm2886, %v3456, %v4346
        %v4431 = vsel %vm2886, %v3457, %v4348
        %v4434 = vsel %vm2886, %v3458, %v4350
        %v4436 = vsel %vm2899, %v4425, %v4356
        %v4438 = vsel %vm2899, %v4428, %v4358
        %v4440 = vsel %vm2899, %v4431, %v4360
        %v4442 = vsel %vm2899, %v4434, %v4362
        %v4444 = vsel %vm2908, %v4436, %v4368
        %v4446 = vsel %vm2908, %v4438, %v4370
        %v4448 = vsel %vm2908, %v4440, %v4372
        %v4450 = vsel %vm2908, %v4442, %v4374
        %v4452 = vsel %vm2917, %v4444, %v4380
        %v4454 = vsel %vm2917, %v4446, %v4382
        %v4456 = vsel %vm2917, %v4448, %v4384
        %v4458 = vsel %vm2917, %v4450, %v4386
        %v4460 = vsel %vm2926, %v4452, %v4392
        %v4462 = vsel %vm2926, %v4454, %v4394
        %v4464 = vsel %vm2926, %v4456, %v4396
        %v4466 = vsel %vm2926, %v4458, %v4398
        %v4468 = vsel %vm2935, %v4460, %v4404
        %v4470 = vsel %vm2935, %v4462, %v4406
        %v4472 = vsel %vm2935, %v4464, %v4408
        %v4474 = vsel %vm2935, %v4466, %v4410
        %v4476 = vsel %vm2944, %v4468, %v4416
        %v4479 = vsel %vm2944, %v4470, %v4418
        %v4482 = vsel %vm2944, %v4472, %v4420
        %v4485 = vsel %vm2944, %v4474, %v4422
        %v4487 = vld [vmem:[%s21] sm:$0xf]
        %v4488 = vld [vmem:[%s21 + $0x4] sm:$0xf]
        %v4489 = vld [vmem:[%s21 + $0x8] sm:$0xf]
        %v4490 = vld [vmem:[%s21 + $0xc] sm:$0xf]
        %v4491 = vld [vmem:[%s21 + $0x10] sm:$0xf]
        %v4492 = vld [vmem:[%s21 + $0x14] sm:$0xf]
        %v4493 = vld [vmem:[%s21 + $0x18] sm:$0xf]
        %v4494 = vld [vmem:[%s21 + $0x1c] sm:$0xf]
        %v4495 = vld [vmem:[%s21 + $0x20] sm:$0xf]
        %v4496 = vld [vmem:[%s21 + $0x24] sm:$0xf]
        %v4497 = vld [vmem:[%s21 + $0x28] sm:$0xf]
        %v4498 = vld [vmem:[%s21 + $0x2c] sm:$0xf]
        %v4499 = vld [vmem:[%s21 + $0x30] sm:$0xf]
        %v4500 = vld [vmem:[%s21 + $0x34] sm:$0xf]
        %v4501 = vld [vmem:[%s21 + $0x38] sm:$0xf]
        %v4502 = vld [vmem:[%s21 + $0x3c] sm:$0xf]
        %v4503 = vld [vmem:[%s21 + $0x40] sm:$0xf]
        %v4504 = vld [vmem:[%s21 + $0x44] sm:$0xf]
        %v4505 = vld [vmem:[%s23] sm:$0x1]
        %v4507 = vlaneseq
        %v4508 = vshrl.u32 %v4507, 7
        %v4509 = vsub.s32 0, %v4508
        %v4510 = vrot.slane %v4505, %v4509
        %v4530 = vunpack.c.l.b16 %v4487
        %v4531 = vunpack.c.l.b16 %v4488
        %v4532 = vunpack.c.l.b16 %v4489
        %v4533 = vunpack.c.l.b16 %v4490
        %v4534 = vunpack.c.l.b16 %v4491
        %v4535 = vunpack.c.l.b16 %v4492
        %v4536 = vunpack.c.l.b16 %v4493
        %v4537 = vunpack.c.l.b16 %v4494
        %v4538 = vunpack.c.l.b16 %v4495
        %v4539 = vunpack.c.l.b16 %v4496
        %v4540 = vunpack.c.l.b16 %v4497
        %v4541 = vunpack.c.l.b16 %v4498
        %v4542 = vunpack.c.l.b16 %v4499
        %v4543 = vunpack.c.l.b16 %v4500
        %v4544 = vunpack.c.l.b16 %v4501
        %v4545 = vunpack.c.l.b16 %v4502
        %v4546 = vunpack.c.l.b16 %v4503
        %v4547 = vunpack.c.l.b16 %v4504
        %v4548 = vpack.c.b16 %v4531, %v4530
        %v4549 = vpack.c.b16 %v4533, %v4532
        %v4550 = vpack.c.b16 %v4535, %v4534
        %v4551 = vpack.c.b16 %v4537, %v4536
        %v4552 = vpack.c.b16 %v4539, %v4538
        %v4553 = vpack.c.b16 %v4541, %v4540
        %v4554 = vpack.c.b16 %v4543, %v4542
        %v4555 = vpack.c.b16 %v4545, %v4544
        %v4556 = vpack.c.b16 %v4547, %v4546
        %v4567 = vsel %vm2886, %v4335, 0
        %v4570 = vsel %vm2886, %v4336, 0
        %v4573 = vsel %vm2886, %v4337, 0
        %v4576 = vsel %vm2886, %v4338, 0
        %4578 = vmatprep.subr.bf16.mxu0 0
        %4579 = vmatpush1.bf16.msra.mxu0 %v4548
        %4580 = vmatprep.subr.bf16.mxu0 0
        %4581 = vmatpush1.bf16.msra.mxu0 %v4549
        %4582 = vmatprep.subr.bf16.mxu0 0
        %4583 = vmatpush1.bf16.msra.mxu0 %v4550
        %4584 = vmatprep.subr.bf16.mxu0 0
        %4585 = vmatpush1.bf16.msra.mxu0 %v4551
        %4586 = vmatprep.subr.bf16.mxu0 0
        %4587 = vmatpush1.bf16.msra.mxu0 %v4552
        %4588 = vmatprep.subr.bf16.mxu0 0
        %4589 = vmatpush1.bf16.msra.mxu0 %v4553
        %4590 = vmatprep.subr.bf16.mxu0 0
        %4591 = vmatpush1.bf16.msra.mxu0 %v4554
        %4592 = vmatprep.subr.bf16.mxu0 0
        %4593 = vmatpush1.bf16.msra.mxu0 %v4555
        %4594 = vmatprep.subr.bf16.mxu0 0
        %4595 = vmatpush1.bf16.msra.mxu0 %v4556
        %4596 = vmatprep.subr.bf16.mxu0 0
        %4597 = vmatpush1.bf16.msra.mxu0 0
        %4598 = vmatprep.subr.bf16.mxu0 0
        %4599 = vmatpush1.bf16.msra.mxu0 0
        %4600 = vmatprep.subr.bf16.mxu0 0
        %4601 = vmatpush1.bf16.msra.mxu0 0
        %4602 = vmatprep.subr.bf16.mxu0 0
        %4603 = vmatpush1.bf16.msra.mxu0 0
        %4604 = vmatprep.subr.bf16.mxu0 0
        %4605 = vmatpush1.bf16.msra.mxu0 0
        %4606 = vmatprep.subr.bf16.mxu0 0
        %4607 = vmatpush1.bf16.msra.mxu0 0
        %4608 = vmatprep.subr.bf16.mxu0 0
        %4609 = vmatpush1.bf16.msra.mxu0 0
        %4610 = vmatprep.mubr.bf16.mxu0 %v4567
        %4611 = vmatmul.mubr.bf16.gmra.mrb[0].mxu0 %v4476
        %v4612 = vpop.f32.mrb[0].mxu0
        %v4613 = vadd.f32 %v4510, %v4612
        %v4614 = vpop.f32.mrb[0].mxu0
        %v4615 = vpop.f32.mrb[0].mxu0
        %v4616 = vadd.f32 %v4510, %v4615
        %v4617 = vpop.f32.mrb[0].mxu0
        %4618 = vmatprep.mubr.bf16.mxu0 %v4570
        %4619 = vmatmul.mubr.bf16.gmra.mrb[0].mxu0 %v4479
        %v4620 = vpop.f32.mrb[0].mxu0
        %v4621 = vadd.f32 %v4510, %v4620
        %v4622 = vpop.f32.mrb[0].mxu0
        %v4623 = vpop.f32.mrb[0].mxu0
        %v4624 = vadd.f32 %v4510, %v4623
        %v4625 = vpop.f32.mrb[0].mxu0
        %4626 = vmatprep.mubr.bf16.mxu0 %v4573
        %4627 = vmatmul.mubr.bf16.gmra.mrb[0].mxu0 %v4482
        %v4628 = vpop.f32.mrb[0].mxu0
        %v4629 = vadd.f32 %v4510, %v4628
        %v4630 = vpop.f32.mrb[0].mxu0
        %v4631 = vpop.f32.mrb[0].mxu0
        %v4632 = vadd.f32 %v4510, %v4631
        %v4633 = vpop.f32.mrb[0].mxu0
        %4634 = vmatprep.mubr.bf16.mxu0 %v4576
        %4635 = vmatmul.mubr.bf16.gmra.mrb[0].mxu0 %v4485
        %v4636 = vpop.f32.mrb[0].mxu0
        %v4637 = vadd.f32 %v4510, %v4636
        %v4638 = vpop.f32.mrb[0].mxu0
        %v4639 = vpop.f32.mrb[0].mxu0
        %v4640 = vadd.f32 %v4510, %v4639
        %v4641 = vpop.f32.mrb[0].mxu0
        %4642 = vdwg.mxu0
        %v4643 = vadd.f32 %v4613, %v3320
        %v4644 = vadd.f32 %v4616, %v3323
        %v4645 = vadd.f32 %v4621, %v3328
        %v4646 = vadd.f32 %v4624, %v3331
        %v4647 = vadd.f32 %v4629, %v3336
        %v4648 = vadd.f32 %v4632, %v3339
        %v4649 = vadd.f32 %v4637, %v3344
        %v4650 = vadd.f32 %v4640, %v3347
        %vm4651 = vcmp.ge.f32.partialorder %v4643, 0.0
        %vm4652 = vcmp.ge.f32.partialorder %v4644, 0.0
        %vm4653 = vcmp.ge.f32.partialorder %v4645, 0.0
        %vm4654 = vcmp.ge.f32.partialorder %v4646, 0.0
        %vm4655 = vcmp.ge.f32.partialorder %v4647, 0.0
        %vm4656 = vcmp.ge.f32.partialorder %v4648, 0.0
        %vm4657 = vcmp.ge.f32.partialorder %v4649, 0.0
        %vm4658 = vcmp.ge.f32.partialorder %v4650, 0.0
        %v4659 = vmul.f32 %v4643, 0.01
        %v4660 = vmul.f32 %v4644, 0.01
        %v4661 = vmul.f32 %v4645, 0.01
        %v4662 = vmul.f32 %v4646, 0.01
        %v4663 = vmul.f32 %v4647, 0.01
        %v4664 = vmul.f32 %v4648, 0.01
        %v4665 = vmul.f32 %v4649, 0.01
        %v4666 = vmul.f32 %v4650, 0.01
        %v4667 = vsel %vm4651, %v4643, %v4659
        %v4668 = vsel %vm4652, %v4644, %v4660
        %v4669 = vsel %vm4653, %v4645, %v4661
        %v4670 = vsel %vm4654, %v4646, %v4662
        %v4671 = vsel %vm4655, %v4647, %v4663
        %v4672 = vsel %vm4656, %v4648, %v4664
        %v4673 = vsel %vm4657, %v4649, %v4665
        %v4674 = vsel %vm4658, %v4650, %v4666
        %v4675 = vpack.c.bf16 %v4668, %v4667
        %v4676 = vpack.c.bf16 %v4670, %v4669
        %v4677 = vpack.c.bf16 %v4672, %v4671
        %v4678 = vpack.c.bf16 %v4674, %v4673
        %v4679 = vld [vmem:[%s25] sm:$0xf]
        %v4680 = vld [vmem:[%s25 + $0x4] sm:$0xf]
        %v4683 = vunpack.c.l.b16 %v4679
        %v4684 = vunpack.c.l.b16 %v4680
        %v4685 = vpack.c.b16 %v4684, %v4683
        %v4687 = vsel %vm2917, %v4685, 0
        %4689 = vmatprep.subr.bf16.mxu0 0
        %4690 = vmatpush1.bf16.msra.mxu0 %v4675
        %4691 = vmatprep.subr.bf16.mxu0 0
        %4692 = vmatpush1.bf16.msra.mxu0 %v4676
        %4693 = vmatprep.subr.bf16.mxu0 0
        %4694 = vmatpush1.bf16.msra.mxu0 %v4677
        %4695 = vmatprep.subr.bf16.mxu0 0
        %4696 = vmatpush1.bf16.msra.mxu0 %v4678
        %4697 = vmatprep.subr.bf16.mxu0 0
        %4698 = vmatpush1.bf16.msra.mxu0 0
        %4699 = vmatprep.subr.bf16.mxu0 0
        %4700 = vmatpush1.bf16.msra.mxu0 0
        %4701 = vmatprep.subr.bf16.mxu0 0
        %4702 = vmatpush1.bf16.msra.mxu0 0
        %4703 = vmatprep.subr.bf16.mxu0 0
        %4704 = vmatpush1.bf16.msra.mxu0 0
        %4705 = vmatprep.subr.bf16.mxu0 0
        %4706 = vmatpush1.bf16.msra.mxu0 0
        %4707 = vmatprep.subr.bf16.mxu0 0
        %4708 = vmatpush1.bf16.msra.mxu0 0
        %4709 = vmatprep.subr.bf16.mxu0 0
        %4710 = vmatpush1.bf16.msra.mxu0 0
        %4711 = vmatprep.subr.bf16.mxu0 0
        %4712 = vmatpush1.bf16.msra.mxu0 0
        %4713 = vmatprep.subr.bf16.mxu0 0
        %4714 = vmatpush1.bf16.msra.mxu0 0
        %4715 = vmatprep.subr.bf16.mxu0 0
        %4716 = vmatpush1.bf16.msra.mxu0 0
        %4717 = vmatprep.subr.bf16.mxu0 0
        %4718 = vmatpush1.bf16.msra.mxu0 0
        %4719 = vmatprep.subr.bf16.mxu0 0
        %4720 = vmatpush1.bf16.msra.mxu0 0
        %4721 = vmatprep.mubr.bf16.mxu0 0
        %4722 = vmatmul.mubr.bf16.gmra.mrb[0].mxu0 %v4687
        %v4723 = vpop.f32.mrb[0].mxu0
        %v4724 = vadd.f32 0.0, %v4723
        %v4725 = vpop.f32.mrb[0].mxu0
        %v4726 = vpop.f32.mrb[0].mxu0
        %v4727 = vadd.f32 0.0, %v4726
        %v4728 = vpop.f32.mrb[0].mxu0
        %4729 = vdwg.mxu0
        %v4730 = vpack.c.bf16 %v4727, %v4724
        %s4731 = scalar_lea.vmem %s25, 8
        %v4732 = vld [vmem:[%s4731] sm:$0xf]
        %v4733 = vld [vmem:[%s4731 + $0x4] sm:$0xf]
        %v4736 = vunpack.c.l.b16 %v4732
        %v4737 = vunpack.c.l.b16 %v4733
        %v4738 = vpack.c.b16 %v4737, %v4736
        %v4740 = vsel %vm2917, %v4738, 0
        %4742 = vmatprep.subr.bf16.mxu0 0
        %4743 = vmatpush1.bf16.msra.mxu0 %v4675
        %4744 = vmatprep.subr.bf16.mxu0 0
        %4745 = vmatpush1.bf16.msra.mxu0 %v4676
        %4746 = vmatprep.subr.bf16.mxu0 0
        %4747 = vmatpush1.bf16.msra.mxu0 %v4677
        %4748 = vmatprep.subr.bf16.mxu0 0
        %4749 = vmatpush1.bf16.msra.mxu0 %v4678
        %4750 = vmatprep.subr.bf16.mxu0 0
        %4751 = vmatpush1.bf16.msra.mxu0 0
        %4752 = vmatprep.subr.bf16.mxu0 0
        %4753 = vmatpush1.bf16.msra.mxu0 0
        %4754 = vmatprep.subr.bf16.mxu0 0
        %4755 = vmatpush1.bf16.msra.mxu0 0
        %4756 = vmatprep.subr.bf16.mxu0 0
        %4757 = vmatpush1.bf16.msra.mxu0 0
        %4758 = vmatprep.subr.bf16.mxu0 0
        %4759 = vmatpush1.bf16.msra.mxu0 0
        %4760 = vmatprep.subr.bf16.mxu0 0
        %4761 = vmatpush1.bf16.msra.mxu0 0
        %4762 = vmatprep.subr.bf16.mxu0 0
        %4763 = vmatpush1.bf16.msra.mxu0 0
        %4764 = vmatprep.subr.bf16.mxu0 0
        %4765 = vmatpush1.bf16.msra.mxu0 0
        %4766 = vmatprep.subr.bf16.mxu0 0
        %4767 = vmatpush1.bf16.msra.mxu0 0
        %4768 = vmatprep.subr.bf16.mxu0 0
        %4769 = vmatpush1.bf16.msra.mxu0 0
        %4770 = vmatprep.subr.bf16.mxu0 0
        %4771 = vmatpush1.bf16.msra.mxu0 0
        %4772 = vmatprep.subr.bf16.mxu0 0
        %4773 = vmatpush1.bf16.msra.mxu0 0
        %4774 = vmatprep.mubr.bf16.mxu0 0
        %4775 = vmatmul.mubr.bf16.gmra.mrb[0].mxu0 %v4740
        %v4776 = vpop.f32.mrb[0].mxu0
        %v4777 = vadd.f32 0.0, %v4776
        %v4778 = vpop.f32.mrb[0].mxu0
        %v4779 = vpop.f32.mrb[0].mxu0
        %v4780 = vadd.f32 0.0, %v4779
        %v4781 = vpop.f32.mrb[0].mxu0
        %4782 = vdwg.mxu0
        %v4783 = vpack.c.bf16 %v4780, %v4777
        %s4784 = scalar_lea.vmem %s25, 16
        %v4785 = vld [vmem:[%s4784] sm:$0xf]
        %v4786 = vld [vmem:[%s4784 + $0x4] sm:$0xf]
        %v4789 = vunpack.c.l.b16 %v4785
        %v4790 = vunpack.c.l.b16 %v4786
        %v4791 = vpack.c.b16 %v4790, %v4789
        %v4793 = vsel %vm2917, %v4791, 0
        %4795 = vmatprep.subr.bf16.mxu0 0
        %4796 = vmatpush1.bf16.msra.mxu0 %v4675
        %4797 = vmatprep.subr.bf16.mxu0 0
        %4798 = vmatpush1.bf16.msra.mxu0 %v4676
        %4799 = vmatprep.subr.bf16.mxu0 0
        %4800 = vmatpush1.bf16.msra.mxu0 %v4677
        %4801 = vmatprep.subr.bf16.mxu0 0
        %4802 = vmatpush1.bf16.msra.mxu0 %v4678
        %4803 = vmatprep.subr.bf16.mxu0 0
        %4804 = vmatpush1.bf16.msra.mxu0 0
        %4805 = vmatprep.subr.bf16.mxu0 0
        %4806 = vmatpush1.bf16.msra.mxu0 0
        %4807 = vmatprep.subr.bf16.mxu0 0
        %4808 = vmatpush1.bf16.msra.mxu0 0
        %4809 = vmatprep.subr.bf16.mxu0 0
        %4810 = vmatpush1.bf16.msra.mxu0 0
        %4811 = vmatprep.subr.bf16.mxu0 0
        %4812 = vmatpush1.bf16.msra.mxu0 0
        %4813 = vmatprep.subr.bf16.mxu0 0
        %4814 = vmatpush1.bf16.msra.mxu0 0
        %4815 = vmatprep.subr.bf16.mxu0 0
        %4816 = vmatpush1.bf16.msra.mxu0 0
        %4817 = vmatprep.subr.bf16.mxu0 0
        %4818 = vmatpush1.bf16.msra.mxu0 0
        %4819 = vmatprep.subr.bf16.mxu0 0
        %4820 = vmatpush1.bf16.msra.mxu0 0
        %4821 = vmatprep.subr.bf16.mxu0 0
        %4822 = vmatpush1.bf16.msra.mxu0 0
        %4823 = vmatprep.subr.bf16.mxu0 0
        %4824 = vmatpush1.bf16.msra.mxu0 0
        %4825 = vmatprep.subr.bf16.mxu0 0
        %4826 = vmatpush1.bf16.msra.mxu0 0
        %4827 = vmatprep.mubr.bf16.mxu0 0
        %4828 = vmatmul.mubr.bf16.gmra.mrb[0].mxu0 %v4793
        %v4829 = vpop.f32.mrb[0].mxu0
        %v4830 = vadd.f32 0.0, %v4829
        %v4831 = vpop.f32.mrb[0].mxu0
        %v4832 = vpop.f32.mrb[0].mxu0
        %v4833 = vadd.f32 0.0, %v4832
        %v4834 = vpop.f32.mrb[0].mxu0
        %4835 = vdwg.mxu0
        %v4836 = vpack.c.bf16 %v4833, %v4830
        %s4837 = scalar_lea.vmem %s25, 24
        %v4838 = vld [vmem:[%s4837] sm:$0xf]
        %v4839 = vld [vmem:[%s4837 + $0x4] sm:$0xf]
        %v4842 = vunpack.c.l.b16 %v4838
        %v4843 = vunpack.c.l.b16 %v4839
        %v4844 = vpack.c.b16 %v4843, %v4842
        %v4846 = vsel %vm2917, %v4844, 0
        %4848 = vmatprep.subr.bf16.mxu0 0
        %4849 = vmatpush1.bf16.msra.mxu0 %v4675
        %4850 = vmatprep.subr.bf16.mxu0 0
        %4851 = vmatpush1.bf16.msra.mxu0 %v4676
        %4852 = vmatprep.subr.bf16.mxu0 0
        %4853 = vmatpush1.bf16.msra.mxu0 %v4677
        %4854 = vmatprep.subr.bf16.mxu0 0
        %4855 = vmatpush1.bf16.msra.mxu0 %v4678
        %4856 = vmatprep.subr.bf16.mxu0 0
        %4857 = vmatpush1.bf16.msra.mxu0 0
        %4858 = vmatprep.subr.bf16.mxu0 0
        %4859 = vmatpush1.bf16.msra.mxu0 0
        %4860 = vmatprep.subr.bf16.mxu0 0
        %4861 = vmatpush1.bf16.msra.mxu0 0
        %4862 = vmatprep.subr.bf16.mxu0 0
        %4863 = vmatpush1.bf16.msra.mxu0 0
        %4864 = vmatprep.subr.bf16.mxu0 0
        %4865 = vmatpush1.bf16.msra.mxu0 0
        %4866 = vmatprep.subr.bf16.mxu0 0
        %4867 = vmatpush1.bf16.msra.mxu0 0
        %4868 = vmatprep.subr.bf16.mxu0 0
        %4869 = vmatpush1.bf16.msra.mxu0 0
        %4870 = vmatprep.subr.bf16.mxu0 0
        %4871 = vmatpush1.bf16.msra.mxu0 0
        %4872 = vmatprep.subr.bf16.mxu0 0
        %4873 = vmatpush1.bf16.msra.mxu0 0
        %4874 = vmatprep.subr.bf16.mxu0 0
        %4875 = vmatpush1.bf16.msra.mxu0 0
        %4876 = vmatprep.subr.bf16.mxu0 0
        %4877 = vmatpush1.bf16.msra.mxu0 0
        %4878 = vmatprep.subr.bf16.mxu0 0
        %4879 = vmatpush1.bf16.msra.mxu0 0
        %4880 = vmatprep.mubr.bf16.mxu0 0
        %4881 = vmatmul.mubr.bf16.gmra.mrb[0].mxu0 %v4846
        %v4882 = vpop.f32.mrb[0].mxu0
        %v4883 = vadd.f32 0.0, %v4882
        %v4884 = vpop.f32.mrb[0].mxu0
        %v4885 = vpop.f32.mrb[0].mxu0
        %v4886 = vadd.f32 0.0, %v4885
        %v4887 = vpop.f32.mrb[0].mxu0
        %4888 = vdwg.mxu0
        %v4889 = vpack.c.bf16 %v4886, %v4883
        %s4890 = scalar_lea.vmem %s25, 32
        %v4891 = vld [vmem:[%s4890] sm:$0xf]
        %v4892 = vld [vmem:[%s4890 + $0x4] sm:$0xf]
        %v4895 = vunpack.c.l.b16 %v4891
        %v4896 = vunpack.c.l.b16 %v4892
        %v4897 = vpack.c.b16 %v4896, %v4895
        %v4899 = vsel %vm2917, %v4897, 0
        %4901 = vmatprep.subr.bf16.mxu0 0
        %4902 = vmatpush1.bf16.msra.mxu0 %v4675
        %4903 = vmatprep.subr.bf16.mxu0 0
        %4904 = vmatpush1.bf16.msra.mxu0 %v4676
        %4905 = vmatprep.subr.bf16.mxu0 0
        %4906 = vmatpush1.bf16.msra.mxu0 %v4677
        %4907 = vmatprep.subr.bf16.mxu0 0
        %4908 = vmatpush1.bf16.msra.mxu0 %v4678
        %4909 = vmatprep.subr.bf16.mxu0 0
        %4910 = vmatpush1.bf16.msra.mxu0 0
        %4911 = vmatprep.subr.bf16.mxu0 0
        %4912 = vmatpush1.bf16.msra.mxu0 0
        %4913 = vmatprep.subr.bf16.mxu0 0
        %4914 = vmatpush1.bf16.msra.mxu0 0
        %4915 = vmatprep.subr.bf16.mxu0 0
        %4916 = vmatpush1.bf16.msra.mxu0 0
        %4917 = vmatprep.subr.bf16.mxu0 0
        %4918 = vmatpush1.bf16.msra.mxu0 0
        %4919 = vmatprep.subr.bf16.mxu0 0
        %4920 = vmatpush1.bf16.msra.mxu0 0
        %4921 = vmatprep.subr.bf16.mxu0 0
        %4922 = vmatpush1.bf16.msra.mxu0 0
        %4923 = vmatprep.subr.bf16.mxu0 0
        %4924 = vmatpush1.bf16.msra.mxu0 0
        %4925 = vmatprep.subr.bf16.mxu0 0
        %4926 = vmatpush1.bf16.msra.mxu0 0
        %4927 = vmatprep.subr.bf16.mxu0 0
        %4928 = vmatpush1.bf16.msra.mxu0 0
        %4929 = vmatprep.subr.bf16.mxu0 0
        %4930 = vmatpush1.bf16.msra.mxu0 0
        %4931 = vmatprep.subr.bf16.mxu0 0
        %4932 = vmatpush1.bf16.msra.mxu0 0
        %4933 = vmatprep.mubr.bf16.mxu0 0
        %4934 = vmatmul.mubr.bf16.gmra.mrb[0].mxu0 %v4899
        %v4935 = vpop.f32.mrb[0].mxu0
        %v4936 = vadd.f32 0.0, %v4935
        %v4937 = vpop.f32.mrb[0].mxu0
        %v4938 = vpop.f32.mrb[0].mxu0
        %v4939 = vadd.f32 0.0, %v4938
        %v4940 = vpop.f32.mrb[0].mxu0
        %4941 = vdwg.mxu0
        %v4942 = vpack.c.bf16 %v4939, %v4936
        %s4943 = scalar_lea.vmem %s25, 40
        %v4944 = vld [vmem:[%s4943] sm:$0xf]
        %v4945 = vld [vmem:[%s4943 + $0x4] sm:$0xf]
        %v4948 = vunpack.c.l.b16 %v4944
        %v4949 = vunpack.c.l.b16 %v4945
        %v4950 = vpack.c.b16 %v4949, %v4948
        %v4952 = vsel %vm2917, %v4950, 0
        %4954 = vmatprep.subr.bf16.mxu0 0
        %4955 = vmatpush1.bf16.msra.mxu0 %v4675
        %4956 = vmatprep.subr.bf16.mxu0 0
        %4957 = vmatpush1.bf16.msra.mxu0 %v4676
        %4958 = vmatprep.subr.bf16.mxu0 0
        %4959 = vmatpush1.bf16.msra.mxu0 %v4677
        %4960 = vmatprep.subr.bf16.mxu0 0
        %4961 = vmatpush1.bf16.msra.mxu0 %v4678
        %4962 = vmatprep.subr.bf16.mxu0 0
        %4963 = vmatpush1.bf16.msra.mxu0 0
        %4964 = vmatprep.subr.bf16.mxu0 0
        %4965 = vmatpush1.bf16.msra.mxu0 0
        %4966 = vmatprep.subr.bf16.mxu0 0
        %4967 = vmatpush1.bf16.msra.mxu0 0
        %4968 = vmatprep.subr.bf16.mxu0 0
        %4969 = vmatpush1.bf16.msra.mxu0 0
        %4970 = vmatprep.subr.bf16.mxu0 0
        %4971 = vmatpush1.bf16.msra.mxu0 0
        %4972 = vmatprep.subr.bf16.mxu0 0
        %4973 = vmatpush1.bf16.msra.mxu0 0
        %4974 = vmatprep.subr.bf16.mxu0 0
        %4975 = vmatpush1.bf16.msra.mxu0 0
        %4976 = vmatprep.subr.bf16.mxu0 0
        %4977 = vmatpush1.bf16.msra.mxu0 0
        %4978 = vmatprep.subr.bf16.mxu0 0
        %4979 = vmatpush1.bf16.msra.mxu0 0
        %4980 = vmatprep.subr.bf16.mxu0 0
        %4981 = vmatpush1.bf16.msra.mxu0 0
        %4982 = vmatprep.subr.bf16.mxu0 0
        %4983 = vmatpush1.bf16.msra.mxu0 0
        %4984 = vmatprep.subr.bf16.mxu0 0
        %4985 = vmatpush1.bf16.msra.mxu0 0
        %4986 = vmatprep.mubr.bf16.mxu0 0
        %4987 = vmatmul.mubr.bf16.gmra.mrb[0].mxu0 %v4952
        %v4988 = vpop.f32.mrb[0].mxu0
        %v4989 = vadd.f32 0.0, %v4988
        %v4990 = vpop.f32.mrb[0].mxu0
        %v4991 = vpop.f32.mrb[0].mxu0
        %v4992 = vadd.f32 0.0, %v4991
        %v4993 = vpop.f32.mrb[0].mxu0
        %4994 = vdwg.mxu0
        %v4995 = vpack.c.bf16 %v4992, %v4989
        %s4996 = scalar_lea.vmem %s25, 48
        %v4997 = vld [vmem:[%s4996] sm:$0xf]
        %v4998 = vld [vmem:[%s4996 + $0x4] sm:$0xf]
        %v5001 = vunpack.c.l.b16 %v4997
        %v5002 = vunpack.c.l.b16 %v4998
        %v5003 = vpack.c.b16 %v5002, %v5001
        %v5005 = vsel %vm2917, %v5003, 0
        %5007 = vmatprep.subr.bf16.mxu0 0
        %5008 = vmatpush1.bf16.msra.mxu0 %v4675
        %5009 = vmatprep.subr.bf16.mxu0 0
        %5010 = vmatpush1.bf16.msra.mxu0 %v4676
        %5011 = vmatprep.subr.bf16.mxu0 0
        %5012 = vmatpush1.bf16.msra.mxu0 %v4677
        %5013 = vmatprep.subr.bf16.mxu0 0
        %5014 = vmatpush1.bf16.msra.mxu0 %v4678
        %5015 = vmatprep.subr.bf16.mxu0 0
        %5016 = vmatpush1.bf16.msra.mxu0 0
        %5017 = vmatprep.subr.bf16.mxu0 0
        %5018 = vmatpush1.bf16.msra.mxu0 0
        %5019 = vmatprep.subr.bf16.mxu0 0
        %5020 = vmatpush1.bf16.msra.mxu0 0
        %5021 = vmatprep.subr.bf16.mxu0 0
        %5022 = vmatpush1.bf16.msra.mxu0 0
        %5023 = vmatprep.subr.bf16.mxu0 0
        %5024 = vmatpush1.bf16.msra.mxu0 0
        %5025 = vmatprep.subr.bf16.mxu0 0
        %5026 = vmatpush1.bf16.msra.mxu0 0
        %5027 = vmatprep.subr.bf16.mxu0 0
        %5028 = vmatpush1.bf16.msra.mxu0 0
        %5029 = vmatprep.subr.bf16.mxu0 0
        %5030 = vmatpush1.bf16.msra.mxu0 0
        %5031 = vmatprep.subr.bf16.mxu0 0
        %5032 = vmatpush1.bf16.msra.mxu0 0
        %5033 = vmatprep.subr.bf16.mxu0 0
        %5034 = vmatpush1.bf16.msra.mxu0 0
        %5035 = vmatprep.subr.bf16.mxu0 0
        %5036 = vmatpush1.bf16.msra.mxu0 0
        %5037 = vmatprep.subr.bf16.mxu0 0
        %5038 = vmatpush1.bf16.msra.mxu0 0
        %5039 = vmatprep.mubr.bf16.mxu0 0
        %5040 = vmatmul.mubr.bf16.gmra.mrb[0].mxu0 %v5005
        %v5041 = vpop.f32.mrb[0].mxu0
        %v5042 = vadd.f32 0.0, %v5041
        %v5043 = vpop.f32.mrb[0].mxu0
        %v5044 = vpop.f32.mrb[0].mxu0
        %v5045 = vadd.f32 0.0, %v5044
        %v5046 = vpop.f32.mrb[0].mxu0
        %5047 = vdwg.mxu0
        %v5048 = vpack.c.bf16 %v5045, %v5042
        %s5049 = scalar_lea.vmem %s25, 56
        %v5050 = vld [vmem:[%s5049] sm:$0xf]
        %v5051 = vld [vmem:[%s5049 + $0x4] sm:$0xf]
        %v5054 = vunpack.c.l.b16 %v5050
        %v5055 = vunpack.c.l.b16 %v5051
        %v5056 = vpack.c.b16 %v5055, %v5054
        %v5058 = vsel %vm2917, %v5056, 0
        %5060 = vmatprep.subr.bf16.mxu0 0
        %5061 = vmatpush1.bf16.msra.mxu0 %v4675
        %5062 = vmatprep.subr.bf16.mxu0 0
        %5063 = vmatpush1.bf16.msra.mxu0 %v4676
        %5064 = vmatprep.subr.bf16.mxu0 0
        %5065 = vmatpush1.bf16.msra.mxu0 %v4677
        %5066 = vmatprep.subr.bf16.mxu0 0
        %5067 = vmatpush1.bf16.msra.mxu0 %v4678
        %5068 = vmatprep.subr.bf16.mxu0 0
        %5069 = vmatpush1.bf16.msra.mxu0 0
        %5070 = vmatprep.subr.bf16.mxu0 0
        %5071 = vmatpush1.bf16.msra.mxu0 0
        %5072 = vmatprep.subr.bf16.mxu0 0
        %5073 = vmatpush1.bf16.msra.mxu0 0
        %5074 = vmatprep.subr.bf16.mxu0 0
        %5075 = vmatpush1.bf16.msra.mxu0 0
        %5076 = vmatprep.subr.bf16.mxu0 0
        %5077 = vmatpush1.bf16.msra.mxu0 0
        %5078 = vmatprep.subr.bf16.mxu0 0
        %5079 = vmatpush1.bf16.msra.mxu0 0
        %5080 = vmatprep.subr.bf16.mxu0 0
        %5081 = vmatpush1.bf16.msra.mxu0 0
        %5082 = vmatprep.subr.bf16.mxu0 0
        %5083 = vmatpush1.bf16.msra.mxu0 0
        %5084 = vmatprep.subr.bf16.mxu0 0
        %5085 = vmatpush1.bf16.msra.mxu0 0
        %5086 = vmatprep.subr.bf16.mxu0 0
        %5087 = vmatpush1.bf16.msra.mxu0 0
        %5088 = vmatprep.subr.bf16.mxu0 0
        %5089 = vmatpush1.bf16.msra.mxu0 0
        %5090 = vmatprep.subr.bf16.mxu0 0
        %5091 = vmatpush1.bf16.msra.mxu0 0
        %5092 = vmatprep.mubr.bf16.mxu0 0
        %5093 = vmatmul.mubr.bf16.gmra.mrb[0].mxu0 %v5058
        %v5094 = vpop.f32.mrb[0].mxu0
        %v5095 = vadd.f32 0.0, %v5094
        %v5096 = vpop.f32.mrb[0].mxu0
        %v5097 = vpop.f32.mrb[0].mxu0
        %v5098 = vadd.f32 0.0, %v5097
        %v5099 = vpop.f32.mrb[0].mxu0
        %5100 = vdwg.mxu0
        %v5101 = vpack.c.bf16 %v5098, %v5095
        %s5102 = scalar_lea.vmem %s25, 64
        %v5103 = vld [vmem:[%s5102] sm:$0xf]
        %v5104 = vld [vmem:[%s5102 + $0x4] sm:$0xf]
        %v5107 = vunpack.c.l.b16 %v5103
        %v5108 = vunpack.c.l.b16 %v5104
        %v5109 = vpack.c.b16 %v5108, %v5107
        %v5111 = vsel %vm2917, %v5109, 0
        %5113 = vmatprep.subr.bf16.mxu0 0
        %5114 = vmatpush1.bf16.msra.mxu0 %v4675
        %5115 = vmatprep.subr.bf16.mxu0 0
        %5116 = vmatpush1.bf16.msra.mxu0 %v4676
        %5117 = vmatprep.subr.bf16.mxu0 0
        %5118 = vmatpush1.bf16.msra.mxu0 %v4677
        %5119 = vmatprep.subr.bf16.mxu0 0
        %5120 = vmatpush1.bf16.msra.mxu0 %v4678
        %5121 = vmatprep.subr.bf16.mxu0 0
        %5122 = vmatpush1.bf16.msra.mxu0 0
        %5123 = vmatprep.subr.bf16.mxu0 0
        %5124 = vmatpush1.bf16.msra.mxu0 0
        %5125 = vmatprep.subr.bf16.mxu0 0
        %5126 = vmatpush1.bf16.msra.mxu0 0
        %5127 = vmatprep.subr.bf16.mxu0 0
        %5128 = vmatpush1.bf16.msra.mxu0 0
        %5129 = vmatprep.subr.bf16.mxu0 0
        %5130 = vmatpush1.bf16.msra.mxu0 0
        %5131 = vmatprep.subr.bf16.mxu0 0
        %5132 = vmatpush1.bf16.msra.mxu0 0
        %5133 = vmatprep.subr.bf16.mxu0 0
        %5134 = vmatpush1.bf16.msra.mxu0 0
        %5135 = vmatprep.subr.bf16.mxu0 0
        %5136 = vmatpush1.bf16.msra.mxu0 0
        %5137 = vmatprep.subr.bf16.mxu0 0
        %5138 = vmatpush1.bf16.msra.mxu0 0
        %5139 = vmatprep.subr.bf16.mxu0 0
        %5140 = vmatpush1.bf16.msra.mxu0 0
        %5141 = vmatprep.subr.bf16.mxu0 0
        %5142 = vmatpush1.bf16.msra.mxu0 0
        %5143 = vmatprep.subr.bf16.mxu0 0
        %5144 = vmatpush1.bf16.msra.mxu0 0
        %5145 = vmatprep.mubr.bf16.mxu0 0
        %5146 = vmatmul.mubr.bf16.gmra.mrb[0].mxu0 %v5111
        %v5147 = vpop.f32.mrb[0].mxu0
        %v5148 = vadd.f32 0.0, %v5147
        %v5149 = vpop.f32.mrb[0].mxu0
        %v5150 = vpop.f32.mrb[0].mxu0
        %v5151 = vadd.f32 0.0, %v5150
        %v5152 = vpop.f32.mrb[0].mxu0
        %5153 = vdwg.mxu0
        %v5154 = vpack.c.bf16 %v5151, %v5148
        %5156 = vrot.lane.b32.xlu0 %v4783, 16
        %v5157 = vpop.permute.xlu0 %5156
        %5159 = vrot.lane.b32.xlu0 %v4836, 32
        %v5160 = vpop.permute.xlu0 %5159
        %5162 = vrot.lane.b32.xlu0 %v4889, 48
        %v5163 = vpop.permute.xlu0 %5162
        %5165 = vrot.lane.b32.xlu0 %v4942, 64
        %v5166 = vpop.permute.xlu0 %5165
        %5168 = vrot.lane.b32.xlu0 %v4995, 80
        %v5169 = vpop.permute.xlu0 %5168
        %5171 = vrot.lane.b32.xlu0 %v5048, 96
        %v5172 = vpop.permute.xlu0 %5171
        %5174 = vrot.lane.b32.xlu0 %v5101, 112
        %v5175 = vpop.permute.xlu0 %5174
        %v5178 = vsel %vm2886, %v4730, %v5157
        %v5180 = vsel %vm2899, %v5178, %v5160
        %v5182 = vsel %vm2908, %v5180, %v5163
        %v5184 = vsel %vm2917, %v5182, %v5166
        %v5186 = vsel %vm2926, %v5184, %v5169
        %v5188 = vsel %vm2935, %v5186, %v5172
        %v5190 = vsel %vm2944, %v5188, %v5175
        %v5192 = vld [vmem:[%s27] sm:$0xf]
        %v5193 = vld [vmem:[%s27 + $0x4] sm:$0xf]
        %v5194 = vld [vmem:[%s27 + $0x8] sm:$0xf]
        %v5195 = vld [vmem:[%s27 + $0xc] sm:$0xf]
        %v5196 = vld [vmem:[%s27 + $0x10] sm:$0xf]
        %v5197 = vld [vmem:[%s27 + $0x14] sm:$0xf]
        %v5198 = vld [vmem:[%s27 + $0x18] sm:$0xf]
        %v5199 = vld [vmem:[%s27 + $0x1c] sm:$0xf]
        %v5200 = vld [vmem:[%s27 + $0x20] sm:$0xf]
        %v5201 = vld [vmem:[%s27 + $0x24] sm:$0xf]
        %v5202 = vld [vmem:[%s27 + $0x28] sm:$0xf]
        %v5203 = vld [vmem:[%s27 + $0x2c] sm:$0xf]
        %v5204 = vld [vmem:[%s27 + $0x30] sm:$0xf]
        %v5205 = vld [vmem:[%s27 + $0x34] sm:$0xf]
        %v5206 = vld [vmem:[%s27 + $0x38] sm:$0xf]
        %v5207 = vld [vmem:[%s27 + $0x3c] sm:$0xf]
        %v5208 = vld [vmem:[%s27 + $0x40] sm:$0xf]
        %v5209 = vld [vmem:[%s27 + $0x44] sm:$0xf]
        %v5210 = vld [vmem:[%s29] sm:$0x1]
        %v5212 = vlaneseq
        %v5213 = vshrl.u32 %v5212, 7
        %v5214 = vsub.s32 0, %v5213
        %v5215 = vrot.slane %v5210, %v5214
        %v5235 = vunpack.c.l.b16 %v5192
        %v5236 = vunpack.c.l.b16 %v5193
        %v5237 = vunpack.c.l.b16 %v5194
        %v5238 = vunpack.c.l.b16 %v5195
        %v5239 = vunpack.c.l.b16 %v5196
        %v5240 = vunpack.c.l.b16 %v5197
        %v5241 = vunpack.c.l.b16 %v5198
        %v5242 = vunpack.c.l.b16 %v5199
        %v5243 = vunpack.c.l.b16 %v5200
        %v5244 = vunpack.c.l.b16 %v5201
        %v5245 = vunpack.c.l.b16 %v5202
        %v5246 = vunpack.c.l.b16 %v5203
        %v5247 = vunpack.c.l.b16 %v5204
        %v5248 = vunpack.c.l.b16 %v5205
        %v5249 = vunpack.c.l.b16 %v5206
        %v5250 = vunpack.c.l.b16 %v5207
        %v5251 = vunpack.c.l.b16 %v5208
        %v5252 = vunpack.c.l.b16 %v5209
        %v5253 = vpack.c.b16 %v5236, %v5235
        %v5254 = vpack.c.b16 %v5238, %v5237
        %v5255 = vpack.c.b16 %v5240, %v5239
        %v5256 = vpack.c.b16 %v5242, %v5241
        %v5257 = vpack.c.b16 %v5244, %v5243
        %v5258 = vpack.c.b16 %v5246, %v5245
        %v5259 = vpack.c.b16 %v5248, %v5247
        %v5260 = vpack.c.b16 %v5250, %v5249
        %v5261 = vpack.c.b16 %v5252, %v5251
        %v5272 = vsel %vm2886, %v5154, 0
        %5274 = vmatprep.subr.bf16.mxu0 0
        %5275 = vmatpush1.bf16.msra.mxu0 %v5253
        %5276 = vmatprep.subr.bf16.mxu0 0
        %5277 = vmatpush1.bf16.msra.mxu0 %v5254
        %5278 = vmatprep.subr.bf16.mxu0 0
        %5279 = vmatpush1.bf16.msra.mxu0 %v5255
        %5280 = vmatprep.subr.bf16.mxu0 0
        %5281 = vmatpush1.bf16.msra.mxu0 %v5256
        %5282 = vmatprep.subr.bf16.mxu0 0
        %5283 = vmatpush1.bf16.msra.mxu0 %v5257
        %5284 = vmatprep.subr.bf16.mxu0 0
        %5285 = vmatpush1.bf16.msra.mxu0 %v5258
        %5286 = vmatprep.subr.bf16.mxu0 0
        %5287 = vmatpush1.bf16.msra.mxu0 %v5259
        %5288 = vmatprep.subr.bf16.mxu0 0
        %5289 = vmatpush1.bf16.msra.mxu0 %v5260
        %5290 = vmatprep.subr.bf16.mxu0 0
        %5291 = vmatpush1.bf16.msra.mxu0 %v5261
        %5292 = vmatprep.subr.bf16.mxu0 0
        %5293 = vmatpush1.bf16.msra.mxu0 0
        %5294 = vmatprep.subr.bf16.mxu0 0
        %5295 = vmatpush1.bf16.msra.mxu0 0
        %5296 = vmatprep.subr.bf16.mxu0 0
        %5297 = vmatpush1.bf16.msra.mxu0 0
        %5298 = vmatprep.subr.bf16.mxu0 0
        %5299 = vmatpush1.bf16.msra.mxu0 0
        %5300 = vmatprep.subr.bf16.mxu0 0
        %5301 = vmatpush1.bf16.msra.mxu0 0
        %5302 = vmatprep.subr.bf16.mxu0 0
        %5303 = vmatpush1.bf16.msra.mxu0 0
        %5304 = vmatprep.subr.bf16.mxu0 0
        %5305 = vmatpush1.bf16.msra.mxu0 0
        %5306 = vmatprep.mubr.bf16.mxu0 %v5272
        %5307 = vmatmul.mubr.bf16.gmra.mrb[0].mxu0 %v5190
        %v5308 = vpop.f32.mrb[0].mxu0
        %v5309 = vadd.f32 %v5215, %v5308
        %v5310 = vpop.f32.mrb[0].mxu0
        %v5311 = vpop.f32.mrb[0].mxu0
        %v5312 = vadd.f32 %v5215, %v5311
        %v5313 = vpop.f32.mrb[0].mxu0
        %5314 = vdwg.mxu0
        %vm5315 = vcmp.ge.f32.partialorder %v5309, 0.0
        %vm5316 = vcmp.ge.f32.partialorder %v5312, 0.0
        %v5317 = vmul.f32 %v5309, 0.01
        %v5318 = vmul.f32 %v5312, 0.01
        %v5319 = vsel %vm5315, %v5309, %v5317
        %v5320 = vsel %vm5316, %v5312, %v5318
        %v5321 = vpack.c.bf16 %v5320, %v5319
        %v5322 = vld [vmem:[%s31] sm:$0xf]
        %v5323 = vld [vmem:[%s31 + $0x4] sm:$0xf]
        %v5326 = vunpack.c.l.b16 %v5322
        %v5327 = vunpack.c.l.b16 %v5323
        %v5328 = vpack.c.b16 %v5327, %v5326
        %v5330 = vsel %vm2917, %v5328, 0
        %5332 = vmatprep.subr.bf16.mxu0 0
        %5333 = vmatpush1.bf16.msra.mxu0 %v4675
        %5334 = vmatprep.subr.bf16.mxu0 0
        %5335 = vmatpush1.bf16.msra.mxu0 %v4676
        %5336 = vmatprep.subr.bf16.mxu0 0
        %5337 = vmatpush1.bf16.msra.mxu0 %v4677
        %5338 = vmatprep.subr.bf16.mxu0 0
        %5339 = vmatpush1.bf16.msra.mxu0 %v4678
        %5340 = vmatprep.subr.bf16.mxu0 0
        %5341 = vmatpush1.bf16.msra.mxu0 0
        %5342 = vmatprep.subr.bf16.mxu0 0
        %5343 = vmatpush1.bf16.msra.mxu0 0
        %5344 = vmatprep.subr.bf16.mxu0 0
        %5345 = vmatpush1.bf16.msra.mxu0 0
        %5346 = vmatprep.subr.bf16.mxu0 0
        %5347 = vmatpush1.bf16.msra.mxu0 0
        %5348 = vmatprep.subr.bf16.mxu0 0
        %5349 = vmatpush1.bf16.msra.mxu0 0
        %5350 = vmatprep.subr.bf16.mxu0 0
        %5351 = vmatpush1.bf16.msra.mxu0 0
        %5352 = vmatprep.subr.bf16.mxu0 0
        %5353 = vmatpush1.bf16.msra.mxu0 0
        %5354 = vmatprep.subr.bf16.mxu0 0
        %5355 = vmatpush1.bf16.msra.mxu0 0
        %5356 = vmatprep.subr.bf16.mxu0 0
        %5357 = vmatpush1.bf16.msra.mxu0 0
        %5358 = vmatprep.subr.bf16.mxu0 0
        %5359 = vmatpush1.bf16.msra.mxu0 0
        %5360 = vmatprep.subr.bf16.mxu0 0
        %5361 = vmatpush1.bf16.msra.mxu0 0
        %5362 = vmatprep.subr.bf16.mxu0 0
        %5363 = vmatpush1.bf16.msra.mxu0 0
        %5364 = vmatprep.mubr.bf16.mxu0 0
        %5365 = vmatmul.mubr.bf16.gmra.mrb[0].mxu0 %v5330
        %v5366 = vpop.f32.mrb[0].mxu0
        %v5367 = vadd.f32 0.0, %v5366
        %v5368 = vpop.f32.mrb[0].mxu0
        %v5369 = vpop.f32.mrb[0].mxu0
        %v5370 = vadd.f32 0.0, %v5369
        %v5371 = vpop.f32.mrb[0].mxu0
        %5372 = vdwg.mxu0
        %v5373 = vpack.c.bf16 %v5370, %v5367
        %v5374 = vld [vmem:[%s33] sm:$0xf]
        %v5375 = vld [vmem:[%s33 + $0x4] sm:$0xf]
        %v5376 = vld [vmem:[%s35] sm:$0x1]
        %v5378 = vlaneseq
        %v5379 = vshrl.u32 %v5378, 7
        %v5380 = vsub.s32 0, %v5379
        %v5381 = vrot.slane %v5376, %v5380
        %v5385 = vunpack.c.l.b16 %v5374
        %v5386 = vunpack.c.l.b16 %v5375
        %v5387 = vpack.c.b16 %v5386, %v5385
        %v5390 = vsel %vm2886, %v5373, 0
        %5392 = vmatprep.subr.bf16.mxu0 0
        %5393 = vmatpush1.bf16.msra.mxu0 %v5387
        %5394 = vmatprep.subr.bf16.mxu0 0
        %5395 = vmatpush1.bf16.msra.mxu0 0
        %5396 = vmatprep.subr.bf16.mxu0 0
        %5397 = vmatpush1.bf16.msra.mxu0 0
        %5398 = vmatprep.subr.bf16.mxu0 0
        %5399 = vmatpush1.bf16.msra.mxu0 0
        %5400 = vmatprep.subr.bf16.mxu0 0
        %5401 = vmatpush1.bf16.msra.mxu0 0
        %5402 = vmatprep.subr.bf16.mxu0 0
        %5403 = vmatpush1.bf16.msra.mxu0 0
        %5404 = vmatprep.subr.bf16.mxu0 0
        %5405 = vmatpush1.bf16.msra.mxu0 0
        %5406 = vmatprep.subr.bf16.mxu0 0
        %5407 = vmatpush1.bf16.msra.mxu0 0
        %5408 = vmatprep.subr.bf16.mxu0 0
        %5409 = vmatpush1.bf16.msra.mxu0 0
        %5410 = vmatprep.subr.bf16.mxu0 0
        %5411 = vmatpush1.bf16.msra.mxu0 0
        %5412 = vmatprep.subr.bf16.mxu0 0
        %5413 = vmatpush1.bf16.msra.mxu0 0
        %5414 = vmatprep.subr.bf16.mxu0 0
        %5415 = vmatpush1.bf16.msra.mxu0 0
        %5416 = vmatprep.subr.bf16.mxu0 0
        %5417 = vmatpush1.bf16.msra.mxu0 0
        %5418 = vmatprep.subr.bf16.mxu0 0
        %5419 = vmatpush1.bf16.msra.mxu0 0
        %5420 = vmatprep.subr.bf16.mxu0 0
        %5421 = vmatpush1.bf16.msra.mxu0 0
        %5422 = vmatprep.subr.bf16.mxu0 0
        %5423 = vmatpush1.bf16.msra.mxu0 0
        %5424 = vmatprep.mubr.bf16.mxu0 0
        %5425 = vmatmul.mubr.bf16.gmra.mrb[0].mxu0 %v5390
        %v5426 = vpop.f32.mrb[0].mxu0
        %v5427 = vadd.f32 %v5381, %v5426
        %v5428 = vpop.f32.mrb[0].mxu0
        %v5429 = vpop.f32.mrb[0].mxu0
        %v5430 = vadd.f32 %v5381, %v5429
        %v5431 = vpop.f32.mrb[0].mxu0
        %5432 = vdwg.mxu0
        %v5433 = vld [vmem:[%s37] sm:$0xf]
        %v5434 = vld [vmem:[%s37 + $0x4] sm:$0xf]
        %v5437 = vunpack.c.l.b16 %v5433
        %v5438 = vunpack.c.l.b16 %v5434
        %v5439 = vpack.c.b16 %v5438, %v5437
        %v5441 = vsel %vm2886, %v5439, 0
        %5443 = vmatprep.subr.bf16.mxu0 0
        %5444 = vmatpush1.bf16.msra.mxu0 %v5321
        %5445 = vmatprep.subr.bf16.mxu0 0
        %5446 = vmatpush1.bf16.msra.mxu0 0
        %5447 = vmatprep.subr.bf16.mxu0 0
        %5448 = vmatpush1.bf16.msra.mxu0 0
        %5449 = vmatprep.subr.bf16.mxu0 0
        %5450 = vmatpush1.bf16.msra.mxu0 0
        %5451 = vmatprep.subr.bf16.mxu0 0
        %5452 = vmatpush1.bf16.msra.mxu0 0
        %5453 = vmatprep.subr.bf16.mxu0 0
        %5454 = vmatpush1.bf16.msra.mxu0 0
        %5455 = vmatprep.subr.bf16.mxu0 0
        %5456 = vmatpush1.bf16.msra.mxu0 0
        %5457 = vmatprep.subr.bf16.mxu0 0
        %5458 = vmatpush1.bf16.msra.mxu0 0
        %5459 = vmatprep.subr.bf16.mxu0 0
        %5460 = vmatpush1.bf16.msra.mxu0 0
        %5461 = vmatprep.subr.bf16.mxu0 0
        %5462 = vmatpush1.bf16.msra.mxu0 0
        %5463 = vmatprep.subr.bf16.mxu0 0
        %5464 = vmatpush1.bf16.msra.mxu0 0
        %5465 = vmatprep.subr.bf16.mxu0 0
        %5466 = vmatpush1.bf16.msra.mxu0 0
        %5467 = vmatprep.subr.bf16.mxu0 0
        %5468 = vmatpush1.bf16.msra.mxu0 0
        %5469 = vmatprep.subr.bf16.mxu0 0
        %5470 = vmatpush1.bf16.msra.mxu0 0
        %5471 = vmatprep.subr.bf16.mxu0 0
        %5472 = vmatpush1.bf16.msra.mxu0 0
        %5473 = vmatprep.subr.bf16.mxu0 0
        %5474 = vmatpush1.bf16.msra.mxu0 0
        %5475 = vmatprep.mubr.bf16.mxu0 0
        %5476 = vmatmul.mubr.bf16.gmra.mrb[0].mxu0 %v5441
        %v5477 = vpop.f32.mrb[0].mxu0
        %v5478 = vadd.f32 0.0, %v5477
        %v5479 = vpop.f32.mrb[0].mxu0
        %v5480 = vpop.f32.mrb[0].mxu0
        %v5481 = vadd.f32 0.0, %v5480
        %v5482 = vpop.f32.mrb[0].mxu0
        %5483 = vdwg.mxu0
        %v5484 = vpack.c.bf16 %v5481, %v5478
        %s5485 = scalar_lea.vmem %s37, 8
        %v5486 = vld [vmem:[%s5485] sm:$0xf]
        %v5487 = vld [vmem:[%s5485 + $0x4] sm:$0xf]
        %v5490 = vunpack.c.l.b16 %v5486
        %v5491 = vunpack.c.l.b16 %v5487
        %v5492 = vpack.c.b16 %v5491, %v5490
        %v5494 = vsel %vm2886, %v5492, 0
        %5496 = vmatprep.subr.bf16.mxu0 0
        %5497 = vmatpush1.bf16.msra.mxu0 %v5321
        %5498 = vmatprep.subr.bf16.mxu0 0
        %5499 = vmatpush1.bf16.msra.mxu0 0
        %5500 = vmatprep.subr.bf16.mxu0 0
        %5501 = vmatpush1.bf16.msra.mxu0 0
        %5502 = vmatprep.subr.bf16.mxu0 0
        %5503 = vmatpush1.bf16.msra.mxu0 0
        %5504 = vmatprep.subr.bf16.mxu0 0
        %5505 = vmatpush1.bf16.msra.mxu0 0
        %5506 = vmatprep.subr.bf16.mxu0 0
        %5507 = vmatpush1.bf16.msra.mxu0 0
        %5508 = vmatprep.subr.bf16.mxu0 0
        %5509 = vmatpush1.bf16.msra.mxu0 0
        %5510 = vmatprep.subr.bf16.mxu0 0
        %5511 = vmatpush1.bf16.msra.mxu0 0
        %5512 = vmatprep.subr.bf16.mxu0 0
        %5513 = vmatpush1.bf16.msra.mxu0 0
        %5514 = vmatprep.subr.bf16.mxu0 0
        %5515 = vmatpush1.bf16.msra.mxu0 0
        %5516 = vmatprep.subr.bf16.mxu0 0
        %5517 = vmatpush1.bf16.msra.mxu0 0
        %5518 = vmatprep.subr.bf16.mxu0 0
        %5519 = vmatpush1.bf16.msra.mxu0 0
        %5520 = vmatprep.subr.bf16.mxu0 0
        %5521 = vmatpush1.bf16.msra.mxu0 0
        %5522 = vmatprep.subr.bf16.mxu0 0
        %5523 = vmatpush1.bf16.msra.mxu0 0
        %5524 = vmatprep.subr.bf16.mxu0 0
        %5525 = vmatpush1.bf16.msra.mxu0 0
        %5526 = vmatprep.subr.bf16.mxu0 0
        %5527 = vmatpush1.bf16.msra.mxu0 0
        %5528 = vmatprep.mubr.bf16.mxu0 0
        %5529 = vmatmul.mubr.bf16.gmra.mrb[0].mxu0 %v5494
        %v5530 = vpop.f32.mrb[0].mxu0
        %v5531 = vadd.f32 0.0, %v5530
        %v5532 = vpop.f32.mrb[0].mxu0
        %v5533 = vpop.f32.mrb[0].mxu0
        %v5534 = vadd.f32 0.0, %v5533
        %v5535 = vpop.f32.mrb[0].mxu0
        %5536 = vdwg.mxu0
        %v5537 = vpack.c.bf16 %v5534, %v5531
        %s5538 = scalar_lea.vmem %s37, 16
        %v5539 = vld [vmem:[%s5538] sm:$0xf]
        %v5540 = vld [vmem:[%s5538 + $0x4] sm:$0xf]
        %v5543 = vunpack.c.l.b16 %v5539
        %v5544 = vunpack.c.l.b16 %v5540
        %v5545 = vpack.c.b16 %v5544, %v5543
        %v5547 = vsel %vm2886, %v5545, 0
        %5549 = vmatprep.subr.bf16.mxu0 0
        %5550 = vmatpush1.bf16.msra.mxu0 %v5321
        %5551 = vmatprep.subr.bf16.mxu0 0
        %5552 = vmatpush1.bf16.msra.mxu0 0
        %5553 = vmatprep.subr.bf16.mxu0 0
        %5554 = vmatpush1.bf16.msra.mxu0 0
        %5555 = vmatprep.subr.bf16.mxu0 0
        %5556 = vmatpush1.bf16.msra.mxu0 0
        %5557 = vmatprep.subr.bf16.mxu0 0
        %5558 = vmatpush1.bf16.msra.mxu0 0
        %5559 = vmatprep.subr.bf16.mxu0 0
        %5560 = vmatpush1.bf16.msra.mxu0 0
        %5561 = vmatprep.subr.bf16.mxu0 0
        %5562 = vmatpush1.bf16.msra.mxu0 0
        %5563 = vmatprep.subr.bf16.mxu0 0
        %5564 = vmatpush1.bf16.msra.mxu0 0
        %5565 = vmatprep.subr.bf16.mxu0 0
        %5566 = vmatpush1.bf16.msra.mxu0 0
        %5567 = vmatprep.subr.bf16.mxu0 0
        %5568 = vmatpush1.bf16.msra.mxu0 0
        %5569 = vmatprep.subr.bf16.mxu0 0
        %5570 = vmatpush1.bf16.msra.mxu0 0
        %5571 = vmatprep.subr.bf16.mxu0 0
        %5572 = vmatpush1.bf16.msra.mxu0 0
        %5573 = vmatprep.subr.bf16.mxu0 0
        %5574 = vmatpush1.bf16.msra.mxu0 0
        %5575 = vmatprep.subr.bf16.mxu0 0
        %5576 = vmatpush1.bf16.msra.mxu0 0
        %5577 = vmatprep.subr.bf16.mxu0 0
        %5578 = vmatpush1.bf16.msra.mxu0 0
        %5579 = vmatprep.subr.bf16.mxu0 0
        %5580 = vmatpush1.bf16.msra.mxu0 0
        %5581 = vmatprep.mubr.bf16.mxu0 0
        %5582 = vmatmul.mubr.bf16.gmra.mrb[0].mxu0 %v5547
        %v5583 = vpop.f32.mrb[0].mxu0
        %v5584 = vadd.f32 0.0, %v5583
        %v5585 = vpop.f32.mrb[0].mxu0
        %v5586 = vpop.f32.mrb[0].mxu0
        %v5587 = vadd.f32 0.0, %v5586
        %v5588 = vpop.f32.mrb[0].mxu0
        %5589 = vdwg.mxu0
        %v5590 = vpack.c.bf16 %v5587, %v5584
        %s5591 = scalar_lea.vmem %s37, 24
        %v5592 = vld [vmem:[%s5591] sm:$0xf]
        %v5593 = vld [vmem:[%s5591 + $0x4] sm:$0xf]
        %v5596 = vunpack.c.l.b16 %v5592
        %v5597 = vunpack.c.l.b16 %v5593
        %v5598 = vpack.c.b16 %v5597, %v5596
        %v5600 = vsel %vm2886, %v5598, 0
        %5602 = vmatprep.subr.bf16.mxu0 0
        %5603 = vmatpush1.bf16.msra.mxu0 %v5321
        %5604 = vmatprep.subr.bf16.mxu0 0
        %5605 = vmatpush1.bf16.msra.mxu0 0
        %5606 = vmatprep.subr.bf16.mxu0 0
        %5607 = vmatpush1.bf16.msra.mxu0 0
        %5608 = vmatprep.subr.bf16.mxu0 0
        %5609 = vmatpush1.bf16.msra.mxu0 0
        %5610 = vmatprep.subr.bf16.mxu0 0
        %5611 = vmatpush1.bf16.msra.mxu0 0
        %5612 = vmatprep.subr.bf16.mxu0 0
        %5613 = vmatpush1.bf16.msra.mxu0 0
        %5614 = vmatprep.subr.bf16.mxu0 0
        %5615 = vmatpush1.bf16.msra.mxu0 0
        %5616 = vmatprep.subr.bf16.mxu0 0
        %5617 = vmatpush1.bf16.msra.mxu0 0
        %5618 = vmatprep.subr.bf16.mxu0 0
        %5619 = vmatpush1.bf16.msra.mxu0 0
        %5620 = vmatprep.subr.bf16.mxu0 0
        %5621 = vmatpush1.bf16.msra.mxu0 0
        %5622 = vmatprep.subr.bf16.mxu0 0
        %5623 = vmatpush1.bf16.msra.mxu0 0
        %5624 = vmatprep.subr.bf16.mxu0 0
        %5625 = vmatpush1.bf16.msra.mxu0 0
        %5626 = vmatprep.subr.bf16.mxu0 0
        %5627 = vmatpush1.bf16.msra.mxu0 0
        %5628 = vmatprep.subr.bf16.mxu0 0
        %5629 = vmatpush1.bf16.msra.mxu0 0
        %5630 = vmatprep.subr.bf16.mxu0 0
        %5631 = vmatpush1.bf16.msra.mxu0 0
        %5632 = vmatprep.subr.bf16.mxu0 0
        %5633 = vmatpush1.bf16.msra.mxu0 0
        %5634 = vmatprep.mubr.bf16.mxu0 0
        %5635 = vmatmul.mubr.bf16.gmra.mrb[0].mxu0 %v5600
        %v5636 = vpop.f32.mrb[0].mxu0
        %v5637 = vadd.f32 0.0, %v5636
        %v5638 = vpop.f32.mrb[0].mxu0
        %v5639 = vpop.f32.mrb[0].mxu0
        %v5640 = vadd.f32 0.0, %v5639
        %v5641 = vpop.f32.mrb[0].mxu0
        %5642 = vdwg.mxu0
        %v5643 = vpack.c.bf16 %v5640, %v5637
        %s5644 = scalar_lea.vmem %s37, 32
        %v5645 = vld [vmem:[%s5644] sm:$0xf]
        %v5646 = vld [vmem:[%s5644 + $0x4] sm:$0xf]
        %v5649 = vunpack.c.l.b16 %v5645
        %v5650 = vunpack.c.l.b16 %v5646
        %v5651 = vpack.c.b16 %v5650, %v5649
        %v5653 = vsel %vm2886, %v5651, 0
        %5655 = vmatprep.subr.bf16.mxu0 0
        %5656 = vmatpush1.bf16.msra.mxu0 %v5321
        %5657 = vmatprep.subr.bf16.mxu0 0
        %5658 = vmatpush1.bf16.msra.mxu0 0
        %5659 = vmatprep.subr.bf16.mxu0 0
        %5660 = vmatpush1.bf16.msra.mxu0 0
        %5661 = vmatprep.subr.bf16.mxu0 0
        %5662 = vmatpush1.bf16.msra.mxu0 0
        %5663 = vmatprep.subr.bf16.mxu0 0
        %5664 = vmatpush1.bf16.msra.mxu0 0
        %5665 = vmatprep.subr.bf16.mxu0 0
        %5666 = vmatpush1.bf16.msra.mxu0 0
        %5667 = vmatprep.subr.bf16.mxu0 0
        %5668 = vmatpush1.bf16.msra.mxu0 0
        %5669 = vmatprep.subr.bf16.mxu0 0
        %5670 = vmatpush1.bf16.msra.mxu0 0
        %5671 = vmatprep.subr.bf16.mxu0 0
        %5672 = vmatpush1.bf16.msra.mxu0 0
        %5673 = vmatprep.subr.bf16.mxu0 0
        %5674 = vmatpush1.bf16.msra.mxu0 0
        %5675 = vmatprep.subr.bf16.mxu0 0
        %5676 = vmatpush1.bf16.msra.mxu0 0
        %5677 = vmatprep.subr.bf16.mxu0 0
        %5678 = vmatpush1.bf16.msra.mxu0 0
        %5679 = vmatprep.subr.bf16.mxu0 0
        %5680 = vmatpush1.bf16.msra.mxu0 0
        %5681 = vmatprep.subr.bf16.mxu0 0
        %5682 = vmatpush1.bf16.msra.mxu0 0
        %5683 = vmatprep.subr.bf16.mxu0 0
        %5684 = vmatpush1.bf16.msra.mxu0 0
        %5685 = vmatprep.subr.bf16.mxu0 0
        %5686 = vmatpush1.bf16.msra.mxu0 0
        %5687 = vmatprep.mubr.bf16.mxu0 0
        %5688 = vmatmul.mubr.bf16.gmra.mrb[0].mxu0 %v5653
        %v5689 = vpop.f32.mrb[0].mxu0
        %v5690 = vadd.f32 0.0, %v5689
        %v5691 = vpop.f32.mrb[0].mxu0
        %v5692 = vpop.f32.mrb[0].mxu0
        %v5693 = vadd.f32 0.0, %v5692
        %v5694 = vpop.f32.mrb[0].mxu0
        %5695 = vdwg.mxu0
        %v5696 = vpack.c.bf16 %v5693, %v5690
        %s5697 = scalar_lea.vmem %s37, 40
        %v5698 = vld [vmem:[%s5697] sm:$0xf]
        %v5699 = vld [vmem:[%s5697 + $0x4] sm:$0xf]
        %v5702 = vunpack.c.l.b16 %v5698
        %v5703 = vunpack.c.l.b16 %v5699
        %v5704 = vpack.c.b16 %v5703, %v5702
        %v5706 = vsel %vm2886, %v5704, 0
        %5708 = vmatprep.subr.bf16.mxu0 0
        %5709 = vmatpush1.bf16.msra.mxu0 %v5321
        %5710 = vmatprep.subr.bf16.mxu0 0
        %5711 = vmatpush1.bf16.msra.mxu0 0
        %5712 = vmatprep.subr.bf16.mxu0 0
        %5713 = vmatpush1.bf16.msra.mxu0 0
        %5714 = vmatprep.subr.bf16.mxu0 0
        %5715 = vmatpush1.bf16.msra.mxu0 0
        %5716 = vmatprep.subr.bf16.mxu0 0
        %5717 = vmatpush1.bf16.msra.mxu0 0
        %5718 = vmatprep.subr.bf16.mxu0 0
        %5719 = vmatpush1.bf16.msra.mxu0 0
        %5720 = vmatprep.subr.bf16.mxu0 0
        %5721 = vmatpush1.bf16.msra.mxu0 0
        %5722 = vmatprep.subr.bf16.mxu0 0
        %5723 = vmatpush1.bf16.msra.mxu0 0
        %5724 = vmatprep.subr.bf16.mxu0 0
        %5725 = vmatpush1.bf16.msra.mxu0 0
        %5726 = vmatprep.subr.bf16.mxu0 0
        %5727 = vmatpush1.bf16.msra.mxu0 0
        %5728 = vmatprep.subr.bf16.mxu0 0
        %5729 = vmatpush1.bf16.msra.mxu0 0
        %5730 = vmatprep.subr.bf16.mxu0 0
        %5731 = vmatpush1.bf16.msra.mxu0 0
        %5732 = vmatprep.subr.bf16.mxu0 0
        %5733 = vmatpush1.bf16.msra.mxu0 0
        %5734 = vmatprep.subr.bf16.mxu0 0
        %5735 = vmatpush1.bf16.msra.mxu0 0
        %5736 = vmatprep.subr.bf16.mxu0 0
        %5737 = vmatpush1.bf16.msra.mxu0 0
        %5738 = vmatprep.subr.bf16.mxu0 0
        %5739 = vmatpush1.bf16.msra.mxu0 0
        %5740 = vmatprep.mubr.bf16.mxu0 0
        %5741 = vmatmul.mubr.bf16.gmra.mrb[0].mxu0 %v5706
        %v5742 = vpop.f32.mrb[0].mxu0
        %v5743 = vadd.f32 0.0, %v5742
        %v5744 = vpop.f32.mrb[0].mxu0
        %v5745 = vpop.f32.mrb[0].mxu0
        %v5746 = vadd.f32 0.0, %v5745
        %v5747 = vpop.f32.mrb[0].mxu0
        %5748 = vdwg.mxu0
        %v5749 = vpack.c.bf16 %v5746, %v5743
        %s5750 = scalar_lea.vmem %s37, 48
        %v5751 = vld [vmem:[%s5750] sm:$0xf]
        %v5752 = vld [vmem:[%s5750 + $0x4] sm:$0xf]
        %v5755 = vunpack.c.l.b16 %v5751
        %v5756 = vunpack.c.l.b16 %v5752
        %v5757 = vpack.c.b16 %v5756, %v5755
        %v5759 = vsel %vm2886, %v5757, 0
        %5761 = vmatprep.subr.bf16.mxu0 0
        %5762 = vmatpush1.bf16.msra.mxu0 %v5321
        %5763 = vmatprep.subr.bf16.mxu0 0
        %5764 = vmatpush1.bf16.msra.mxu0 0
        %5765 = vmatprep.subr.bf16.mxu0 0
        %5766 = vmatpush1.bf16.msra.mxu0 0
        %5767 = vmatprep.subr.bf16.mxu0 0
        %5768 = vmatpush1.bf16.msra.mxu0 0
        %5769 = vmatprep.subr.bf16.mxu0 0
        %5770 = vmatpush1.bf16.msra.mxu0 0
        %5771 = vmatprep.subr.bf16.mxu0 0
        %5772 = vmatpush1.bf16.msra.mxu0 0
        %5773 = vmatprep.subr.bf16.mxu0 0
        %5774 = vmatpush1.bf16.msra.mxu0 0
        %5775 = vmatprep.subr.bf16.mxu0 0
        %5776 = vmatpush1.bf16.msra.mxu0 0
        %5777 = vmatprep.subr.bf16.mxu0 0
        %5778 = vmatpush1.bf16.msra.mxu0 0
        %5779 = vmatprep.subr.bf16.mxu0 0
        %5780 = vmatpush1.bf16.msra.mxu0 0
        %5781 = vmatprep.subr.bf16.mxu0 0
        %5782 = vmatpush1.bf16.msra.mxu0 0
        %5783 = vmatprep.subr.bf16.mxu0 0
        %5784 = vmatpush1.bf16.msra.mxu0 0
        %5785 = vmatprep.subr.bf16.mxu0 0
        %5786 = vmatpush1.bf16.msra.mxu0 0
        %5787 = vmatprep.subr.bf16.mxu0 0
        %5788 = vmatpush1.bf16.msra.mxu0 0
        %5789 = vmatprep.subr.bf16.mxu0 0
        %5790 = vmatpush1.bf16.msra.mxu0 0
        %5791 = vmatprep.subr.bf16.mxu0 0
        %5792 = vmatpush1.bf16.msra.mxu0 0
        %5793 = vmatprep.mubr.bf16.mxu0 0
        %5794 = vmatmul.mubr.bf16.gmra.mrb[0].mxu0 %v5759
        %v5795 = vpop.f32.mrb[0].mxu0
        %v5796 = vadd.f32 0.0, %v5795
        %v5797 = vpop.f32.mrb[0].mxu0
        %v5798 = vpop.f32.mrb[0].mxu0
        %v5799 = vadd.f32 0.0, %v5798
        %v5800 = vpop.f32.mrb[0].mxu0
        %5801 = vdwg.mxu0
        %v5802 = vpack.c.bf16 %v5799, %v5796
        %s5803 = scalar_lea.vmem %s37, 56
        %v5804 = vld [vmem:[%s5803] sm:$0xf]
        %v5805 = vld [vmem:[%s5803 + $0x4] sm:$0xf]
        %v5808 = vunpack.c.l.b16 %v5804
        %v5809 = vunpack.c.l.b16 %v5805
        %v5810 = vpack.c.b16 %v5809, %v5808
        %v5812 = vsel %vm2886, %v5810, 0
        %5814 = vmatprep.subr.bf16.mxu0 0
        %5815 = vmatpush1.bf16.msra.mxu0 %v5321
        %5816 = vmatprep.subr.bf16.mxu0 0
        %5817 = vmatpush1.bf16.msra.mxu0 0
        %5818 = vmatprep.subr.bf16.mxu0 0
        %5819 = vmatpush1.bf16.msra.mxu0 0
        %5820 = vmatprep.subr.bf16.mxu0 0
        %5821 = vmatpush1.bf16.msra.mxu0 0
        %5822 = vmatprep.subr.bf16.mxu0 0
        %5823 = vmatpush1.bf16.msra.mxu0 0
        %5824 = vmatprep.subr.bf16.mxu0 0
        %5825 = vmatpush1.bf16.msra.mxu0 0
        %5826 = vmatprep.subr.bf16.mxu0 0
        %5827 = vmatpush1.bf16.msra.mxu0 0
        %5828 = vmatprep.subr.bf16.mxu0 0
        %5829 = vmatpush1.bf16.msra.mxu0 0
        %5830 = vmatprep.subr.bf16.mxu0 0
        %5831 = vmatpush1.bf16.msra.mxu0 0
        %5832 = vmatprep.subr.bf16.mxu0 0
        %5833 = vmatpush1.bf16.msra.mxu0 0
        %5834 = vmatprep.subr.bf16.mxu0 0
        %5835 = vmatpush1.bf16.msra.mxu0 0
        %5836 = vmatprep.subr.bf16.mxu0 0
        %5837 = vmatpush1.bf16.msra.mxu0 0
        %5838 = vmatprep.subr.bf16.mxu0 0
        %5839 = vmatpush1.bf16.msra.mxu0 0
        %5840 = vmatprep.subr.bf16.mxu0 0
        %5841 = vmatpush1.bf16.msra.mxu0 0
        %5842 = vmatprep.subr.bf16.mxu0 0
        %5843 = vmatpush1.bf16.msra.mxu0 0
        %5844 = vmatprep.subr.bf16.mxu0 0
        %5845 = vmatpush1.bf16.msra.mxu0 0
        %5846 = vmatprep.mubr.bf16.mxu0 0
        %5847 = vmatmul.mubr.bf16.gmra.mrb[0].mxu0 %v5812
        %v5848 = vpop.f32.mrb[0].mxu0
        %v5849 = vadd.f32 0.0, %v5848
        %v5850 = vpop.f32.mrb[0].mxu0
        %v5851 = vpop.f32.mrb[0].mxu0
        %v5852 = vadd.f32 0.0, %v5851
        %v5853 = vpop.f32.mrb[0].mxu0
        %5854 = vdwg.mxu0
        %v5855 = vpack.c.bf16 %v5852, %v5849
        %s5856 = scalar_lea.vmem %s37, 64
        %v5857 = vld [vmem:[%s5856] sm:$0xf]
        %v5858 = vld [vmem:[%s5856 + $0x4] sm:$0xf]
        %v5861 = vunpack.c.l.b16 %v5857
        %v5862 = vunpack.c.l.b16 %v5858
        %v5863 = vpack.c.b16 %v5862, %v5861
        %v5865 = vsel %vm2886, %v5863, 0
        %5867 = vmatprep.subr.bf16.mxu0 0
        %5868 = vmatpush1.bf16.msra.mxu0 %v5321
        %5869 = vmatprep.subr.bf16.mxu0 0
        %5870 = vmatpush1.bf16.msra.mxu0 0
        %5871 = vmatprep.subr.bf16.mxu0 0
        %5872 = vmatpush1.bf16.msra.mxu0 0
        %5873 = vmatprep.subr.bf16.mxu0 0
        %5874 = vmatpush1.bf16.msra.mxu0 0
        %5875 = vmatprep.subr.bf16.mxu0 0
        %5876 = vmatpush1.bf16.msra.mxu0 0
        %5877 = vmatprep.subr.bf16.mxu0 0
        %5878 = vmatpush1.bf16.msra.mxu0 0
        %5879 = vmatprep.subr.bf16.mxu0 0
        %5880 = vmatpush1.bf16.msra.mxu0 0
        %5881 = vmatprep.subr.bf16.mxu0 0
        %5882 = vmatpush1.bf16.msra.mxu0 0
        %5883 = vmatprep.subr.bf16.mxu0 0
        %5884 = vmatpush1.bf16.msra.mxu0 0
        %5885 = vmatprep.subr.bf16.mxu0 0
        %5886 = vmatpush1.bf16.msra.mxu0 0
        %5887 = vmatprep.subr.bf16.mxu0 0
        %5888 = vmatpush1.bf16.msra.mxu0 0
        %5889 = vmatprep.subr.bf16.mxu0 0
        %5890 = vmatpush1.bf16.msra.mxu0 0
        %5891 = vmatprep.subr.bf16.mxu0 0
        %5892 = vmatpush1.bf16.msra.mxu0 0
        %5893 = vmatprep.subr.bf16.mxu0 0
        %5894 = vmatpush1.bf16.msra.mxu0 0
        %5895 = vmatprep.subr.bf16.mxu0 0
        %5896 = vmatpush1.bf16.msra.mxu0 0
        %5897 = vmatprep.subr.bf16.mxu0 0
        %5898 = vmatpush1.bf16.msra.mxu0 0
        %5899 = vmatprep.mubr.bf16.mxu0 0
        %5900 = vmatmul.mubr.bf16.gmra.mrb[0].mxu0 %v5865
        %v5901 = vpop.f32.mrb[0].mxu0
        %v5902 = vadd.f32 0.0, %v5901
        %v5903 = vpop.f32.mrb[0].mxu0
        %v5904 = vpop.f32.mrb[0].mxu0
        %v5905 = vadd.f32 0.0, %v5904
        %v5906 = vpop.f32.mrb[0].mxu0
        %5907 = vdwg.mxu0
        %v5908 = vpack.c.bf16 %v5905, %v5902
        %5910 = vrot.lane.b32.xlu0 %v5537, 32
        %v5911 = vpop.permute.xlu0 %5910
        %5913 = vrot.lane.b32.xlu0 %v5590, 64
        %v5914 = vpop.permute.xlu0 %5913
        %5916 = vrot.lane.b32.xlu0 %v5643, 96
        %v5917 = vpop.permute.xlu0 %5916
        %5919 = vrot.lane.b32.xlu0 %v5749, 32
        %v5920 = vpop.permute.xlu0 %5919
        %5922 = vrot.lane.b32.xlu0 %v5802, 64
        %v5923 = vpop.permute.xlu0 %5922
        %5925 = vrot.lane.b32.xlu0 %v5855, 96
        %v5926 = vpop.permute.xlu0 %5925
        %v5929 = vsel %vm2899, %v5484, %v5911
        %v5931 = vsel %vm2917, %v5929, %v5914
        %v5933 = vsel %vm2935, %v5931, %v5917
        %v5937 = vsel %vm2899, %v5696, %v5920
        %v5939 = vsel %vm2917, %v5937, %v5923
        %v5941 = vsel %vm2935, %v5939, %v5926
        %v5943 = vld [vmem:[%s39] sm:$0xf]
        %v5944 = vld [vmem:[%s39 + $0x4] sm:$0xf]
        %v5945 = vld [vmem:[%s39 + $0x8] sm:$0xf]
        %v5946 = vld [vmem:[%s39 + $0xc] sm:$0xf]
        %v5947 = vld [vmem:[%s39 + $0x10] sm:$0xf]
        %v5948 = vld [vmem:[%s39 + $0x14] sm:$0xf]
        %v5949 = vld [vmem:[%s39 + $0x18] sm:$0xf]
        %v5950 = vld [vmem:[%s39 + $0x1c] sm:$0xf]
        %v5951 = vld [vmem:[%s39 + $0x20] sm:$0xf]
        %v5952 = vld [vmem:[%s39 + $0x24] sm:$0xf]
        %v5953 = vld [vmem:[%s39 + $0x28] sm:$0xf]
        %v5954 = vld [vmem:[%s39 + $0x2c] sm:$0xf]
        %v5955 = vld [vmem:[%s39 + $0x30] sm:$0xf]
        %v5956 = vld [vmem:[%s39 + $0x34] sm:$0xf]
        %v5957 = vld [vmem:[%s39 + $0x38] sm:$0xf]
        %v5958 = vld [vmem:[%s39 + $0x3c] sm:$0xf]
        %v5959 = vld [vmem:[%s39 + $0x40] sm:$0xf]
        %v5960 = vld [vmem:[%s39 + $0x44] sm:$0xf]
        %v5961 = vld [vmem:[%s39 + $0x48] sm:$0xf]
        %v5962 = vld [vmem:[%s39 + $0x4c] sm:$0xf]
        %v5963 = vld [vmem:[%s39 + $0x50] sm:$0xf]
        %v5964 = vld [vmem:[%s39 + $0x54] sm:$0xf]
        %v5965 = vld [vmem:[%s39 + $0x58] sm:$0xf]
        %v5966 = vld [vmem:[%s39 + $0x5c] sm:$0xf]
        %v5967 = vld [vmem:[%s39 + $0x60] sm:$0xf]
        %v5968 = vld [vmem:[%s39 + $0x64] sm:$0xf]
        %v5969 = vld [vmem:[%s39 + $0x68] sm:$0xf]
        %v5970 = vld [vmem:[%s39 + $0x6c] sm:$0xf]
        %v5971 = vld [vmem:[%s39 + $0x70] sm:$0xf]
        %v5972 = vld [vmem:[%s39 + $0x74] sm:$0xf]
        %v5973 = vld [vmem:[%s39 + $0x78] sm:$0xf]
        %v5974 = vld [vmem:[%s39 + $0x7c] sm:$0xf]
        %v5975 = vld [vmem:[%s39 + $0x80] sm:$0xf]
        %v5976 = vld [vmem:[%s39 + $0x84] sm:$0xf]
        %v5977 = vld [vmem:[%s39 + $0x88] sm:$0xf]
        %v5978 = vld [vmem:[%s39 + $0x8c] sm:$0xf]
        %v5979 = vld [vmem:[%s41] sm:$0x1]
        %v5981 = vlaneseq
        %v5982 = vshrl.u32 %v5981, 7
        %v5983 = vsub.s32 0, %v5982
        %v5984 = vrot.slane %v5979, %v5983
        %v6022 = vunpack.c.l.b16 %v5943
        %v6023 = vunpack.c.l.b16 %v5944
        %v6024 = vunpack.c.l.b16 %v5945
        %v6025 = vunpack.c.l.b16 %v5946
        %v6026 = vunpack.c.l.b16 %v5947
        %v6027 = vunpack.c.l.b16 %v5948
        %v6028 = vunpack.c.l.b16 %v5949
        %v6029 = vunpack.c.l.b16 %v5950
        %v6030 = vunpack.c.l.b16 %v5951
        %v6031 = vunpack.c.l.b16 %v5952
        %v6032 = vunpack.c.l.b16 %v5953
        %v6033 = vunpack.c.l.b16 %v5954
        %v6034 = vunpack.c.l.b16 %v5955
        %v6035 = vunpack.c.l.b16 %v5956
        %v6036 = vunpack.c.l.b16 %v5957
        %v6037 = vunpack.c.l.b16 %v5958
        %v6038 = vunpack.c.l.b16 %v5959
        %v6039 = vunpack.c.l.b16 %v5960
        %v6040 = vunpack.c.l.b16 %v5961
        %v6041 = vunpack.c.l.b16 %v5962
        %v6042 = vunpack.c.l.b16 %v5963
        %v6043 = vunpack.c.l.b16 %v5964
        %v6044 = vunpack.c.l.b16 %v5965
        %v6045 = vunpack.c.l.b16 %v5966
        %v6046 = vunpack.c.l.b16 %v5967
        %v6047 = vunpack.c.l.b16 %v5968
        %v6048 = vunpack.c.l.b16 %v5969
        %v6049 = vunpack.c.l.b16 %v5970
        %v6050 = vunpack.c.l.b16 %v5971
        %v6051 = vunpack.c.l.b16 %v5972
        %v6052 = vunpack.c.l.b16 %v5973
        %v6053 = vunpack.c.l.b16 %v5974
        %v6054 = vunpack.c.l.b16 %v5975
        %v6055 = vunpack.c.l.b16 %v5976
        %v6056 = vunpack.c.l.b16 %v5977
        %v6057 = vunpack.c.l.b16 %v5978
        %v6058 = vpack.c.b16 %v6023, %v6022
        %v6059 = vpack.c.b16 %v6025, %v6024
        %v6060 = vpack.c.b16 %v6027, %v6026
        %v6061 = vpack.c.b16 %v6029, %v6028
        %v6062 = vpack.c.b16 %v6031, %v6030
        %v6063 = vpack.c.b16 %v6033, %v6032
        %v6064 = vpack.c.b16 %v6035, %v6034
        %v6065 = vpack.c.b16 %v6037, %v6036
        %v6066 = vpack.c.b16 %v6039, %v6038
        %v6067 = vpack.c.b16 %v6041, %v6040
        %v6068 = vpack.c.b16 %v6043, %v6042
        %v6069 = vpack.c.b16 %v6045, %v6044
        %v6070 = vpack.c.b16 %v6047, %v6046
        %v6071 = vpack.c.b16 %v6049, %v6048
        %v6072 = vpack.c.b16 %v6051, %v6050
        %v6073 = vpack.c.b16 %v6053, %v6052
        %v6074 = vpack.c.b16 %v6055, %v6054
        %v6075 = vpack.c.b16 %v6057, %v6056
        %v6095 = vsel %vm2899, %v5908, 0
        %6097 = vmatprep.subr.bf16.mxu0 0
        %6098 = vmatpush1.bf16.msra.mxu0 %v6058
        %6099 = vmatprep.subr.bf16.mxu0 0
        %6100 = vmatpush1.bf16.msra.mxu0 %v6059
        %6101 = vmatprep.subr.bf16.mxu0 0
        %6102 = vmatpush1.bf16.msra.mxu0 %v6060
        %6103 = vmatprep.subr.bf16.mxu0 0
        %6104 = vmatpush1.bf16.msra.mxu0 %v6061
        %6105 = vmatprep.subr.bf16.mxu0 0
        %6106 = vmatpush1.bf16.msra.mxu0 %v6062
        %6107 = vmatprep.subr.bf16.mxu0 0
        %6108 = vmatpush1.bf16.msra.mxu0 %v6063
        %6109 = vmatprep.subr.bf16.mxu0 0
        %6110 = vmatpush1.bf16.msra.mxu0 %v6064
        %6111 = vmatprep.subr.bf16.mxu0 0
        %6112 = vmatpush1.bf16.msra.mxu0 %v6065
        %6113 = vmatprep.subr.bf16.mxu0 0
        %6114 = vmatpush1.bf16.msra.mxu0 %v6066
        %6115 = vmatprep.subr.bf16.mxu0 0
        %6116 = vmatpush1.bf16.msra.mxu0 %v6067
        %6117 = vmatprep.subr.bf16.mxu0 0
        %6118 = vmatpush1.bf16.msra.mxu0 %v6068
        %6119 = vmatprep.subr.bf16.mxu0 0
        %6120 = vmatpush1.bf16.msra.mxu0 %v6069
        %6121 = vmatprep.subr.bf16.mxu0 0
        %6122 = vmatpush1.bf16.msra.mxu0 %v6070
        %6123 = vmatprep.subr.bf16.mxu0 0
        %6124 = vmatpush1.bf16.msra.mxu0 %v6071
        %6125 = vmatprep.subr.bf16.mxu0 0
        %6126 = vmatpush1.bf16.msra.mxu0 %v6072
        %6127 = vmatprep.subr.bf16.mxu0 0
        %6128 = vmatpush1.bf16.msra.mxu0 %v6073
        %6129 = vmatprep.mubr.bf16.mxu0 %v5941
        %6130 = vmatmul.mubr.bf16.gmra.mrb[0].mxu0 %v5933
        %v6131 = vpop.f32.mrb[0].mxu0
        %v6132 = vadd.f32 %v5984, %v6131
        %v6133 = vpop.f32.mrb[0].mxu0
        %v6134 = vpop.f32.mrb[0].mxu0
        %v6135 = vadd.f32 %v5984, %v6134
        %v6136 = vpop.f32.mrb[0].mxu0
        %6137 = vdwg.mxu0
        %6138 = vmatprep.subr.bf16.mxu0 0
        %6139 = vmatpush1.bf16.msra.mxu0 %v6074
        %6140 = vmatprep.subr.bf16.mxu0 0
        %6141 = vmatpush1.bf16.msra.mxu0 %v6075
        %6142 = vmatprep.subr.bf16.mxu0 0
        %6143 = vmatpush1.bf16.msra.mxu0 0
        %6144 = vmatprep.subr.bf16.mxu0 0
        %6145 = vmatpush1.bf16.msra.mxu0 0
        %6146 = vmatprep.subr.bf16.mxu0 0
        %6147 = vmatpush1.bf16.msra.mxu0 0
        %6148 = vmatprep.subr.bf16.mxu0 0
        %6149 = vmatpush1.bf16.msra.mxu0 0
        %6150 = vmatprep.subr.bf16.mxu0 0
        %6151 = vmatpush1.bf16.msra.mxu0 0
        %6152 = vmatprep.subr.bf16.mxu0 0
        %6153 = vmatpush1.bf16.msra.mxu0 0
        %6154 = vmatprep.subr.bf16.mxu0 0
        %6155 = vmatpush1.bf16.msra.mxu0 0
        %6156 = vmatprep.subr.bf16.mxu0 0
        %6157 = vmatpush1.bf16.msra.mxu0 0
        %6158 = vmatprep.subr.bf16.mxu0 0
        %6159 = vmatpush1.bf16.msra.mxu0 0
        %6160 = vmatprep.subr.bf16.mxu0 0
        %6161 = vmatpush1.bf16.msra.mxu0 0
        %6162 = vmatprep.subr.bf16.mxu0 0
        %6163 = vmatpush1.bf16.msra.mxu0 0
        %6164 = vmatprep.subr.bf16.mxu0 0
        %6165 = vmatpush1.bf16.msra.mxu0 0
        %6166 = vmatprep.subr.bf16.mxu0 0
        %6167 = vmatpush1.bf16.msra.mxu0 0
        %6168 = vmatprep.subr.bf16.mxu0 0
        %6169 = vmatpush1.bf16.msra.mxu0 0
        %6170 = vmatprep.mubr.bf16.mxu0 0
        %6171 = vmatmul.mubr.bf16.gmra.mrb[0].mxu0 %v6095
        %v6172 = vpop.f32.mrb[0].mxu0
        %v6173 = vadd.f32 %v6132, %v6172
        %v6174 = vpop.f32.mrb[0].mxu0
        %v6175 = vpop.f32.mrb[0].mxu0
        %v6176 = vadd.f32 %v6135, %v6175
        %v6177 = vpop.f32.mrb[0].mxu0
        %6178 = vdwg.mxu0
        %v6179 = vadd.f32 %v6173, %v5427
        %v6180 = vadd.f32 %v6176, %v5430
        %vm6181 = vcmp.ge.f32.partialorder %v6179, 0.0
        %vm6182 = vcmp.ge.f32.partialorder %v6180, 0.0
        %v6183 = vmul.f32 %v6179, 0.01
        %v6184 = vmul.f32 %v6180, 0.01
        %v6185 = vsel %vm6181, %v6179, %v6183
        %v6186 = vsel %vm6182, %v6180, %v6184
        %v6187 = vpack.c.bf16 %v6186, %v6185
        %v6188 = vld [vmem:[%s43] sm:$0x3]
        %v6190 = vsel %vm2886, %v6188, 0
        %6192 = vmatprep.subr.bf16.mxu0 0
        %6193 = vmatpush1.bf16.msra.mxu0 %v6187
        %6194 = vmatprep.subr.bf16.mxu0 0
        %6195 = vmatpush1.bf16.msra.mxu0 0
        %6196 = vmatprep.subr.bf16.mxu0 0
        %6197 = vmatpush1.bf16.msra.mxu0 0
        %6198 = vmatprep.subr.bf16.mxu0 0
        %6199 = vmatpush1.bf16.msra.mxu0 0
        %6200 = vmatprep.subr.bf16.mxu0 0
        %6201 = vmatpush1.bf16.msra.mxu0 0
        %6202 = vmatprep.subr.bf16.mxu0 0
        %6203 = vmatpush1.bf16.msra.mxu0 0
        %6204 = vmatprep.subr.bf16.mxu0 0
        %6205 = vmatpush1.bf16.msra.mxu0 0
        %6206 = vmatprep.subr.bf16.mxu0 0
        %6207 = vmatpush1.bf16.msra.mxu0 0
        %6208 = vmatprep.subr.bf16.mxu0 0
        %6209 = vmatpush1.bf16.msra.mxu0 0
        %6210 = vmatprep.subr.bf16.mxu0 0
        %6211 = vmatpush1.bf16.msra.mxu0 0
        %6212 = vmatprep.subr.bf16.mxu0 0
        %6213 = vmatpush1.bf16.msra.mxu0 0
        %6214 = vmatprep.subr.bf16.mxu0 0
        %6215 = vmatpush1.bf16.msra.mxu0 0
        %6216 = vmatprep.subr.bf16.mxu0 0
        %6217 = vmatpush1.bf16.msra.mxu0 0
        %6218 = vmatprep.subr.bf16.mxu0 0
        %6219 = vmatpush1.bf16.msra.mxu0 0
        %6220 = vmatprep.subr.bf16.mxu0 0
        %6221 = vmatpush1.bf16.msra.mxu0 0
        %6222 = vmatprep.subr.bf16.mxu0 0
        %6223 = vmatpush1.bf16.msra.mxu0 0
        %6224 = vmatprep.mubr.bf16.mxu0 0
        %6225 = vmatmul.mubr.bf16.gmra.mrb[0].mxu0 %v6190
        %v6226 = vpop.f32.mrb[0].mxu0
        %v6227 = vadd.f32 0.0, %v6226
        %v6228 = vpop.f32.mrb[0].mxu0
        %v6229 = vpop.f32.mrb[0].mxu0
        %v6230 = vpop.f32.mrb[0].mxu0
        %6231 = vdwg.mxu0
        %v6232 = vpack.c.bf16 %v6227, %v6227
        %s6233 = scalar_lea.vmem %s43, 2
        %v6234 = vld [vmem:[%s6233] sm:$0x3]
        %v6236 = vsel %vm2886, %v6234, 0
        %6238 = vmatprep.subr.bf16.mxu0 0
        %6239 = vmatpush1.bf16.msra.mxu0 %v6187
        %6240 = vmatprep.subr.bf16.mxu0 0
        %6241 = vmatpush1.bf16.msra.mxu0 0
        %6242 = vmatprep.subr.bf16.mxu0 0
        %6243 = vmatpush1.bf16.msra.mxu0 0
        %6244 = vmatprep.subr.bf16.mxu0 0
        %6245 = vmatpush1.bf16.msra.mxu0 0
        %6246 = vmatprep.subr.bf16.mxu0 0
        %6247 = vmatpush1.bf16.msra.mxu0 0
        %6248 = vmatprep.subr.bf16.mxu0 0
        %6249 = vmatpush1.bf16.msra.mxu0 0
        %6250 = vmatprep.subr.bf16.mxu0 0
        %6251 = vmatpush1.bf16.msra.mxu0 0
        %6252 = vmatprep.subr.bf16.mxu0 0
        %6253 = vmatpush1.bf16.msra.mxu0 0
        %6254 = vmatprep.subr.bf16.mxu0 0
        %6255 = vmatpush1.bf16.msra.mxu0 0
        %6256 = vmatprep.subr.bf16.mxu0 0
        %6257 = vmatpush1.bf16.msra.mxu0 0
        %6258 = vmatprep.subr.bf16.mxu0 0
        %6259 = vmatpush1.bf16.msra.mxu0 0
        %6260 = vmatprep.subr.bf16.mxu0 0
        %6261 = vmatpush1.bf16.msra.mxu0 0
        %6262 = vmatprep.subr.bf16.mxu0 0
        %6263 = vmatpush1.bf16.msra.mxu0 0
        %6264 = vmatprep.subr.bf16.mxu0 0
        %6265 = vmatpush1.bf16.msra.mxu0 0
        %6266 = vmatprep.subr.bf16.mxu0 0
        %6267 = vmatpush1.bf16.msra.mxu0 0
        %6268 = vmatprep.subr.bf16.mxu0 0
        %6269 = vmatpush1.bf16.msra.mxu0 0
        %6270 = vmatprep.mubr.bf16.mxu0 0
        %6271 = vmatmul.mubr.bf16.gmra.mrb[0].mxu0 %v6236
        %v6272 = vpop.f32.mrb[0].mxu0
        %v6273 = vadd.f32 0.0, %v6272
        %v6274 = vpop.f32.mrb[0].mxu0
        %v6275 = vpop.f32.mrb[0].mxu0
        %v6276 = vpop.f32.mrb[0].mxu0
        %6277 = vdwg.mxu0
        %v6278 = vpack.c.bf16 %v6273, %v6273
        %s6279 = scalar_lea.vmem %s43, 4
        %v6280 = vld [vmem:[%s6279] sm:$0x3]
        %v6282 = vsel %vm2886, %v6280, 0
        %6284 = vmatprep.subr.bf16.mxu0 0
        %6285 = vmatpush1.bf16.msra.mxu0 %v6187
        %6286 = vmatprep.subr.bf16.mxu0 0
        %6287 = vmatpush1.bf16.msra.mxu0 0
        %6288 = vmatprep.subr.bf16.mxu0 0
        %6289 = vmatpush1.bf16.msra.mxu0 0
        %6290 = vmatprep.subr.bf16.mxu0 0
        %6291 = vmatpush1.bf16.msra.mxu0 0
        %6292 = vmatprep.subr.bf16.mxu0 0
        %6293 = vmatpush1.bf16.msra.mxu0 0
        %6294 = vmatprep.subr.bf16.mxu0 0
        %6295 = vmatpush1.bf16.msra.mxu0 0
        %6296 = vmatprep.subr.bf16.mxu0 0
        %6297 = vmatpush1.bf16.msra.mxu0 0
        %6298 = vmatprep.subr.bf16.mxu0 0
        %6299 = vmatpush1.bf16.msra.mxu0 0
        %6300 = vmatprep.subr.bf16.mxu0 0
        %6301 = vmatpush1.bf16.msra.mxu0 0
        %6302 = vmatprep.subr.bf16.mxu0 0
        %6303 = vmatpush1.bf16.msra.mxu0 0
        %6304 = vmatprep.subr.bf16.mxu0 0
        %6305 = vmatpush1.bf16.msra.mxu0 0
        %6306 = vmatprep.subr.bf16.mxu0 0
        %6307 = vmatpush1.bf16.msra.mxu0 0
        %6308 = vmatprep.subr.bf16.mxu0 0
        %6309 = vmatpush1.bf16.msra.mxu0 0
        %6310 = vmatprep.subr.bf16.mxu0 0
        %6311 = vmatpush1.bf16.msra.mxu0 0
        %6312 = vmatprep.subr.bf16.mxu0 0
        %6313 = vmatpush1.bf16.msra.mxu0 0
        %6314 = vmatprep.subr.bf16.mxu0 0
        %6315 = vmatpush1.bf16.msra.mxu0 0
        %6316 = vmatprep.mubr.bf16.mxu0 0
        %6317 = vmatmul.mubr.bf16.gmra.mrb[0].mxu0 %v6282
        %v6318 = vpop.f32.mrb[0].mxu0
        %v6319 = vadd.f32 0.0, %v6318
        %v6320 = vpop.f32.mrb[0].mxu0
        %v6321 = vpop.f32.mrb[0].mxu0
        %v6322 = vpop.f32.mrb[0].mxu0
        %6323 = vdwg.mxu0
        %v6324 = vpack.c.bf16 %v6319, %v6319
        %s6325 = scalar_lea.vmem %s43, 6
        %v6326 = vld [vmem:[%s6325] sm:$0x3]
        %v6328 = vsel %vm2886, %v6326, 0
        %6330 = vmatprep.subr.bf16.mxu0 0
        %6331 = vmatpush1.bf16.msra.mxu0 %v6187
        %6332 = vmatprep.subr.bf16.mxu0 0
        %6333 = vmatpush1.bf16.msra.mxu0 0
        %6334 = vmatprep.subr.bf16.mxu0 0
        %6335 = vmatpush1.bf16.msra.mxu0 0
        %6336 = vmatprep.subr.bf16.mxu0 0
        %6337 = vmatpush1.bf16.msra.mxu0 0
        %6338 = vmatprep.subr.bf16.mxu0 0
        %6339 = vmatpush1.bf16.msra.mxu0 0
        %6340 = vmatprep.subr.bf16.mxu0 0
        %6341 = vmatpush1.bf16.msra.mxu0 0
        %6342 = vmatprep.subr.bf16.mxu0 0
        %6343 = vmatpush1.bf16.msra.mxu0 0
        %6344 = vmatprep.subr.bf16.mxu0 0
        %6345 = vmatpush1.bf16.msra.mxu0 0
        %6346 = vmatprep.subr.bf16.mxu0 0
        %6347 = vmatpush1.bf16.msra.mxu0 0
        %6348 = vmatprep.subr.bf16.mxu0 0
        %6349 = vmatpush1.bf16.msra.mxu0 0
        %6350 = vmatprep.subr.bf16.mxu0 0
        %6351 = vmatpush1.bf16.msra.mxu0 0
        %6352 = vmatprep.subr.bf16.mxu0 0
        %6353 = vmatpush1.bf16.msra.mxu0 0
        %6354 = vmatprep.subr.bf16.mxu0 0
        %6355 = vmatpush1.bf16.msra.mxu0 0
        %6356 = vmatprep.subr.bf16.mxu0 0
        %6357 = vmatpush1.bf16.msra.mxu0 0
        %6358 = vmatprep.subr.bf16.mxu0 0
        %6359 = vmatpush1.bf16.msra.mxu0 0
        %6360 = vmatprep.subr.bf16.mxu0 0
        %6361 = vmatpush1.bf16.msra.mxu0 0
        %6362 = vmatprep.mubr.bf16.mxu0 0
        %6363 = vmatmul.mubr.bf16.gmra.mrb[0].mxu0 %v6328
        %v6364 = vpop.f32.mrb[0].mxu0
        %v6365 = vadd.f32 0.0, %v6364
        %v6366 = vpop.f32.mrb[0].mxu0
        %v6367 = vpop.f32.mrb[0].mxu0
        %v6368 = vpop.f32.mrb[0].mxu0
        %6369 = vdwg.mxu0
        %v6370 = vpack.c.bf16 %v6365, %v6365
        %s6371 = scalar_lea.vmem %s43, 8
        %v6372 = vld [vmem:[%s6371] sm:$0x3]
        %v6374 = vsel %vm2886, %v6372, 0
        %6376 = vmatprep.subr.bf16.mxu0 0
        %6377 = vmatpush1.bf16.msra.mxu0 %v6187
        %6378 = vmatprep.subr.bf16.mxu0 0
        %6379 = vmatpush1.bf16.msra.mxu0 0
        %6380 = vmatprep.subr.bf16.mxu0 0
        %6381 = vmatpush1.bf16.msra.mxu0 0
        %6382 = vmatprep.subr.bf16.mxu0 0
        %6383 = vmatpush1.bf16.msra.mxu0 0
        %6384 = vmatprep.subr.bf16.mxu0 0
        %6385 = vmatpush1.bf16.msra.mxu0 0
        %6386 = vmatprep.subr.bf16.mxu0 0
        %6387 = vmatpush1.bf16.msra.mxu0 0
        %6388 = vmatprep.subr.bf16.mxu0 0
        %6389 = vmatpush1.bf16.msra.mxu0 0
        %6390 = vmatprep.subr.bf16.mxu0 0
        %6391 = vmatpush1.bf16.msra.mxu0 0
        %6392 = vmatprep.subr.bf16.mxu0 0
        %6393 = vmatpush1.bf16.msra.mxu0 0
        %6394 = vmatprep.subr.bf16.mxu0 0
        %6395 = vmatpush1.bf16.msra.mxu0 0
        %6396 = vmatprep.subr.bf16.mxu0 0
        %6397 = vmatpush1.bf16.msra.mxu0 0
        %6398 = vmatprep.subr.bf16.mxu0 0
        %6399 = vmatpush1.bf16.msra.mxu0 0
        %6400 = vmatprep.subr.bf16.mxu0 0
        %6401 = vmatpush1.bf16.msra.mxu0 0
        %6402 = vmatprep.subr.bf16.mxu0 0
        %6403 = vmatpush1.bf16.msra.mxu0 0
        %6404 = vmatprep.subr.bf16.mxu0 0
        %6405 = vmatpush1.bf16.msra.mxu0 0
        %6406 = vmatprep.subr.bf16.mxu0 0
        %6407 = vmatpush1.bf16.msra.mxu0 0
        %6408 = vmatprep.mubr.bf16.mxu0 0
        %6409 = vmatmul.mubr.bf16.gmra.mrb[0].mxu0 %v6374
        %v6410 = vpop.f32.mrb[0].mxu0
        %v6411 = vadd.f32 0.0, %v6410
        %v6412 = vpop.f32.mrb[0].mxu0
        %v6413 = vpop.f32.mrb[0].mxu0
        %v6414 = vpop.f32.mrb[0].mxu0
        %6415 = vdwg.mxu0
        %v6416 = vpack.c.bf16 %v6411, %v6411
        %s6417 = scalar_lea.vmem %s43, 10
        %v6418 = vld [vmem:[%s6417] sm:$0x3]
        %v6420 = vsel %vm2886, %v6418, 0
        %6422 = vmatprep.subr.bf16.mxu0 0
        %6423 = vmatpush1.bf16.msra.mxu0 %v6187
        %6424 = vmatprep.subr.bf16.mxu0 0
        %6425 = vmatpush1.bf16.msra.mxu0 0
        %6426 = vmatprep.subr.bf16.mxu0 0
        %6427 = vmatpush1.bf16.msra.mxu0 0
        %6428 = vmatprep.subr.bf16.mxu0 0
        %6429 = vmatpush1.bf16.msra.mxu0 0
        %6430 = vmatprep.subr.bf16.mxu0 0
        %6431 = vmatpush1.bf16.msra.mxu0 0
        %6432 = vmatprep.subr.bf16.mxu0 0
        %6433 = vmatpush1.bf16.msra.mxu0 0
        %6434 = vmatprep.subr.bf16.mxu0 0
        %6435 = vmatpush1.bf16.msra.mxu0 0
        %6436 = vmatprep.subr.bf16.mxu0 0
        %6437 = vmatpush1.bf16.msra.mxu0 0
        %6438 = vmatprep.subr.bf16.mxu0 0
        %6439 = vmatpush1.bf16.msra.mxu0 0
        %6440 = vmatprep.subr.bf16.mxu0 0
        %6441 = vmatpush1.bf16.msra.mxu0 0
        %6442 = vmatprep.subr.bf16.mxu0 0
        %6443 = vmatpush1.bf16.msra.mxu0 0
        %6444 = vmatprep.subr.bf16.mxu0 0
        %6445 = vmatpush1.bf16.msra.mxu0 0
        %6446 = vmatprep.subr.bf16.mxu0 0
        %6447 = vmatpush1.bf16.msra.mxu0 0
        %6448 = vmatprep.subr.bf16.mxu0 0
        %6449 = vmatpush1.bf16.msra.mxu0 0
        %6450 = vmatprep.subr.bf16.mxu0 0
        %6451 = vmatpush1.bf16.msra.mxu0 0
        %6452 = vmatprep.subr.bf16.mxu0 0
        %6453 = vmatpush1.bf16.msra.mxu0 0
        %6454 = vmatprep.mubr.bf16.mxu0 0
        %6455 = vmatmul.mubr.bf16.gmra.mrb[0].mxu0 %v6420
        %v6456 = vpop.f32.mrb[0].mxu0
        %v6457 = vadd.f32 0.0, %v6456
        %v6458 = vpop.f32.mrb[0].mxu0
        %v6459 = vpop.f32.mrb[0].mxu0
        %v6460 = vpop.f32.mrb[0].mxu0
        %6461 = vdwg.mxu0
        %v6462 = vpack.c.bf16 %v6457, %v6457
        %s6463 = scalar_lea.vmem %s43, 12
        %v6464 = vld [vmem:[%s6463] sm:$0x3]
        %v6466 = vsel %vm2886, %v6464, 0
        %6468 = vmatprep.subr.bf16.mxu0 0
        %6469 = vmatpush1.bf16.msra.mxu0 %v6187
        %6470 = vmatprep.subr.bf16.mxu0 0
        %6471 = vmatpush1.bf16.msra.mxu0 0
        %6472 = vmatprep.subr.bf16.mxu0 0
        %6473 = vmatpush1.bf16.msra.mxu0 0
        %6474 = vmatprep.subr.bf16.mxu0 0
        %6475 = vmatpush1.bf16.msra.mxu0 0
        %6476 = vmatprep.subr.bf16.mxu0 0
        %6477 = vmatpush1.bf16.msra.mxu0 0
        %6478 = vmatprep.subr.bf16.mxu0 0
        %6479 = vmatpush1.bf16.msra.mxu0 0
        %6480 = vmatprep.subr.bf16.mxu0 0
        %6481 = vmatpush1.bf16.msra.mxu0 0
        %6482 = vmatprep.subr.bf16.mxu0 0
        %6483 = vmatpush1.bf16.msra.mxu0 0
        %6484 = vmatprep.subr.bf16.mxu0 0
        %6485 = vmatpush1.bf16.msra.mxu0 0
        %6486 = vmatprep.subr.bf16.mxu0 0
        %6487 = vmatpush1.bf16.msra.mxu0 0
        %6488 = vmatprep.subr.bf16.mxu0 0
        %6489 = vmatpush1.bf16.msra.mxu0 0
        %6490 = vmatprep.subr.bf16.mxu0 0
        %6491 = vmatpush1.bf16.msra.mxu0 0
        %6492 = vmatprep.subr.bf16.mxu0 0
        %6493 = vmatpush1.bf16.msra.mxu0 0
        %6494 = vmatprep.subr.bf16.mxu0 0
        %6495 = vmatpush1.bf16.msra.mxu0 0
        %6496 = vmatprep.subr.bf16.mxu0 0
        %6497 = vmatpush1.bf16.msra.mxu0 0
        %6498 = vmatprep.subr.bf16.mxu0 0
        %6499 = vmatpush1.bf16.msra.mxu0 0
        %6500 = vmatprep.mubr.bf16.mxu0 0
        %6501 = vmatmul.mubr.bf16.gmra.mrb[0].mxu0 %v6466
        %v6502 = vpop.f32.mrb[0].mxu0
        %v6503 = vadd.f32 0.0, %v6502
        %v6504 = vpop.f32.mrb[0].mxu0
        %v6505 = vpop.f32.mrb[0].mxu0
        %v6506 = vpop.f32.mrb[0].mxu0
        %6507 = vdwg.mxu0
        %v6508 = vpack.c.bf16 %v6503, %v6503
        %s6509 = scalar_lea.vmem %s43, 14
        %v6510 = vld [vmem:[%s6509] sm:$0x3]
        %v6512 = vsel %vm2886, %v6510, 0
        %6514 = vmatprep.subr.bf16.mxu0 0
        %6515 = vmatpush1.bf16.msra.mxu0 %v6187
        %6516 = vmatprep.subr.bf16.mxu0 0
        %6517 = vmatpush1.bf16.msra.mxu0 0
        %6518 = vmatprep.subr.bf16.mxu0 0
        %6519 = vmatpush1.bf16.msra.mxu0 0
        %6520 = vmatprep.subr.bf16.mxu0 0
        %6521 = vmatpush1.bf16.msra.mxu0 0
        %6522 = vmatprep.subr.bf16.mxu0 0
        %6523 = vmatpush1.bf16.msra.mxu0 0
        %6524 = vmatprep.subr.bf16.mxu0 0
        %6525 = vmatpush1.bf16.msra.mxu0 0
        %6526 = vmatprep.subr.bf16.mxu0 0
        %6527 = vmatpush1.bf16.msra.mxu0 0
        %6528 = vmatprep.subr.bf16.mxu0 0
        %6529 = vmatpush1.bf16.msra.mxu0 0
        %6530 = vmatprep.subr.bf16.mxu0 0
        %6531 = vmatpush1.bf16.msra.mxu0 0
        %6532 = vmatprep.subr.bf16.mxu0 0
        %6533 = vmatpush1.bf16.msra.mxu0 0
        %6534 = vmatprep.subr.bf16.mxu0 0
        %6535 = vmatpush1.bf16.msra.mxu0 0
        %6536 = vmatprep.subr.bf16.mxu0 0
        %6537 = vmatpush1.bf16.msra.mxu0 0
        %6538 = vmatprep.subr.bf16.mxu0 0
        %6539 = vmatpush1.bf16.msra.mxu0 0
        %6540 = vmatprep.subr.bf16.mxu0 0
        %6541 = vmatpush1.bf16.msra.mxu0 0
        %6542 = vmatprep.subr.bf16.mxu0 0
        %6543 = vmatpush1.bf16.msra.mxu0 0
        %6544 = vmatprep.subr.bf16.mxu0 0
        %6545 = vmatpush1.bf16.msra.mxu0 0
        %6546 = vmatprep.mubr.bf16.mxu0 0
        %6547 = vmatmul.mubr.bf16.gmra.mrb[0].mxu0 %v6512
        %v6548 = vpop.f32.mrb[0].mxu0
        %v6549 = vadd.f32 0.0, %v6548
        %v6550 = vpop.f32.mrb[0].mxu0
        %v6551 = vpop.f32.mrb[0].mxu0
        %v6552 = vpop.f32.mrb[0].mxu0
        %6553 = vdwg.mxu0
        %v6554 = vpack.c.bf16 %v6549, %v6549
        %s6555 = scalar_lea.vmem %s43, 16
        %v6556 = vld [vmem:[%s6555] sm:$0x3]
        %v6558 = vsel %vm2886, %v6556, 0
        %6560 = vmatprep.subr.bf16.mxu0 0
        %6561 = vmatpush1.bf16.msra.mxu0 %v6187
        %6562 = vmatprep.subr.bf16.mxu0 0
        %6563 = vmatpush1.bf16.msra.mxu0 0
        %6564 = vmatprep.subr.bf16.mxu0 0
        %6565 = vmatpush1.bf16.msra.mxu0 0
        %6566 = vmatprep.subr.bf16.mxu0 0
        %6567 = vmatpush1.bf16.msra.mxu0 0
        %6568 = vmatprep.subr.bf16.mxu0 0
        %6569 = vmatpush1.bf16.msra.mxu0 0
        %6570 = vmatprep.subr.bf16.mxu0 0
        %6571 = vmatpush1.bf16.msra.mxu0 0
        %6572 = vmatprep.subr.bf16.mxu0 0
        %6573 = vmatpush1.bf16.msra.mxu0 0
        %6574 = vmatprep.subr.bf16.mxu0 0
        %6575 = vmatpush1.bf16.msra.mxu0 0
        %6576 = vmatprep.subr.bf16.mxu0 0
        %6577 = vmatpush1.bf16.msra.mxu0 0
        %6578 = vmatprep.subr.bf16.mxu0 0
        %6579 = vmatpush1.bf16.msra.mxu0 0
        %6580 = vmatprep.subr.bf16.mxu0 0
        %6581 = vmatpush1.bf16.msra.mxu0 0
        %6582 = vmatprep.subr.bf16.mxu0 0
        %6583 = vmatpush1.bf16.msra.mxu0 0
        %6584 = vmatprep.subr.bf16.mxu0 0
        %6585 = vmatpush1.bf16.msra.mxu0 0
        %6586 = vmatprep.subr.bf16.mxu0 0
        %6587 = vmatpush1.bf16.msra.mxu0 0
        %6588 = vmatprep.subr.bf16.mxu0 0
        %6589 = vmatpush1.bf16.msra.mxu0 0
        %6590 = vmatprep.subr.bf16.mxu0 0
        %6591 = vmatpush1.bf16.msra.mxu0 0
        %6592 = vmatprep.mubr.bf16.mxu0 0
        %6593 = vmatmul.mubr.bf16.gmra.mrb[0].mxu0 %v6558
        %v6594 = vpop.f32.mrb[0].mxu0
        %v6595 = vadd.f32 0.0, %v6594
        %v6596 = vpop.f32.mrb[0].mxu0
        %v6597 = vpop.f32.mrb[0].mxu0
        %v6598 = vpop.f32.mrb[0].mxu0
        %6599 = vdwg.mxu0
        %v6600 = vpack.c.bf16 %v6595, %v6595
        %6602 = vrot.lane.b32.xlu0 %v6278, 32
        %v6603 = vpop.permute.xlu0 %6602
        %6605 = vrot.lane.b32.xlu0 %v6324, 64
        %v6606 = vpop.permute.xlu0 %6605
        %6608 = vrot.lane.b32.xlu0 %v6370, 96
        %v6609 = vpop.permute.xlu0 %6608
        %6611 = vrot.lane.b32.xlu0 %v6462, 32
        %v6612 = vpop.permute.xlu0 %6611
        %6614 = vrot.lane.b32.xlu0 %v6508, 64
        %v6615 = vpop.permute.xlu0 %6614
        %6617 = vrot.lane.b32.xlu0 %v6554, 96
        %v6618 = vpop.permute.xlu0 %6617
        %v6621 = vsel %vm2899, %v6232, %v6603
        %v6623 = vsel %vm2917, %v6621, %v6606
        %v6625 = vsel %vm2935, %v6623, %v6609
        %v6629 = vsel %vm2899, %v6416, %v6612
        %v6631 = vsel %vm2917, %v6629, %v6615
        %v6633 = vsel %vm2935, %v6631, %v6618
        %v6635 = vld [vmem:[%s45] sm:$0xf]
        %v6636 = vld [vmem:[%s45 + $0x4] sm:$0xf]
        %v6637 = vld [vmem:[%s45 + $0x8] sm:$0xf]
        %v6638 = vld [vmem:[%s45 + $0xc] sm:$0xf]
        %v6639 = vld [vmem:[%s45 + $0x10] sm:$0xf]
        %v6640 = vld [vmem:[%s45 + $0x14] sm:$0xf]
        %v6641 = vld [vmem:[%s45 + $0x18] sm:$0xf]
        %v6642 = vld [vmem:[%s45 + $0x1c] sm:$0xf]
        %v6643 = vld [vmem:[%s45 + $0x20] sm:$0xf]
        %v6644 = vld [vmem:[%s45 + $0x24] sm:$0xf]
        %v6645 = vld [vmem:[%s45 + $0x28] sm:$0xf]
        %v6646 = vld [vmem:[%s45 + $0x2c] sm:$0xf]
        %v6647 = vld [vmem:[%s45 + $0x30] sm:$0xf]
        %v6648 = vld [vmem:[%s45 + $0x34] sm:$0xf]
        %v6649 = vld [vmem:[%s45 + $0x38] sm:$0xf]
        %v6650 = vld [vmem:[%s45 + $0x3c] sm:$0xf]
        %v6651 = vld [vmem:[%s45 + $0x40] sm:$0xf]
        %v6652 = vld [vmem:[%s45 + $0x44] sm:$0xf]
        %v6653 = vld [vmem:[%s45 + $0x48] sm:$0xf]
        %v6654 = vld [vmem:[%s45 + $0x4c] sm:$0xf]
        %v6655 = vld [vmem:[%s45 + $0x50] sm:$0xf]
        %v6656 = vld [vmem:[%s45 + $0x54] sm:$0xf]
        %v6657 = vld [vmem:[%s45 + $0x58] sm:$0xf]
        %v6658 = vld [vmem:[%s45 + $0x5c] sm:$0xf]
        %v6659 = vld [vmem:[%s45 + $0x60] sm:$0xf]
        %v6660 = vld [vmem:[%s45 + $0x64] sm:$0xf]
        %v6661 = vld [vmem:[%s45 + $0x68] sm:$0xf]
        %v6662 = vld [vmem:[%s45 + $0x6c] sm:$0xf]
        %v6663 = vld [vmem:[%s45 + $0x70] sm:$0xf]
        %v6664 = vld [vmem:[%s45 + $0x74] sm:$0xf]
        %v6665 = vld [vmem:[%s45 + $0x78] sm:$0xf]
        %v6666 = vld [vmem:[%s45 + $0x7c] sm:$0xf]
        %v6667 = vld [vmem:[%s45 + $0x80] sm:$0xf]
        %v6668 = vld [vmem:[%s45 + $0x84] sm:$0xf]
        %v6669 = vld [vmem:[%s45 + $0x88] sm:$0xf]
        %v6670 = vld [vmem:[%s45 + $0x8c] sm:$0xf]
        %v6671 = vld [vmem:[%s47] sm:$0x1]
        %v6673 = vlaneseq
        %v6674 = vshrl.u32 %v6673, 7
        %v6675 = vsub.s32 0, %v6674
        %v6676 = vrot.slane %v6671, %v6675
        %v6714 = vunpack.c.l.b16 %v6635
        %v6715 = vunpack.c.l.b16 %v6636
        %v6716 = vunpack.c.l.b16 %v6637
        %v6717 = vunpack.c.l.b16 %v6638
        %v6718 = vunpack.c.l.b16 %v6639
        %v6719 = vunpack.c.l.b16 %v6640
        %v6720 = vunpack.c.l.b16 %v6641
        %v6721 = vunpack.c.l.b16 %v6642
        %v6722 = vunpack.c.l.b16 %v6643
        %v6723 = vunpack.c.l.b16 %v6644
        %v6724 = vunpack.c.l.b16 %v6645
        %v6725 = vunpack.c.l.b16 %v6646
        %v6726 = vunpack.c.l.b16 %v6647
        %v6727 = vunpack.c.l.b16 %v6648
        %v6728 = vunpack.c.l.b16 %v6649
        %v6729 = vunpack.c.l.b16 %v6650
        %v6730 = vunpack.c.l.b16 %v6651
        %v6731 = vunpack.c.l.b16 %v6652
        %v6732 = vunpack.c.l.b16 %v6653
        %v6733 = vunpack.c.l.b16 %v6654
        %v6734 = vunpack.c.l.b16 %v6655
        %v6735 = vunpack.c.l.b16 %v6656
        %v6736 = vunpack.c.l.b16 %v6657
        %v6737 = vunpack.c.l.b16 %v6658
        %v6738 = vunpack.c.l.b16 %v6659
        %v6739 = vunpack.c.l.b16 %v6660
        %v6740 = vunpack.c.l.b16 %v6661
        %v6741 = vunpack.c.l.b16 %v6662
        %v6742 = vunpack.c.l.b16 %v6663
        %v6743 = vunpack.c.l.b16 %v6664
        %v6744 = vunpack.c.l.b16 %v6665
        %v6745 = vunpack.c.l.b16 %v6666
        %v6746 = vunpack.c.l.b16 %v6667
        %v6747 = vunpack.c.l.b16 %v6668
        %v6748 = vunpack.c.l.b16 %v6669
        %v6749 = vunpack.c.l.b16 %v6670
        %v6750 = vpack.c.b16 %v6715, %v6714
        %v6751 = vpack.c.b16 %v6717, %v6716
        %v6752 = vpack.c.b16 %v6719, %v6718
        %v6753 = vpack.c.b16 %v6721, %v6720
        %v6754 = vpack.c.b16 %v6723, %v6722
        %v6755 = vpack.c.b16 %v6725, %v6724
        %v6756 = vpack.c.b16 %v6727, %v6726
        %v6757 = vpack.c.b16 %v6729, %v6728
        %v6758 = vpack.c.b16 %v6731, %v6730
        %v6759 = vpack.c.b16 %v6733, %v6732
        %v6760 = vpack.c.b16 %v6735, %v6734
        %v6761 = vpack.c.b16 %v6737, %v6736
        %v6762 = vpack.c.b16 %v6739, %v6738
        %v6763 = vpack.c.b16 %v6741, %v6740
        %v6764 = vpack.c.b16 %v6743, %v6742
        %v6765 = vpack.c.b16 %v6745, %v6744
        %v6766 = vpack.c.b16 %v6747, %v6746
        %v6767 = vpack.c.b16 %v6749, %v6748
        %v6787 = vsel %vm2899, %v6600, 0
        %6789 = vmatprep.subr.bf16.mxu0 0
        %6790 = vmatpush1.bf16.msra.mxu0 %v6750
        %6791 = vmatprep.subr.bf16.mxu0 0
        %6792 = vmatpush1.bf16.msra.mxu0 %v6751
        %6793 = vmatprep.subr.bf16.mxu0 0
        %6794 = vmatpush1.bf16.msra.mxu0 %v6752
        %6795 = vmatprep.subr.bf16.mxu0 0
        %6796 = vmatpush1.bf16.msra.mxu0 %v6753
        %6797 = vmatprep.subr.bf16.mxu0 0
        %6798 = vmatpush1.bf16.msra.mxu0 %v6754
        %6799 = vmatprep.subr.bf16.mxu0 0
        %6800 = vmatpush1.bf16.msra.mxu0 %v6755
        %6801 = vmatprep.subr.bf16.mxu0 0
        %6802 = vmatpush1.bf16.msra.mxu0 %v6756
        %6803 = vmatprep.subr.bf16.mxu0 0
        %6804 = vmatpush1.bf16.msra.mxu0 %v6757
        %6805 = vmatprep.subr.bf16.mxu0 0
        %6806 = vmatpush1.bf16.msra.mxu0 %v6758
        %6807 = vmatprep.subr.bf16.mxu0 0
        %6808 = vmatpush1.bf16.msra.mxu0 %v6759
        %6809 = vmatprep.subr.bf16.mxu0 0
        %6810 = vmatpush1.bf16.msra.mxu0 %v6760
        %6811 = vmatprep.subr.bf16.mxu0 0
        %6812 = vmatpush1.bf16.msra.mxu0 %v6761
        %6813 = vmatprep.subr.bf16.mxu0 0
        %6814 = vmatpush1.bf16.msra.mxu0 %v6762
        %6815 = vmatprep.subr.bf16.mxu0 0
        %6816 = vmatpush1.bf16.msra.mxu0 %v6763
        %6817 = vmatprep.subr.bf16.mxu0 0
        %6818 = vmatpush1.bf16.msra.mxu0 %v6764
        %6819 = vmatprep.subr.bf16.mxu0 0
        %6820 = vmatpush1.bf16.msra.mxu0 %v6765
        %6821 = vmatprep.mubr.bf16.mxu0 %v6633
        %6822 = vmatmul.mubr.bf16.gmra.mrb[0].mxu0 %v6625
        %v6823 = vpop.f32.mrb[0].mxu0
        %v6824 = vadd.f32 %v6676, %v6823
        %v6825 = vpop.f32.mrb[0].mxu0
        %v6826 = vpop.f32.mrb[0].mxu0
        %v6827 = vpop.f32.mrb[0].mxu0
        %6828 = vdwg.mxu0
        %6829 = vmatprep.subr.bf16.mxu0 0
        %6830 = vmatpush1.bf16.msra.mxu0 %v6766
        %6831 = vmatprep.subr.bf16.mxu0 0
        %6832 = vmatpush1.bf16.msra.mxu0 %v6767
        %6833 = vmatprep.subr.bf16.mxu0 0
        %6834 = vmatpush1.bf16.msra.mxu0 0
        %6835 = vmatprep.subr.bf16.mxu0 0
        %6836 = vmatpush1.bf16.msra.mxu0 0
        %6837 = vmatprep.subr.bf16.mxu0 0
        %6838 = vmatpush1.bf16.msra.mxu0 0
        %6839 = vmatprep.subr.bf16.mxu0 0
        %6840 = vmatpush1.bf16.msra.mxu0 0
        %6841 = vmatprep.subr.bf16.mxu0 0
        %6842 = vmatpush1.bf16.msra.mxu0 0
        %6843 = vmatprep.subr.bf16.mxu0 0
        %6844 = vmatpush1.bf16.msra.mxu0 0
        %6845 = vmatprep.subr.bf16.mxu0 0
        %6846 = vmatpush1.bf16.msra.mxu0 0
        %6847 = vmatprep.subr.bf16.mxu0 0
        %6848 = vmatpush1.bf16.msra.mxu0 0
        %6849 = vmatprep.subr.bf16.mxu0 0
        %6850 = vmatpush1.bf16.msra.mxu0 0
        %6851 = vmatprep.subr.bf16.mxu0 0
        %6852 = vmatpush1.bf16.msra.mxu0 0
        %6853 = vmatprep.subr.bf16.mxu0 0
        %6854 = vmatpush1.bf16.msra.mxu0 0
        %6855 = vmatprep.subr.bf16.mxu0 0
        %6856 = vmatpush1.bf16.msra.mxu0 0
        %6857 = vmatprep.subr.bf16.mxu0 0
        %6858 = vmatpush1.bf16.msra.mxu0 0
        %6859 = vmatprep.subr.bf16.mxu0 0
        %6860 = vmatpush1.bf16.msra.mxu0 0
        %6861 = vmatprep.mubr.bf16.mxu0 0
        %6862 = vmatmul.mubr.bf16.gmra.mrb[0].mxu0 %v6787
        %v6863 = vpop.f32.mrb[0].mxu0
        %v6864 = vadd.f32 %v6824, %v6863
        %v6865 = vpop.f32.mrb[0].mxu0
        %v6866 = vpop.f32.mrb[0].mxu0
        %v6867 = vpop.f32.mrb[0].mxu0
        %6868 = vdwg.mxu0
        %vm6869 = vcmp.ge.f32.partialorder %v6864, 0.0
        %v6870 = vmul.f32 %v6864, 0.01
        %v6871 = vsel %vm6869, %v6864, %v6870
        %v6872 = vpack.c.bf16 %v6871, %v6871
        %v6873 = vld [vmem:[%s49] sm:$0x3]
        %v6875 = vsel %vm2886, %v6873, 0
        %6877 = vmatprep.subr.bf16.mxu0 0
        %6878 = vmatpush1.bf16.msra.mxu0 %v6187
        %6879 = vmatprep.subr.bf16.mxu0 0
        %6880 = vmatpush1.bf16.msra.mxu0 0
        %6881 = vmatprep.subr.bf16.mxu0 0
        %6882 = vmatpush1.bf16.msra.mxu0 0
        %6883 = vmatprep.subr.bf16.mxu0 0
        %6884 = vmatpush1.bf16.msra.mxu0 0
        %6885 = vmatprep.subr.bf16.mxu0 0
        %6886 = vmatpush1.bf16.msra.mxu0 0
        %6887 = vmatprep.subr.bf16.mxu0 0
        %6888 = vmatpush1.bf16.msra.mxu0 0
        %6889 = vmatprep.subr.bf16.mxu0 0
        %6890 = vmatpush1.bf16.msra.mxu0 0
        %6891 = vmatprep.subr.bf16.mxu0 0
        %6892 = vmatpush1.bf16.msra.mxu0 0
        %6893 = vmatprep.subr.bf16.mxu0 0
        %6894 = vmatpush1.bf16.msra.mxu0 0
        %6895 = vmatprep.subr.bf16.mxu0 0
        %6896 = vmatpush1.bf16.msra.mxu0 0
        %6897 = vmatprep.subr.bf16.mxu0 0
        %6898 = vmatpush1.bf16.msra.mxu0 0
        %6899 = vmatprep.subr.bf16.mxu0 0
        %6900 = vmatpush1.bf16.msra.mxu0 0
        %6901 = vmatprep.subr.bf16.mxu0 0
        %6902 = vmatpush1.bf16.msra.mxu0 0
        %6903 = vmatprep.subr.bf16.mxu0 0
        %6904 = vmatpush1.bf16.msra.mxu0 0
        %6905 = vmatprep.subr.bf16.mxu0 0
        %6906 = vmatpush1.bf16.msra.mxu0 0
        %6907 = vmatprep.subr.bf16.mxu0 0
        %6908 = vmatpush1.bf16.msra.mxu0 0
        %6909 = vmatprep.mubr.bf16.mxu0 0
        %6910 = vmatmul.mubr.bf16.gmra.mrb[0].mxu0 %v6875
        %v6911 = vpop.f32.mrb[0].mxu0
        %v6912 = vadd.f32 0.0, %v6911
        %v6913 = vpop.f32.mrb[0].mxu0
        %v6914 = vpop.f32.mrb[0].mxu0
        %v6915 = vpop.f32.mrb[0].mxu0
        %6916 = vdwg.mxu0
        %v6917 = vpack.c.bf16 %v6912, %v6912
        %v6918 = vld [vmem:[%s51] sm:$0xf]
        %v6919 = vld [vmem:[%s51 + $0x4] sm:$0xf]
        %v6920 = vld [vmem:[%s51 + $0x8] sm:$0xf]
        %v6921 = vld [vmem:[%s51 + $0xc] sm:$0xf]
        %v6922 = vld [vmem:[%s53] sm:$0x1]
        %v6924 = vlaneseq
        %v6925 = vshrl.u32 %v6924, 7
        %v6926 = vsub.s32 0, %v6925
        %v6927 = vrot.slane %v6922, %v6926
        %v6933 = vunpack.c.l.b16 %v6918
        %v6934 = vunpack.c.l.b16 %v6919
        %v6935 = vunpack.c.l.b16 %v6920
        %v6936 = vunpack.c.l.b16 %v6921
        %v6937 = vpack.c.b16 %v6934, %v6933
        %v6938 = vpack.c.b16 %v6936, %v6935
        %v6942 = vsel %vm2899, %v6917, 0
        %6944 = vmatprep.subr.bf16.mxu0 0
        %6945 = vmatpush1.bf16.msra.mxu0 %v6937
        %6946 = vmatprep.subr.bf16.mxu0 0
        %6947 = vmatpush1.bf16.msra.mxu0 %v6938
        %6948 = vmatprep.subr.bf16.mxu0 0
        %6949 = vmatpush1.bf16.msra.mxu0 0
        %6950 = vmatprep.subr.bf16.mxu0 0
        %6951 = vmatpush1.bf16.msra.mxu0 0
        %6952 = vmatprep.subr.bf16.mxu0 0
        %6953 = vmatpush1.bf16.msra.mxu0 0
        %6954 = vmatprep.subr.bf16.mxu0 0
        %6955 = vmatpush1.bf16.msra.mxu0 0
        %6956 = vmatprep.subr.bf16.mxu0 0
        %6957 = vmatpush1.bf16.msra.mxu0 0
        %6958 = vmatprep.subr.bf16.mxu0 0
        %6959 = vmatpush1.bf16.msra.mxu0 0
        %6960 = vmatprep.subr.bf16.mxu0 0
        %6961 = vmatpush1.bf16.msra.mxu0 0
        %6962 = vmatprep.subr.bf16.mxu0 0
        %6963 = vmatpush1.bf16.msra.mxu0 0
        %6964 = vmatprep.subr.bf16.mxu0 0
        %6965 = vmatpush1.bf16.msra.mxu0 0
        %6966 = vmatprep.subr.bf16.mxu0 0
        %6967 = vmatpush1.bf16.msra.mxu0 0
        %6968 = vmatprep.subr.bf16.mxu0 0
        %6969 = vmatpush1.bf16.msra.mxu0 0
        %6970 = vmatprep.subr.bf16.mxu0 0
        %6971 = vmatpush1.bf16.msra.mxu0 0
        %6972 = vmatprep.subr.bf16.mxu0 0
        %6973 = vmatpush1.bf16.msra.mxu0 0
        %6974 = vmatprep.subr.bf16.mxu0 0
        %6975 = vmatpush1.bf16.msra.mxu0 0
        %6976 = vmatprep.mubr.bf16.mxu0 0
        %6977 = vmatmul.mubr.bf16.gmra.mrb[0].mxu0 %v6942
        %v6978 = vpop.f32.mrb[0].mxu0
        %v6979 = vadd.f32 %v6927, %v6978
        %v6980 = vpop.f32.mrb[0].mxu0
        %v6981 = vpop.f32.mrb[0].mxu0
        %v6982 = vpop.f32.mrb[0].mxu0
        %6983 = vdwg.mxu0
        %v6984 = vld [vmem:[%s55] sm:$0x3]
        %vm6985 = vcmask 31744
        %v6987 = vsel %vm6985, %v6984, 0
        %vm6989 = vcmask 1041408
        %v6991 = vsel %vm6989, %v6872, 0
        %6993 = vmatprep.subr.bf16.mxu0 0
        %6994 = vmatpush1.bf16.msra.mxu0 %v6991
        %6995 = vmatprep.subr.bf16.mxu0 0
        %6996 = vmatpush1.bf16.msra.mxu0 0
        %6997 = vmatprep.subr.bf16.mxu0 0
        %6998 = vmatpush1.bf16.msra.mxu0 0
        %6999 = vmatprep.subr.bf16.mxu0 0
        %7000 = vmatpush1.bf16.msra.mxu0 0
        %7001 = vmatprep.subr.bf16.mxu0 0
        %7002 = vmatpush1.bf16.msra.mxu0 0
        %7003 = vmatprep.subr.bf16.mxu0 0
        %7004 = vmatpush1.bf16.msra.mxu0 0
        %7005 = vmatprep.subr.bf16.mxu0 0
        %7006 = vmatpush1.bf16.msra.mxu0 0
        %7007 = vmatprep.subr.bf16.mxu0 0
        %7008 = vmatpush1.bf16.msra.mxu0 0
        %7009 = vmatprep.subr.bf16.mxu0 0
        %7010 = vmatpush1.bf16.msra.mxu0 0
        %7011 = vmatprep.subr.bf16.mxu0 0
        %7012 = vmatpush1.bf16.msra.mxu0 0
        %7013 = vmatprep.subr.bf16.mxu0 0
        %7014 = vmatpush1.bf16.msra.mxu0 0
        %7015 = vmatprep.subr.bf16.mxu0 0
        %7016 = vmatpush1.bf16.msra.mxu0 0
        %7017 = vmatprep.subr.bf16.mxu0 0
        %7018 = vmatpush1.bf16.msra.mxu0 0
        %7019 = vmatprep.subr.bf16.mxu0 0
        %7020 = vmatpush1.bf16.msra.mxu0 0
        %7021 = vmatprep.subr.bf16.mxu0 0
        %7022 = vmatpush1.bf16.msra.mxu0 0
        %7023 = vmatprep.subr.bf16.mxu0 0
        %7024 = vmatpush1.bf16.msra.mxu0 0
        %7025 = vmatprep.mubr.bf16.mxu0 0
        %7026 = vmatmul.mubr.bf16.gmra.mrb[0].mxu0 %v6987
        %v7027 = vpop.f32.mrb[0].mxu0
        %v7028 = vadd.f32 0.0, %v7027
        %v7029 = vpop.f32.mrb[0].mxu0
        %v7030 = vpop.f32.mrb[0].mxu0
        %v7031 = vpop.f32.mrb[0].mxu0
        %7032 = vdwg.mxu0
        %v7033 = vpack.c.bf16 %v7028, %v7028
        %s7034 = scalar_lea.vmem %s55, 2
        %v7035 = vld [vmem:[%s7034] sm:$0x3]
        %v7037 = vsel %vm6985, %v7035, 0
        %7039 = vmatprep.subr.bf16.mxu0 0
        %7040 = vmatpush1.bf16.msra.mxu0 %v6991
        %7041 = vmatprep.subr.bf16.mxu0 0
        %7042 = vmatpush1.bf16.msra.mxu0 0
        %7043 = vmatprep.subr.bf16.mxu0 0
        %7044 = vmatpush1.bf16.msra.mxu0 0
        %7045 = vmatprep.subr.bf16.mxu0 0
        %7046 = vmatpush1.bf16.msra.mxu0 0
        %7047 = vmatprep.subr.bf16.mxu0 0
        %7048 = vmatpush1.bf16.msra.mxu0 0
        %7049 = vmatprep.subr.bf16.mxu0 0
        %7050 = vmatpush1.bf16.msra.mxu0 0
        %7051 = vmatprep.subr.bf16.mxu0 0
        %7052 = vmatpush1.bf16.msra.mxu0 0
        %7053 = vmatprep.subr.bf16.mxu0 0
        %7054 = vmatpush1.bf16.msra.mxu0 0
        %7055 = vmatprep.subr.bf16.mxu0 0
        %7056 = vmatpush1.bf16.msra.mxu0 0
        %7057 = vmatprep.subr.bf16.mxu0 0
        %7058 = vmatpush1.bf16.msra.mxu0 0
        %7059 = vmatprep.subr.bf16.mxu0 0
        %7060 = vmatpush1.bf16.msra.mxu0 0
        %7061 = vmatprep.subr.bf16.mxu0 0
        %7062 = vmatpush1.bf16.msra.mxu0 0
        %7063 = vmatprep.subr.bf16.mxu0 0
        %7064 = vmatpush1.bf16.msra.mxu0 0
        %7065 = vmatprep.subr.bf16.mxu0 0
        %7066 = vmatpush1.bf16.msra.mxu0 0
        %7067 = vmatprep.subr.bf16.mxu0 0
        %7068 = vmatpush1.bf16.msra.mxu0 0
        %7069 = vmatprep.subr.bf16.mxu0 0
        %7070 = vmatpush1.bf16.msra.mxu0 0
        %7071 = vmatprep.mubr.bf16.mxu0 0
        %7072 = vmatmul.mubr.bf16.gmra.mrb[0].mxu0 %v7037
        %v7073 = vpop.f32.mrb[0].mxu0
        %v7074 = vadd.f32 0.0, %v7073
        %v7075 = vpop.f32.mrb[0].mxu0
        %v7076 = vpop.f32.mrb[0].mxu0
        %v7077 = vpop.f32.mrb[0].mxu0
        %7078 = vdwg.mxu0
        %v7079 = vpack.c.bf16 %v7074, %v7074
        %s7080 = scalar_lea.vmem %s55, 4
        %v7081 = vld [vmem:[%s7080] sm:$0x3]
        %v7083 = vsel %vm6985, %v7081, 0
        %7085 = vmatprep.subr.bf16.mxu0 0
        %7086 = vmatpush1.bf16.msra.mxu0 %v6991
        %7087 = vmatprep.subr.bf16.mxu0 0
        %7088 = vmatpush1.bf16.msra.mxu0 0
        %7089 = vmatprep.subr.bf16.mxu0 0
        %7090 = vmatpush1.bf16.msra.mxu0 0
        %7091 = vmatprep.subr.bf16.mxu0 0
        %7092 = vmatpush1.bf16.msra.mxu0 0
        %7093 = vmatprep.subr.bf16.mxu0 0
        %7094 = vmatpush1.bf16.msra.mxu0 0
        %7095 = vmatprep.subr.bf16.mxu0 0
        %7096 = vmatpush1.bf16.msra.mxu0 0
        %7097 = vmatprep.subr.bf16.mxu0 0
        %7098 = vmatpush1.bf16.msra.mxu0 0
        %7099 = vmatprep.subr.bf16.mxu0 0
        %7100 = vmatpush1.bf16.msra.mxu0 0
        %7101 = vmatprep.subr.bf16.mxu0 0
        %7102 = vmatpush1.bf16.msra.mxu0 0
        %7103 = vmatprep.subr.bf16.mxu0 0
        %7104 = vmatpush1.bf16.msra.mxu0 0
        %7105 = vmatprep.subr.bf16.mxu0 0
        %7106 = vmatpush1.bf16.msra.mxu0 0
        %7107 = vmatprep.subr.bf16.mxu0 0
        %7108 = vmatpush1.bf16.msra.mxu0 0
        %7109 = vmatprep.subr.bf16.mxu0 0
        %7110 = vmatpush1.bf16.msra.mxu0 0
        %7111 = vmatprep.subr.bf16.mxu0 0
        %7112 = vmatpush1.bf16.msra.mxu0 0
        %7113 = vmatprep.subr.bf16.mxu0 0
        %7114 = vmatpush1.bf16.msra.mxu0 0
        %7115 = vmatprep.subr.bf16.mxu0 0
        %7116 = vmatpush1.bf16.msra.mxu0 0
        %7117 = vmatprep.mubr.bf16.mxu0 0
        %7118 = vmatmul.mubr.bf16.gmra.mrb[0].mxu0 %v7083
        %v7119 = vpop.f32.mrb[0].mxu0
        %v7120 = vadd.f32 0.0, %v7119
        %v7121 = vpop.f32.mrb[0].mxu0
        %v7122 = vpop.f32.mrb[0].mxu0
        %v7123 = vpop.f32.mrb[0].mxu0
        %7124 = vdwg.mxu0
        %v7125 = vpack.c.bf16 %v7120, %v7120
        %s7126 = scalar_lea.vmem %s55, 6
        %v7127 = vld [vmem:[%s7126] sm:$0x3]
        %v7129 = vsel %vm6985, %v7127, 0
        %7131 = vmatprep.subr.bf16.mxu0 0
        %7132 = vmatpush1.bf16.msra.mxu0 %v6991
        %7133 = vmatprep.subr.bf16.mxu0 0
        %7134 = vmatpush1.bf16.msra.mxu0 0
        %7135 = vmatprep.subr.bf16.mxu0 0
        %7136 = vmatpush1.bf16.msra.mxu0 0
        %7137 = vmatprep.subr.bf16.mxu0 0
        %7138 = vmatpush1.bf16.msra.mxu0 0
        %7139 = vmatprep.subr.bf16.mxu0 0
        %7140 = vmatpush1.bf16.msra.mxu0 0
        %7141 = vmatprep.subr.bf16.mxu0 0
        %7142 = vmatpush1.bf16.msra.mxu0 0
        %7143 = vmatprep.subr.bf16.mxu0 0
        %7144 = vmatpush1.bf16.msra.mxu0 0
        %7145 = vmatprep.subr.bf16.mxu0 0
        %7146 = vmatpush1.bf16.msra.mxu0 0
        %7147 = vmatprep.subr.bf16.mxu0 0
        %7148 = vmatpush1.bf16.msra.mxu0 0
        %7149 = vmatprep.subr.bf16.mxu0 0
        %7150 = vmatpush1.bf16.msra.mxu0 0
        %7151 = vmatprep.subr.bf16.mxu0 0
        %7152 = vmatpush1.bf16.msra.mxu0 0
        %7153 = vmatprep.subr.bf16.mxu0 0
        %7154 = vmatpush1.bf16.msra.mxu0 0
        %7155 = vmatprep.subr.bf16.mxu0 0
        %7156 = vmatpush1.bf16.msra.mxu0 0
        %7157 = vmatprep.subr.bf16.mxu0 0
        %7158 = vmatpush1.bf16.msra.mxu0 0
        %7159 = vmatprep.subr.bf16.mxu0 0
        %7160 = vmatpush1.bf16.msra.mxu0 0
        %7161 = vmatprep.subr.bf16.mxu0 0
        %7162 = vmatpush1.bf16.msra.mxu0 0
        %7163 = vmatprep.mubr.bf16.mxu0 0
        %7164 = vmatmul.mubr.bf16.gmra.mrb[0].mxu0 %v7129
        %v7165 = vpop.f32.mrb[0].mxu0
        %v7166 = vadd.f32 0.0, %v7165
        %v7167 = vpop.f32.mrb[0].mxu0
        %v7168 = vpop.f32.mrb[0].mxu0
        %v7169 = vpop.f32.mrb[0].mxu0
        %7170 = vdwg.mxu0
        %v7171 = vpack.c.bf16 %v7166, %v7166
        %s7172 = scalar_lea.vmem %s55, 8
        %v7173 = vld [vmem:[%s7172] sm:$0x3]
        %v7175 = vsel %vm6985, %v7173, 0
        %7177 = vmatprep.subr.bf16.mxu0 0
        %7178 = vmatpush1.bf16.msra.mxu0 %v6991
        %7179 = vmatprep.subr.bf16.mxu0 0
        %7180 = vmatpush1.bf16.msra.mxu0 0
        %7181 = vmatprep.subr.bf16.mxu0 0
        %7182 = vmatpush1.bf16.msra.mxu0 0
        %7183 = vmatprep.subr.bf16.mxu0 0
        %7184 = vmatpush1.bf16.msra.mxu0 0
        %7185 = vmatprep.subr.bf16.mxu0 0
        %7186 = vmatpush1.bf16.msra.mxu0 0
        %7187 = vmatprep.subr.bf16.mxu0 0
        %7188 = vmatpush1.bf16.msra.mxu0 0
        %7189 = vmatprep.subr.bf16.mxu0 0
        %7190 = vmatpush1.bf16.msra.mxu0 0
        %7191 = vmatprep.subr.bf16.mxu0 0
        %7192 = vmatpush1.bf16.msra.mxu0 0
        %7193 = vmatprep.subr.bf16.mxu0 0
        %7194 = vmatpush1.bf16.msra.mxu0 0
        %7195 = vmatprep.subr.bf16.mxu0 0
        %7196 = vmatpush1.bf16.msra.mxu0 0
        %7197 = vmatprep.subr.bf16.mxu0 0
        %7198 = vmatpush1.bf16.msra.mxu0 0
        %7199 = vmatprep.subr.bf16.mxu0 0
        %7200 = vmatpush1.bf16.msra.mxu0 0
        %7201 = vmatprep.subr.bf16.mxu0 0
        %7202 = vmatpush1.bf16.msra.mxu0 0
        %7203 = vmatprep.subr.bf16.mxu0 0
        %7204 = vmatpush1.bf16.msra.mxu0 0
        %7205 = vmatprep.subr.bf16.mxu0 0
        %7206 = vmatpush1.bf16.msra.mxu0 0
        %7207 = vmatprep.subr.bf16.mxu0 0
        %7208 = vmatpush1.bf16.msra.mxu0 0
        %7209 = vmatprep.mubr.bf16.mxu0 0
        %7210 = vmatmul.mubr.bf16.gmra.mrb[0].mxu0 %v7175
        %v7211 = vpop.f32.mrb[0].mxu0
        %v7212 = vadd.f32 0.0, %v7211
        %v7213 = vpop.f32.mrb[0].mxu0
        %v7214 = vpop.f32.mrb[0].mxu0
        %v7215 = vpop.f32.mrb[0].mxu0
        %7216 = vdwg.mxu0
        %v7217 = vpack.c.bf16 %v7212, %v7212
        %s7218 = scalar_lea.vmem %s55, 10
        %v7219 = vld [vmem:[%s7218] sm:$0x3]
        %v7221 = vsel %vm6985, %v7219, 0
        %7223 = vmatprep.subr.bf16.mxu0 0
        %7224 = vmatpush1.bf16.msra.mxu0 %v6991
        %7225 = vmatprep.subr.bf16.mxu0 0
        %7226 = vmatpush1.bf16.msra.mxu0 0
        %7227 = vmatprep.subr.bf16.mxu0 0
        %7228 = vmatpush1.bf16.msra.mxu0 0
        %7229 = vmatprep.subr.bf16.mxu0 0
        %7230 = vmatpush1.bf16.msra.mxu0 0
        %7231 = vmatprep.subr.bf16.mxu0 0
        %7232 = vmatpush1.bf16.msra.mxu0 0
        %7233 = vmatprep.subr.bf16.mxu0 0
        %7234 = vmatpush1.bf16.msra.mxu0 0
        %7235 = vmatprep.subr.bf16.mxu0 0
        %7236 = vmatpush1.bf16.msra.mxu0 0
        %7237 = vmatprep.subr.bf16.mxu0 0
        %7238 = vmatpush1.bf16.msra.mxu0 0
        %7239 = vmatprep.subr.bf16.mxu0 0
        %7240 = vmatpush1.bf16.msra.mxu0 0
        %7241 = vmatprep.subr.bf16.mxu0 0
        %7242 = vmatpush1.bf16.msra.mxu0 0
        %7243 = vmatprep.subr.bf16.mxu0 0
        %7244 = vmatpush1.bf16.msra.mxu0 0
        %7245 = vmatprep.subr.bf16.mxu0 0
        %7246 = vmatpush1.bf16.msra.mxu0 0
        %7247 = vmatprep.subr.bf16.mxu0 0
        %7248 = vmatpush1.bf16.msra.mxu0 0
        %7249 = vmatprep.subr.bf16.mxu0 0
        %7250 = vmatpush1.bf16.msra.mxu0 0
        %7251 = vmatprep.subr.bf16.mxu0 0
        %7252 = vmatpush1.bf16.msra.mxu0 0
        %7253 = vmatprep.subr.bf16.mxu0 0
        %7254 = vmatpush1.bf16.msra.mxu0 0
        %7255 = vmatprep.mubr.bf16.mxu0 0
        %7256 = vmatmul.mubr.bf16.gmra.mrb[0].mxu0 %v7221
        %v7257 = vpop.f32.mrb[0].mxu0
        %v7258 = vadd.f32 0.0, %v7257
        %v7259 = vpop.f32.mrb[0].mxu0
        %v7260 = vpop.f32.mrb[0].mxu0
        %v7261 = vpop.f32.mrb[0].mxu0
        %7262 = vdwg.mxu0
        %v7263 = vpack.c.bf16 %v7258, %v7258
        %s7264 = scalar_lea.vmem %s55, 12
        %v7265 = vld [vmem:[%s7264] sm:$0x3]
        %v7267 = vsel %vm6985, %v7265, 0
        %7269 = vmatprep.subr.bf16.mxu0 0
        %7270 = vmatpush1.bf16.msra.mxu0 %v6991
        %7271 = vmatprep.subr.bf16.mxu0 0
        %7272 = vmatpush1.bf16.msra.mxu0 0
        %7273 = vmatprep.subr.bf16.mxu0 0
        %7274 = vmatpush1.bf16.msra.mxu0 0
        %7275 = vmatprep.subr.bf16.mxu0 0
        %7276 = vmatpush1.bf16.msra.mxu0 0
        %7277 = vmatprep.subr.bf16.mxu0 0
        %7278 = vmatpush1.bf16.msra.mxu0 0
        %7279 = vmatprep.subr.bf16.mxu0 0
        %7280 = vmatpush1.bf16.msra.mxu0 0
        %7281 = vmatprep.subr.bf16.mxu0 0
        %7282 = vmatpush1.bf16.msra.mxu0 0
        %7283 = vmatprep.subr.bf16.mxu0 0
        %7284 = vmatpush1.bf16.msra.mxu0 0
        %7285 = vmatprep.subr.bf16.mxu0 0
        %7286 = vmatpush1.bf16.msra.mxu0 0
        %7287 = vmatprep.subr.bf16.mxu0 0
        %7288 = vmatpush1.bf16.msra.mxu0 0
        %7289 = vmatprep.subr.bf16.mxu0 0
        %7290 = vmatpush1.bf16.msra.mxu0 0
        %7291 = vmatprep.subr.bf16.mxu0 0
        %7292 = vmatpush1.bf16.msra.mxu0 0
        %7293 = vmatprep.subr.bf16.mxu0 0
        %7294 = vmatpush1.bf16.msra.mxu0 0
        %7295 = vmatprep.subr.bf16.mxu0 0
        %7296 = vmatpush1.bf16.msra.mxu0 0
        %7297 = vmatprep.subr.bf16.mxu0 0
        %7298 = vmatpush1.bf16.msra.mxu0 0
        %7299 = vmatprep.subr.bf16.mxu0 0
        %7300 = vmatpush1.bf16.msra.mxu0 0
        %7301 = vmatprep.mubr.bf16.mxu0 0
        %7302 = vmatmul.mubr.bf16.gmra.mrb[0].mxu0 %v7267
        %v7303 = vpop.f32.mrb[0].mxu0
        %v7304 = vadd.f32 0.0, %v7303
        %v7305 = vpop.f32.mrb[0].mxu0
        %v7306 = vpop.f32.mrb[0].mxu0
        %v7307 = vpop.f32.mrb[0].mxu0
        %7308 = vdwg.mxu0
        %v7309 = vpack.c.bf16 %v7304, %v7304
        %s7310 = scalar_lea.vmem %s55, 14
        %v7311 = vld [vmem:[%s7310] sm:$0x3]
        %v7313 = vsel %vm6985, %v7311, 0
        %7315 = vmatprep.subr.bf16.mxu0 0
        %7316 = vmatpush1.bf16.msra.mxu0 %v6991
        %7317 = vmatprep.subr.bf16.mxu0 0
        %7318 = vmatpush1.bf16.msra.mxu0 0
        %7319 = vmatprep.subr.bf16.mxu0 0
        %7320 = vmatpush1.bf16.msra.mxu0 0
        %7321 = vmatprep.subr.bf16.mxu0 0
        %7322 = vmatpush1.bf16.msra.mxu0 0
        %7323 = vmatprep.subr.bf16.mxu0 0
        %7324 = vmatpush1.bf16.msra.mxu0 0
        %7325 = vmatprep.subr.bf16.mxu0 0
        %7326 = vmatpush1.bf16.msra.mxu0 0
        %7327 = vmatprep.subr.bf16.mxu0 0
        %7328 = vmatpush1.bf16.msra.mxu0 0
        %7329 = vmatprep.subr.bf16.mxu0 0
        %7330 = vmatpush1.bf16.msra.mxu0 0
        %7331 = vmatprep.subr.bf16.mxu0 0
        %7332 = vmatpush1.bf16.msra.mxu0 0
        %7333 = vmatprep.subr.bf16.mxu0 0
        %7334 = vmatpush1.bf16.msra.mxu0 0
        %7335 = vmatprep.subr.bf16.mxu0 0
        %7336 = vmatpush1.bf16.msra.mxu0 0
        %7337 = vmatprep.subr.bf16.mxu0 0
        %7338 = vmatpush1.bf16.msra.mxu0 0
        %7339 = vmatprep.subr.bf16.mxu0 0
        %7340 = vmatpush1.bf16.msra.mxu0 0
        %7341 = vmatprep.subr.bf16.mxu0 0
        %7342 = vmatpush1.bf16.msra.mxu0 0
        %7343 = vmatprep.subr.bf16.mxu0 0
        %7344 = vmatpush1.bf16.msra.mxu0 0
        %7345 = vmatprep.subr.bf16.mxu0 0
        %7346 = vmatpush1.bf16.msra.mxu0 0
        %7347 = vmatprep.mubr.bf16.mxu0 0
        %7348 = vmatmul.mubr.bf16.gmra.mrb[0].mxu0 %v7313
        %v7349 = vpop.f32.mrb[0].mxu0
        %v7350 = vadd.f32 0.0, %v7349
        %v7351 = vpop.f32.mrb[0].mxu0
        %v7352 = vpop.f32.mrb[0].mxu0
        %v7353 = vpop.f32.mrb[0].mxu0
        %7354 = vdwg.mxu0
        %v7355 = vpack.c.bf16 %v7350, %v7350
        %s7356 = scalar_lea.vmem %s55, 16
        %v7357 = vld [vmem:[%s7356] sm:$0x3]
        %v7359 = vsel %vm6985, %v7357, 0
        %7361 = vmatprep.subr.bf16.mxu0 0
        %7362 = vmatpush1.bf16.msra.mxu0 %v6991
        %7363 = vmatprep.subr.bf16.mxu0 0
        %7364 = vmatpush1.bf16.msra.mxu0 0
        %7365 = vmatprep.subr.bf16.mxu0 0
        %7366 = vmatpush1.bf16.msra.mxu0 0
        %7367 = vmatprep.subr.bf16.mxu0 0
        %7368 = vmatpush1.bf16.msra.mxu0 0
        %7369 = vmatprep.subr.bf16.mxu0 0
        %7370 = vmatpush1.bf16.msra.mxu0 0
        %7371 = vmatprep.subr.bf16.mxu0 0
        %7372 = vmatpush1.bf16.msra.mxu0 0
        %7373 = vmatprep.subr.bf16.mxu0 0
        %7374 = vmatpush1.bf16.msra.mxu0 0
        %7375 = vmatprep.subr.bf16.mxu0 0
        %7376 = vmatpush1.bf16.msra.mxu0 0
        %7377 = vmatprep.subr.bf16.mxu0 0
        %7378 = vmatpush1.bf16.msra.mxu0 0
        %7379 = vmatprep.subr.bf16.mxu0 0
        %7380 = vmatpush1.bf16.msra.mxu0 0
        %7381 = vmatprep.subr.bf16.mxu0 0
        %7382 = vmatpush1.bf16.msra.mxu0 0
        %7383 = vmatprep.subr.bf16.mxu0 0
        %7384 = vmatpush1.bf16.msra.mxu0 0
        %7385 = vmatprep.subr.bf16.mxu0 0
        %7386 = vmatpush1.bf16.msra.mxu0 0
        %7387 = vmatprep.subr.bf16.mxu0 0
        %7388 = vmatpush1.bf16.msra.mxu0 0
        %7389 = vmatprep.subr.bf16.mxu0 0
        %7390 = vmatpush1.bf16.msra.mxu0 0
        %7391 = vmatprep.subr.bf16.mxu0 0
        %7392 = vmatpush1.bf16.msra.mxu0 0
        %7393 = vmatprep.mubr.bf16.mxu0 0
        %7394 = vmatmul.mubr.bf16.gmra.mrb[0].mxu0 %v7359
        %v7395 = vpop.f32.mrb[0].mxu0
        %v7396 = vadd.f32 0.0, %v7395
        %v7397 = vpop.f32.mrb[0].mxu0
        %v7398 = vpop.f32.mrb[0].mxu0
        %v7399 = vpop.f32.mrb[0].mxu0
        %7400 = vdwg.mxu0
        %v7401 = vpack.c.bf16 %v7396, %v7396
        %7403 = vrot.lane.b32.xlu0 %v7079, 64
        %v7404 = vpop.permute.xlu0 %7403
        %7406 = vrot.lane.b32.xlu0 %v7171, 64
        %v7407 = vpop.permute.xlu0 %7406
        %7409 = vrot.lane.b32.xlu0 %v7263, 64
        %v7410 = vpop.permute.xlu0 %7409
        %7412 = vrot.lane.b32.xlu0 %v7355, 64
        %v7413 = vpop.permute.xlu0 %7412
        %v7416 = vsel %vm2917, %v7033, %v7404
        %v7420 = vsel %vm2917, %v7125, %v7407
        %v7424 = vsel %vm2917, %v7217, %v7410
        %v7428 = vsel %vm2917, %v7309, %v7413
        %v7430 = vld [vmem:[%s57] sm:$0xf]
        %v7431 = vld [vmem:[%s57 + $0x4] sm:$0xf]
        %v7432 = vld [vmem:[%s57 + $0x8] sm:$0xf]
        %v7433 = vld [vmem:[%s57 + $0xc] sm:$0xf]
        %v7434 = vld [vmem:[%s57 + $0x10] sm:$0xf]
        %v7435 = vld [vmem:[%s57 + $0x14] sm:$0xf]
        %v7436 = vld [vmem:[%s57 + $0x18] sm:$0xf]
        %v7437 = vld [vmem:[%s57 + $0x1c] sm:$0xf]
        %v7438 = vld [vmem:[%s57 + $0x20] sm:$0xf]
        %v7439 = vld [vmem:[%s57 + $0x24] sm:$0xf]
        %v7440 = vld [vmem:[%s57 + $0x28] sm:$0xf]
        %v7441 = vld [vmem:[%s57 + $0x2c] sm:$0xf]
        %v7442 = vld [vmem:[%s57 + $0x30] sm:$0xf]
        %v7443 = vld [vmem:[%s57 + $0x34] sm:$0xf]
        %v7444 = vld [vmem:[%s57 + $0x38] sm:$0xf]
        %v7445 = vld [vmem:[%s57 + $0x3c] sm:$0xf]
        %v7446 = vld [vmem:[%s57 + $0x40] sm:$0xf]
        %v7447 = vld [vmem:[%s57 + $0x44] sm:$0xf]
        %v7448 = vld [vmem:[%s57 + $0x48] sm:$0xf]
        %v7449 = vld [vmem:[%s57 + $0x4c] sm:$0xf]
        %v7450 = vld [vmem:[%s57 + $0x50] sm:$0xf]
        %v7451 = vld [vmem:[%s57 + $0x54] sm:$0xf]
        %v7452 = vld [vmem:[%s57 + $0x58] sm:$0xf]
        %v7453 = vld [vmem:[%s57 + $0x5c] sm:$0xf]
        %v7454 = vld [vmem:[%s57 + $0x60] sm:$0xf]
        %v7455 = vld [vmem:[%s57 + $0x64] sm:$0xf]
        %v7456 = vld [vmem:[%s57 + $0x68] sm:$0xf]
        %v7457 = vld [vmem:[%s57 + $0x6c] sm:$0xf]
        %v7458 = vld [vmem:[%s57 + $0x70] sm:$0xf]
        %v7459 = vld [vmem:[%s57 + $0x74] sm:$0xf]
        %v7460 = vld [vmem:[%s57 + $0x78] sm:$0xf]
        %v7461 = vld [vmem:[%s57 + $0x7c] sm:$0xf]
        %v7462 = vld [vmem:[%s57 + $0x80] sm:$0xf]
        %v7463 = vld [vmem:[%s57 + $0x84] sm:$0xf]
        %v7464 = vld [vmem:[%s57 + $0x88] sm:$0xf]
        %v7465 = vld [vmem:[%s57 + $0x8c] sm:$0xf]
        %v7466 = vld [vmem:[%s57 + $0x90] sm:$0xf]
        %v7467 = vld [vmem:[%s57 + $0x94] sm:$0xf]
        %v7468 = vld [vmem:[%s57 + $0x98] sm:$0xf]
        %v7469 = vld [vmem:[%s57 + $0x9c] sm:$0xf]
        %v7470 = vld [vmem:[%s57 + $0xa0] sm:$0xf]
        %v7471 = vld [vmem:[%s57 + $0xa4] sm:$0xf]
        %v7472 = vld [vmem:[%s57 + $0xa8] sm:$0xf]
        %v7473 = vld [vmem:[%s57 + $0xac] sm:$0xf]
        %v7474 = vld [vmem:[%s57 + $0xb0] sm:$0xf]
        %v7475 = vld [vmem:[%s57 + $0xb4] sm:$0xf]
        %v7476 = vld [vmem:[%s57 + $0xb8] sm:$0xf]
        %v7477 = vld [vmem:[%s57 + $0xbc] sm:$0xf]
        %v7478 = vld [vmem:[%s57 + $0xc0] sm:$0xf]
        %v7479 = vld [vmem:[%s57 + $0xc4] sm:$0xf]
        %v7480 = vld [vmem:[%s57 + $0xc8] sm:$0xf]
        %v7481 = vld [vmem:[%s57 + $0xcc] sm:$0xf]
        %v7482 = vld [vmem:[%s57 + $0xd0] sm:$0xf]
        %v7483 = vld [vmem:[%s57 + $0xd4] sm:$0xf]
        %v7484 = vld [vmem:[%s57 + $0xd8] sm:$0xf]
        %v7485 = vld [vmem:[%s57 + $0xdc] sm:$0xf]
        %v7486 = vld [vmem:[%s57 + $0xe0] sm:$0xf]
        %v7487 = vld [vmem:[%s57 + $0xe4] sm:$0xf]
        %v7488 = vld [vmem:[%s57 + $0xe8] sm:$0xf]
        %v7489 = vld [vmem:[%s57 + $0xec] sm:$0xf]
        %v7490 = vld [vmem:[%s57 + $0xf0] sm:$0xf]
        %v7491 = vld [vmem:[%s57 + $0xf4] sm:$0xf]
        %v7492 = vld [vmem:[%s57 + $0xf8] sm:$0xf]
        %v7493 = vld [vmem:[%s57 + $0xfc] sm:$0xf]
        %v7494 = vld [vmem:[%s57 + $0x100] sm:$0xf]
        %v7495 = vld [vmem:[%s57 + $0x104] sm:$0xf]
        %v7496 = vld [vmem:[%s57 + $0x108] sm:$0xf]
        %v7497 = vld [vmem:[%s57 + $0x10c] sm:$0xf]
        %v7498 = vld [vmem:[%s57 + $0x110] sm:$0xf]
        %v7499 = vld [vmem:[%s57 + $0x114] sm:$0xf]
        %v7500 = vld [vmem:[%s57 + $0x118] sm:$0xf]
        %v7501 = vld [vmem:[%s57 + $0x11c] sm:$0xf]
        %v7502 = vld [vmem:[%s59] sm:$0x1]
        %v7504 = vlaneseq
        %v7505 = vshrl.u32 %v7504, 7
        %v7506 = vsub.s32 0, %v7505
        %v7507 = vrot.slane %v7502, %v7506
        %v7581 = vunpack.c.l.b16 %v7430
        %v7582 = vunpack.c.l.b16 %v7431
        %v7583 = vunpack.c.l.b16 %v7432
        %v7584 = vunpack.c.l.b16 %v7433
        %v7585 = vunpack.c.l.b16 %v7434
        %v7586 = vunpack.c.l.b16 %v7435
        %v7587 = vunpack.c.l.b16 %v7436
        %v7588 = vunpack.c.l.b16 %v7437
        %v7589 = vunpack.c.l.b16 %v7438
        %v7590 = vunpack.c.l.b16 %v7439
        %v7591 = vunpack.c.l.b16 %v7440
        %v7592 = vunpack.c.l.b16 %v7441
        %v7593 = vunpack.c.l.b16 %v7442
        %v7594 = vunpack.c.l.b16 %v7443
        %v7595 = vunpack.c.l.b16 %v7444
        %v7596 = vunpack.c.l.b16 %v7445
        %v7597 = vunpack.c.l.b16 %v7446
        %v7598 = vunpack.c.l.b16 %v7447
        %v7599 = vunpack.c.l.b16 %v7448
        %v7600 = vunpack.c.l.b16 %v7449
        %v7601 = vunpack.c.l.b16 %v7450
        %v7602 = vunpack.c.l.b16 %v7451
        %v7603 = vunpack.c.l.b16 %v7452
        %v7604 = vunpack.c.l.b16 %v7453
        %v7605 = vunpack.c.l.b16 %v7454
        %v7606 = vunpack.c.l.b16 %v7455
        %v7607 = vunpack.c.l.b16 %v7456
        %v7608 = vunpack.c.l.b16 %v7457
        %v7609 = vunpack.c.l.b16 %v7458
        %v7610 = vunpack.c.l.b16 %v7459
        %v7611 = vunpack.c.l.b16 %v7460
        %v7612 = vunpack.c.l.b16 %v7461
        %v7613 = vunpack.c.l.b16 %v7462
        %v7614 = vunpack.c.l.b16 %v7463
        %v7615 = vunpack.c.l.b16 %v7464
        %v7616 = vunpack.c.l.b16 %v7465
        %v7617 = vunpack.c.l.b16 %v7466
        %v7618 = vunpack.c.l.b16 %v7467
        %v7619 = vunpack.c.l.b16 %v7468
        %v7620 = vunpack.c.l.b16 %v7469
        %v7621 = vunpack.c.l.b16 %v7470
        %v7622 = vunpack.c.l.b16 %v7471
        %v7623 = vunpack.c.l.b16 %v7472
        %v7624 = vunpack.c.l.b16 %v7473
        %v7625 = vunpack.c.l.b16 %v7474
        %v7626 = vunpack.c.l.b16 %v7475
        %v7627 = vunpack.c.l.b16 %v7476
        %v7628 = vunpack.c.l.b16 %v7477
        %v7629 = vunpack.c.l.b16 %v7478
        %v7630 = vunpack.c.l.b16 %v7479
        %v7631 = vunpack.c.l.b16 %v7480
        %v7632 = vunpack.c.l.b16 %v7481
        %v7633 = vunpack.c.l.b16 %v7482
        %v7634 = vunpack.c.l.b16 %v7483
        %v7635 = vunpack.c.l.b16 %v7484
        %v7636 = vunpack.c.l.b16 %v7485
        %v7637 = vunpack.c.l.b16 %v7486
        %v7638 = vunpack.c.l.b16 %v7487
        %v7639 = vunpack.c.l.b16 %v7488
        %v7640 = vunpack.c.l.b16 %v7489
        %v7641 = vunpack.c.l.b16 %v7490
        %v7642 = vunpack.c.l.b16 %v7491
        %v7643 = vunpack.c.l.b16 %v7492
        %v7644 = vunpack.c.l.b16 %v7493
        %v7645 = vunpack.c.l.b16 %v7494
        %v7646 = vunpack.c.l.b16 %v7495
        %v7647 = vunpack.c.l.b16 %v7496
        %v7648 = vunpack.c.l.b16 %v7497
        %v7649 = vunpack.c.l.b16 %v7498
        %v7650 = vunpack.c.l.b16 %v7499
        %v7651 = vunpack.c.l.b16 %v7500
        %v7652 = vunpack.c.l.b16 %v7501
        %v7653 = vpack.c.b16 %v7582, %v7581
        %v7654 = vpack.c.b16 %v7584, %v7583
        %v7655 = vpack.c.b16 %v7586, %v7585
        %v7656 = vpack.c.b16 %v7588, %v7587
        %v7657 = vpack.c.b16 %v7590, %v7589
        %v7658 = vpack.c.b16 %v7592, %v7591
        %v7659 = vpack.c.b16 %v7594, %v7593
        %v7660 = vpack.c.b16 %v7596, %v7595
        %v7661 = vpack.c.b16 %v7598, %v7597
        %v7662 = vpack.c.b16 %v7600, %v7599
        %v7663 = vpack.c.b16 %v7602, %v7601
        %v7664 = vpack.c.b16 %v7604, %v7603
        %v7665 = vpack.c.b16 %v7606, %v7605
        %v7666 = vpack.c.b16 %v7608, %v7607
        %v7667 = vpack.c.b16 %v7610, %v7609
        %v7668 = vpack.c.b16 %v7612, %v7611
        %v7669 = vpack.c.b16 %v7614, %v7613
        %v7670 = vpack.c.b16 %v7616, %v7615
        %v7671 = vpack.c.b16 %v7618, %v7617
        %v7672 = vpack.c.b16 %v7620, %v7619
        %v7673 = vpack.c.b16 %v7622, %v7621
        %v7674 = vpack.c.b16 %v7624, %v7623
        %v7675 = vpack.c.b16 %v7626, %v7625
        %v7676 = vpack.c.b16 %v7628, %v7627
        %v7677 = vpack.c.b16 %v7630, %v7629
        %v7678 = vpack.c.b16 %v7632, %v7631
        %v7679 = vpack.c.b16 %v7634, %v7633
        %v7680 = vpack.c.b16 %v7636, %v7635
        %v7681 = vpack.c.b16 %v7638, %v7637
        %v7682 = vpack.c.b16 %v7640, %v7639
        %v7683 = vpack.c.b16 %v7642, %v7641
        %v7684 = vpack.c.b16 %v7644, %v7643
        %v7685 = vpack.c.b16 %v7646, %v7645
        %v7686 = vpack.c.b16 %v7648, %v7647
        %v7687 = vpack.c.b16 %v7650, %v7649
        %v7688 = vpack.c.b16 %v7652, %v7651
        %v7726 = vsel %vm2917, %v7401, 0
        %7728 = vmatprep.subr.bf16.mxu0 0
        %7729 = vmatpush1.bf16.msra.mxu0 %v7653
        %7730 = vmatprep.subr.bf16.mxu0 0
        %7731 = vmatpush1.bf16.msra.mxu0 %v7654
        %7732 = vmatprep.subr.bf16.mxu0 0
        %7733 = vmatpush1.bf16.msra.mxu0 %v7655
        %7734 = vmatprep.subr.bf16.mxu0 0
        %7735 = vmatpush1.bf16.msra.mxu0 %v7656
        %7736 = vmatprep.subr.bf16.mxu0 0
        %7737 = vmatpush1.bf16.msra.mxu0 %v7657
        %7738 = vmatprep.subr.bf16.mxu0 0
        %7739 = vmatpush1.bf16.msra.mxu0 %v7658
        %7740 = vmatprep.subr.bf16.mxu0 0
        %7741 = vmatpush1.bf16.msra.mxu0 %v7659
        %7742 = vmatprep.subr.bf16.mxu0 0
        %7743 = vmatpush1.bf16.msra.mxu0 %v7660
        %7744 = vmatprep.subr.bf16.mxu0 0
        %7745 = vmatpush1.bf16.msra.mxu0 %v7661
        %7746 = vmatprep.subr.bf16.mxu0 0
        %7747 = vmatpush1.bf16.msra.mxu0 %v7662
        %7748 = vmatprep.subr.bf16.mxu0 0
        %7749 = vmatpush1.bf16.msra.mxu0 %v7663
        %7750 = vmatprep.subr.bf16.mxu0 0
        %7751 = vmatpush1.bf16.msra.mxu0 %v7664
        %7752 = vmatprep.subr.bf16.mxu0 0
        %7753 = vmatpush1.bf16.msra.mxu0 %v7665
        %7754 = vmatprep.subr.bf16.mxu0 0
        %7755 = vmatpush1.bf16.msra.mxu0 %v7666
        %7756 = vmatprep.subr.bf16.mxu0 0
        %7757 = vmatpush1.bf16.msra.mxu0 %v7667
        %7758 = vmatprep.subr.bf16.mxu0 0
        %7759 = vmatpush1.bf16.msra.mxu0 %v7668
        %7760 = vmatprep.mubr.bf16.mxu0 %v7420
        %7761 = vmatmul.mubr.bf16.gmra.mrb[0].mxu0 %v7416
        %v7762 = vpop.f32.mrb[0].mxu0
        %v7763 = vadd.f32 %v7507, %v7762
        %v7764 = vpop.f32.mrb[0].mxu0
        %v7765 = vpop.f32.mrb[0].mxu0
        %v7766 = vpop.f32.mrb[0].mxu0
        %7767 = vdwg.mxu0
        %7768 = vmatprep.subr.bf16.mxu0 0
        %7769 = vmatpush1.bf16.msra.mxu0 %v7669
        %7770 = vmatprep.subr.bf16.mxu0 0
        %7771 = vmatpush1.bf16.msra.mxu0 %v7670
        %7772 = vmatprep.subr.bf16.mxu0 0
        %7773 = vmatpush1.bf16.msra.mxu0 %v7671
        %7774 = vmatprep.subr.bf16.mxu0 0
        %7775 = vmatpush1.bf16.msra.mxu0 %v7672
        %7776 = vmatprep.subr.bf16.mxu0 0
        %7777 = vmatpush1.bf16.msra.mxu0 %v7673
        %7778 = vmatprep.subr.bf16.mxu0 0
        %7779 = vmatpush1.bf16.msra.mxu0 %v7674
        %7780 = vmatprep.subr.bf16.mxu0 0
        %7781 = vmatpush1.bf16.msra.mxu0 %v7675
        %7782 = vmatprep.subr.bf16.mxu0 0
        %7783 = vmatpush1.bf16.msra.mxu0 %v7676
        %7784 = vmatprep.subr.bf16.mxu0 0
        %7785 = vmatpush1.bf16.msra.mxu0 %v7677
        %7786 = vmatprep.subr.bf16.mxu0 0
        %7787 = vmatpush1.bf16.msra.mxu0 %v7678
        %7788 = vmatprep.subr.bf16.mxu0 0
        %7789 = vmatpush1.bf16.msra.mxu0 %v7679
        %7790 = vmatprep.subr.bf16.mxu0 0
        %7791 = vmatpush1.bf16.msra.mxu0 %v7680
        %7792 = vmatprep.subr.bf16.mxu0 0
        %7793 = vmatpush1.bf16.msra.mxu0 %v7681
        %7794 = vmatprep.subr.bf16.mxu0 0
        %7795 = vmatpush1.bf16.msra.mxu0 %v7682
        %7796 = vmatprep.subr.bf16.mxu0 0
        %7797 = vmatpush1.bf16.msra.mxu0 %v7683
        %7798 = vmatprep.subr.bf16.mxu0 0
        %7799 = vmatpush1.bf16.msra.mxu0 %v7684
        %7800 = vmatprep.mubr.bf16.mxu0 %v7428
        %7801 = vmatmul.mubr.bf16.gmra.mrb[0].mxu0 %v7424
        %v7802 = vpop.f32.mrb[0].mxu0
        %v7803 = vadd.f32 %v7763, %v7802
        %v7804 = vpop.f32.mrb[0].mxu0
        %v7805 = vpop.f32.mrb[0].mxu0
        %v7806 = vpop.f32.mrb[0].mxu0
        %7807 = vdwg.mxu0
        %7808 = vmatprep.subr.bf16.mxu0 0
        %7809 = vmatpush1.bf16.msra.mxu0 %v7685
        %7810 = vmatprep.subr.bf16.mxu0 0
        %7811 = vmatpush1.bf16.msra.mxu0 %v7686
        %7812 = vmatprep.subr.bf16.mxu0 0
        %7813 = vmatpush1.bf16.msra.mxu0 %v7687
        %7814 = vmatprep.subr.bf16.mxu0 0
        %7815 = vmatpush1.bf16.msra.mxu0 %v7688
        %7816 = vmatprep.subr.bf16.mxu0 0
        %7817 = vmatpush1.bf16.msra.mxu0 0
        %7818 = vmatprep.subr.bf16.mxu0 0
        %7819 = vmatpush1.bf16.msra.mxu0 0
        %7820 = vmatprep.subr.bf16.mxu0 0
        %7821 = vmatpush1.bf16.msra.mxu0 0
        %7822 = vmatprep.subr.bf16.mxu0 0
        %7823 = vmatpush1.bf16.msra.mxu0 0
        %7824 = vmatprep.subr.bf16.mxu0 0
        %7825 = vmatpush1.bf16.msra.mxu0 0
        %7826 = vmatprep.subr.bf16.mxu0 0
        %7827 = vmatpush1.bf16.msra.mxu0 0
        %7828 = vmatprep.subr.bf16.mxu0 0
        %7829 = vmatpush1.bf16.msra.mxu0 0
        %7830 = vmatprep.subr.bf16.mxu0 0
        %7831 = vmatpush1.bf16.msra.mxu0 0
        %7832 = vmatprep.subr.bf16.mxu0 0
        %7833 = vmatpush1.bf16.msra.mxu0 0
        %7834 = vmatprep.subr.bf16.mxu0 0
        %7835 = vmatpush1.bf16.msra.mxu0 0
        %7836 = vmatprep.subr.bf16.mxu0 0
        %7837 = vmatpush1.bf16.msra.mxu0 0
        %7838 = vmatprep.subr.bf16.mxu0 0
        %7839 = vmatpush1.bf16.msra.mxu0 0
        %7840 = vmatprep.mubr.bf16.mxu0 0
        %7841 = vmatmul.mubr.bf16.gmra.mrb[0].mxu0 %v7726
        %v7842 = vpop.f32.mrb[0].mxu0
        %v7843 = vadd.f32 %v7803, %v7842
        %v7844 = vpop.f32.mrb[0].mxu0
        %v7845 = vpop.f32.mrb[0].mxu0
        %v7846 = vpop.f32.mrb[0].mxu0
        %7847 = vdwg.mxu0
        %v7848 = vadd.f32 %v7843, %v6979
        %vm7849 = vcmp.ge.f32.partialorder %v7848, 0.0
        %v7850 = vmul.f32 %v7848, 0.01
        %v7851 = vsel %vm7849, %v7848, %v7850
        %v7852 = vpack.c.bf16 %v7851, %v7851
        %v7853 = vld [vmem:[%s61] sm:$0x1]
        %v7855 = vsel %vm6985, %v7853, 0
        %v7858 = vsel %vm6989, %v7852, 0
        %7860 = vmatprep.subr.bf16.mxu0 0
        %7861 = vmatpush1.bf16.msra.mxu0 %v7858
        %7862 = vmatprep.subr.bf16.mxu0 0
        %7863 = vmatpush1.bf16.msra.mxu0 0
        %7864 = vmatprep.subr.bf16.mxu0 0
        %7865 = vmatpush1.bf16.msra.mxu0 0
        %7866 = vmatprep.subr.bf16.mxu0 0
        %7867 = vmatpush1.bf16.msra.mxu0 0
        %7868 = vmatprep.subr.bf16.mxu0 0
        %7869 = vmatpush1.bf16.msra.mxu0 0
        %7870 = vmatprep.subr.bf16.mxu0 0
        %7871 = vmatpush1.bf16.msra.mxu0 0
        %7872 = vmatprep.subr.bf16.mxu0 0
        %7873 = vmatpush1.bf16.msra.mxu0 0
        %7874 = vmatprep.subr.bf16.mxu0 0
        %7875 = vmatpush1.bf16.msra.mxu0 0
        %7876 = vmatprep.subr.bf16.mxu0 0
        %7877 = vmatpush1.bf16.msra.mxu0 0
        %7878 = vmatprep.subr.bf16.mxu0 0
        %7879 = vmatpush1.bf16.msra.mxu0 0
        %7880 = vmatprep.subr.bf16.mxu0 0
        %7881 = vmatpush1.bf16.msra.mxu0 0
        %7882 = vmatprep.subr.bf16.mxu0 0
        %7883 = vmatpush1.bf16.msra.mxu0 0
        %7884 = vmatprep.subr.bf16.mxu0 0
        %7885 = vmatpush1.bf16.msra.mxu0 0
        %7886 = vmatprep.subr.bf16.mxu0 0
        %7887 = vmatpush1.bf16.msra.mxu0 0
        %7888 = vmatprep.subr.bf16.mxu0 0
        %7889 = vmatpush1.bf16.msra.mxu0 0
        %7890 = vmatprep.subr.bf16.mxu0 0
        %7891 = vmatpush1.bf16.msra.mxu0 0
        %7892 = vmatprep.mubr.bf16.mxu0 0
        %7893 = vmatmul.mubr.bf16.gmra.mrb[0].mxu0 %v7855
        %v7894 = vpop.f32.mrb[0].mxu0
        %v7895 = vadd.f32 0.0, %v7894
        %v7896 = vpop.f32.mrb[0].mxu0
        %v7897 = vpop.f32.mrb[0].mxu0
        %v7898 = vpop.f32.mrb[0].mxu0
        %7899 = vdwg.mxu0
        %v7900 = vpack.c.bf16 %v7895, %v7895
        %s7901 = scalar_lea.vmem %s61, 1
        %v7902 = vld [vmem:[%s7901] sm:$0x1]
        %v7904 = vsel %vm6985, %v7902, 0
        %7906 = vmatprep.subr.bf16.mxu0 0
        %7907 = vmatpush1.bf16.msra.mxu0 %v7858
        %7908 = vmatprep.subr.bf16.mxu0 0
        %7909 = vmatpush1.bf16.msra.mxu0 0
        %7910 = vmatprep.subr.bf16.mxu0 0
        %7911 = vmatpush1.bf16.msra.mxu0 0
        %7912 = vmatprep.subr.bf16.mxu0 0
        %7913 = vmatpush1.bf16.msra.mxu0 0
        %7914 = vmatprep.subr.bf16.mxu0 0
        %7915 = vmatpush1.bf16.msra.mxu0 0
        %7916 = vmatprep.subr.bf16.mxu0 0
        %7917 = vmatpush1.bf16.msra.mxu0 0
        %7918 = vmatprep.subr.bf16.mxu0 0
        %7919 = vmatpush1.bf16.msra.mxu0 0
        %7920 = vmatprep.subr.bf16.mxu0 0
        %7921 = vmatpush1.bf16.msra.mxu0 0
        %7922 = vmatprep.subr.bf16.mxu0 0
        %7923 = vmatpush1.bf16.msra.mxu0 0
        %7924 = vmatprep.subr.bf16.mxu0 0
        %7925 = vmatpush1.bf16.msra.mxu0 0
        %7926 = vmatprep.subr.bf16.mxu0 0
        %7927 = vmatpush1.bf16.msra.mxu0 0
        %7928 = vmatprep.subr.bf16.mxu0 0
        %7929 = vmatpush1.bf16.msra.mxu0 0
        %7930 = vmatprep.subr.bf16.mxu0 0
        %7931 = vmatpush1.bf16.msra.mxu0 0
        %7932 = vmatprep.subr.bf16.mxu0 0
        %7933 = vmatpush1.bf16.msra.mxu0 0
        %7934 = vmatprep.subr.bf16.mxu0 0
        %7935 = vmatpush1.bf16.msra.mxu0 0
        %7936 = vmatprep.subr.bf16.mxu0 0
        %7937 = vmatpush1.bf16.msra.mxu0 0
        %7938 = vmatprep.mubr.bf16.mxu0 0
        %7939 = vmatmul.mubr.bf16.gmra.mrb[0].mxu0 %v7904
        %v7940 = vpop.f32.mrb[0].mxu0
        %v7941 = vadd.f32 0.0, %v7940
        %v7942 = vpop.f32.mrb[0].mxu0
        %v7943 = vpop.f32.mrb[0].mxu0
        %v7944 = vpop.f32.mrb[0].mxu0
        %7945 = vdwg.mxu0
        %v7946 = vpack.c.bf16 %v7941, %v7941
        %s7947 = scalar_lea.vmem %s61, 2
        %v7948 = vld [vmem:[%s7947] sm:$0x1]
        %v7950 = vsel %vm6985, %v7948, 0
        %7952 = vmatprep.subr.bf16.mxu0 0
        %7953 = vmatpush1.bf16.msra.mxu0 %v7858
        %7954 = vmatprep.subr.bf16.mxu0 0
        %7955 = vmatpush1.bf16.msra.mxu0 0
        %7956 = vmatprep.subr.bf16.mxu0 0
        %7957 = vmatpush1.bf16.msra.mxu0 0
        %7958 = vmatprep.subr.bf16.mxu0 0
        %7959 = vmatpush1.bf16.msra.mxu0 0
        %7960 = vmatprep.subr.bf16.mxu0 0
        %7961 = vmatpush1.bf16.msra.mxu0 0
        %7962 = vmatprep.subr.bf16.mxu0 0
        %7963 = vmatpush1.bf16.msra.mxu0 0
        %7964 = vmatprep.subr.bf16.mxu0 0
        %7965 = vmatpush1.bf16.msra.mxu0 0
        %7966 = vmatprep.subr.bf16.mxu0 0
        %7967 = vmatpush1.bf16.msra.mxu0 0
        %7968 = vmatprep.subr.bf16.mxu0 0
        %7969 = vmatpush1.bf16.msra.mxu0 0
        %7970 = vmatprep.subr.bf16.mxu0 0
        %7971 = vmatpush1.bf16.msra.mxu0 0
        %7972 = vmatprep.subr.bf16.mxu0 0
        %7973 = vmatpush1.bf16.msra.mxu0 0
        %7974 = vmatprep.subr.bf16.mxu0 0
        %7975 = vmatpush1.bf16.msra.mxu0 0
        %7976 = vmatprep.subr.bf16.mxu0 0
        %7977 = vmatpush1.bf16.msra.mxu0 0
        %7978 = vmatprep.subr.bf16.mxu0 0
        %7979 = vmatpush1.bf16.msra.mxu0 0
        %7980 = vmatprep.subr.bf16.mxu0 0
        %7981 = vmatpush1.bf16.msra.mxu0 0
        %7982 = vmatprep.subr.bf16.mxu0 0
        %7983 = vmatpush1.bf16.msra.mxu0 0
        %7984 = vmatprep.mubr.bf16.mxu0 0
        %7985 = vmatmul.mubr.bf16.gmra.mrb[0].mxu0 %v7950
        %v7986 = vpop.f32.mrb[0].mxu0
        %v7987 = vadd.f32 0.0, %v7986
        %v7988 = vpop.f32.mrb[0].mxu0
        %v7989 = vpop.f32.mrb[0].mxu0
        %v7990 = vpop.f32.mrb[0].mxu0
        %7991 = vdwg.mxu0
        %v7992 = vpack.c.bf16 %v7987, %v7987
        %s7993 = scalar_lea.vmem %s61, 3
        %v7994 = vld [vmem:[%s7993] sm:$0x1]
        %v7996 = vsel %vm6985, %v7994, 0
        %7998 = vmatprep.subr.bf16.mxu0 0
        %7999 = vmatpush1.bf16.msra.mxu0 %v7858
        %8000 = vmatprep.subr.bf16.mxu0 0
        %8001 = vmatpush1.bf16.msra.mxu0 0
        %8002 = vmatprep.subr.bf16.mxu0 0
        %8003 = vmatpush1.bf16.msra.mxu0 0
        %8004 = vmatprep.subr.bf16.mxu0 0
        %8005 = vmatpush1.bf16.msra.mxu0 0
        %8006 = vmatprep.subr.bf16.mxu0 0
        %8007 = vmatpush1.bf16.msra.mxu0 0
        %8008 = vmatprep.subr.bf16.mxu0 0
        %8009 = vmatpush1.bf16.msra.mxu0 0
        %8010 = vmatprep.subr.bf16.mxu0 0
        %8011 = vmatpush1.bf16.msra.mxu0 0
        %8012 = vmatprep.subr.bf16.mxu0 0
        %8013 = vmatpush1.bf16.msra.mxu0 0
        %8014 = vmatprep.subr.bf16.mxu0 0
        %8015 = vmatpush1.bf16.msra.mxu0 0
        %8016 = vmatprep.subr.bf16.mxu0 0
        %8017 = vmatpush1.bf16.msra.mxu0 0
        %8018 = vmatprep.subr.bf16.mxu0 0
        %8019 = vmatpush1.bf16.msra.mxu0 0
        %8020 = vmatprep.subr.bf16.mxu0 0
        %8021 = vmatpush1.bf16.msra.mxu0 0
        %8022 = vmatprep.subr.bf16.mxu0 0
        %8023 = vmatpush1.bf16.msra.mxu0 0
        %8024 = vmatprep.subr.bf16.mxu0 0
        %8025 = vmatpush1.bf16.msra.mxu0 0
        %8026 = vmatprep.subr.bf16.mxu0 0
        %8027 = vmatpush1.bf16.msra.mxu0 0
        %8028 = vmatprep.subr.bf16.mxu0 0
        %8029 = vmatpush1.bf16.msra.mxu0 0
        %8030 = vmatprep.mubr.bf16.mxu0 0
        %8031 = vmatmul.mubr.bf16.gmra.mrb[0].mxu0 %v7996
        %v8032 = vpop.f32.mrb[0].mxu0
        %v8033 = vadd.f32 0.0, %v8032
        %v8034 = vpop.f32.mrb[0].mxu0
        %v8035 = vpop.f32.mrb[0].mxu0
        %v8036 = vpop.f32.mrb[0].mxu0
        %8037 = vdwg.mxu0
        %v8038 = vpack.c.bf16 %v8033, %v8033
        %8040 = vrot.lane.b32.xlu0 %v7946, 64
        %v8041 = vpop.permute.xlu0 %8040
        %8043 = vrot.lane.b32.xlu0 %v8038, 64
        %v8044 = vpop.permute.xlu0 %8043
        %v8047 = vsel %vm2917, %v7900, %v8041
        %v8051 = vsel %vm2917, %v7992, %v8044
        %v8053 = vld [vmem:[%s63] sm:$0xf]
        %v8054 = vld [vmem:[%s63 + $0x4] sm:$0xf]
        %v8055 = vld [vmem:[%s63 + $0x8] sm:$0xf]
        %v8056 = vld [vmem:[%s63 + $0xc] sm:$0xf]
        %v8057 = vld [vmem:[%s63 + $0x10] sm:$0xf]
        %v8058 = vld [vmem:[%s63 + $0x14] sm:$0xf]
        %v8059 = vld [vmem:[%s63 + $0x18] sm:$0xf]
        %v8060 = vld [vmem:[%s63 + $0x1c] sm:$0xf]
        %v8061 = vld [vmem:[%s63 + $0x20] sm:$0xf]
        %v8062 = vld [vmem:[%s63 + $0x24] sm:$0xf]
        %v8063 = vld [vmem:[%s63 + $0x28] sm:$0xf]
        %v8064 = vld [vmem:[%s63 + $0x2c] sm:$0xf]
        %v8065 = vld [vmem:[%s63 + $0x30] sm:$0xf]
        %v8066 = vld [vmem:[%s63 + $0x34] sm:$0xf]
        %v8067 = vld [vmem:[%s63 + $0x38] sm:$0xf]
        %v8068 = vld [vmem:[%s63 + $0x3c] sm:$0xf]
        %v8069 = vld [vmem:[%s63 + $0x40] sm:$0xf]
        %v8070 = vld [vmem:[%s63 + $0x44] sm:$0xf]
        %v8071 = vld [vmem:[%s63 + $0x48] sm:$0xf]
        %v8072 = vld [vmem:[%s63 + $0x4c] sm:$0xf]
        %v8073 = vld [vmem:[%s63 + $0x50] sm:$0xf]
        %v8074 = vld [vmem:[%s63 + $0x54] sm:$0xf]
        %v8075 = vld [vmem:[%s63 + $0x58] sm:$0xf]
        %v8076 = vld [vmem:[%s63 + $0x5c] sm:$0xf]
        %v8077 = vld [vmem:[%s63 + $0x60] sm:$0xf]
        %v8078 = vld [vmem:[%s63 + $0x64] sm:$0xf]
        %v8079 = vld [vmem:[%s63 + $0x68] sm:$0xf]
        %v8080 = vld [vmem:[%s63 + $0x6c] sm:$0xf]
        %v8081 = vld [vmem:[%s63 + $0x70] sm:$0xf]
        %v8082 = vld [vmem:[%s63 + $0x74] sm:$0xf]
        %v8083 = vld [vmem:[%s63 + $0x78] sm:$0xf]
        %v8084 = vld [vmem:[%s63 + $0x7c] sm:$0xf]
        %v8085 = vld [vmem:[%s65] sm:$0x1]
        %v8118 = vunpack.c.l.b16 %v8053
        %v8119 = vunpack.c.l.b16 %v8054
        %v8120 = vunpack.c.l.b16 %v8055
        %v8121 = vunpack.c.l.b16 %v8056
        %v8122 = vunpack.c.l.b16 %v8057
        %v8123 = vunpack.c.l.b16 %v8058
        %v8124 = vunpack.c.l.b16 %v8059
        %v8125 = vunpack.c.l.b16 %v8060
        %v8126 = vunpack.c.l.b16 %v8061
        %v8127 = vunpack.c.l.b16 %v8062
        %v8128 = vunpack.c.l.b16 %v8063
        %v8129 = vunpack.c.l.b16 %v8064
        %v8130 = vunpack.c.l.b16 %v8065
        %v8131 = vunpack.c.l.b16 %v8066
        %v8132 = vunpack.c.l.b16 %v8067
        %v8133 = vunpack.c.l.b16 %v8068
        %v8134 = vunpack.c.l.b16 %v8069
        %v8135 = vunpack.c.l.b16 %v8070
        %v8136 = vunpack.c.l.b16 %v8071
        %v8137 = vunpack.c.l.b16 %v8072
        %v8138 = vunpack.c.l.b16 %v8073
        %v8139 = vunpack.c.l.b16 %v8074
        %v8140 = vunpack.c.l.b16 %v8075
        %v8141 = vunpack.c.l.b16 %v8076
        %v8142 = vunpack.c.l.b16 %v8077
        %v8143 = vunpack.c.l.b16 %v8078
        %v8144 = vunpack.c.l.b16 %v8079
        %v8145 = vunpack.c.l.b16 %v8080
        %v8146 = vunpack.c.l.b16 %v8081
        %v8147 = vunpack.c.l.b16 %v8082
        %v8148 = vunpack.c.l.b16 %v8083
        %v8149 = vunpack.c.l.b16 %v8084
        %v8150 = vpack.c.b16 %v8119, %v8118
        %v8151 = vpack.c.b16 %v8121, %v8120
        %v8152 = vpack.c.b16 %v8123, %v8122
        %v8153 = vpack.c.b16 %v8125, %v8124
        %v8154 = vpack.c.b16 %v8127, %v8126
        %v8155 = vpack.c.b16 %v8129, %v8128
        %v8156 = vpack.c.b16 %v8131, %v8130
        %v8157 = vpack.c.b16 %v8133, %v8132
        %v8158 = vpack.c.b16 %v8135, %v8134
        %v8159 = vpack.c.b16 %v8137, %v8136
        %v8160 = vpack.c.b16 %v8139, %v8138
        %v8161 = vpack.c.b16 %v8141, %v8140
        %v8162 = vpack.c.b16 %v8143, %v8142
        %v8163 = vpack.c.b16 %v8145, %v8144
        %v8164 = vpack.c.b16 %v8147, %v8146
        %v8165 = vpack.c.b16 %v8149, %v8148
        %8182 = vmatprep.subr.bf16.mxu0 0
        %8183 = vmatpush1.bf16.msra.mxu0 %v8150
        %8184 = vmatprep.subr.bf16.mxu0 0
        %8185 = vmatpush1.bf16.msra.mxu0 %v8151
        %8186 = vmatprep.subr.bf16.mxu0 0
        %8187 = vmatpush1.bf16.msra.mxu0 %v8152
        %8188 = vmatprep.subr.bf16.mxu0 0
        %8189 = vmatpush1.bf16.msra.mxu0 %v8153
        %8190 = vmatprep.subr.bf16.mxu0 0
        %8191 = vmatpush1.bf16.msra.mxu0 %v8154
        %8192 = vmatprep.subr.bf16.mxu0 0
        %8193 = vmatpush1.bf16.msra.mxu0 %v8155
        %8194 = vmatprep.subr.bf16.mxu0 0
        %8195 = vmatpush1.bf16.msra.mxu0 %v8156
        %8196 = vmatprep.subr.bf16.mxu0 0
        %8197 = vmatpush1.bf16.msra.mxu0 %v8157
        %8198 = vmatprep.subr.bf16.mxu0 0
        %8199 = vmatpush1.bf16.msra.mxu0 %v8158
        %8200 = vmatprep.subr.bf16.mxu0 0
        %8201 = vmatpush1.bf16.msra.mxu0 %v8159
        %8202 = vmatprep.subr.bf16.mxu0 0
        %8203 = vmatpush1.bf16.msra.mxu0 %v8160
        %8204 = vmatprep.subr.bf16.mxu0 0
        %8205 = vmatpush1.bf16.msra.mxu0 %v8161
        %8206 = vmatprep.subr.bf16.mxu0 0
        %8207 = vmatpush1.bf16.msra.mxu0 %v8162
        %8208 = vmatprep.subr.bf16.mxu0 0
        %8209 = vmatpush1.bf16.msra.mxu0 %v8163
        %8210 = vmatprep.subr.bf16.mxu0 0
        %8211 = vmatpush1.bf16.msra.mxu0 %v8164
        %8212 = vmatprep.subr.bf16.mxu0 0
        %8213 = vmatpush1.bf16.msra.mxu0 %v8165
        %8214 = vmatprep.mubr.bf16.mxu0 %v8051
        %8215 = vmatmul.mubr.bf16.gmra.mrb[0].mxu0 %v8047
        %v8216 = vpop.f32.mrb[0].mxu0
        %v8217 = vadd.f32 %v8085, %v8216
        %v8218 = vpop.f32.mrb[0].mxu0
        %v8219 = vpop.f32.mrb[0].mxu0
        %v8220 = vpop.f32.mrb[0].mxu0
        %8221 = vdwg.mxu0
        %vm8222 = vcmp.ge.f32.partialorder %v8217, 0.0
        %v8223 = vmul.f32 %v8217, 0.01
        %v8224 = vsel %vm8222, %v8217, %v8223
        %v8225 = vpack.c.bf16 %v8224, %v8224
        %v8226 = vld [vmem:[%s67] sm:$0x1]
        %v8228 = vsel %vm6985, %v8226, 0
        %8230 = vmatprep.subr.bf16.mxu0 0
        %8231 = vmatpush1.bf16.msra.mxu0 %v7858
        %8232 = vmatprep.subr.bf16.mxu0 0
        %8233 = vmatpush1.bf16.msra.mxu0 0
        %8234 = vmatprep.subr.bf16.mxu0 0
        %8235 = vmatpush1.bf16.msra.mxu0 0
        %8236 = vmatprep.subr.bf16.mxu0 0
        %8237 = vmatpush1.bf16.msra.mxu0 0
        %8238 = vmatprep.subr.bf16.mxu0 0
        %8239 = vmatpush1.bf16.msra.mxu0 0
        %8240 = vmatprep.subr.bf16.mxu0 0
        %8241 = vmatpush1.bf16.msra.mxu0 0
        %8242 = vmatprep.subr.bf16.mxu0 0
        %8243 = vmatpush1.bf16.msra.mxu0 0
        %8244 = vmatprep.subr.bf16.mxu0 0
        %8245 = vmatpush1.bf16.msra.mxu0 0
        %8246 = vmatprep.subr.bf16.mxu0 0
        %8247 = vmatpush1.bf16.msra.mxu0 0
        %8248 = vmatprep.subr.bf16.mxu0 0
        %8249 = vmatpush1.bf16.msra.mxu0 0
        %8250 = vmatprep.subr.bf16.mxu0 0
        %8251 = vmatpush1.bf16.msra.mxu0 0
        %8252 = vmatprep.subr.bf16.mxu0 0
        %8253 = vmatpush1.bf16.msra.mxu0 0
        %8254 = vmatprep.subr.bf16.mxu0 0
        %8255 = vmatpush1.bf16.msra.mxu0 0
        %8256 = vmatprep.subr.bf16.mxu0 0
        %8257 = vmatpush1.bf16.msra.mxu0 0
        %8258 = vmatprep.subr.bf16.mxu0 0
        %8259 = vmatpush1.bf16.msra.mxu0 0
        %8260 = vmatprep.subr.bf16.mxu0 0
        %8261 = vmatpush1.bf16.msra.mxu0 0
        %8262 = vmatprep.mubr.bf16.mxu0 0
        %8263 = vmatmul.mubr.bf16.gmra.mrb[0].mxu0 %v8228
        %v8264 = vpop.f32.mrb[0].mxu0
        %v8265 = vadd.f32 0.0, %v8264
        %v8266 = vpop.f32.mrb[0].mxu0
        %v8267 = vpop.f32.mrb[0].mxu0
        %v8268 = vpop.f32.mrb[0].mxu0
        %8269 = vdwg.mxu0
        %v8270 = vpack.c.bf16 %v8265, %v8265
        %v8271 = vld [vmem:[%s69] sm:$0xf]
        %v8272 = vld [vmem:[%s69 + $0x4] sm:$0xf]
        %v8273 = vld [vmem:[%s69 + $0x8] sm:$0xf]
        %v8274 = vld [vmem:[%s69 + $0xc] sm:$0xf]
        %v8275 = vld [vmem:[%s69 + $0x10] sm:$0xf]
        %v8276 = vld [vmem:[%s69 + $0x14] sm:$0xf]
        %v8277 = vld [vmem:[%s69 + $0x18] sm:$0xf]
        %v8278 = vld [vmem:[%s69 + $0x1c] sm:$0xf]
        %v8279 = vld [vmem:[%s71] sm:$0x1]
        %v8288 = vunpack.c.l.b16 %v8271
        %v8289 = vunpack.c.l.b16 %v8272
        %v8290 = vunpack.c.l.b16 %v8273
        %v8291 = vunpack.c.l.b16 %v8274
        %v8292 = vunpack.c.l.b16 %v8275
        %v8293 = vunpack.c.l.b16 %v8276
        %v8294 = vunpack.c.l.b16 %v8277
        %v8295 = vunpack.c.l.b16 %v8278
        %v8296 = vpack.c.b16 %v8289, %v8288
        %v8297 = vpack.c.b16 %v8291, %v8290
        %v8298 = vpack.c.b16 %v8293, %v8292
        %v8299 = vpack.c.b16 %v8295, %v8294
        %v8305 = vsel %vm2917, %v8270, 0
        %8307 = vmatprep.subr.bf16.mxu0 0
        %8308 = vmatpush1.bf16.msra.mxu0 %v8296
        %8309 = vmatprep.subr.bf16.mxu0 0
        %8310 = vmatpush1.bf16.msra.mxu0 %v8297
        %8311 = vmatprep.subr.bf16.mxu0 0
        %8312 = vmatpush1.bf16.msra.mxu0 %v8298
        %8313 = vmatprep.subr.bf16.mxu0 0
        %8314 = vmatpush1.bf16.msra.mxu0 %v8299
        %8315 = vmatprep.subr.bf16.mxu0 0
        %8316 = vmatpush1.bf16.msra.mxu0 0
        %8317 = vmatprep.subr.bf16.mxu0 0
        %8318 = vmatpush1.bf16.msra.mxu0 0
        %8319 = vmatprep.subr.bf16.mxu0 0
        %8320 = vmatpush1.bf16.msra.mxu0 0
        %8321 = vmatprep.subr.bf16.mxu0 0
        %8322 = vmatpush1.bf16.msra.mxu0 0
        %8323 = vmatprep.subr.bf16.mxu0 0
        %8324 = vmatpush1.bf16.msra.mxu0 0
        %8325 = vmatprep.subr.bf16.mxu0 0
        %8326 = vmatpush1.bf16.msra.mxu0 0
        %8327 = vmatprep.subr.bf16.mxu0 0
        %8328 = vmatpush1.bf16.msra.mxu0 0
        %8329 = vmatprep.subr.bf16.mxu0 0
        %8330 = vmatpush1.bf16.msra.mxu0 0
        %8331 = vmatprep.subr.bf16.mxu0 0
        %8332 = vmatpush1.bf16.msra.mxu0 0
        %8333 = vmatprep.subr.bf16.mxu0 0
        %8334 = vmatpush1.bf16.msra.mxu0 0
        %8335 = vmatprep.subr.bf16.mxu0 0
        %8336 = vmatpush1.bf16.msra.mxu0 0
        %8337 = vmatprep.subr.bf16.mxu0 0
        %8338 = vmatpush1.bf16.msra.mxu0 0
        %8339 = vmatprep.mubr.bf16.mxu0 0
        %8340 = vmatmul.mubr.bf16.gmra.mrb[0].mxu0 %v8305
        %v8341 = vpop.f32.mrb[0].mxu0
        %v8342 = vadd.f32 %v8279, %v8341
        %v8343 = vpop.f32.mrb[0].mxu0
        %v8344 = vpop.f32.mrb[0].mxu0
        %v8345 = vpop.f32.mrb[0].mxu0
        %8346 = vdwg.mxu0
        %v8347 = vld [vmem:[%s73] sm:$0xf]
        %v8348 = vld [vmem:[%s73 + $0x4] sm:$0xf]
        %v8349 = vld [vmem:[%s73 + $0x8] sm:$0xf]
        %v8350 = vld [vmem:[%s73 + $0xc] sm:$0xf]
        %v8351 = vld [vmem:[%s73 + $0x10] sm:$0xf]
        %v8352 = vld [vmem:[%s73 + $0x14] sm:$0xf]
        %v8353 = vld [vmem:[%s73 + $0x18] sm:$0xf]
        %v8354 = vld [vmem:[%s73 + $0x1c] sm:$0xf]
        %v8355 = vld [vmem:[%s73 + $0x20] sm:$0xf]
        %v8356 = vld [vmem:[%s73 + $0x24] sm:$0xf]
        %v8357 = vld [vmem:[%s73 + $0x28] sm:$0xf]
        %v8358 = vld [vmem:[%s73 + $0x2c] sm:$0xf]
        %v8359 = vld [vmem:[%s73 + $0x30] sm:$0xf]
        %v8360 = vld [vmem:[%s73 + $0x34] sm:$0xf]
        %v8361 = vld [vmem:[%s73 + $0x38] sm:$0xf]
        %v8362 = vld [vmem:[%s73 + $0x3c] sm:$0xf]
        %v8363 = vld [vmem:[%s75] sm:$0x1]
        %v8380 = vunpack.c.l.b16 %v8347
        %v8381 = vunpack.c.l.b16 %v8348
        %v8382 = vunpack.c.l.b16 %v8349
        %v8383 = vunpack.c.l.b16 %v8350
        %v8384 = vunpack.c.l.b16 %v8351
        %v8385 = vunpack.c.l.b16 %v8352
        %v8386 = vunpack.c.l.b16 %v8353
        %v8387 = vunpack.c.l.b16 %v8354
        %v8388 = vunpack.c.l.b16 %v8355
        %v8389 = vunpack.c.l.b16 %v8356
        %v8390 = vunpack.c.l.b16 %v8357
        %v8391 = vunpack.c.l.b16 %v8358
        %v8392 = vunpack.c.l.b16 %v8359
        %v8393 = vunpack.c.l.b16 %v8360
        %v8394 = vunpack.c.l.b16 %v8361
        %v8395 = vunpack.c.l.b16 %v8362
        %v8396 = vpack.c.b16 %v8381, %v8380
        %v8397 = vpack.c.b16 %v8383, %v8382
        %v8398 = vpack.c.b16 %v8385, %v8384
        %v8399 = vpack.c.b16 %v8387, %v8386
        %v8400 = vpack.c.b16 %v8389, %v8388
        %v8401 = vpack.c.b16 %v8391, %v8390
        %v8402 = vpack.c.b16 %v8393, %v8392
        %v8403 = vpack.c.b16 %v8395, %v8394
        %8412 = vmatprep.subr.bf16.mxu0 0
        %8413 = vmatpush1.bf16.msra.mxu0 %v8396
        %8414 = vmatprep.subr.bf16.mxu0 0
        %8415 = vmatpush1.bf16.msra.mxu0 %v8397
        %8416 = vmatprep.subr.bf16.mxu0 0
        %8417 = vmatpush1.bf16.msra.mxu0 %v8398
        %8418 = vmatprep.subr.bf16.mxu0 0
        %8419 = vmatpush1.bf16.msra.mxu0 %v8399
        %8420 = vmatprep.subr.bf16.mxu0 0
        %8421 = vmatpush1.bf16.msra.mxu0 %v8400
        %8422 = vmatprep.subr.bf16.mxu0 0
        %8423 = vmatpush1.bf16.msra.mxu0 %v8401
        %8424 = vmatprep.subr.bf16.mxu0 0
        %8425 = vmatpush1.bf16.msra.mxu0 %v8402
        %8426 = vmatprep.subr.bf16.mxu0 0
        %8427 = vmatpush1.bf16.msra.mxu0 %v8403
        %8428 = vmatprep.subr.bf16.mxu0 0
        %8429 = vmatpush1.bf16.msra.mxu0 0
        %8430 = vmatprep.subr.bf16.mxu0 0
        %8431 = vmatpush1.bf16.msra.mxu0 0
        %8432 = vmatprep.subr.bf16.mxu0 0
        %8433 = vmatpush1.bf16.msra.mxu0 0
        %8434 = vmatprep.subr.bf16.mxu0 0
        %8435 = vmatpush1.bf16.msra.mxu0 0
        %8436 = vmatprep.subr.bf16.mxu0 0
        %8437 = vmatpush1.bf16.msra.mxu0 0
        %8438 = vmatprep.subr.bf16.mxu0 0
        %8439 = vmatpush1.bf16.msra.mxu0 0
        %8440 = vmatprep.subr.bf16.mxu0 0
        %8441 = vmatpush1.bf16.msra.mxu0 0
        %8442 = vmatprep.subr.bf16.mxu0 0
        %8443 = vmatpush1.bf16.msra.mxu0 0
        %8444 = vmatprep.mubr.bf16.mxu0 0
        %8445 = vmatmul.mubr.bf16.gmra.mrb[0].mxu0 %v8225
        %v8446 = vpop.f32.mrb[0].mxu0
        %v8447 = vadd.f32 %v8363, %v8446
        %v8448 = vpop.f32.mrb[0].mxu0
        %v8449 = vpop.f32.mrb[0].mxu0
        %v8450 = vpop.f32.mrb[0].mxu0
        %8451 = vdwg.mxu0
        %v8452 = vadd.f32 %v8447, %v8342
        %vm8453 = vcmp.ge.f32.partialorder %v8452, 0.0
        %v8454 = vmul.f32 %v8452, 0.01
        %v8455 = vsel %vm8453, %v8452, %v8454
        %v8456 = vpack.c.bf16 %v8455, %v8455
        %v8457 = vld [vmem:[%s77] sm:$0xf]
        %v8458 = vld [vmem:[%s77 + $0x4] sm:$0xf]
        %v8459 = vld [vmem:[%s77 + $0x8] sm:$0xf]
        %v8460 = vld [vmem:[%s77 + $0xc] sm:$0xf]
        %v8461 = vld [vmem:[%s77 + $0x10] sm:$0xf]
        %v8462 = vld [vmem:[%s77 + $0x14] sm:$0xf]
        %v8463 = vld [vmem:[%s77 + $0x18] sm:$0xf]
        %v8464 = vld [vmem:[%s77 + $0x1c] sm:$0xf]
        %v8465 = vld [vmem:[%s77 + $0x20] sm:$0xf]
        %v8466 = vld [vmem:[%s77 + $0x24] sm:$0xf]
        %v8467 = vld [vmem:[%s77 + $0x28] sm:$0xf]
        %v8468 = vld [vmem:[%s77 + $0x2c] sm:$0xf]
        %v8469 = vld [vmem:[%s77 + $0x30] sm:$0xf]
        %v8470 = vld [vmem:[%s77 + $0x34] sm:$0xf]
        %v8471 = vld [vmem:[%s77 + $0x38] sm:$0xf]
        %v8472 = vld [vmem:[%s77 + $0x3c] sm:$0xf]
        %v8473 = vld [vmem:[%s79] sm:$0x1]
        %v8490 = vunpack.c.l.b16 %v8457
        %v8491 = vunpack.c.l.b16 %v8458
        %v8492 = vunpack.c.l.b16 %v8459
        %v8493 = vunpack.c.l.b16 %v8460
        %v8494 = vunpack.c.l.b16 %v8461
        %v8495 = vunpack.c.l.b16 %v8462
        %v8496 = vunpack.c.l.b16 %v8463
        %v8497 = vunpack.c.l.b16 %v8464
        %v8498 = vunpack.c.l.b16 %v8465
        %v8499 = vunpack.c.l.b16 %v8466
        %v8500 = vunpack.c.l.b16 %v8467
        %v8501 = vunpack.c.l.b16 %v8468
        %v8502 = vunpack.c.l.b16 %v8469
        %v8503 = vunpack.c.l.b16 %v8470
        %v8504 = vunpack.c.l.b16 %v8471
        %v8505 = vunpack.c.l.b16 %v8472
        %v8506 = vpack.c.b16 %v8491, %v8490
        %v8507 = vpack.c.b16 %v8493, %v8492
        %v8508 = vpack.c.b16 %v8495, %v8494
        %v8509 = vpack.c.b16 %v8497, %v8496
        %v8510 = vpack.c.b16 %v8499, %v8498
        %v8511 = vpack.c.b16 %v8501, %v8500
        %v8512 = vpack.c.b16 %v8503, %v8502
        %v8513 = vpack.c.b16 %v8505, %v8504
        %8522 = vmatprep.subr.bf16.mxu0 0
        %8523 = vmatpush1.bf16.msra.mxu0 %v8506
        %8524 = vmatprep.subr.bf16.mxu0 0
        %8525 = vmatpush1.bf16.msra.mxu0 %v8507
        %8526 = vmatprep.subr.bf16.mxu0 0
        %8527 = vmatpush1.bf16.msra.mxu0 %v8508
        %8528 = vmatprep.subr.bf16.mxu0 0
        %8529 = vmatpush1.bf16.msra.mxu0 %v8509
        %8530 = vmatprep.subr.bf16.mxu0 0
        %8531 = vmatpush1.bf16.msra.mxu0 %v8510
        %8532 = vmatprep.subr.bf16.mxu0 0
        %8533 = vmatpush1.bf16.msra.mxu0 %v8511
        %8534 = vmatprep.subr.bf16.mxu0 0
        %8535 = vmatpush1.bf16.msra.mxu0 %v8512
        %8536 = vmatprep.subr.bf16.mxu0 0
        %8537 = vmatpush1.bf16.msra.mxu0 %v8513
        %8538 = vmatprep.subr.bf16.mxu0 0
        %8539 = vmatpush1.bf16.msra.mxu0 0
        %8540 = vmatprep.subr.bf16.mxu0 0
        %8541 = vmatpush1.bf16.msra.mxu0 0
        %8542 = vmatprep.subr.bf16.mxu0 0
        %8543 = vmatpush1.bf16.msra.mxu0 0
        %8544 = vmatprep.subr.bf16.mxu0 0
        %8545 = vmatpush1.bf16.msra.mxu0 0
        %8546 = vmatprep.subr.bf16.mxu0 0
        %8547 = vmatpush1.bf16.msra.mxu0 0
        %8548 = vmatprep.subr.bf16.mxu0 0
        %8549 = vmatpush1.bf16.msra.mxu0 0
        %8550 = vmatprep.subr.bf16.mxu0 0
        %8551 = vmatpush1.bf16.msra.mxu0 0
        %8552 = vmatprep.subr.bf16.mxu0 0
        %8553 = vmatpush1.bf16.msra.mxu0 0
        %8554 = vmatprep.mubr.bf16.mxu0 0
        %8555 = vmatmul.mubr.bf16.gmra.mrb[0].mxu0 %v8456
        %v8556 = vpop.f32.mrb[0].mxu0
        %v8557 = vadd.f32 %v8473, %v8556
        %v8558 = vpop.f32.mrb[0].mxu0
        %v8559 = vpop.f32.mrb[0].mxu0
        %v8560 = vpop.f32.mrb[0].mxu0
        %8561 = vdwg.mxu0
        %vm8562 = vcmp.ge.f32.partialorder %v8557, 0.0
        %v8563 = vmul.f32 %v8557, 0.01
        %v8564 = vsel %vm8562, %v8557, %v8563
        %v8565 = vadd.f32 %v8564, 0.0
        %v8566 = vpack.c.bf16 %v8565, %v8565
        %v8567 = vld [vmem:[%s81] sm:$0xf]
        %v8568 = vld [vmem:[%s81 + $0x4] sm:$0xf]
        %v8569 = vld [vmem:[%s81 + $0x8] sm:$0xf]
        %v8570 = vld [vmem:[%s81 + $0xc] sm:$0xf]
        %v8571 = vld [vmem:[%s81 + $0x10] sm:$0xf]
        %v8572 = vld [vmem:[%s81 + $0x14] sm:$0xf]
        %v8573 = vld [vmem:[%s81 + $0x18] sm:$0xf]
        %v8574 = vld [vmem:[%s81 + $0x1c] sm:$0xf]
        %v8575 = vld [vmem:[%s81 + $0x20] sm:$0xf]
        %v8576 = vld [vmem:[%s81 + $0x24] sm:$0xf]
        %v8577 = vld [vmem:[%s81 + $0x28] sm:$0xf]
        %v8578 = vld [vmem:[%s81 + $0x2c] sm:$0xf]
        %v8579 = vld [vmem:[%s81 + $0x30] sm:$0xf]
        %v8580 = vld [vmem:[%s81 + $0x34] sm:$0xf]
        %v8581 = vld [vmem:[%s81 + $0x38] sm:$0xf]
        %v8582 = vld [vmem:[%s81 + $0x3c] sm:$0xf]
        %v8583 = vld [vmem:[#allocation2] sm:$0x1]
        %v8600 = vunpack.c.l.b16 %v8567
        %v8601 = vunpack.c.l.b16 %v8568
        %v8602 = vunpack.c.l.b16 %v8569
        %v8603 = vunpack.c.l.b16 %v8570
        %v8604 = vunpack.c.l.b16 %v8571
        %v8605 = vunpack.c.l.b16 %v8572
        %v8606 = vunpack.c.l.b16 %v8573
        %v8607 = vunpack.c.l.b16 %v8574
        %v8608 = vunpack.c.l.b16 %v8575
        %v8609 = vunpack.c.l.b16 %v8576
        %v8610 = vunpack.c.l.b16 %v8577
        %v8611 = vunpack.c.l.b16 %v8578
        %v8612 = vunpack.c.l.b16 %v8579
        %v8613 = vunpack.c.l.b16 %v8580
        %v8614 = vunpack.c.l.b16 %v8581
        %v8615 = vunpack.c.l.b16 %v8582
        %v8616 = vpack.c.b16 %v8601, %v8600
        %v8617 = vpack.c.b16 %v8603, %v8602
        %v8618 = vpack.c.b16 %v8605, %v8604
        %v8619 = vpack.c.b16 %v8607, %v8606
        %v8620 = vpack.c.b16 %v8609, %v8608
        %v8621 = vpack.c.b16 %v8611, %v8610
        %v8622 = vpack.c.b16 %v8613, %v8612
        %v8623 = vpack.c.b16 %v8615, %v8614
        %8632 = vmatprep.subr.bf16.mxu0 0
        %8633 = vmatpush1.bf16.msra.mxu0 %v8616
        %8634 = vmatprep.subr.bf16.mxu0 0
        %8635 = vmatpush1.bf16.msra.mxu0 %v8617
        %8636 = vmatprep.subr.bf16.mxu0 0
        %8637 = vmatpush1.bf16.msra.mxu0 %v8618
        %8638 = vmatprep.subr.bf16.mxu0 0
        %8639 = vmatpush1.bf16.msra.mxu0 %v8619
        %8640 = vmatprep.subr.bf16.mxu0 0
        %8641 = vmatpush1.bf16.msra.mxu0 %v8620
        %8642 = vmatprep.subr.bf16.mxu0 0
        %8643 = vmatpush1.bf16.msra.mxu0 %v8621
        %8644 = vmatprep.subr.bf16.mxu0 0
        %8645 = vmatpush1.bf16.msra.mxu0 %v8622
        %8646 = vmatprep.subr.bf16.mxu0 0
        %8647 = vmatpush1.bf16.msra.mxu0 %v8623
        %8648 = vmatprep.subr.bf16.mxu0 0
        %8649 = vmatpush1.bf16.msra.mxu0 0
        %8650 = vmatprep.subr.bf16.mxu0 0
        %8651 = vmatpush1.bf16.msra.mxu0 0
        %8652 = vmatprep.subr.bf16.mxu0 0
        %8653 = vmatpush1.bf16.msra.mxu0 0
        %8654 = vmatprep.subr.bf16.mxu0 0
        %8655 = vmatpush1.bf16.msra.mxu0 0
        %8656 = vmatprep.subr.bf16.mxu0 0
        %8657 = vmatpush1.bf16.msra.mxu0 0
        %8658 = vmatprep.subr.bf16.mxu0 0
        %8659 = vmatpush1.bf16.msra.mxu0 0
        %8660 = vmatprep.subr.bf16.mxu0 0
        %8661 = vmatpush1.bf16.msra.mxu0 0
        %8662 = vmatprep.subr.bf16.mxu0 0
        %8663 = vmatpush1.bf16.msra.mxu0 0
        %8664 = vmatprep.mubr.bf16.mxu0 0
        %8665 = vmatmul.mubr.bf16.gmra.mrb[0].mxu0 %v8566
        %v8666 = vpop.f32.mrb[0].mxu0
        %v8667 = vadd.f32 %v8583, %v8666
        %v8668 = vpop.f32.mrb[0].mxu0
        %v8669 = vpop.f32.mrb[0].mxu0
        %v8670 = vpop.f32.mrb[0].mxu0
        %8671 = vdwg.mxu0
        %vm8672 = vcmask 73728
        %8673 = vst.msk [vmem:[%s1271] sm:$0x1] %vm8672, %v8667
        %s8674 = sand.u32 %s995, 1
        %s8675 = scalar_lea.sflag [#allocation4], %s8674
        %s8676 = sand.u32 %s995, 1
        %s8677 = scalar_lea.vmem [#allocation5], %s8676
        // Predicated region
        $region193: #{bnet_forward.1} parent=187 // pred_check
          %p8678 = pneg %p1005
        $region194: #{bnet_forward.1} parent=187 // pred_check_branch
          %8680 = sbr.rel (%p8678) target = $region196
        $region195: #{bnet_forward.1} parent=187 // pred_region
          %s8682 = ssub.s32 16, 16
          %8683 = vsyncadd %s8675, %s8682
          %s8684 = smul.addr %s100, 16
          %s8685 = scalar_lea.hbm %s85, %s8684
          %s8687 = sshll.u32 %s8677, 4
          %s8688 = int_to_ptr.vmem [resolvable:$true] %s8687
          %8690 = dma.vmem_to_hbm [thread:$0]  %s8688, 16, %s8685, %s8675
        $region196: #{bnet_forward.1} parent=187 // pred_fallthru
          _
      $region188: #{bnet_forward.1} parent=5 // pred_fallthru
        _
      %p8691 = scmp.le.s32.totalorder 2, %s95
      // Predicated region
      $region197: #{bnet_forward.1} parent=5 // pred_check
        %p8692 = pneg %p8691
      $region198: #{bnet_forward.1} parent=5 // pred_check_branch
        %8694 = sbr.rel (%p8692) target = $region200
      $region199: #{bnet_forward.1} parent=5 // pred_region
        %s8695 = ssub.s32 %s95, 2
        // Predicated region
        $region201: #{bnet_forward.1} parent=199 // pred_check
          %p8696 = pneg %p1011
        $region202: #{bnet_forward.1} parent=199 // pred_check_branch
          %8698 = sbr.rel (%p8696) target = $region204
        $region203: #{bnet_forward.1} parent=199 // pred_region
          %s8699 = sand.u32 %s996, 1
          %s8700 = scalar_lea.sflag [#allocation4], %s8699
          %s8701 = sand.u32 %s996, 1
          %s8702 = scalar_lea.vmem [#allocation5], %s8701
          %8703 = dma.done %s8700, 16
        $region204: #{bnet_forward.1} parent=199 // pred_fallthru
          _
      $region200: #{bnet_forward.1} parent=5 // pred_fallthru
        _
    $region6: #{bnet_forward.1} parent=1 // loop_footer
      %s99 = sadd.s32 1, %s95
    $region7: #{bnet_forward.1} parent=1 // loop_footer_branch
      %94 = sbr.rel target = $region3
    $region8: #{bnet_forward.1} parent=1 // loop_exit
      _
    %8704 = vsyncpa [#allocation3], 1
    %s8705 = scalar_lea.sflag [#allocation3], 1
    %8706 = vsyncpa %s8705, 1
    %8707 = vsyncpa [#allocation4], 1
    %s8708 = scalar_lea.sflag [#allocation4], 1
    %8709 = vsyncpa %s8708, 1

</llo_original>
